<compile_context>
chip_gen: v6e
topology: v6e:2x2x1
jax: 0.10.0
libtpu: 0.0.40
codegen_flags: <defaults>
</compile_context>

<pallas_src>
import numpy as np

import jax
import jax.numpy as jnp
from jax import lax
from jax.experimental import pallas as pl
from jax.experimental.pallas import tpu as pltpu


ALPHA = 20.0  # certainty-scaling sharpness (hard-coded in the PyTorch module)


# ----------------------------------------------------------------------------
# Host-side constants: 1-D bilinear interpolation weight matrices that match
# torch.nn.functional.interpolate(mode='bilinear', align_corners=False).
# ----------------------------------------------------------------------------
def _interp_matrix(dst: int, src: int) -> np.ndarray:
    scale = src / dst
    x = (np.arange(dst, dtype=np.float64) + 0.5) * scale - 0.5
    x0 = np.floor(x)
    w1 = x - x0
    i0 = np.clip(x0.astype(np.int64), 0, src - 1)
    i1 = np.clip(x0.astype(np.int64) + 1, 0, src - 1)
    m = np.zeros((dst, src), np.float32)
    rows = np.arange(dst)
    m[rows, i0] += (1.0 - w1)
    m[rows, i1] += w1
    return m


# ----------------------------------------------------------------------------
# Fused Pallas kernel (single grid step, both sequences batched inside).
#
#   temp_ref  : (1,)                     f32  SMEM  softmax temperature
#   train_ref : (nseq, nmem*S, C)        f32        memory-frame features (rows)
#   test_ref  : (nseq, C, S)             f32        test features (cols)
#   wnum_ref  : (nseq, nmem, nmem*S)     f32        block-diag downsampled labels
#   up_ref    : (S, P)                   f32        kron bilinear-upsample matrix
#   ts_ref    : (nseq, 1, P)             f32        test scores (flattened)
#   out_ref   : (nseq, 1, P)             f32        fused + globally rescaled output
# ----------------------------------------------------------------------------
def _fused_kernel(temp_ref, train_ref, test_ref, wnum_ref, up_ref, ts_ref, out_ref):
    temp = temp_ref[0]
    nseq = train_ref.shape[0]
    s = test_ref.shape[2]
    nmem = wnum_ref.shape[1]

    # ---- cosine-similarity attention (one batched MXU matmul for all seqs) ----
    tr = train_ref[...]                                     # (nseq, nmem*S, C)
    te = test_ref[...]                                      # (nseq, C, S)
    # per-position L2 normalization over channels (no eps -> matches PyTorch);
    # the softmax temperature is folded into the test-side scale.
    tr_n = tr * lax.rsqrt(jnp.sum(tr * tr, axis=-1, keepdims=True))
    te_n = te * (temp * lax.rsqrt(jnp.sum(te * te, axis=1, keepdims=True)))
    simT = jnp.einsum('nkc,ncs->nks', tr_n, te_n,
                      preferred_element_type=jnp.float32)    # (nseq, nmem*S, S)

    # ---- per-frame softmax numerator / denominator (single exp, no concat) ----
    sim4 = simT.reshape(nseq, nmem, s, s)                    # leading-dim split
    e4 = jnp.exp(sim4 - jnp.max(sim4, axis=2, keepdims=True))
    den = jnp.sum(e4, axis=2)                                # (nseq, nmem, S) XLU
    num = jnp.einsum('nmj,njs->nms', wnum_ref[...],
                     e4.reshape(nseq, nmem * s, s),
                     preferred_element_type=jnp.float32)     # block-diag labels
    # den >= 1 (max-shifted exp), so the approx EUP reciprocal is safe.
    pmt_down = num * pl.reciprocal(den, approx=True)         # (nseq, nmem, S)

    # ---- fused upsample + mean / unbiased std / certainty scaling + scores ----
    up = up_ref[...]                                         # (S, P), hoisted
    ts_all = ts_ref[...]                                     # (nseq, 1, P)
    inv_nm = 1.0 / nmem
    inv_nm1 = 1.0 / (nmem - 1)                               # torch.std is unbiased

    fused_seq = []
    sm_max = None
    fused_max = None
    for n in range(nseq):                                    # static unroll (nseq=2)
        pmt_n = jnp.dot(pmt_down[n], up,
                        preferred_element_type=jnp.float32)  # (nmem, P) bilinear up
        mean = jnp.sum(pmt_n, axis=0, keepdims=True) * inv_nm          # (1, P)
        d = pmt_n - mean
        var = jnp.sum(d * d, axis=0, keepdims=True) * inv_nm1          # std**2
        sm = jnp.exp(ALPHA / (1.0 + var) - ALPHA) * mean               # scaled mean
        fused = sm + ts_all[n]                                          # (1, P)
        fused_seq.append(fused)

        sm_n = jnp.max(sm)
        f_n = jnp.max(fused)
        sm_max = sm_n if sm_max is None else jnp.maximum(sm_max, sm_n)
        fused_max = f_n if fused_max is None else jnp.maximum(fused_max, f_n)

    # ---- global-max rescale (same global maxima as the PyTorch module) ----
    max_peak = jnp.maximum(jnp.max(ts_all), sm_max)
    scale = max_peak / fused_max
    for n in range(nseq):
        out_ref[n] = fused_seq[n] * scale


def fused_attention_fuse_rescale(temp, train_rows, test_cols, w_num, u_t, ts_flat):
    nseq, ms, c = train_rows.shape
    s = test_cols.shape[2]
    nmem = w_num.shape[1]
    p = u_t.shape[1]
    return pl.pallas_call(
        _fused_kernel,
        out_shape=jax.ShapeDtypeStruct((nseq, 1, p), jnp.float32),
        grid=(1,),
        in_specs=[
            pl.BlockSpec(memory_space=pltpu.MemorySpace.SMEM),        # temp scalar
            pl.BlockSpec((nseq, ms, c), lambda i: (0, 0, 0)),         # train rows
            pl.BlockSpec((nseq, c, s), lambda i: (0, 0, 0)),          # test cols
            pl.BlockSpec((nseq, nmem, nmem * s), lambda i: (0, 0, 0)),  # label blkdiag
            pl.BlockSpec((s, p), lambda i: (0, 0)),                   # upsample matrix
            pl.BlockSpec((nseq, 1, p), lambda i: (0, 0, 0)),          # test scores
        ],
        out_specs=pl.BlockSpec((nseq, 1, p), lambda i: (0, 0, 0)),
        compiler_params=pltpu.CompilerParams(
            dimension_semantics=("arbitrary",),
            vmem_limit_bytes=32 * 1024 * 1024),
    )(temp, train_rows, test_cols, w_num, u_t, ts_flat)


# ----------------------------------------------------------------------------
# Forward wrapper (only layout transposes + tiny constant/weight prep in XLA)
# ----------------------------------------------------------------------------
def forward(params, test_scores, train_labels, test_feat, train_feats):
    """
    test_scores : (1, nseq, wl, hl)
    train_labels: (nmem, nseq, wl, hl)
    test_feat   : (1, nseq, c, wf, hf)
    train_feats : (nmem, nseq, c, wf, hf)
    returns     : (1, nseq, wl, hl)
    """
    nmem, nseq, c, wf, hf = train_feats.shape
    _, _, wl, hl = test_scores.shape
    s = wf * hf
    p = wl * hl

    # Bilinear weight matrices (host constants, align_corners=False semantics).
    d_w = jnp.asarray(_interp_matrix(wf, wl))                         # (wf, wl)
    d_h = jnp.asarray(_interp_matrix(hf, hl))                         # (hf, hl)
    u_t = jnp.asarray(np.kron(_interp_matrix(wl, wf),
                              _interp_matrix(hl, hf)).T)              # (S, P)

    # Downsample train labels to feature resolution (tiny glue matmuls).
    lab = jnp.einsum('mnab,xb->mnax', train_labels.astype(jnp.float32), d_h)
    lab = jnp.einsum('wa,mnax->mnwx', d_w, lab)                        # (nmem,nseq,wf,hf)
    lab = jnp.transpose(lab, (1, 0, 2, 3)).reshape(nseq, nmem, s)      # (nseq,nmem,S)

    # Block-diagonal numerator weights: w_num[n, m, m*S + j] = label[n, m, j].
    eye = jnp.eye(nmem, dtype=jnp.float32)
    w_num = (lab[:, :, None, :] * eye[None, :, :, None]).reshape(nseq, nmem, nmem * s)

    # Features pre-transposed so the kernel contracts on natural MXU axes.
    train_rows = jnp.transpose(train_feats, (1, 0, 3, 4, 2)).reshape(nseq, nmem * s, c)
    test_cols = test_feat[0].reshape(nseq, c, s)
    ts_flat = jnp.transpose(test_scores, (1, 0, 2, 3)).reshape(nseq, 1, p)

    out = fused_attention_fuse_rescale(
        params["softmax_temp"].astype(jnp.float32),
        train_rows.astype(jnp.float32),
        test_cols.astype(jnp.float32),
        w_num, u_t,
        ts_flat.astype(jnp.float32))                                   # (nseq, 1, P)

    return jnp.transpose(out.reshape(nseq, 1, wl, hl), (1, 0, 2, 3))


def init_params():
    # nn.Parameter(softmax_temp_init * torch.ones(1)) with softmax_temp_init=50
    return {"softmax_temp": jnp.full((1,), 50.0, jnp.float32)}


if __name__ == "__main__":
    key = jax.random.PRNGKey(0)
    k_ts, k_tl, k_tf, k_trf = jax.random.split(key, 4)

    nseq, nmem, c = 2, 3, 32
    wf = hf = 16       # feature resolution -> S = 256 (lane-aligned)
    wl = hl = 32       # label / score resolution -> P = 1024 (lane-dense)

    params = init_params()
    test_scores = 0.5 * jax.random.normal(k_ts, (1, nseq, wl, hl), jnp.float32)
    train_labels = jax.random.uniform(k_tl, (nmem, nseq, wl, hl), jnp.float32)
    test_feat = jax.random.normal(k_tf, (1, nseq, c, wf, hf), jnp.float32)
    train_feats = jax.random.normal(k_trf, (nmem, nseq, c, wf, hf), jnp.float32)

    fwd = jax.jit(forward)
    out = jax.block_until_ready(fwd(params, test_scores, train_labels,
                                    test_feat, train_feats))

    assert out.shape == (1, nseq, wl, hl)
    assert bool(jnp.all(jnp.isfinite(out)))
    print("KERNEL_OK")
</pallas_src>

<mosaic_0001>
module attributes {stable_mosaic.version = 11 : i64} {
  func.func @_fused_kernel(%arg0: i32, %arg1: memref<1xf32, #tpu.memory_space<smem>>, %arg2: memref<2x768x32xf32, #tpu.memory_space<vmem>>, %arg3: memref<2x32x256xf32, #tpu.memory_space<vmem>>, %arg4: memref<2x3x768xf32, #tpu.memory_space<vmem>>, %arg5: memref<256x1024xf32, #tpu.memory_space<vmem>>, %arg6: memref<2x1x1024xf32, #tpu.memory_space<vmem>>, %arg7: memref<2x1x1024xf32, #tpu.memory_space<vmem>>) attributes {dimension_semantics = [#tpu.dimension_semantics<arbitrary>], iteration_bounds = array<i64: 1>, scalar_prefetch = 0 : i64, scratch_operands = 0 : i64, tpu.core_type = #tpu.core_type<tc>, window_params = [{transform_indices = @transform_0, window_bounds = array<i64: 1>}, {pipeline_mode = #tpu.pipeline_mode<synchronous>, transform_indices = @transform_1, window_bounds = array<i64: 2, 768, 32>}, {pipeline_mode = #tpu.pipeline_mode<synchronous>, transform_indices = @transform_2, window_bounds = array<i64: 2, 32, 256>}, {pipeline_mode = #tpu.pipeline_mode<synchronous>, transform_indices = @transform_3, window_bounds = array<i64: 2, 3, 768>}, {pipeline_mode = #tpu.pipeline_mode<synchronous>, transform_indices = @transform_4, window_bounds = array<i64: 256, 1024>}, {pipeline_mode = #tpu.pipeline_mode<synchronous>, transform_indices = @transform_5, window_bounds = array<i64: 2, 1, 1024>}, {pipeline_mode = #tpu.pipeline_mode<synchronous>, transform_indices = @transform_6, window_bounds = array<i64: 2, 1, 1024>}]} {
    %c0 = arith.constant 0 : index
    %0 = memref.load %arg1[%c0] : memref<1xf32, #tpu.memory_space<smem>>
    %c0_0 = arith.constant 0 : index
    %c0_1 = arith.constant 0 : index
    %c0_2 = arith.constant 0 : index
    %1 = vector.load %arg2[%c0_0, %c0_1, %c0_2] : memref<2x768x32xf32, #tpu.memory_space<vmem>>, vector<2x768x32xf32>
    %c0_3 = arith.constant 0 : index
    %c0_4 = arith.constant 0 : index
    %c0_5 = arith.constant 0 : index
    %2 = vector.load %arg3[%c0_3, %c0_4, %c0_5] : memref<2x32x256xf32, #tpu.memory_space<vmem>>, vector<2x32x256xf32>
    %3 = arith.mulf %1, %1 : vector<2x768x32xf32>
    %cst = arith.constant dense<0.000000e+00> : vector<2x768xf32>
    %4 = vector.multi_reduction <add>, %3, %cst [2] : vector<2x768x32xf32> to vector<2x768xf32>
    %5 = vector.shape_cast %4 : vector<2x768xf32> to vector<2x768x1xf32>
    %6 = math.rsqrt %5 : vector<2x768x1xf32>
    %7 = vector.broadcast %6 : vector<2x768x1xf32> to vector<2x768x32xf32>
    %8 = arith.mulf %1, %7 : vector<2x768x32xf32>
    %9 = arith.mulf %2, %2 : vector<2x32x256xf32>
    %cst_6 = arith.constant dense<0.000000e+00> : vector<2x256xf32>
    %10 = vector.multi_reduction <add>, %9, %cst_6 [1] : vector<2x32x256xf32> to vector<2x256xf32>
    %11 = vector.shape_cast %10 : vector<2x256xf32> to vector<2x1x256xf32>
    %12 = math.rsqrt %11 : vector<2x1x256xf32>
    %13 = vector.broadcast %0 : f32 to vector<2x1x256xf32>
    %14 = arith.mulf %13, %12 : vector<2x1x256xf32>
    %15 = vector.broadcast %14 : vector<2x1x256xf32> to vector<2x32x256xf32>
    %16 = arith.mulf %2, %15 : vector<2x32x256xf32>
    "tpu.trace_start"() <{level = 10 : i32, message = "nkc,ncs->nks"}> : () -> ()
    %cst_7 = arith.constant dense<0.000000e+00> : vector<2x768x256xf32>
    %17 = tpu.matmul %8, %16, %cst_7 {dimension_numbers = #tpu.dot_dimension_numbers<[2], [1], [1], [2], [0, 0, 0, 1, 1, 2], [0], [0]>} : vector<2x768x32xf32>, vector<2x32x256xf32>, vector<2x768x256xf32> -> vector<2x768x256xf32>
    "tpu.trace_stop"() : () -> ()
    %18 = vector.shape_cast %17 : vector<2x768x256xf32> to vector<2x3x256x256xf32>
    %cst_8 = arith.constant dense<0xFF800000> : vector<2x3x256xf32>
    %19 = vector.multi_reduction <maximumf>, %18, %cst_8 [2] : vector<2x3x256x256xf32> to vector<2x3x256xf32>
    %20 = vector.shape_cast %19 : vector<2x3x256xf32> to vector<2x3x1x256xf32>
    %21 = vector.broadcast %20 : vector<2x3x1x256xf32> to vector<2x3x256x256xf32>
    %22 = arith.subf %18, %21 : vector<2x3x256x256xf32>
    %23 = math.exp %22 : vector<2x3x256x256xf32>
    %cst_9 = arith.constant dense<0.000000e+00> : vector<2x3x256xf32>
    %24 = vector.multi_reduction <add>, %23, %cst_9 [2] : vector<2x3x256x256xf32> to vector<2x3x256xf32>
    %c0_10 = arith.constant 0 : index
    %c0_11 = arith.constant 0 : index
    %c0_12 = arith.constant 0 : index
    %25 = vector.load %arg4[%c0_10, %c0_11, %c0_12] : memref<2x3x768xf32, #tpu.memory_space<vmem>>, vector<2x3x768xf32>
    %26 = vector.shape_cast %23 : vector<2x3x256x256xf32> to vector<2x768x256xf32>
    "tpu.trace_start"() <{level = 10 : i32, message = "nmj,njs->nms"}> : () -> ()
    %cst_13 = arith.constant dense<0.000000e+00> : vector<2x3x256xf32>
    %27 = tpu.matmul %25, %26, %cst_13 {dimension_numbers = #tpu.dot_dimension_numbers<[2], [1], [1], [2], [0, 0, 0, 1, 1, 2], [0], [0]>} : vector<2x3x768xf32>, vector<2x768x256xf32>, vector<2x3x256xf32> -> vector<2x3x256xf32>
    "tpu.trace_stop"() : () -> ()
    %28 = tpu.reciprocal %24 {approx = true} : vector<2x3x256xf32> -> vector<2x3x256xf32>
    %29 = arith.mulf %27, %28 : vector<2x3x256xf32>
    %c0_14 = arith.constant 0 : index
    %c0_15 = arith.constant 0 : index
    %30 = vector.load %arg5[%c0_14, %c0_15] : memref<256x1024xf32, #tpu.memory_space<vmem>>, vector<256x1024xf32>
    %c0_16 = arith.constant 0 : index
    %c0_17 = arith.constant 0 : index
    %c0_18 = arith.constant 0 : index
    %31 = vector.load %arg6[%c0_16, %c0_17, %c0_18] : memref<2x1x1024xf32, #tpu.memory_space<vmem>>, vector<2x1x1024xf32>
    %32 = vector.extract_strided_slice %29 {offsets = [0, 0, 0], sizes = [1, 3, 256], strides = [1, 1, 1]} : vector<2x3x256xf32> to vector<1x3x256xf32>
    %33 = vector.shape_cast %32 : vector<1x3x256xf32> to vector<3x256xf32>
    %cst_19 = arith.constant dense<0.000000e+00> : vector<3x1024xf32>
    %34 = tpu.matmul %33, %30, %cst_19 {dimension_numbers = #tpu.dot_dimension_numbers<[1], [0], [0], [1], [0, 0, 1, 1], [], []>} : vector<3x256xf32>, vector<256x1024xf32>, vector<3x1024xf32> -> vector<3x1024xf32>
    %cst_20 = arith.constant dense<0.000000e+00> : vector<1024xf32>
    %35 = vector.multi_reduction <add>, %34, %cst_20 [0] : vector<3x1024xf32> to vector<1024xf32>
    %36 = vector.shape_cast %35 : vector<1024xf32> to vector<1x1024xf32>
    %cst_21 = arith.constant 0.333333343 : f32
    %37 = vector.broadcast %cst_21 : f32 to vector<1x1024xf32>
    %38 = arith.mulf %36, %37 : vector<1x1024xf32>
    %39 = vector.broadcast %38 : vector<1x1024xf32> to vector<3x1024xf32>
    %40 = arith.subf %34, %39 : vector<3x1024xf32>
    %41 = arith.mulf %40, %40 : vector<3x1024xf32>
    %cst_22 = arith.constant dense<0.000000e+00> : vector<1024xf32>
    %42 = vector.multi_reduction <add>, %41, %cst_22 [0] : vector<3x1024xf32> to vector<1024xf32>
    %43 = vector.shape_cast %42 : vector<1024xf32> to vector<1x1024xf32>
    %cst_23 = arith.constant 5.000000e-01 : f32
    %44 = vector.broadcast %cst_23 : f32 to vector<1x1024xf32>
    %45 = arith.mulf %43, %44 : vector<1x1024xf32>
    %cst_24 = arith.constant 1.000000e+00 : f32
    %46 = vector.broadcast %cst_24 : f32 to vector<1x1024xf32>
    %47 = arith.addf %46, %45 : vector<1x1024xf32>
    %cst_25 = arith.constant 2.000000e+01 : f32
    %48 = vector.broadcast %cst_25 : f32 to vector<1x1024xf32>
    %49 = arith.divf %48, %47 : vector<1x1024xf32>
    %cst_26 = arith.constant 2.000000e+01 : f32
    %50 = vector.broadcast %cst_26 : f32 to vector<1x1024xf32>
    %51 = arith.subf %49, %50 : vector<1x1024xf32>
    %52 = math.exp %51 : vector<1x1024xf32>
    %53 = arith.mulf %52, %38 : vector<1x1024xf32>
    %54 = vector.extract_strided_slice %31 {offsets = [0, 0, 0], sizes = [1, 1, 1024], strides = [1, 1, 1]} : vector<2x1x1024xf32> to vector<1x1x1024xf32>
    %55 = vector.shape_cast %54 : vector<1x1x1024xf32> to vector<1x1024xf32>
    %56 = arith.addf %53, %55 : vector<1x1024xf32>
    %57 = vector.shape_cast %53 : vector<1x1024xf32> to vector<1x1x1024xf32>
    %cst_27 = arith.constant dense<0xFF800000> : vector<1xf32>
    %58 = vector.multi_reduction <maximumf>, %57, %cst_27 [1, 2] : vector<1x1x1024xf32> to vector<1xf32>
    %59 = vector.shape_cast %58 : vector<1xf32> to vector<1x1x1xf32>
    %60 = vector.extract %59[0, 0, 0] : f32 from vector<1x1x1xf32>
    %61 = vector.shape_cast %56 : vector<1x1024xf32> to vector<1x1x1024xf32>
    %cst_28 = arith.constant dense<0xFF800000> : vector<1xf32>
    %62 = vector.multi_reduction <maximumf>, %61, %cst_28 [1, 2] : vector<1x1x1024xf32> to vector<1xf32>
    %63 = vector.shape_cast %62 : vector<1xf32> to vector<1x1x1xf32>
    %64 = vector.extract %63[0, 0, 0] : f32 from vector<1x1x1xf32>
    %65 = vector.extract_strided_slice %29 {offsets = [1, 0, 0], sizes = [1, 3, 256], strides = [1, 1, 1]} : vector<2x3x256xf32> to vector<1x3x256xf32>
    %66 = vector.shape_cast %65 : vector<1x3x256xf32> to vector<3x256xf32>
    %cst_29 = arith.constant dense<0.000000e+00> : vector<3x1024xf32>
    %67 = tpu.matmul %66, %30, %cst_29 {dimension_numbers = #tpu.dot_dimension_numbers<[1], [0], [0], [1], [0, 0, 1, 1], [], []>} : vector<3x256xf32>, vector<256x1024xf32>, vector<3x1024xf32> -> vector<3x1024xf32>
    %cst_30 = arith.constant dense<0.000000e+00> : vector<1024xf32>
    %68 = vector.multi_reduction <add>, %67, %cst_30 [0] : vector<3x1024xf32> to vector<1024xf32>
    %69 = vector.shape_cast %68 : vector<1024xf32> to vector<1x1024xf32>
    %cst_31 = arith.constant 0.333333343 : f32
    %70 = vector.broadcast %cst_31 : f32 to vector<1x1024xf32>
    %71 = arith.mulf %69, %70 : vector<1x1024xf32>
    %72 = vector.broadcast %71 : vector<1x1024xf32> to vector<3x1024xf32>
    %73 = arith.subf %67, %72 : vector<3x1024xf32>
    %74 = arith.mulf %73, %73 : vector<3x1024xf32>
    %cst_32 = arith.constant dense<0.000000e+00> : vector<1024xf32>
    %75 = vector.multi_reduction <add>, %74, %cst_32 [0] : vector<3x1024xf32> to vector<1024xf32>
    %76 = vector.shape_cast %75 : vector<1024xf32> to vector<1x1024xf32>
    %cst_33 = arith.constant 5.000000e-01 : f32
    %77 = vector.broadcast %cst_33 : f32 to vector<1x1024xf32>
    %78 = arith.mulf %76, %77 : vector<1x1024xf32>
    %cst_34 = arith.constant 1.000000e+00 : f32
    %79 = vector.broadcast %cst_34 : f32 to vector<1x1024xf32>
    %80 = arith.addf %79, %78 : vector<1x1024xf32>
    %cst_35 = arith.constant 2.000000e+01 : f32
    %81 = vector.broadcast %cst_35 : f32 to vector<1x1024xf32>
    %82 = arith.divf %81, %80 : vector<1x1024xf32>
    %cst_36 = arith.constant 2.000000e+01 : f32
    %83 = vector.broadcast %cst_36 : f32 to vector<1x1024xf32>
    %84 = arith.subf %82, %83 : vector<1x1024xf32>
    %85 = math.exp %84 : vector<1x1024xf32>
    %86 = arith.mulf %85, %71 : vector<1x1024xf32>
    %87 = vector.extract_strided_slice %31 {offsets = [1, 0, 0], sizes = [1, 1, 1024], strides = [1, 1, 1]} : vector<2x1x1024xf32> to vector<1x1x1024xf32>
    %88 = vector.shape_cast %87 : vector<1x1x1024xf32> to vector<1x1024xf32>
    %89 = arith.addf %86, %88 : vector<1x1024xf32>
    %90 = vector.shape_cast %86 : vector<1x1024xf32> to vector<1x1x1024xf32>
    %cst_37 = arith.constant dense<0xFF800000> : vector<1xf32>
    %91 = vector.multi_reduction <maximumf>, %90, %cst_37 [1, 2] : vector<1x1x1024xf32> to vector<1xf32>
    %92 = vector.shape_cast %91 : vector<1xf32> to vector<1x1x1xf32>
    %93 = vector.extract %92[0, 0, 0] : f32 from vector<1x1x1xf32>
    %94 = vector.shape_cast %89 : vector<1x1024xf32> to vector<1x1x1024xf32>
    %cst_38 = arith.constant dense<0xFF800000> : vector<1xf32>
    %95 = vector.multi_reduction <maximumf>, %94, %cst_38 [1, 2] : vector<1x1x1024xf32> to vector<1xf32>
    %96 = vector.shape_cast %95 : vector<1xf32> to vector<1x1x1xf32>
    %97 = vector.extract %96[0, 0, 0] : f32 from vector<1x1x1xf32>
    %98 = arith.maximumf %60, %93 : f32
    %99 = arith.maximumf %64, %97 : f32
    %100 = vector.shape_cast %31 : vector<2x1x1024xf32> to vector<1x2x1x1024xf32>
    %cst_39 = arith.constant dense<0xFF800000> : vector<1xf32>
    %101 = vector.multi_reduction <maximumf>, %100, %cst_39 [1, 2, 3] : vector<1x2x1x1024xf32> to vector<1xf32>
    %102 = vector.shape_cast %101 : vector<1xf32> to vector<1x1x1x1xf32>
    %103 = vector.extract %102[0, 0, 0, 0] : f32 from vector<1x1x1x1xf32>
    %104 = arith.maximumf %103, %98 : f32
    %105 = arith.divf %104, %99 : f32
    %106 = vector.broadcast %105 : f32 to vector<1x1024xf32>
    %107 = arith.mulf %56, %106 : vector<1x1024xf32>
    %c0_40 = arith.constant 0 : index
    %c0_41 = arith.constant 0 : index
    %c0_42 = arith.constant 0 : index
    %108 = vector.load %arg7[%c0_40, %c0_41, %c0_42] : memref<2x1x1024xf32, #tpu.memory_space<vmem>>, vector<1x1x1024xf32>
    %109 = vector.shape_cast %108 : vector<1x1x1024xf32> to vector<1x1024xf32>
    %110 = vector.shape_cast %107 : vector<1x1024xf32> to vector<1x1x1024xf32>
    tpu.vector_store %arg7[%c0_40, %c0_41, %c0_42], %110 {strides = array<i32>} : memref<2x1x1024xf32, #tpu.memory_space<vmem>>, vector<1x1x1024xf32>,
    %111 = vector.broadcast %105 : f32 to vector<1x1024xf32>
    %112 = arith.mulf %89, %111 : vector<1x1024xf32>
    %c1 = arith.constant 1 : index
    %c0_43 = arith.constant 0 : index
    %c0_44 = arith.constant 0 : index
    %113 = vector.load %arg7[%c1, %c0_43, %c0_44] : memref<2x1x1024xf32, #tpu.memory_space<vmem>>, vector<1x1x1024xf32>
    %114 = vector.shape_cast %113 : vector<1x1x1024xf32> to vector<1x1024xf32>
    %115 = vector.shape_cast %112 : vector<1x1024xf32> to vector<1x1x1024xf32>
    tpu.vector_store %arg7[%c1, %c0_43, %c0_44], %115 {strides = array<i32>} : memref<2x1x1024xf32, #tpu.memory_space<vmem>>, vector<1x1x1024xf32>,
    return
  }
  func.func @transform_0(%arg0: i32) -> i32 {
    %c0_i32 = arith.constant 0 : i32
    %c0_i32_0 = arith.constant 0 : i32
    return %c0_i32 : i32
  }
  func.func @transform_1(%arg0: i32) -> (i32, i32, i32) {
    %c0_i32 = arith.constant 0 : i32
    %c0_i32_0 = arith.constant 0 : i32
    %c0_i32_1 = arith.constant 0 : i32
    %c0_i32_2 = arith.constant 0 : i32
    return %c0_i32, %c0_i32_0, %c0_i32_1 : i32, i32, i32
  }
  func.func @transform_2(%arg0: i32) -> (i32, i32, i32) {
    %c0_i32 = arith.constant 0 : i32
    %c0_i32_0 = arith.constant 0 : i32
    %c0_i32_1 = arith.constant 0 : i32
    %c0_i32_2 = arith.constant 0 : i32
    return %c0_i32, %c0_i32_0, %c0_i32_1 : i32, i32, i32
  }
  func.func @transform_3(%arg0: i32) -> (i32, i32, i32) {
    %c0_i32 = arith.constant 0 : i32
    %c0_i32_0 = arith.constant 0 : i32
    %c0_i32_1 = arith.constant 0 : i32
    %c0_i32_2 = arith.constant 0 : i32
    return %c0_i32, %c0_i32_0, %c0_i32_1 : i32, i32, i32
  }
  func.func @transform_4(%arg0: i32) -> (i32, i32) {
    %c0_i32 = arith.constant 0 : i32
    %c0_i32_0 = arith.constant 0 : i32
    %c0_i32_1 = arith.constant 0 : i32
    return %c0_i32, %c0_i32_0 : i32, i32
  }
  func.func @transform_5(%arg0: i32) -> (i32, i32, i32) {
    %c0_i32 = arith.constant 0 : i32
    %c0_i32_0 = arith.constant 0 : i32
    %c0_i32_1 = arith.constant 0 : i32
    %c0_i32_2 = arith.constant 0 : i32
    return %c0_i32, %c0_i32_0, %c0_i32_1 : i32, i32, i32
  }
  func.func @transform_6(%arg0: i32) -> (i32, i32, i32) {
    %c0_i32 = arith.constant 0 : i32
    %c0_i32_0 = arith.constant 0 : i32
    %c0_i32_1 = arith.constant 0 : i32
    %c0_i32_2 = arith.constant 0 : i32
    return %c0_i32, %c0_i32_0, %c0_i32_1 : i32, i32, i32
  }
}

</mosaic_0001>

<llo_original>
// kernel: mul.8
$region0: #{mul.8}
  %s0 = inlined_call_operand.vmem [shape: f32[2,3,16,16], index: 0, kind: input, shape index: {}]
  %s1 = inlined_call_operand.vmem [shape: f32[2,3,256], index: 1, kind: output, shape index: {}]
  $region1: #{mul.8} parent=0
    #allocation0 [shape = 'u8[24576]{0}', space=vmem, size = 0x6000, scoped, tag = 'scoped mem for output reshape']
    %v2 = vld [vmem:[%s0] ss:$8 sm:$0xf]
    %v3 = vld [vmem:[%s0] ss:$8 sm:$0xf0]
    %vm4 = vcmask 1047556
    %v5 = vsel %vm4, %v3, %v2
    %vm6 = vcmask 130048
    %7 = vst.msk [vmem:[#allocation0] ss:$8 sm:$0x3] %vm6, %v5
    %s8 = scalar_lea.vmem [#allocation0], 4294967281
    %9 = vst.msk [vmem:[%s8] ss:$8 sm:$0xc] %vm6, %v5
    %s10 = scalar_lea.vmem [#allocation0], 4294967280
    %11 = vst.msk [vmem:[%s10] ss:$8 sm:$0x30] %vm6, %v5
    %s12 = scalar_lea.vmem [#allocation0], 4294967265
    %13 = vst.msk [vmem:[%s12] ss:$8 sm:$0xc0] %vm6, %v5
    %s14 = scalar_lea.vmem %s0, 64
    %v15 = vld [vmem:[%s14] ss:$8 sm:$0xf]
    %vm16 = vcmask 130048
    %s17 = scalar_lea.vmem [#allocation0], 32
    %18 = vst.msk [vmem:[%s17] ss:$8 sm:$0x3] %vm16, %v15
    %s19 = scalar_lea.vmem [#allocation0], 17
    %20 = vst.msk [vmem:[%s19] ss:$8 sm:$0xc] %vm16, %v15
    %s21 = scalar_lea.vmem %s0, 7
    %s22 = smov 3
    %v23 = vld [vmem:[%s21] ss:$16 sm:%s22]
    %s24 = scalar_lea.vmem %s0, 4294967279
    %s25 = smov 12
    %v26 = vld [vmem:[%s24] ss:$16 sm:%s25]
    %vm27 = vcmask 1043458
    %v28 = vsel %vm27, %v26, %v23
    %s29 = scalar_lea.vmem %s0, 4294967271
    %s30 = smov 48
    %v31 = vld [vmem:[%s29] ss:$16 sm:%s30]
    %vm32 = vcmask 1045508
    %v33 = vsel %vm32, %v31, %v28
    %s34 = scalar_lea.vmem %s0, 4294967247
    %s35 = smov 192
    %v36 = vld [vmem:[%s34] ss:$16 sm:%s35]
    %vm37 = vcmask 1047558
    %v38 = vsel %vm37, %v36, %v33
    %39 = vrot.lane.b32.xlu0 %v38, 112
    %v40 = vpop.permute.xlu0 %39
    %vm41 = vcmask 1048448
    %42 = vst.msk [vmem:[#allocation0] sm:$0x3] %vm41, %v40
    %s43 = scalar_lea.vmem [#allocation0], 6
    %44 = vst.msk [vmem:[%s43] sm:$0xc] %vm41, %v40
    %s45 = scalar_lea.vmem [#allocation0], 12
    %46 = vst.msk [vmem:[%s45] sm:$0x30] %vm41, %v40
    %s47 = scalar_lea.vmem [#allocation0], 18
    %48 = vst.msk [vmem:[%s47] sm:$0xc0] %vm41, %v40
    %s49 = scalar_lea.vmem %s0, 71
    %s50 = smov 3
    %v51 = vld [vmem:[%s49] ss:$16 sm:%s50]
    %s52 = scalar_lea.vmem %s0, 47
    %s53 = smov 12
    %v54 = vld [vmem:[%s52] ss:$16 sm:%s53]
    %vm55 = vcmask 1043458
    %v56 = vsel %vm55, %v54, %v51
    %57 = vrot.lane.b32.xlu0 %v56, 112
    %v58 = vpop.permute.xlu0 %57
    %vm59 = vcmask 1048448
    %s60 = scalar_lea.vmem [#allocation0], 32
    %61 = vst.msk [vmem:[%s60] sm:$0x3] %vm59, %v58
    %s62 = scalar_lea.vmem [#allocation0], 38
    %63 = vst.msk [vmem:[%s62] sm:$0xc] %vm59, %v58
    %s64 = scalar_lea.vmem %s0, 6
    %s65 = smov 3
    %v66 = vld [vmem:[%s64] ss:$16 sm:%s65]
    %s67 = scalar_lea.vmem %s0, 4294967278
    %s68 = smov 12
    %v69 = vld [vmem:[%s67] ss:$16 sm:%s68]
    %vm70 = vcmask 1043458
    %v71 = vsel %vm70, %v69, %v66
    %s72 = scalar_lea.vmem %s0, 4294967270
    %s73 = smov 48
    %v74 = vld [vmem:[%s72] ss:$16 sm:%s73]
    %vm75 = vcmask 1045508
    %v76 = vsel %vm75, %v74, %v71
    %s77 = scalar_lea.vmem %s0, 4294967246
    %s78 = smov 192
    %v79 = vld [vmem:[%s77] ss:$16 sm:%s78]
    %vm80 = vcmask 1047558
    %v81 = vsel %vm80, %v79, %v76
    %82 = vrot.lane.b32.xlu0 %v81, 96
    %v83 = vpop.permute.xlu0 %82
    %vm84 = vcmask 917248
    %85 = vst.msk [vmem:[#allocation0] sm:$0x3] %vm84, %v83
    %s86 = scalar_lea.vmem [#allocation0], 6
    %87 = vst.msk [vmem:[%s86] sm:$0xc] %vm84, %v83
    %s88 = scalar_lea.vmem [#allocation0], 12
    %89 = vst.msk [vmem:[%s88] sm:$0x30] %vm84, %v83
    %s90 = scalar_lea.vmem [#allocation0], 18
    %91 = vst.msk [vmem:[%s90] sm:$0xc0] %vm84, %v83
    %s92 = scalar_lea.vmem %s0, 70
    %s93 = smov 3
    %v94 = vld [vmem:[%s92] ss:$16 sm:%s93]
    %s95 = scalar_lea.vmem %s0, 46
    %s96 = smov 12
    %v97 = vld [vmem:[%s95] ss:$16 sm:%s96]
    %vm98 = vcmask 1043458
    %v99 = vsel %vm98, %v97, %v94
    %100 = vrot.lane.b32.xlu0 %v99, 96
    %v101 = vpop.permute.xlu0 %100
    %vm102 = vcmask 917248
    %s103 = scalar_lea.vmem [#allocation0], 32
    %104 = vst.msk [vmem:[%s103] sm:$0x3] %vm102, %v101
    %s105 = scalar_lea.vmem [#allocation0], 38
    %106 = vst.msk [vmem:[%s105] sm:$0xc] %vm102, %v101
    %s107 = scalar_lea.vmem %s0, 5
    %s108 = smov 3
    %v109 = vld [vmem:[%s107] ss:$16 sm:%s108]
    %s110 = scalar_lea.vmem %s0, 4294967277
    %s111 = smov 12
    %v112 = vld [vmem:[%s110] ss:$16 sm:%s111]
    %vm113 = vcmask 1043458
    %v114 = vsel %vm113, %v112, %v109
    %s115 = scalar_lea.vmem %s0, 4294967269
    %s116 = smov 48
    %v117 = vld [vmem:[%s115] ss:$16 sm:%s116]
    %vm118 = vcmask 1045508
    %v119 = vsel %vm118, %v117, %v114
    %s120 = scalar_lea.vmem %s0, 4294967245
    %s121 = smov 192
    %v122 = vld [vmem:[%s120] ss:$16 sm:%s121]
    %vm123 = vcmask 1047558
    %v124 = vsel %vm123, %v122, %v119
    %125 = vrot.lane.b32.xlu0 %v124, 80
    %v126 = vpop.permute.xlu0 %125
    %vm127 = vcmask 786048
    %128 = vst.msk [vmem:[#allocation0] sm:$0x3] %vm127, %v126
    %s129 = scalar_lea.vmem [#allocation0], 6
    %130 = vst.msk [vmem:[%s129] sm:$0xc] %vm127, %v126
    %s131 = scalar_lea.vmem [#allocation0], 12
    %132 = vst.msk [vmem:[%s131] sm:$0x30] %vm127, %v126
    %s133 = scalar_lea.vmem [#allocation0], 18
    %134 = vst.msk [vmem:[%s133] sm:$0xc0] %vm127, %v126
    %s135 = scalar_lea.vmem %s0, 69
    %s136 = smov 3
    %v137 = vld [vmem:[%s135] ss:$16 sm:%s136]
    %s138 = scalar_lea.vmem %s0, 45
    %s139 = smov 12
    %v140 = vld [vmem:[%s138] ss:$16 sm:%s139]
    %vm141 = vcmask 1043458
    %v142 = vsel %vm141, %v140, %v137
    %143 = vrot.lane.b32.xlu0 %v142, 80
    %v144 = vpop.permute.xlu0 %143
    %vm145 = vcmask 786048
    %s146 = scalar_lea.vmem [#allocation0], 32
    %147 = vst.msk [vmem:[%s146] sm:$0x3] %vm145, %v144
    %s148 = scalar_lea.vmem [#allocation0], 38
    %149 = vst.msk [vmem:[%s148] sm:$0xc] %vm145, %v144
    %s150 = scalar_lea.vmem %s0, 4
    %s151 = smov 3
    %v152 = vld [vmem:[%s150] ss:$16 sm:%s151]
    %s153 = scalar_lea.vmem %s0, 4294967276
    %s154 = smov 12
    %v155 = vld [vmem:[%s153] ss:$16 sm:%s154]
    %vm156 = vcmask 1043458
    %v157 = vsel %vm156, %v155, %v152
    %s158 = scalar_lea.vmem %s0, 4294967268
    %s159 = smov 48
    %v160 = vld [vmem:[%s158] ss:$16 sm:%s159]
    %vm161 = vcmask 1045508
    %v162 = vsel %vm161, %v160, %v157
    %s163 = scalar_lea.vmem %s0, 4294967244
    %s164 = smov 192
    %v165 = vld [vmem:[%s163] ss:$16 sm:%s164]
    %vm166 = vcmask 1047558
    %v167 = vsel %vm166, %v165, %v162
    %168 = vrot.lane.b32.xlu0 %v167, 64
    %v169 = vpop.permute.xlu0 %168
    %vm170 = vcmask 654848
    %171 = vst.msk [vmem:[#allocation0] sm:$0x3] %vm170, %v169
    %s172 = scalar_lea.vmem [#allocation0], 6
    %173 = vst.msk [vmem:[%s172] sm:$0xc] %vm170, %v169
    %s174 = scalar_lea.vmem [#allocation0], 12
    %175 = vst.msk [vmem:[%s174] sm:$0x30] %vm170, %v169
    %s176 = scalar_lea.vmem [#allocation0], 18
    %177 = vst.msk [vmem:[%s176] sm:$0xc0] %vm170, %v169
    %s178 = scalar_lea.vmem %s0, 68
    %s179 = smov 3
    %v180 = vld [vmem:[%s178] ss:$16 sm:%s179]
    %s181 = scalar_lea.vmem %s0, 44
    %s182 = smov 12
    %v183 = vld [vmem:[%s181] ss:$16 sm:%s182]
    %vm184 = vcmask 1043458
    %v185 = vsel %vm184, %v183, %v180
    %186 = vrot.lane.b32.xlu0 %v185, 64
    %v187 = vpop.permute.xlu0 %186
    %vm188 = vcmask 654848
    %s189 = scalar_lea.vmem [#allocation0], 32
    %190 = vst.msk [vmem:[%s189] sm:$0x3] %vm188, %v187
    %s191 = scalar_lea.vmem [#allocation0], 38
    %192 = vst.msk [vmem:[%s191] sm:$0xc] %vm188, %v187
    %s193 = scalar_lea.vmem %s0, 3
    %s194 = smov 3
    %v195 = vld [vmem:[%s193] ss:$16 sm:%s194]
    %s196 = scalar_lea.vmem %s0, 4294967275
    %s197 = smov 12
    %v198 = vld [vmem:[%s196] ss:$16 sm:%s197]
    %vm199 = vcmask 1043458
    %v200 = vsel %vm199, %v198, %v195
    %s201 = scalar_lea.vmem %s0, 4294967267
    %s202 = smov 48
    %v203 = vld [vmem:[%s201] ss:$16 sm:%s202]
    %vm204 = vcmask 1045508
    %v205 = vsel %vm204, %v203, %v200
    %s206 = scalar_lea.vmem %s0, 4294967243
    %s207 = smov 192
    %v208 = vld [vmem:[%s206] ss:$16 sm:%s207]
    %vm209 = vcmask 1047558
    %v210 = vsel %vm209, %v208, %v205
    %211 = vrot.lane.b32.xlu0 %v210, 48
    %v212 = vpop.permute.xlu0 %211
    %vm213 = vcmask 523648
    %214 = vst.msk [vmem:[#allocation0] sm:$0x3] %vm213, %v212
    %s215 = scalar_lea.vmem [#allocation0], 6
    %216 = vst.msk [vmem:[%s215] sm:$0xc] %vm213, %v212
    %s217 = scalar_lea.vmem [#allocation0], 12
    %218 = vst.msk [vmem:[%s217] sm:$0x30] %vm213, %v212
    %s219 = scalar_lea.vmem [#allocation0], 18
    %220 = vst.msk [vmem:[%s219] sm:$0xc0] %vm213, %v212
    %s221 = scalar_lea.vmem %s0, 67
    %s222 = smov 3
    %v223 = vld [vmem:[%s221] ss:$16 sm:%s222]
    %s224 = scalar_lea.vmem %s0, 43
    %s225 = smov 12
    %v226 = vld [vmem:[%s224] ss:$16 sm:%s225]
    %vm227 = vcmask 1043458
    %v228 = vsel %vm227, %v226, %v223
    %229 = vrot.lane.b32.xlu0 %v228, 48
    %v230 = vpop.permute.xlu0 %229
    %vm231 = vcmask 523648
    %s232 = scalar_lea.vmem [#allocation0], 32
    %233 = vst.msk [vmem:[%s232] sm:$0x3] %vm231, %v230
    %s234 = scalar_lea.vmem [#allocation0], 38
    %235 = vst.msk [vmem:[%s234] sm:$0xc] %vm231, %v230
    %s236 = scalar_lea.vmem %s0, 2
    %s237 = smov 3
    %v238 = vld [vmem:[%s236] ss:$16 sm:%s237]
    %s239 = scalar_lea.vmem %s0, 4294967274
    %s240 = smov 12
    %v241 = vld [vmem:[%s239] ss:$16 sm:%s240]
    %vm242 = vcmask 1043458
    %v243 = vsel %vm242, %v241, %v238
    %s244 = scalar_lea.vmem %s0, 4294967266
    %s245 = smov 48
    %v246 = vld [vmem:[%s244] ss:$16 sm:%s245]
    %vm247 = vcmask 1045508
    %v248 = vsel %vm247, %v246, %v243
    %s249 = scalar_lea.vmem %s0, 4294967242
    %s250 = smov 192
    %v251 = vld [vmem:[%s249] ss:$16 sm:%s250]
    %vm252 = vcmask 1047558
    %v253 = vsel %vm252, %v251, %v248
    %254 = vrot.lane.b32.xlu0 %v253, 32
    %v255 = vpop.permute.xlu0 %254
    %vm256 = vcmask 392448
    %257 = vst.msk [vmem:[#allocation0] sm:$0x3] %vm256, %v255
    %s258 = scalar_lea.vmem [#allocation0], 6
    %259 = vst.msk [vmem:[%s258] sm:$0xc] %vm256, %v255
    %s260 = scalar_lea.vmem [#allocation0], 12
    %261 = vst.msk [vmem:[%s260] sm:$0x30] %vm256, %v255
    %s262 = scalar_lea.vmem [#allocation0], 18
    %263 = vst.msk [vmem:[%s262] sm:$0xc0] %vm256, %v255
    %s264 = scalar_lea.vmem %s0, 66
    %s265 = smov 3
    %v266 = vld [vmem:[%s264] ss:$16 sm:%s265]
    %s267 = scalar_lea.vmem %s0, 42
    %s268 = smov 12
    %v269 = vld [vmem:[%s267] ss:$16 sm:%s268]
    %vm270 = vcmask 1043458
    %v271 = vsel %vm270, %v269, %v266
    %272 = vrot.lane.b32.xlu0 %v271, 32
    %v273 = vpop.permute.xlu0 %272
    %vm274 = vcmask 392448
    %s275 = scalar_lea.vmem [#allocation0], 32
    %276 = vst.msk [vmem:[%s275] sm:$0x3] %vm274, %v273
    %s277 = scalar_lea.vmem [#allocation0], 38
    %278 = vst.msk [vmem:[%s277] sm:$0xc] %vm274, %v273
    %s279 = scalar_lea.vmem %s0, 1
    %s280 = smov 3
    %v281 = vld [vmem:[%s279] ss:$16 sm:%s280]
    %s282 = scalar_lea.vmem %s0, 4294967273
    %s283 = smov 12
    %v284 = vld [vmem:[%s282] ss:$16 sm:%s283]
    %vm285 = vcmask 1043458
    %v286 = vsel %vm285, %v284, %v281
    %s287 = scalar_lea.vmem %s0, 4294967265
    %s288 = smov 48
    %v289 = vld [vmem:[%s287] ss:$16 sm:%s288]
    %vm290 = vcmask 1045508
    %v291 = vsel %vm290, %v289, %v286
    %s292 = scalar_lea.vmem %s0, 4294967241
    %s293 = smov 192
    %v294 = vld [vmem:[%s292] ss:$16 sm:%s293]
    %vm295 = vcmask 1047558
    %v296 = vsel %vm295, %v294, %v291
    %297 = vrot.lane.b32.xlu0 %v296, 16
    %v298 = vpop.permute.xlu0 %297
    %vm299 = vcmask 261248
    %300 = vst.msk [vmem:[#allocation0] sm:$0x3] %vm299, %v298
    %s301 = scalar_lea.vmem [#allocation0], 6
    %302 = vst.msk [vmem:[%s301] sm:$0xc] %vm299, %v298
    %s303 = scalar_lea.vmem [#allocation0], 12
    %304 = vst.msk [vmem:[%s303] sm:$0x30] %vm299, %v298
    %s305 = scalar_lea.vmem [#allocation0], 18
    %306 = vst.msk [vmem:[%s305] sm:$0xc0] %vm299, %v298
    %s307 = scalar_lea.vmem %s0, 65
    %s308 = smov 3
    %v309 = vld [vmem:[%s307] ss:$16 sm:%s308]
    %s310 = scalar_lea.vmem %s0, 41
    %s311 = smov 12
    %v312 = vld [vmem:[%s310] ss:$16 sm:%s311]
    %vm313 = vcmask 1043458
    %v314 = vsel %vm313, %v312, %v309
    %315 = vrot.lane.b32.xlu0 %v314, 16
    %v316 = vpop.permute.xlu0 %315
    %vm317 = vcmask 261248
    %s318 = scalar_lea.vmem [#allocation0], 32
    %319 = vst.msk [vmem:[%s318] sm:$0x3] %vm317, %v316
    %s320 = scalar_lea.vmem [#allocation0], 38
    %321 = vst.msk [vmem:[%s320] sm:$0xc] %vm317, %v316
    %s323 = sshll.u32 1, 2
    %s324 = ssub.s32 %s323, 1
    %v326 = vld [vmem:[#allocation0] sm:%s324]
    %s327 = sshll.u32 1, 2
    %s328 = ssub.s32 %s327, 1
    %329 = vst [vmem:[%s1] sm:%s328] %v326
    %s330 = scalar_lea.vmem [#allocation0], 8
    %v331 = vld [vmem:[%s330] sm:%s324]
    %s332 = sshll.u32 1, 2
    %s333 = ssub.s32 %s332, 1
    %s334 = scalar_lea.vmem %s1, 2
    %335 = vst [vmem:[%s334] sm:%s333] %v331
    %s336 = scalar_lea.vmem [#allocation0], 16
    %v337 = vld [vmem:[%s336] sm:%s324]
    %s338 = sshll.u32 1, 2
    %s339 = ssub.s32 %s338, 1
    %s340 = smul.addr 2, 2
    %s341 = scalar_lea.vmem %s1, %s340
    %342 = vst [vmem:[%s341] sm:%s339] %v337
    %s343 = scalar_lea.vmem [#allocation0], 24
    %v344 = vld [vmem:[%s343] sm:%s324]
    %s345 = sshll.u32 1, 2
    %s346 = ssub.s32 %s345, 1
    %s347 = smul.addr 2, 3
    %s348 = scalar_lea.vmem %s1, %s347
    %349 = vst [vmem:[%s348] sm:%s346] %v344
    %s350 = scalar_lea.vmem [#allocation0], 32
    %v351 = vld [vmem:[%s350] sm:%s324]
    %s352 = sshll.u32 1, 2
    %s353 = ssub.s32 %s352, 1
    %s354 = smul.addr 2, 4
    %s355 = scalar_lea.vmem %s1, %s354
    %356 = vst [vmem:[%s355] sm:%s353] %v351
    %s357 = scalar_lea.vmem [#allocation0], 40
    %v358 = vld [vmem:[%s357] sm:%s324]
    %s359 = sshll.u32 1, 2
    %s360 = ssub.s32 %s359, 1
    %s361 = smul.addr 2, 5
    %s362 = scalar_lea.vmem %s1, %s361
    %363 = vst [vmem:[%s362] sm:%s360] %v358

// kernel: forward.1
$region0: #{forward.1}
  #allocation0 [shape = 'u32[]', space=smem, size = 0x4, offset = 0x4, fixed_abs, tag = 'smem constant byte address 0x4 - core index']
  #allocation1 [shape = 'u32[144,128]{1,0:T(1,128)}', space=vmem, size = 0x12000, scoped, tag = 'internal scratch']
  #allocation2 [shape = 'f32[1]{0:T(128)S(6)}', space=smem, size = 0x200, scoped, tag = 'scoped memory for forward.1']
  %s0 = inlined_call_operand.<no memory space> [shape: f32[1], index: 0, kind: input, shape index: {}]
  %s1 = inlined_call_operand.vmem [shape: f32[2,768,32], index: 1, kind: input, shape index: {}]
  %s2 = inlined_call_operand.vmem [shape: f32[2,32,256], index: 2, kind: input, shape index: {}]
  %s3 = inlined_call_operand.vmem [shape: f32[2,3,768], index: 3, kind: input, shape index: {}]
  %s4 = inlined_call_operand.vmem [shape: f32[256,1024], index: 4, kind: input, shape index: {}]
  %s5 = inlined_call_operand.vmem [shape: f32[2,1,1024], index: 5, kind: input, shape index: {}]
  %s6 = inlined_call_operand.vmem [shape: f32[2,1,1024], index: 6, kind: output, shape index: {}]
  %s7 = sld [smem:[#allocation0]]
  $region34: #{forward.1} parent=0
    _
  %s9 = ssub.s32 1, %s7
  %s10 = scalar_select 0, %s9, %s7
  %11 = sst [smem:[#allocation2]] %s0
  // Predicated region
  $region2: #{forward.1} parent=0 // pred_check
    _
  $region3: #{forward.1} parent=0 // pred_check_branch
    %13 = sbr.rel (0) target = $region5
  $region4: #{forward.1} parent=0 // pred_region
    _
  $region5: #{forward.1} parent=0 // pred_fallthru
    _
  // Predicated region
  $region6: #{forward.1} parent=0 // pred_check
    _
  $region7: #{forward.1} parent=0 // pred_check_branch
    %15 = sbr.rel (0) target = $region9
  $region8: #{forward.1} parent=0 // pred_region
    _
  $region9: #{forward.1} parent=0 // pred_fallthru
    _
  // Predicated region
  $region10: #{forward.1} parent=0 // pred_check
    _
  $region11: #{forward.1} parent=0 // pred_check_branch
    %17 = sbr.rel (0) target = $region13
  $region12: #{forward.1} parent=0 // pred_region
    _
  $region13: #{forward.1} parent=0 // pred_fallthru
    _
  // Predicated region
  $region14: #{forward.1} parent=0 // pred_check
    _
  $region15: #{forward.1} parent=0 // pred_check_branch
    %19 = sbr.rel (0) target = $region17
  $region16: #{forward.1} parent=0 // pred_region
    _
  $region17: #{forward.1} parent=0 // pred_fallthru
    _
  // Predicated region
  $region18: #{forward.1} parent=0 // pred_check
    _
  $region19: #{forward.1} parent=0 // pred_check_branch
    %21 = sbr.rel (0) target = $region21
  $region20: #{forward.1} parent=0 // pred_region
    _
  $region21: #{forward.1} parent=0 // pred_fallthru
    _
  // Predicated region
  $region22: #{forward.1} parent=0 // pred_check
    _
  $region23: #{forward.1} parent=0 // pred_check_branch
    %23 = sbr.rel (0) target = $region25
  $region24: #{forward.1} parent=0 // pred_region
    _
  $region25: #{forward.1} parent=0 // pred_fallthru
    _
  %s24 = sld [smem:[#allocation2]]
  %v25 = vld [vmem:[%s1] sm:$0xff]
  %v26 = vld [vmem:[%s1 + $0x8] sm:$0xff]
  %v27 = vld [vmem:[%s1 + $0x10] sm:$0xff]
  %v28 = vld [vmem:[%s1 + $0x18] sm:$0xff]
  %v29 = vld [vmem:[%s1 + $0x20] sm:$0xff]
  %v30 = vld [vmem:[%s1 + $0x28] sm:$0xff]
  %v31 = vld [vmem:[%s1 + $0x30] sm:$0xff]
  %v32 = vld [vmem:[%s1 + $0x38] sm:$0xff]
  %v33 = vld [vmem:[%s1 + $0x40] sm:$0xff]
  %v34 = vld [vmem:[%s1 + $0x48] sm:$0xff]
  %v35 = vld [vmem:[%s1 + $0x50] sm:$0xff]
  %v36 = vld [vmem:[%s1 + $0x58] sm:$0xff]
  %v37 = vld [vmem:[%s1 + $0x60] sm:$0xff]
  %v38 = vld [vmem:[%s1 + $0x68] sm:$0xff]
  %v39 = vld [vmem:[%s1 + $0x70] sm:$0xff]
  %v40 = vld [vmem:[%s1 + $0x78] sm:$0xff]
  %v41 = vld [vmem:[%s1 + $0x80] sm:$0xff]
  %v42 = vld [vmem:[%s1 + $0x88] sm:$0xff]
  %v43 = vld [vmem:[%s1 + $0x90] sm:$0xff]
  %v44 = vld [vmem:[%s1 + $0x98] sm:$0xff]
  %v45 = vld [vmem:[%s1 + $0xa0] sm:$0xff]
  %v46 = vld [vmem:[%s1 + $0xa8] sm:$0xff]
  %v47 = vld [vmem:[%s1 + $0xb0] sm:$0xff]
  %v48 = vld [vmem:[%s1 + $0xb8] sm:$0xff]
  %v49 = vld [vmem:[%s1 + $0xc0] sm:$0xff]
  %v50 = vld [vmem:[%s1 + $0xc8] sm:$0xff]
  %v51 = vld [vmem:[%s1 + $0xd0] sm:$0xff]
  %v52 = vld [vmem:[%s1 + $0xd8] sm:$0xff]
  %v53 = vld [vmem:[%s1 + $0xe0] sm:$0xff]
  %v54 = vld [vmem:[%s1 + $0xe8] sm:$0xff]
  %v55 = vld [vmem:[%s1 + $0xf0] sm:$0xff]
  %v56 = vld [vmem:[%s1 + $0xf8] sm:$0xff]
  %v57 = vld [vmem:[%s1 + $0x100] sm:$0xff]
  %v58 = vld [vmem:[%s1 + $0x108] sm:$0xff]
  %v59 = vld [vmem:[%s1 + $0x110] sm:$0xff]
  %v60 = vld [vmem:[%s1 + $0x118] sm:$0xff]
  %v61 = vld [vmem:[%s1 + $0x120] sm:$0xff]
  %v62 = vld [vmem:[%s1 + $0x128] sm:$0xff]
  %v63 = vld [vmem:[%s1 + $0x130] sm:$0xff]
  %v64 = vld [vmem:[%s1 + $0x138] sm:$0xff]
  %v65 = vld [vmem:[%s1 + $0x140] sm:$0xff]
  %v66 = vld [vmem:[%s1 + $0x148] sm:$0xff]
  %v67 = vld [vmem:[%s1 + $0x150] sm:$0xff]
  %v68 = vld [vmem:[%s1 + $0x158] sm:$0xff]
  %v69 = vld [vmem:[%s1 + $0x160] sm:$0xff]
  %v70 = vld [vmem:[%s1 + $0x168] sm:$0xff]
  %v71 = vld [vmem:[%s1 + $0x170] sm:$0xff]
  %v72 = vld [vmem:[%s1 + $0x178] sm:$0xff]
  %v73 = vld [vmem:[%s1 + $0x180] sm:$0xff]
  %v74 = vld [vmem:[%s1 + $0x188] sm:$0xff]
  %v75 = vld [vmem:[%s1 + $0x190] sm:$0xff]
  %v76 = vld [vmem:[%s1 + $0x198] sm:$0xff]
  %v77 = vld [vmem:[%s1 + $0x1a0] sm:$0xff]
  %v78 = vld [vmem:[%s1 + $0x1a8] sm:$0xff]
  %v79 = vld [vmem:[%s1 + $0x1b0] sm:$0xff]
  %v80 = vld [vmem:[%s1 + $0x1b8] sm:$0xff]
  %v81 = vld [vmem:[%s1 + $0x1c0] sm:$0xff]
  %v82 = vld [vmem:[%s1 + $0x1c8] sm:$0xff]
  %v83 = vld [vmem:[%s1 + $0x1d0] sm:$0xff]
  %v84 = vld [vmem:[%s1 + $0x1d8] sm:$0xff]
  %v85 = vld [vmem:[%s1 + $0x1e0] sm:$0xff]
  %v86 = vld [vmem:[%s1 + $0x1e8] sm:$0xff]
  %v87 = vld [vmem:[%s1 + $0x1f0] sm:$0xff]
  %v88 = vld [vmem:[%s1 + $0x1f8] sm:$0xff]
  %v89 = vld [vmem:[%s1 + $0x200] sm:$0xff]
  %v90 = vld [vmem:[%s1 + $0x208] sm:$0xff]
  %v91 = vld [vmem:[%s1 + $0x210] sm:$0xff]
  %v92 = vld [vmem:[%s1 + $0x218] sm:$0xff]
  %v93 = vld [vmem:[%s1 + $0x220] sm:$0xff]
  %v94 = vld [vmem:[%s1 + $0x228] sm:$0xff]
  %v95 = vld [vmem:[%s1 + $0x230] sm:$0xff]
  %v96 = vld [vmem:[%s1 + $0x238] sm:$0xff]
  %v97 = vld [vmem:[%s1 + $0x240] sm:$0xff]
  %v98 = vld [vmem:[%s1 + $0x248] sm:$0xff]
  %v99 = vld [vmem:[%s1 + $0x250] sm:$0xff]
  %v100 = vld [vmem:[%s1 + $0x258] sm:$0xff]
  %v101 = vld [vmem:[%s1 + $0x260] sm:$0xff]
  %v102 = vld [vmem:[%s1 + $0x268] sm:$0xff]
  %v103 = vld [vmem:[%s1 + $0x270] sm:$0xff]
  %v104 = vld [vmem:[%s1 + $0x278] sm:$0xff]
  %v105 = vld [vmem:[%s1 + $0x280] sm:$0xff]
  %v106 = vld [vmem:[%s1 + $0x288] sm:$0xff]
  %v107 = vld [vmem:[%s1 + $0x290] sm:$0xff]
  %v108 = vld [vmem:[%s1 + $0x298] sm:$0xff]
  %v109 = vld [vmem:[%s1 + $0x2a0] sm:$0xff]
  %v110 = vld [vmem:[%s1 + $0x2a8] sm:$0xff]
  %v111 = vld [vmem:[%s1 + $0x2b0] sm:$0xff]
  %v112 = vld [vmem:[%s1 + $0x2b8] sm:$0xff]
  %v113 = vld [vmem:[%s1 + $0x2c0] sm:$0xff]
  %v114 = vld [vmem:[%s1 + $0x2c8] sm:$0xff]
  %v115 = vld [vmem:[%s1 + $0x2d0] sm:$0xff]
  %v116 = vld [vmem:[%s1 + $0x2d8] sm:$0xff]
  %v117 = vld [vmem:[%s1 + $0x2e0] sm:$0xff]
  %v118 = vld [vmem:[%s1 + $0x2e8] sm:$0xff]
  %v119 = vld [vmem:[%s1 + $0x2f0] sm:$0xff]
  %v120 = vld [vmem:[%s1 + $0x2f8] sm:$0xff]
  %v121 = vld [vmem:[%s1 + $0x300] sm:$0xff]
  %v122 = vld [vmem:[%s1 + $0x308] sm:$0xff]
  %v123 = vld [vmem:[%s1 + $0x310] sm:$0xff]
  %v124 = vld [vmem:[%s1 + $0x318] sm:$0xff]
  %v125 = vld [vmem:[%s1 + $0x320] sm:$0xff]
  %v126 = vld [vmem:[%s1 + $0x328] sm:$0xff]
  %v127 = vld [vmem:[%s1 + $0x330] sm:$0xff]
  %v128 = vld [vmem:[%s1 + $0x338] sm:$0xff]
  %v129 = vld [vmem:[%s1 + $0x340] sm:$0xff]
  %v130 = vld [vmem:[%s1 + $0x348] sm:$0xff]
  %v131 = vld [vmem:[%s1 + $0x350] sm:$0xff]
  %v132 = vld [vmem:[%s1 + $0x358] sm:$0xff]
  %v133 = vld [vmem:[%s1 + $0x360] sm:$0xff]
  %v134 = vld [vmem:[%s1 + $0x368] sm:$0xff]
  %v135 = vld [vmem:[%s1 + $0x370] sm:$0xff]
  %v136 = vld [vmem:[%s1 + $0x378] sm:$0xff]
  %v137 = vld [vmem:[%s1 + $0x380] sm:$0xff]
  %v138 = vld [vmem:[%s1 + $0x388] sm:$0xff]
  %v139 = vld [vmem:[%s1 + $0x390] sm:$0xff]
  %v140 = vld [vmem:[%s1 + $0x398] sm:$0xff]
  %v141 = vld [vmem:[%s1 + $0x3a0] sm:$0xff]
  %v142 = vld [vmem:[%s1 + $0x3a8] sm:$0xff]
  %v143 = vld [vmem:[%s1 + $0x3b0] sm:$0xff]
  %v144 = vld [vmem:[%s1 + $0x3b8] sm:$0xff]
  %v145 = vld [vmem:[%s1 + $0x3c0] sm:$0xff]
  %v146 = vld [vmem:[%s1 + $0x3c8] sm:$0xff]
  %v147 = vld [vmem:[%s1 + $0x3d0] sm:$0xff]
  %v148 = vld [vmem:[%s1 + $0x3d8] sm:$0xff]
  %v149 = vld [vmem:[%s1 + $0x3e0] sm:$0xff]
  %v150 = vld [vmem:[%s1 + $0x3e8] sm:$0xff]
  %v151 = vld [vmem:[%s1 + $0x3f0] sm:$0xff]
  %v152 = vld [vmem:[%s1 + $0x3f8] sm:$0xff]
  %v153 = vld [vmem:[%s1 + $0x400] sm:$0xff]
  %v154 = vld [vmem:[%s1 + $0x408] sm:$0xff]
  %v155 = vld [vmem:[%s1 + $0x410] sm:$0xff]
  %v156 = vld [vmem:[%s1 + $0x418] sm:$0xff]
  %v157 = vld [vmem:[%s1 + $0x420] sm:$0xff]
  %v158 = vld [vmem:[%s1 + $0x428] sm:$0xff]
  %v159 = vld [vmem:[%s1 + $0x430] sm:$0xff]
  %v160 = vld [vmem:[%s1 + $0x438] sm:$0xff]
  %v161 = vld [vmem:[%s1 + $0x440] sm:$0xff]
  %v162 = vld [vmem:[%s1 + $0x448] sm:$0xff]
  %v163 = vld [vmem:[%s1 + $0x450] sm:$0xff]
  %v164 = vld [vmem:[%s1 + $0x458] sm:$0xff]
  %v165 = vld [vmem:[%s1 + $0x460] sm:$0xff]
  %v166 = vld [vmem:[%s1 + $0x468] sm:$0xff]
  %v167 = vld [vmem:[%s1 + $0x470] sm:$0xff]
  %v168 = vld [vmem:[%s1 + $0x478] sm:$0xff]
  %v169 = vld [vmem:[%s1 + $0x480] sm:$0xff]
  %v170 = vld [vmem:[%s1 + $0x488] sm:$0xff]
  %v171 = vld [vmem:[%s1 + $0x490] sm:$0xff]
  %v172 = vld [vmem:[%s1 + $0x498] sm:$0xff]
  %v173 = vld [vmem:[%s1 + $0x4a0] sm:$0xff]
  %v174 = vld [vmem:[%s1 + $0x4a8] sm:$0xff]
  %v175 = vld [vmem:[%s1 + $0x4b0] sm:$0xff]
  %v176 = vld [vmem:[%s1 + $0x4b8] sm:$0xff]
  %v177 = vld [vmem:[%s1 + $0x4c0] sm:$0xff]
  %v178 = vld [vmem:[%s1 + $0x4c8] sm:$0xff]
  %v179 = vld [vmem:[%s1 + $0x4d0] sm:$0xff]
  %v180 = vld [vmem:[%s1 + $0x4d8] sm:$0xff]
  %v181 = vld [vmem:[%s1 + $0x4e0] sm:$0xff]
  %v182 = vld [vmem:[%s1 + $0x4e8] sm:$0xff]
  %v183 = vld [vmem:[%s1 + $0x4f0] sm:$0xff]
  %v184 = vld [vmem:[%s1 + $0x4f8] sm:$0xff]
  %v185 = vld [vmem:[%s1 + $0x500] sm:$0xff]
  %v186 = vld [vmem:[%s1 + $0x508] sm:$0xff]
  %v187 = vld [vmem:[%s1 + $0x510] sm:$0xff]
  %v188 = vld [vmem:[%s1 + $0x518] sm:$0xff]
  %v189 = vld [vmem:[%s1 + $0x520] sm:$0xff]
  %v190 = vld [vmem:[%s1 + $0x528] sm:$0xff]
  %v191 = vld [vmem:[%s1 + $0x530] sm:$0xff]
  %v192 = vld [vmem:[%s1 + $0x538] sm:$0xff]
  %v193 = vld [vmem:[%s1 + $0x540] sm:$0xff]
  %v194 = vld [vmem:[%s1 + $0x548] sm:$0xff]
  %v195 = vld [vmem:[%s1 + $0x550] sm:$0xff]
  %v196 = vld [vmem:[%s1 + $0x558] sm:$0xff]
  %v197 = vld [vmem:[%s1 + $0x560] sm:$0xff]
  %v198 = vld [vmem:[%s1 + $0x568] sm:$0xff]
  %v199 = vld [vmem:[%s1 + $0x570] sm:$0xff]
  %v200 = vld [vmem:[%s1 + $0x578] sm:$0xff]
  %v201 = vld [vmem:[%s1 + $0x580] sm:$0xff]
  %v202 = vld [vmem:[%s1 + $0x588] sm:$0xff]
  %v203 = vld [vmem:[%s1 + $0x590] sm:$0xff]
  %v204 = vld [vmem:[%s1 + $0x598] sm:$0xff]
  %v205 = vld [vmem:[%s1 + $0x5a0] sm:$0xff]
  %v206 = vld [vmem:[%s1 + $0x5a8] sm:$0xff]
  %v207 = vld [vmem:[%s1 + $0x5b0] sm:$0xff]
  %v208 = vld [vmem:[%s1 + $0x5b8] sm:$0xff]
  %v209 = vld [vmem:[%s1 + $0x5c0] sm:$0xff]
  %v210 = vld [vmem:[%s1 + $0x5c8] sm:$0xff]
  %v211 = vld [vmem:[%s1 + $0x5d0] sm:$0xff]
  %v212 = vld [vmem:[%s1 + $0x5d8] sm:$0xff]
  %v213 = vld [vmem:[%s1 + $0x5e0] sm:$0xff]
  %v214 = vld [vmem:[%s1 + $0x5e8] sm:$0xff]
  %v215 = vld [vmem:[%s1 + $0x5f0] sm:$0xff]
  %v216 = vld [vmem:[%s1 + $0x5f8] sm:$0xff]
  %v217 = vld [vmem:[%s2] sm:$0xff]
  %v218 = vld [vmem:[%s2 + $0x8] sm:$0xff]
  %v219 = vld [vmem:[%s2 + $0x10] sm:$0xff]
  %v220 = vld [vmem:[%s2 + $0x18] sm:$0xff]
  %v221 = vld [vmem:[%s2 + $0x20] sm:$0xff]
  %v222 = vld [vmem:[%s2 + $0x28] sm:$0xff]
  %v223 = vld [vmem:[%s2 + $0x30] sm:$0xff]
  %v224 = vld [vmem:[%s2 + $0x38] sm:$0xff]
  %v225 = vld [vmem:[%s2 + $0x40] sm:$0xff]
  %v226 = vld [vmem:[%s2 + $0x48] sm:$0xff]
  %v227 = vld [vmem:[%s2 + $0x50] sm:$0xff]
  %v228 = vld [vmem:[%s2 + $0x58] sm:$0xff]
  %v229 = vld [vmem:[%s2 + $0x60] sm:$0xff]
  %v230 = vld [vmem:[%s2 + $0x68] sm:$0xff]
  %v231 = vld [vmem:[%s2 + $0x70] sm:$0xff]
  %v232 = vld [vmem:[%s2 + $0x78] sm:$0xff]
  %v233 = vmul.f32 %v25, %v25
  %v234 = vmul.f32 %v26, %v26
  %v235 = vmul.f32 %v27, %v27
  %v236 = vmul.f32 %v28, %v28
  %v237 = vmul.f32 %v29, %v29
  %v238 = vmul.f32 %v30, %v30
  %v239 = vmul.f32 %v31, %v31
  %v240 = vmul.f32 %v32, %v32
  %v241 = vmul.f32 %v33, %v33
  %v242 = vmul.f32 %v34, %v34
  %v243 = vmul.f32 %v35, %v35
  %v244 = vmul.f32 %v36, %v36
  %v245 = vmul.f32 %v37, %v37
  %v246 = vmul.f32 %v38, %v38
  %v247 = vmul.f32 %v39, %v39
  %v248 = vmul.f32 %v40, %v40
  %v249 = vmul.f32 %v41, %v41
  %v250 = vmul.f32 %v42, %v42
  %v251 = vmul.f32 %v43, %v43
  %v252 = vmul.f32 %v44, %v44
  %v253 = vmul.f32 %v45, %v45
  %v254 = vmul.f32 %v46, %v46
  %v255 = vmul.f32 %v47, %v47
  %v256 = vmul.f32 %v48, %v48
  %v257 = vmul.f32 %v49, %v49
  %v258 = vmul.f32 %v50, %v50
  %v259 = vmul.f32 %v51, %v51
  %v260 = vmul.f32 %v52, %v52
  %v261 = vmul.f32 %v53, %v53
  %v262 = vmul.f32 %v54, %v54
  %v263 = vmul.f32 %v55, %v55
  %v264 = vmul.f32 %v56, %v56
  %v265 = vmul.f32 %v57, %v57
  %v266 = vmul.f32 %v58, %v58
  %v267 = vmul.f32 %v59, %v59
  %v268 = vmul.f32 %v60, %v60
  %v269 = vmul.f32 %v61, %v61
  %v270 = vmul.f32 %v62, %v62
  %v271 = vmul.f32 %v63, %v63
  %v272 = vmul.f32 %v64, %v64
  %v273 = vmul.f32 %v65, %v65
  %v274 = vmul.f32 %v66, %v66
  %v275 = vmul.f32 %v67, %v67
  %v276 = vmul.f32 %v68, %v68
  %v277 = vmul.f32 %v69, %v69
  %v278 = vmul.f32 %v70, %v70
  %v279 = vmul.f32 %v71, %v71
  %v280 = vmul.f32 %v72, %v72
  %v281 = vmul.f32 %v73, %v73
  %v282 = vmul.f32 %v74, %v74
  %v283 = vmul.f32 %v75, %v75
  %v284 = vmul.f32 %v76, %v76
  %v285 = vmul.f32 %v77, %v77
  %v286 = vmul.f32 %v78, %v78
  %v287 = vmul.f32 %v79, %v79
  %v288 = vmul.f32 %v80, %v80
  %v289 = vmul.f32 %v81, %v81
  %v290 = vmul.f32 %v82, %v82
  %v291 = vmul.f32 %v83, %v83
  %v292 = vmul.f32 %v84, %v84
  %v293 = vmul.f32 %v85, %v85
  %v294 = vmul.f32 %v86, %v86
  %v295 = vmul.f32 %v87, %v87
  %v296 = vmul.f32 %v88, %v88
  %v297 = vmul.f32 %v89, %v89
  %v298 = vmul.f32 %v90, %v90
  %v299 = vmul.f32 %v91, %v91
  %v300 = vmul.f32 %v92, %v92
  %v301 = vmul.f32 %v93, %v93
  %v302 = vmul.f32 %v94, %v94
  %v303 = vmul.f32 %v95, %v95
  %v304 = vmul.f32 %v96, %v96
  %v305 = vmul.f32 %v97, %v97
  %v306 = vmul.f32 %v98, %v98
  %v307 = vmul.f32 %v99, %v99
  %v308 = vmul.f32 %v100, %v100
  %v309 = vmul.f32 %v101, %v101
  %v310 = vmul.f32 %v102, %v102
  %v311 = vmul.f32 %v103, %v103
  %v312 = vmul.f32 %v104, %v104
  %v313 = vmul.f32 %v105, %v105
  %v314 = vmul.f32 %v106, %v106
  %v315 = vmul.f32 %v107, %v107
  %v316 = vmul.f32 %v108, %v108
  %v317 = vmul.f32 %v109, %v109
  %v318 = vmul.f32 %v110, %v110
  %v319 = vmul.f32 %v111, %v111
  %v320 = vmul.f32 %v112, %v112
  %v321 = vmul.f32 %v113, %v113
  %v322 = vmul.f32 %v114, %v114
  %v323 = vmul.f32 %v115, %v115
  %v324 = vmul.f32 %v116, %v116
  %v325 = vmul.f32 %v117, %v117
  %v326 = vmul.f32 %v118, %v118
  %v327 = vmul.f32 %v119, %v119
  %v328 = vmul.f32 %v120, %v120
  %v329 = vmul.f32 %v121, %v121
  %v330 = vmul.f32 %v122, %v122
  %v331 = vmul.f32 %v123, %v123
  %v332 = vmul.f32 %v124, %v124
  %v333 = vmul.f32 %v125, %v125
  %v334 = vmul.f32 %v126, %v126
  %v335 = vmul.f32 %v127, %v127
  %v336 = vmul.f32 %v128, %v128
  %v337 = vmul.f32 %v129, %v129
  %v338 = vmul.f32 %v130, %v130
  %v339 = vmul.f32 %v131, %v131
  %v340 = vmul.f32 %v132, %v132
  %v341 = vmul.f32 %v133, %v133
  %v342 = vmul.f32 %v134, %v134
  %v343 = vmul.f32 %v135, %v135
  %v344 = vmul.f32 %v136, %v136
  %v345 = vmul.f32 %v137, %v137
  %v346 = vmul.f32 %v138, %v138
  %v347 = vmul.f32 %v139, %v139
  %v348 = vmul.f32 %v140, %v140
  %v349 = vmul.f32 %v141, %v141
  %v350 = vmul.f32 %v142, %v142
  %v351 = vmul.f32 %v143, %v143
  %v352 = vmul.f32 %v144, %v144
  %v353 = vmul.f32 %v145, %v145
  %v354 = vmul.f32 %v146, %v146
  %v355 = vmul.f32 %v147, %v147
  %v356 = vmul.f32 %v148, %v148
  %v357 = vmul.f32 %v149, %v149
  %v358 = vmul.f32 %v150, %v150
  %v359 = vmul.f32 %v151, %v151
  %v360 = vmul.f32 %v152, %v152
  %v361 = vmul.f32 %v153, %v153
  %v362 = vmul.f32 %v154, %v154
  %v363 = vmul.f32 %v155, %v155
  %v364 = vmul.f32 %v156, %v156
  %v365 = vmul.f32 %v157, %v157
  %v366 = vmul.f32 %v158, %v158
  %v367 = vmul.f32 %v159, %v159
  %v368 = vmul.f32 %v160, %v160
  %v369 = vmul.f32 %v161, %v161
  %v370 = vmul.f32 %v162, %v162
  %v371 = vmul.f32 %v163, %v163
  %v372 = vmul.f32 %v164, %v164
  %v373 = vmul.f32 %v165, %v165
  %v374 = vmul.f32 %v166, %v166
  %v375 = vmul.f32 %v167, %v167
  %v376 = vmul.f32 %v168, %v168
  %v377 = vmul.f32 %v169, %v169
  %v378 = vmul.f32 %v170, %v170
  %v379 = vmul.f32 %v171, %v171
  %v380 = vmul.f32 %v172, %v172
  %v381 = vmul.f32 %v173, %v173
  %v382 = vmul.f32 %v174, %v174
  %v383 = vmul.f32 %v175, %v175
  %v384 = vmul.f32 %v176, %v176
  %v385 = vmul.f32 %v177, %v177
  %v386 = vmul.f32 %v178, %v178
  %v387 = vmul.f32 %v179, %v179
  %v388 = vmul.f32 %v180, %v180
  %v389 = vmul.f32 %v181, %v181
  %v390 = vmul.f32 %v182, %v182
  %v391 = vmul.f32 %v183, %v183
  %v392 = vmul.f32 %v184, %v184
  %v393 = vmul.f32 %v185, %v185
  %v394 = vmul.f32 %v186, %v186
  %v395 = vmul.f32 %v187, %v187
  %v396 = vmul.f32 %v188, %v188
  %v397 = vmul.f32 %v189, %v189
  %v398 = vmul.f32 %v190, %v190
  %v399 = vmul.f32 %v191, %v191
  %v400 = vmul.f32 %v192, %v192
  %v401 = vmul.f32 %v193, %v193
  %v402 = vmul.f32 %v194, %v194
  %v403 = vmul.f32 %v195, %v195
  %v404 = vmul.f32 %v196, %v196
  %v405 = vmul.f32 %v197, %v197
  %v406 = vmul.f32 %v198, %v198
  %v407 = vmul.f32 %v199, %v199
  %v408 = vmul.f32 %v200, %v200
  %v409 = vmul.f32 %v201, %v201
  %v410 = vmul.f32 %v202, %v202
  %v411 = vmul.f32 %v203, %v203
  %v412 = vmul.f32 %v204, %v204
  %v413 = vmul.f32 %v205, %v205
  %v414 = vmul.f32 %v206, %v206
  %v415 = vmul.f32 %v207, %v207
  %v416 = vmul.f32 %v208, %v208
  %v417 = vmul.f32 %v209, %v209
  %v418 = vmul.f32 %v210, %v210
  %v419 = vmul.f32 %v211, %v211
  %v420 = vmul.f32 %v212, %v212
  %v421 = vmul.f32 %v213, %v213
  %v422 = vmul.f32 %v214, %v214
  %v423 = vmul.f32 %v215, %v215
  %v424 = vmul.f32 %v216, %v216
  %vm425 = vcmask 261120
  %v426 = vsel %vm425, %v233, 0.0
  %427 = vadd.xlane.f32.xlu0 %v426
  %v428 = vpop.xlane.xlu0 %427
  %v429 = vsel %vm425, %v234, 0.0
  %430 = vadd.xlane.f32.xlu0 %v429
  %v431 = vpop.xlane.xlu0 %430
  %v432 = vsel %vm425, %v235, 0.0
  %433 = vadd.xlane.f32.xlu0 %v432
  %v434 = vpop.xlane.xlu0 %433
  %v435 = vsel %vm425, %v236, 0.0
  %436 = vadd.xlane.f32.xlu0 %v435
  %v437 = vpop.xlane.xlu0 %436
  %v438 = vsel %vm425, %v237, 0.0
  %439 = vadd.xlane.f32.xlu0 %v438
  %v440 = vpop.xlane.xlu0 %439
  %v441 = vsel %vm425, %v238, 0.0
  %442 = vadd.xlane.f32.xlu0 %v441
  %v443 = vpop.xlane.xlu0 %442
  %v444 = vsel %vm425, %v239, 0.0
  %445 = vadd.xlane.f32.xlu0 %v444
  %v446 = vpop.xlane.xlu0 %445
  %v447 = vsel %vm425, %v240, 0.0
  %448 = vadd.xlane.f32.xlu0 %v447
  %v449 = vpop.xlane.xlu0 %448
  %v450 = vsel %vm425, %v241, 0.0
  %451 = vadd.xlane.f32.xlu0 %v450
  %v452 = vpop.xlane.xlu0 %451
  %v453 = vsel %vm425, %v242, 0.0
  %454 = vadd.xlane.f32.xlu0 %v453
  %v455 = vpop.xlane.xlu0 %454
  %v456 = vsel %vm425, %v243, 0.0
  %457 = vadd.xlane.f32.xlu0 %v456
  %v458 = vpop.xlane.xlu0 %457
  %v459 = vsel %vm425, %v244, 0.0
  %460 = vadd.xlane.f32.xlu0 %v459
  %v461 = vpop.xlane.xlu0 %460
  %v462 = vsel %vm425, %v245, 0.0
  %463 = vadd.xlane.f32.xlu0 %v462
  %v464 = vpop.xlane.xlu0 %463
  %v465 = vsel %vm425, %v246, 0.0
  %466 = vadd.xlane.f32.xlu0 %v465
  %v467 = vpop.xlane.xlu0 %466
  %v468 = vsel %vm425, %v247, 0.0
  %469 = vadd.xlane.f32.xlu0 %v468
  %v470 = vpop.xlane.xlu0 %469
  %v471 = vsel %vm425, %v248, 0.0
  %472 = vadd.xlane.f32.xlu0 %v471
  %v473 = vpop.xlane.xlu0 %472
  %v474 = vsel %vm425, %v249, 0.0
  %475 = vadd.xlane.f32.xlu0 %v474
  %v476 = vpop.xlane.xlu0 %475
  %v477 = vsel %vm425, %v250, 0.0
  %478 = vadd.xlane.f32.xlu0 %v477
  %v479 = vpop.xlane.xlu0 %478
  %v480 = vsel %vm425, %v251, 0.0
  %481 = vadd.xlane.f32.xlu0 %v480
  %v482 = vpop.xlane.xlu0 %481
  %v483 = vsel %vm425, %v252, 0.0
  %484 = vadd.xlane.f32.xlu0 %v483
  %v485 = vpop.xlane.xlu0 %484
  %v486 = vsel %vm425, %v253, 0.0
  %487 = vadd.xlane.f32.xlu0 %v486
  %v488 = vpop.xlane.xlu0 %487
  %v489 = vsel %vm425, %v254, 0.0
  %490 = vadd.xlane.f32.xlu0 %v489
  %v491 = vpop.xlane.xlu0 %490
  %v492 = vsel %vm425, %v255, 0.0
  %493 = vadd.xlane.f32.xlu0 %v492
  %v494 = vpop.xlane.xlu0 %493
  %v495 = vsel %vm425, %v256, 0.0
  %496 = vadd.xlane.f32.xlu0 %v495
  %v497 = vpop.xlane.xlu0 %496
  %v498 = vsel %vm425, %v257, 0.0
  %499 = vadd.xlane.f32.xlu0 %v498
  %v500 = vpop.xlane.xlu0 %499
  %v501 = vsel %vm425, %v258, 0.0
  %502 = vadd.xlane.f32.xlu0 %v501
  %v503 = vpop.xlane.xlu0 %502
  %v504 = vsel %vm425, %v259, 0.0
  %505 = vadd.xlane.f32.xlu0 %v504
  %v506 = vpop.xlane.xlu0 %505
  %v507 = vsel %vm425, %v260, 0.0
  %508 = vadd.xlane.f32.xlu0 %v507
  %v509 = vpop.xlane.xlu0 %508
  %v510 = vsel %vm425, %v261, 0.0
  %511 = vadd.xlane.f32.xlu0 %v510
  %v512 = vpop.xlane.xlu0 %511
  %v513 = vsel %vm425, %v262, 0.0
  %514 = vadd.xlane.f32.xlu0 %v513
  %v515 = vpop.xlane.xlu0 %514
  %v516 = vsel %vm425, %v263, 0.0
  %517 = vadd.xlane.f32.xlu0 %v516
  %v518 = vpop.xlane.xlu0 %517
  %v519 = vsel %vm425, %v264, 0.0
  %520 = vadd.xlane.f32.xlu0 %v519
  %v521 = vpop.xlane.xlu0 %520
  %v522 = vsel %vm425, %v265, 0.0
  %523 = vadd.xlane.f32.xlu0 %v522
  %v524 = vpop.xlane.xlu0 %523
  %v525 = vsel %vm425, %v266, 0.0
  %526 = vadd.xlane.f32.xlu0 %v525
  %v527 = vpop.xlane.xlu0 %526
  %v528 = vsel %vm425, %v267, 0.0
  %529 = vadd.xlane.f32.xlu0 %v528
  %v530 = vpop.xlane.xlu0 %529
  %v531 = vsel %vm425, %v268, 0.0
  %532 = vadd.xlane.f32.xlu0 %v531
  %v533 = vpop.xlane.xlu0 %532
  %v534 = vsel %vm425, %v269, 0.0
  %535 = vadd.xlane.f32.xlu0 %v534
  %v536 = vpop.xlane.xlu0 %535
  %v537 = vsel %vm425, %v270, 0.0
  %538 = vadd.xlane.f32.xlu0 %v537
  %v539 = vpop.xlane.xlu0 %538
  %v540 = vsel %vm425, %v271, 0.0
  %541 = vadd.xlane.f32.xlu0 %v540
  %v542 = vpop.xlane.xlu0 %541
  %v543 = vsel %vm425, %v272, 0.0
  %544 = vadd.xlane.f32.xlu0 %v543
  %v545 = vpop.xlane.xlu0 %544
  %v546 = vsel %vm425, %v273, 0.0
  %547 = vadd.xlane.f32.xlu0 %v546
  %v548 = vpop.xlane.xlu0 %547
  %v549 = vsel %vm425, %v274, 0.0
  %550 = vadd.xlane.f32.xlu0 %v549
  %v551 = vpop.xlane.xlu0 %550
  %v552 = vsel %vm425, %v275, 0.0
  %553 = vadd.xlane.f32.xlu0 %v552
  %v554 = vpop.xlane.xlu0 %553
  %v555 = vsel %vm425, %v276, 0.0
  %556 = vadd.xlane.f32.xlu0 %v555
  %v557 = vpop.xlane.xlu0 %556
  %v558 = vsel %vm425, %v277, 0.0
  %559 = vadd.xlane.f32.xlu0 %v558
  %v560 = vpop.xlane.xlu0 %559
  %v561 = vsel %vm425, %v278, 0.0
  %562 = vadd.xlane.f32.xlu0 %v561
  %v563 = vpop.xlane.xlu0 %562
  %v564 = vsel %vm425, %v279, 0.0
  %565 = vadd.xlane.f32.xlu0 %v564
  %v566 = vpop.xlane.xlu0 %565
  %v567 = vsel %vm425, %v280, 0.0
  %568 = vadd.xlane.f32.xlu0 %v567
  %v569 = vpop.xlane.xlu0 %568
  %v570 = vsel %vm425, %v281, 0.0
  %571 = vadd.xlane.f32.xlu0 %v570
  %v572 = vpop.xlane.xlu0 %571
  %v573 = vsel %vm425, %v282, 0.0
  %574 = vadd.xlane.f32.xlu0 %v573
  %v575 = vpop.xlane.xlu0 %574
  %v576 = vsel %vm425, %v283, 0.0
  %577 = vadd.xlane.f32.xlu0 %v576
  %v578 = vpop.xlane.xlu0 %577
  %v579 = vsel %vm425, %v284, 0.0
  %580 = vadd.xlane.f32.xlu0 %v579
  %v581 = vpop.xlane.xlu0 %580
  %v582 = vsel %vm425, %v285, 0.0
  %583 = vadd.xlane.f32.xlu0 %v582
  %v584 = vpop.xlane.xlu0 %583
  %v585 = vsel %vm425, %v286, 0.0
  %586 = vadd.xlane.f32.xlu0 %v585
  %v587 = vpop.xlane.xlu0 %586
  %v588 = vsel %vm425, %v287, 0.0
  %589 = vadd.xlane.f32.xlu0 %v588
  %v590 = vpop.xlane.xlu0 %589
  %v591 = vsel %vm425, %v288, 0.0
  %592 = vadd.xlane.f32.xlu0 %v591
  %v593 = vpop.xlane.xlu0 %592
  %v594 = vsel %vm425, %v289, 0.0
  %595 = vadd.xlane.f32.xlu0 %v594
  %v596 = vpop.xlane.xlu0 %595
  %v597 = vsel %vm425, %v290, 0.0
  %598 = vadd.xlane.f32.xlu0 %v597
  %v599 = vpop.xlane.xlu0 %598
  %v600 = vsel %vm425, %v291, 0.0
  %601 = vadd.xlane.f32.xlu0 %v600
  %v602 = vpop.xlane.xlu0 %601
  %v603 = vsel %vm425, %v292, 0.0
  %604 = vadd.xlane.f32.xlu0 %v603
  %v605 = vpop.xlane.xlu0 %604
  %v606 = vsel %vm425, %v293, 0.0
  %607 = vadd.xlane.f32.xlu0 %v606
  %v608 = vpop.xlane.xlu0 %607
  %v609 = vsel %vm425, %v294, 0.0
  %610 = vadd.xlane.f32.xlu0 %v609
  %v611 = vpop.xlane.xlu0 %610
  %v612 = vsel %vm425, %v295, 0.0
  %613 = vadd.xlane.f32.xlu0 %v612
  %v614 = vpop.xlane.xlu0 %613
  %v615 = vsel %vm425, %v296, 0.0
  %616 = vadd.xlane.f32.xlu0 %v615
  %v617 = vpop.xlane.xlu0 %616
  %v618 = vsel %vm425, %v297, 0.0
  %619 = vadd.xlane.f32.xlu0 %v618
  %v620 = vpop.xlane.xlu0 %619
  %v621 = vsel %vm425, %v298, 0.0
  %622 = vadd.xlane.f32.xlu0 %v621
  %v623 = vpop.xlane.xlu0 %622
  %v624 = vsel %vm425, %v299, 0.0
  %625 = vadd.xlane.f32.xlu0 %v624
  %v626 = vpop.xlane.xlu0 %625
  %v627 = vsel %vm425, %v300, 0.0
  %628 = vadd.xlane.f32.xlu0 %v627
  %v629 = vpop.xlane.xlu0 %628
  %v630 = vsel %vm425, %v301, 0.0
  %631 = vadd.xlane.f32.xlu0 %v630
  %v632 = vpop.xlane.xlu0 %631
  %v633 = vsel %vm425, %v302, 0.0
  %634 = vadd.xlane.f32.xlu0 %v633
  %v635 = vpop.xlane.xlu0 %634
  %v636 = vsel %vm425, %v303, 0.0
  %637 = vadd.xlane.f32.xlu0 %v636
  %v638 = vpop.xlane.xlu0 %637
  %v639 = vsel %vm425, %v304, 0.0
  %640 = vadd.xlane.f32.xlu0 %v639
  %v641 = vpop.xlane.xlu0 %640
  %v642 = vsel %vm425, %v305, 0.0
  %643 = vadd.xlane.f32.xlu0 %v642
  %v644 = vpop.xlane.xlu0 %643
  %v645 = vsel %vm425, %v306, 0.0
  %646 = vadd.xlane.f32.xlu0 %v645
  %v647 = vpop.xlane.xlu0 %646
  %v648 = vsel %vm425, %v307, 0.0
  %649 = vadd.xlane.f32.xlu0 %v648
  %v650 = vpop.xlane.xlu0 %649
  %v651 = vsel %vm425, %v308, 0.0
  %652 = vadd.xlane.f32.xlu0 %v651
  %v653 = vpop.xlane.xlu0 %652
  %v654 = vsel %vm425, %v309, 0.0
  %655 = vadd.xlane.f32.xlu0 %v654
  %v656 = vpop.xlane.xlu0 %655
  %v657 = vsel %vm425, %v310, 0.0
  %658 = vadd.xlane.f32.xlu0 %v657
  %v659 = vpop.xlane.xlu0 %658
  %v660 = vsel %vm425, %v311, 0.0
  %661 = vadd.xlane.f32.xlu0 %v660
  %v662 = vpop.xlane.xlu0 %661
  %v663 = vsel %vm425, %v312, 0.0
  %664 = vadd.xlane.f32.xlu0 %v663
  %v665 = vpop.xlane.xlu0 %664
  %v666 = vsel %vm425, %v313, 0.0
  %667 = vadd.xlane.f32.xlu0 %v666
  %v668 = vpop.xlane.xlu0 %667
  %v669 = vsel %vm425, %v314, 0.0
  %670 = vadd.xlane.f32.xlu0 %v669
  %v671 = vpop.xlane.xlu0 %670
  %v672 = vsel %vm425, %v315, 0.0
  %673 = vadd.xlane.f32.xlu0 %v672
  %v674 = vpop.xlane.xlu0 %673
  %v675 = vsel %vm425, %v316, 0.0
  %676 = vadd.xlane.f32.xlu0 %v675
  %v677 = vpop.xlane.xlu0 %676
  %v678 = vsel %vm425, %v317, 0.0
  %679 = vadd.xlane.f32.xlu0 %v678
  %v680 = vpop.xlane.xlu0 %679
  %v681 = vsel %vm425, %v318, 0.0
  %682 = vadd.xlane.f32.xlu0 %v681
  %v683 = vpop.xlane.xlu0 %682
  %v684 = vsel %vm425, %v319, 0.0
  %685 = vadd.xlane.f32.xlu0 %v684
  %v686 = vpop.xlane.xlu0 %685
  %v687 = vsel %vm425, %v320, 0.0
  %688 = vadd.xlane.f32.xlu0 %v687
  %v689 = vpop.xlane.xlu0 %688
  %v690 = vsel %vm425, %v321, 0.0
  %691 = vadd.xlane.f32.xlu0 %v690
  %v692 = vpop.xlane.xlu0 %691
  %v693 = vsel %vm425, %v322, 0.0
  %694 = vadd.xlane.f32.xlu0 %v693
  %v695 = vpop.xlane.xlu0 %694
  %v696 = vsel %vm425, %v323, 0.0
  %697 = vadd.xlane.f32.xlu0 %v696
  %v698 = vpop.xlane.xlu0 %697
  %v699 = vsel %vm425, %v324, 0.0
  %700 = vadd.xlane.f32.xlu0 %v699
  %v701 = vpop.xlane.xlu0 %700
  %v702 = vsel %vm425, %v325, 0.0
  %703 = vadd.xlane.f32.xlu0 %v702
  %v704 = vpop.xlane.xlu0 %703
  %v705 = vsel %vm425, %v326, 0.0
  %706 = vadd.xlane.f32.xlu0 %v705
  %v707 = vpop.xlane.xlu0 %706
  %v708 = vsel %vm425, %v327, 0.0
  %709 = vadd.xlane.f32.xlu0 %v708
  %v710 = vpop.xlane.xlu0 %709
  %v711 = vsel %vm425, %v328, 0.0
  %712 = vadd.xlane.f32.xlu0 %v711
  %v713 = vpop.xlane.xlu0 %712
  %v714 = vsel %vm425, %v329, 0.0
  %715 = vadd.xlane.f32.xlu0 %v714
  %v716 = vpop.xlane.xlu0 %715
  %v717 = vsel %vm425, %v330, 0.0
  %718 = vadd.xlane.f32.xlu0 %v717
  %v719 = vpop.xlane.xlu0 %718
  %v720 = vsel %vm425, %v331, 0.0
  %721 = vadd.xlane.f32.xlu0 %v720
  %v722 = vpop.xlane.xlu0 %721
  %v723 = vsel %vm425, %v332, 0.0
  %724 = vadd.xlane.f32.xlu0 %v723
  %v725 = vpop.xlane.xlu0 %724
  %v726 = vsel %vm425, %v333, 0.0
  %727 = vadd.xlane.f32.xlu0 %v726
  %v728 = vpop.xlane.xlu0 %727
  %v729 = vsel %vm425, %v334, 0.0
  %730 = vadd.xlane.f32.xlu0 %v729
  %v731 = vpop.xlane.xlu0 %730
  %v732 = vsel %vm425, %v335, 0.0
  %733 = vadd.xlane.f32.xlu0 %v732
  %v734 = vpop.xlane.xlu0 %733
  %v735 = vsel %vm425, %v336, 0.0
  %736 = vadd.xlane.f32.xlu0 %v735
  %v737 = vpop.xlane.xlu0 %736
  %v738 = vsel %vm425, %v337, 0.0
  %739 = vadd.xlane.f32.xlu0 %v738
  %v740 = vpop.xlane.xlu0 %739
  %v741 = vsel %vm425, %v338, 0.0
  %742 = vadd.xlane.f32.xlu0 %v741
  %v743 = vpop.xlane.xlu0 %742
  %v744 = vsel %vm425, %v339, 0.0
  %745 = vadd.xlane.f32.xlu0 %v744
  %v746 = vpop.xlane.xlu0 %745
  %v747 = vsel %vm425, %v340, 0.0
  %748 = vadd.xlane.f32.xlu0 %v747
  %v749 = vpop.xlane.xlu0 %748
  %v750 = vsel %vm425, %v341, 0.0
  %751 = vadd.xlane.f32.xlu0 %v750
  %v752 = vpop.xlane.xlu0 %751
  %v753 = vsel %vm425, %v342, 0.0
  %754 = vadd.xlane.f32.xlu0 %v753
  %v755 = vpop.xlane.xlu0 %754
  %v756 = vsel %vm425, %v343, 0.0
  %757 = vadd.xlane.f32.xlu0 %v756
  %v758 = vpop.xlane.xlu0 %757
  %v759 = vsel %vm425, %v344, 0.0
  %760 = vadd.xlane.f32.xlu0 %v759
  %v761 = vpop.xlane.xlu0 %760
  %v762 = vsel %vm425, %v345, 0.0
  %763 = vadd.xlane.f32.xlu0 %v762
  %v764 = vpop.xlane.xlu0 %763
  %v765 = vsel %vm425, %v346, 0.0
  %766 = vadd.xlane.f32.xlu0 %v765
  %v767 = vpop.xlane.xlu0 %766
  %v768 = vsel %vm425, %v347, 0.0
  %769 = vadd.xlane.f32.xlu0 %v768
  %v770 = vpop.xlane.xlu0 %769
  %v771 = vsel %vm425, %v348, 0.0
  %772 = vadd.xlane.f32.xlu0 %v771
  %v773 = vpop.xlane.xlu0 %772
  %v774 = vsel %vm425, %v349, 0.0
  %775 = vadd.xlane.f32.xlu0 %v774
  %v776 = vpop.xlane.xlu0 %775
  %v777 = vsel %vm425, %v350, 0.0
  %778 = vadd.xlane.f32.xlu0 %v777
  %v779 = vpop.xlane.xlu0 %778
  %v780 = vsel %vm425, %v351, 0.0
  %781 = vadd.xlane.f32.xlu0 %v780
  %v782 = vpop.xlane.xlu0 %781
  %v783 = vsel %vm425, %v352, 0.0
  %784 = vadd.xlane.f32.xlu0 %v783
  %v785 = vpop.xlane.xlu0 %784
  %v786 = vsel %vm425, %v353, 0.0
  %787 = vadd.xlane.f32.xlu0 %v786
  %v788 = vpop.xlane.xlu0 %787
  %v789 = vsel %vm425, %v354, 0.0
  %790 = vadd.xlane.f32.xlu0 %v789
  %v791 = vpop.xlane.xlu0 %790
  %v792 = vsel %vm425, %v355, 0.0
  %793 = vadd.xlane.f32.xlu0 %v792
  %v794 = vpop.xlane.xlu0 %793
  %v795 = vsel %vm425, %v356, 0.0
  %796 = vadd.xlane.f32.xlu0 %v795
  %v797 = vpop.xlane.xlu0 %796
  %v798 = vsel %vm425, %v357, 0.0
  %799 = vadd.xlane.f32.xlu0 %v798
  %v800 = vpop.xlane.xlu0 %799
  %v801 = vsel %vm425, %v358, 0.0
  %802 = vadd.xlane.f32.xlu0 %v801
  %v803 = vpop.xlane.xlu0 %802
  %v804 = vsel %vm425, %v359, 0.0
  %805 = vadd.xlane.f32.xlu0 %v804
  %v806 = vpop.xlane.xlu0 %805
  %v807 = vsel %vm425, %v360, 0.0
  %808 = vadd.xlane.f32.xlu0 %v807
  %v809 = vpop.xlane.xlu0 %808
  %v810 = vsel %vm425, %v361, 0.0
  %811 = vadd.xlane.f32.xlu0 %v810
  %v812 = vpop.xlane.xlu0 %811
  %v813 = vsel %vm425, %v362, 0.0
  %814 = vadd.xlane.f32.xlu0 %v813
  %v815 = vpop.xlane.xlu0 %814
  %v816 = vsel %vm425, %v363, 0.0
  %817 = vadd.xlane.f32.xlu0 %v816
  %v818 = vpop.xlane.xlu0 %817
  %v819 = vsel %vm425, %v364, 0.0
  %820 = vadd.xlane.f32.xlu0 %v819
  %v821 = vpop.xlane.xlu0 %820
  %v822 = vsel %vm425, %v365, 0.0
  %823 = vadd.xlane.f32.xlu0 %v822
  %v824 = vpop.xlane.xlu0 %823
  %v825 = vsel %vm425, %v366, 0.0
  %826 = vadd.xlane.f32.xlu0 %v825
  %v827 = vpop.xlane.xlu0 %826
  %v828 = vsel %vm425, %v367, 0.0
  %829 = vadd.xlane.f32.xlu0 %v828
  %v830 = vpop.xlane.xlu0 %829
  %v831 = vsel %vm425, %v368, 0.0
  %832 = vadd.xlane.f32.xlu0 %v831
  %v833 = vpop.xlane.xlu0 %832
  %v834 = vsel %vm425, %v369, 0.0
  %835 = vadd.xlane.f32.xlu0 %v834
  %v836 = vpop.xlane.xlu0 %835
  %v837 = vsel %vm425, %v370, 0.0
  %838 = vadd.xlane.f32.xlu0 %v837
  %v839 = vpop.xlane.xlu0 %838
  %v840 = vsel %vm425, %v371, 0.0
  %841 = vadd.xlane.f32.xlu0 %v840
  %v842 = vpop.xlane.xlu0 %841
  %v843 = vsel %vm425, %v372, 0.0
  %844 = vadd.xlane.f32.xlu0 %v843
  %v845 = vpop.xlane.xlu0 %844
  %v846 = vsel %vm425, %v373, 0.0
  %847 = vadd.xlane.f32.xlu0 %v846
  %v848 = vpop.xlane.xlu0 %847
  %v849 = vsel %vm425, %v374, 0.0
  %850 = vadd.xlane.f32.xlu0 %v849
  %v851 = vpop.xlane.xlu0 %850
  %v852 = vsel %vm425, %v375, 0.0
  %853 = vadd.xlane.f32.xlu0 %v852
  %v854 = vpop.xlane.xlu0 %853
  %v855 = vsel %vm425, %v376, 0.0
  %856 = vadd.xlane.f32.xlu0 %v855
  %v857 = vpop.xlane.xlu0 %856
  %v858 = vsel %vm425, %v377, 0.0
  %859 = vadd.xlane.f32.xlu0 %v858
  %v860 = vpop.xlane.xlu0 %859
  %v861 = vsel %vm425, %v378, 0.0
  %862 = vadd.xlane.f32.xlu0 %v861
  %v863 = vpop.xlane.xlu0 %862
  %v864 = vsel %vm425, %v379, 0.0
  %865 = vadd.xlane.f32.xlu0 %v864
  %v866 = vpop.xlane.xlu0 %865
  %v867 = vsel %vm425, %v380, 0.0
  %868 = vadd.xlane.f32.xlu0 %v867
  %v869 = vpop.xlane.xlu0 %868
  %v870 = vsel %vm425, %v381, 0.0
  %871 = vadd.xlane.f32.xlu0 %v870
  %v872 = vpop.xlane.xlu0 %871
  %v873 = vsel %vm425, %v382, 0.0
  %874 = vadd.xlane.f32.xlu0 %v873
  %v875 = vpop.xlane.xlu0 %874
  %v876 = vsel %vm425, %v383, 0.0
  %877 = vadd.xlane.f32.xlu0 %v876
  %v878 = vpop.xlane.xlu0 %877
  %v879 = vsel %vm425, %v384, 0.0
  %880 = vadd.xlane.f32.xlu0 %v879
  %v881 = vpop.xlane.xlu0 %880
  %v882 = vsel %vm425, %v385, 0.0
  %883 = vadd.xlane.f32.xlu0 %v882
  %v884 = vpop.xlane.xlu0 %883
  %v885 = vsel %vm425, %v386, 0.0
  %886 = vadd.xlane.f32.xlu0 %v885
  %v887 = vpop.xlane.xlu0 %886
  %v888 = vsel %vm425, %v387, 0.0
  %889 = vadd.xlane.f32.xlu0 %v888
  %v890 = vpop.xlane.xlu0 %889
  %v891 = vsel %vm425, %v388, 0.0
  %892 = vadd.xlane.f32.xlu0 %v891
  %v893 = vpop.xlane.xlu0 %892
  %v894 = vsel %vm425, %v389, 0.0
  %895 = vadd.xlane.f32.xlu0 %v894
  %v896 = vpop.xlane.xlu0 %895
  %v897 = vsel %vm425, %v390, 0.0
  %898 = vadd.xlane.f32.xlu0 %v897
  %v899 = vpop.xlane.xlu0 %898
  %v900 = vsel %vm425, %v391, 0.0
  %901 = vadd.xlane.f32.xlu0 %v900
  %v902 = vpop.xlane.xlu0 %901
  %v903 = vsel %vm425, %v392, 0.0
  %904 = vadd.xlane.f32.xlu0 %v903
  %v905 = vpop.xlane.xlu0 %904
  %v906 = vsel %vm425, %v393, 0.0
  %907 = vadd.xlane.f32.xlu0 %v906
  %v908 = vpop.xlane.xlu0 %907
  %v909 = vsel %vm425, %v394, 0.0
  %910 = vadd.xlane.f32.xlu0 %v909
  %v911 = vpop.xlane.xlu0 %910
  %v912 = vsel %vm425, %v395, 0.0
  %913 = vadd.xlane.f32.xlu0 %v912
  %v914 = vpop.xlane.xlu0 %913
  %v915 = vsel %vm425, %v396, 0.0
  %916 = vadd.xlane.f32.xlu0 %v915
  %v917 = vpop.xlane.xlu0 %916
  %v918 = vsel %vm425, %v397, 0.0
  %919 = vadd.xlane.f32.xlu0 %v918
  %v920 = vpop.xlane.xlu0 %919
  %v921 = vsel %vm425, %v398, 0.0
  %922 = vadd.xlane.f32.xlu0 %v921
  %v923 = vpop.xlane.xlu0 %922
  %v924 = vsel %vm425, %v399, 0.0
  %925 = vadd.xlane.f32.xlu0 %v924
  %v926 = vpop.xlane.xlu0 %925
  %v927 = vsel %vm425, %v400, 0.0
  %928 = vadd.xlane.f32.xlu0 %v927
  %v929 = vpop.xlane.xlu0 %928
  %v930 = vsel %vm425, %v401, 0.0
  %931 = vadd.xlane.f32.xlu0 %v930
  %v932 = vpop.xlane.xlu0 %931
  %v933 = vsel %vm425, %v402, 0.0
  %934 = vadd.xlane.f32.xlu0 %v933
  %v935 = vpop.xlane.xlu0 %934
  %v936 = vsel %vm425, %v403, 0.0
  %937 = vadd.xlane.f32.xlu0 %v936
  %v938 = vpop.xlane.xlu0 %937
  %v939 = vsel %vm425, %v404, 0.0
  %940 = vadd.xlane.f32.xlu0 %v939
  %v941 = vpop.xlane.xlu0 %940
  %v942 = vsel %vm425, %v405, 0.0
  %943 = vadd.xlane.f32.xlu0 %v942
  %v944 = vpop.xlane.xlu0 %943
  %v945 = vsel %vm425, %v406, 0.0
  %946 = vadd.xlane.f32.xlu0 %v945
  %v947 = vpop.xlane.xlu0 %946
  %v948 = vsel %vm425, %v407, 0.0
  %949 = vadd.xlane.f32.xlu0 %v948
  %v950 = vpop.xlane.xlu0 %949
  %v951 = vsel %vm425, %v408, 0.0
  %952 = vadd.xlane.f32.xlu0 %v951
  %v953 = vpop.xlane.xlu0 %952
  %v954 = vsel %vm425, %v409, 0.0
  %955 = vadd.xlane.f32.xlu0 %v954
  %v956 = vpop.xlane.xlu0 %955
  %v957 = vsel %vm425, %v410, 0.0
  %958 = vadd.xlane.f32.xlu0 %v957
  %v959 = vpop.xlane.xlu0 %958
  %v960 = vsel %vm425, %v411, 0.0
  %961 = vadd.xlane.f32.xlu0 %v960
  %v962 = vpop.xlane.xlu0 %961
  %v963 = vsel %vm425, %v412, 0.0
  %964 = vadd.xlane.f32.xlu0 %v963
  %v965 = vpop.xlane.xlu0 %964
  %v966 = vsel %vm425, %v413, 0.0
  %967 = vadd.xlane.f32.xlu0 %v966
  %v968 = vpop.xlane.xlu0 %967
  %v969 = vsel %vm425, %v414, 0.0
  %970 = vadd.xlane.f32.xlu0 %v969
  %v971 = vpop.xlane.xlu0 %970
  %v972 = vsel %vm425, %v415, 0.0
  %973 = vadd.xlane.f32.xlu0 %v972
  %v974 = vpop.xlane.xlu0 %973
  %v975 = vsel %vm425, %v416, 0.0
  %976 = vadd.xlane.f32.xlu0 %v975
  %v977 = vpop.xlane.xlu0 %976
  %v978 = vsel %vm425, %v417, 0.0
  %979 = vadd.xlane.f32.xlu0 %v978
  %v980 = vpop.xlane.xlu0 %979
  %v981 = vsel %vm425, %v418, 0.0
  %982 = vadd.xlane.f32.xlu0 %v981
  %v983 = vpop.xlane.xlu0 %982
  %v984 = vsel %vm425, %v419, 0.0
  %985 = vadd.xlane.f32.xlu0 %v984
  %v986 = vpop.xlane.xlu0 %985
  %v987 = vsel %vm425, %v420, 0.0
  %988 = vadd.xlane.f32.xlu0 %v987
  %v989 = vpop.xlane.xlu0 %988
  %v990 = vsel %vm425, %v421, 0.0
  %991 = vadd.xlane.f32.xlu0 %v990
  %v992 = vpop.xlane.xlu0 %991
  %v993 = vsel %vm425, %v422, 0.0
  %994 = vadd.xlane.f32.xlu0 %v993
  %v995 = vpop.xlane.xlu0 %994
  %v996 = vsel %vm425, %v423, 0.0
  %997 = vadd.xlane.f32.xlu0 %v996
  %v998 = vpop.xlane.xlu0 %997
  %v999 = vsel %vm425, %v424, 0.0
  %1000 = vadd.xlane.f32.xlu0 %v999
  %v1001 = vpop.xlane.xlu0 %1000
  %v1002 = vrsqrt.pop %v428
  %v1003 = vrsqrt.pop %v431
  %v1004 = vrsqrt.pop %v434
  %v1005 = vrsqrt.pop %v437
  %v1006 = vrsqrt.pop %v440
  %v1007 = vrsqrt.pop %v443
  %v1008 = vrsqrt.pop %v446
  %v1009 = vrsqrt.pop %v449
  %v1010 = vrsqrt.pop %v452
  %v1011 = vrsqrt.pop %v455
  %v1012 = vrsqrt.pop %v458
  %v1013 = vrsqrt.pop %v461
  %v1014 = vrsqrt.pop %v464
  %v1015 = vrsqrt.pop %v467
  %v1016 = vrsqrt.pop %v470
  %v1017 = vrsqrt.pop %v473
  %v1018 = vrsqrt.pop %v476
  %v1019 = vrsqrt.pop %v479
  %v1020 = vrsqrt.pop %v482
  %v1021 = vrsqrt.pop %v485
  %v1022 = vrsqrt.pop %v488
  %v1023 = vrsqrt.pop %v491
  %v1024 = vrsqrt.pop %v494
  %v1025 = vrsqrt.pop %v497
  %v1026 = vrsqrt.pop %v500
  %v1027 = vrsqrt.pop %v503
  %v1028 = vrsqrt.pop %v506
  %v1029 = vrsqrt.pop %v509
  %v1030 = vrsqrt.pop %v512
  %v1031 = vrsqrt.pop %v515
  %v1032 = vrsqrt.pop %v518
  %v1033 = vrsqrt.pop %v521
  %v1034 = vrsqrt.pop %v524
  %v1035 = vrsqrt.pop %v527
  %v1036 = vrsqrt.pop %v530
  %v1037 = vrsqrt.pop %v533
  %v1038 = vrsqrt.pop %v536
  %v1039 = vrsqrt.pop %v539
  %v1040 = vrsqrt.pop %v542
  %v1041 = vrsqrt.pop %v545
  %v1042 = vrsqrt.pop %v548
  %v1043 = vrsqrt.pop %v551
  %v1044 = vrsqrt.pop %v554
  %v1045 = vrsqrt.pop %v557
  %v1046 = vrsqrt.pop %v560
  %v1047 = vrsqrt.pop %v563
  %v1048 = vrsqrt.pop %v566
  %v1049 = vrsqrt.pop %v569
  %v1050 = vrsqrt.pop %v572
  %v1051 = vrsqrt.pop %v575
  %v1052 = vrsqrt.pop %v578
  %v1053 = vrsqrt.pop %v581
  %v1054 = vrsqrt.pop %v584
  %v1055 = vrsqrt.pop %v587
  %v1056 = vrsqrt.pop %v590
  %v1057 = vrsqrt.pop %v593
  %v1058 = vrsqrt.pop %v596
  %v1059 = vrsqrt.pop %v599
  %v1060 = vrsqrt.pop %v602
  %v1061 = vrsqrt.pop %v605
  %v1062 = vrsqrt.pop %v608
  %v1063 = vrsqrt.pop %v611
  %v1064 = vrsqrt.pop %v614
  %v1065 = vrsqrt.pop %v617
  %v1066 = vrsqrt.pop %v620
  %v1067 = vrsqrt.pop %v623
  %v1068 = vrsqrt.pop %v626
  %v1069 = vrsqrt.pop %v629
  %v1070 = vrsqrt.pop %v632
  %v1071 = vrsqrt.pop %v635
  %v1072 = vrsqrt.pop %v638
  %v1073 = vrsqrt.pop %v641
  %v1074 = vrsqrt.pop %v644
  %v1075 = vrsqrt.pop %v647
  %v1076 = vrsqrt.pop %v650
  %v1077 = vrsqrt.pop %v653
  %v1078 = vrsqrt.pop %v656
  %v1079 = vrsqrt.pop %v659
  %v1080 = vrsqrt.pop %v662
  %v1081 = vrsqrt.pop %v665
  %v1082 = vrsqrt.pop %v668
  %v1083 = vrsqrt.pop %v671
  %v1084 = vrsqrt.pop %v674
  %v1085 = vrsqrt.pop %v677
  %v1086 = vrsqrt.pop %v680
  %v1087 = vrsqrt.pop %v683
  %v1088 = vrsqrt.pop %v686
  %v1089 = vrsqrt.pop %v689
  %v1090 = vrsqrt.pop %v692
  %v1091 = vrsqrt.pop %v695
  %v1092 = vrsqrt.pop %v698
  %v1093 = vrsqrt.pop %v701
  %v1094 = vrsqrt.pop %v704
  %v1095 = vrsqrt.pop %v707
  %v1096 = vrsqrt.pop %v710
  %v1097 = vrsqrt.pop %v713
  %v1098 = vrsqrt.pop %v716
  %v1099 = vrsqrt.pop %v719
  %v1100 = vrsqrt.pop %v722
  %v1101 = vrsqrt.pop %v725
  %v1102 = vrsqrt.pop %v728
  %v1103 = vrsqrt.pop %v731
  %v1104 = vrsqrt.pop %v734
  %v1105 = vrsqrt.pop %v737
  %v1106 = vrsqrt.pop %v740
  %v1107 = vrsqrt.pop %v743
  %v1108 = vrsqrt.pop %v746
  %v1109 = vrsqrt.pop %v749
  %v1110 = vrsqrt.pop %v752
  %v1111 = vrsqrt.pop %v755
  %v1112 = vrsqrt.pop %v758
  %v1113 = vrsqrt.pop %v761
  %v1114 = vrsqrt.pop %v764
  %v1115 = vrsqrt.pop %v767
  %v1116 = vrsqrt.pop %v770
  %v1117 = vrsqrt.pop %v773
  %v1118 = vrsqrt.pop %v776
  %v1119 = vrsqrt.pop %v779
  %v1120 = vrsqrt.pop %v782
  %v1121 = vrsqrt.pop %v785
  %v1122 = vrsqrt.pop %v788
  %v1123 = vrsqrt.pop %v791
  %v1124 = vrsqrt.pop %v794
  %v1125 = vrsqrt.pop %v797
  %v1126 = vrsqrt.pop %v800
  %v1127 = vrsqrt.pop %v803
  %v1128 = vrsqrt.pop %v806
  %v1129 = vrsqrt.pop %v809
  %v1130 = vrsqrt.pop %v812
  %v1131 = vrsqrt.pop %v815
  %v1132 = vrsqrt.pop %v818
  %v1133 = vrsqrt.pop %v821
  %v1134 = vrsqrt.pop %v824
  %v1135 = vrsqrt.pop %v827
  %v1136 = vrsqrt.pop %v830
  %v1137 = vrsqrt.pop %v833
  %v1138 = vrsqrt.pop %v836
  %v1139 = vrsqrt.pop %v839
  %v1140 = vrsqrt.pop %v842
  %v1141 = vrsqrt.pop %v845
  %v1142 = vrsqrt.pop %v848
  %v1143 = vrsqrt.pop %v851
  %v1144 = vrsqrt.pop %v854
  %v1145 = vrsqrt.pop %v857
  %v1146 = vrsqrt.pop %v860
  %v1147 = vrsqrt.pop %v863
  %v1148 = vrsqrt.pop %v866
  %v1149 = vrsqrt.pop %v869
  %v1150 = vrsqrt.pop %v872
  %v1151 = vrsqrt.pop %v875
  %v1152 = vrsqrt.pop %v878
  %v1153 = vrsqrt.pop %v881
  %v1154 = vrsqrt.pop %v884
  %v1155 = vrsqrt.pop %v887
  %v1156 = vrsqrt.pop %v890
  %v1157 = vrsqrt.pop %v893
  %v1158 = vrsqrt.pop %v896
  %v1159 = vrsqrt.pop %v899
  %v1160 = vrsqrt.pop %v902
  %v1161 = vrsqrt.pop %v905
  %v1162 = vrsqrt.pop %v908
  %v1163 = vrsqrt.pop %v911
  %v1164 = vrsqrt.pop %v914
  %v1165 = vrsqrt.pop %v917
  %v1166 = vrsqrt.pop %v920
  %v1167 = vrsqrt.pop %v923
  %v1168 = vrsqrt.pop %v926
  %v1169 = vrsqrt.pop %v929
  %v1170 = vrsqrt.pop %v932
  %v1171 = vrsqrt.pop %v935
  %v1172 = vrsqrt.pop %v938
  %v1173 = vrsqrt.pop %v941
  %v1174 = vrsqrt.pop %v944
  %v1175 = vrsqrt.pop %v947
  %v1176 = vrsqrt.pop %v950
  %v1177 = vrsqrt.pop %v953
  %v1178 = vrsqrt.pop %v956
  %v1179 = vrsqrt.pop %v959
  %v1180 = vrsqrt.pop %v962
  %v1181 = vrsqrt.pop %v965
  %v1182 = vrsqrt.pop %v968
  %v1183 = vrsqrt.pop %v971
  %v1184 = vrsqrt.pop %v974
  %v1185 = vrsqrt.pop %v977
  %v1186 = vrsqrt.pop %v980
  %v1187 = vrsqrt.pop %v983
  %v1188 = vrsqrt.pop %v986
  %v1189 = vrsqrt.pop %v989
  %v1190 = vrsqrt.pop %v992
  %v1191 = vrsqrt.pop %v995
  %v1192 = vrsqrt.pop %v998
  %v1193 = vrsqrt.pop %v1001
  %v1194 = vmul.f32 %v25, %v1002
  %v1195 = vmul.f32 %v26, %v1003
  %v1196 = vmul.f32 %v27, %v1004
  %v1197 = vmul.f32 %v28, %v1005
  %v1198 = vmul.f32 %v29, %v1006
  %v1199 = vmul.f32 %v30, %v1007
  %v1200 = vmul.f32 %v31, %v1008
  %v1201 = vmul.f32 %v32, %v1009
  %v1202 = vmul.f32 %v33, %v1010
  %v1203 = vmul.f32 %v34, %v1011
  %v1204 = vmul.f32 %v35, %v1012
  %v1205 = vmul.f32 %v36, %v1013
  %v1206 = vmul.f32 %v37, %v1014
  %v1207 = vmul.f32 %v38, %v1015
  %v1208 = vmul.f32 %v39, %v1016
  %v1209 = vmul.f32 %v40, %v1017
  %v1210 = vmul.f32 %v41, %v1018
  %v1211 = vmul.f32 %v42, %v1019
  %v1212 = vmul.f32 %v43, %v1020
  %v1213 = vmul.f32 %v44, %v1021
  %v1214 = vmul.f32 %v45, %v1022
  %v1215 = vmul.f32 %v46, %v1023
  %v1216 = vmul.f32 %v47, %v1024
  %v1217 = vmul.f32 %v48, %v1025
  %v1218 = vmul.f32 %v49, %v1026
  %v1219 = vmul.f32 %v50, %v1027
  %v1220 = vmul.f32 %v51, %v1028
  %v1221 = vmul.f32 %v52, %v1029
  %v1222 = vmul.f32 %v53, %v1030
  %v1223 = vmul.f32 %v54, %v1031
  %v1224 = vmul.f32 %v55, %v1032
  %v1225 = vmul.f32 %v56, %v1033
  %v1226 = vmul.f32 %v57, %v1034
  %v1227 = vmul.f32 %v58, %v1035
  %v1228 = vmul.f32 %v59, %v1036
  %v1229 = vmul.f32 %v60, %v1037
  %v1230 = vmul.f32 %v61, %v1038
  %v1231 = vmul.f32 %v62, %v1039
  %v1232 = vmul.f32 %v63, %v1040
  %v1233 = vmul.f32 %v64, %v1041
  %v1234 = vmul.f32 %v65, %v1042
  %v1235 = vmul.f32 %v66, %v1043
  %v1236 = vmul.f32 %v67, %v1044
  %v1237 = vmul.f32 %v68, %v1045
  %v1238 = vmul.f32 %v69, %v1046
  %v1239 = vmul.f32 %v70, %v1047
  %v1240 = vmul.f32 %v71, %v1048
  %v1241 = vmul.f32 %v72, %v1049
  %v1242 = vmul.f32 %v73, %v1050
  %v1243 = vmul.f32 %v74, %v1051
  %v1244 = vmul.f32 %v75, %v1052
  %v1245 = vmul.f32 %v76, %v1053
  %v1246 = vmul.f32 %v77, %v1054
  %v1247 = vmul.f32 %v78, %v1055
  %v1248 = vmul.f32 %v79, %v1056
  %v1249 = vmul.f32 %v80, %v1057
  %v1250 = vmul.f32 %v81, %v1058
  %v1251 = vmul.f32 %v82, %v1059
  %v1252 = vmul.f32 %v83, %v1060
  %v1253 = vmul.f32 %v84, %v1061
  %v1254 = vmul.f32 %v85, %v1062
  %v1255 = vmul.f32 %v86, %v1063
  %v1256 = vmul.f32 %v87, %v1064
  %v1257 = vmul.f32 %v88, %v1065
  %v1258 = vmul.f32 %v89, %v1066
  %v1259 = vmul.f32 %v90, %v1067
  %v1260 = vmul.f32 %v91, %v1068
  %v1261 = vmul.f32 %v92, %v1069
  %v1262 = vmul.f32 %v93, %v1070
  %v1263 = vmul.f32 %v94, %v1071
  %v1264 = vmul.f32 %v95, %v1072
  %v1265 = vmul.f32 %v96, %v1073
  %v1266 = vmul.f32 %v97, %v1074
  %v1267 = vmul.f32 %v98, %v1075
  %v1268 = vmul.f32 %v99, %v1076
  %v1269 = vmul.f32 %v100, %v1077
  %v1270 = vmul.f32 %v101, %v1078
  %v1271 = vmul.f32 %v102, %v1079
  %v1272 = vmul.f32 %v103, %v1080
  %v1273 = vmul.f32 %v104, %v1081
  %v1274 = vmul.f32 %v105, %v1082
  %v1275 = vmul.f32 %v106, %v1083
  %v1276 = vmul.f32 %v107, %v1084
  %v1277 = vmul.f32 %v108, %v1085
  %v1278 = vmul.f32 %v109, %v1086
  %v1279 = vmul.f32 %v110, %v1087
  %v1280 = vmul.f32 %v111, %v1088
  %v1281 = vmul.f32 %v112, %v1089
  %v1282 = vmul.f32 %v113, %v1090
  %v1283 = vmul.f32 %v114, %v1091
  %v1284 = vmul.f32 %v115, %v1092
  %v1285 = vmul.f32 %v116, %v1093
  %v1286 = vmul.f32 %v117, %v1094
  %v1287 = vmul.f32 %v118, %v1095
  %v1288 = vmul.f32 %v119, %v1096
  %v1289 = vmul.f32 %v120, %v1097
  %v1290 = vmul.f32 %v121, %v1098
  %v1291 = vmul.f32 %v122, %v1099
  %v1292 = vmul.f32 %v123, %v1100
  %v1293 = vmul.f32 %v124, %v1101
  %v1294 = vmul.f32 %v125, %v1102
  %v1295 = vmul.f32 %v126, %v1103
  %v1296 = vmul.f32 %v127, %v1104
  %v1297 = vmul.f32 %v128, %v1105
  %v1298 = vmul.f32 %v129, %v1106
  %v1299 = vmul.f32 %v130, %v1107
  %v1300 = vmul.f32 %v131, %v1108
  %v1301 = vmul.f32 %v132, %v1109
  %v1302 = vmul.f32 %v133, %v1110
  %v1303 = vmul.f32 %v134, %v1111
  %v1304 = vmul.f32 %v135, %v1112
  %v1305 = vmul.f32 %v136, %v1113
  %v1306 = vmul.f32 %v137, %v1114
  %v1307 = vmul.f32 %v138, %v1115
  %v1308 = vmul.f32 %v139, %v1116
  %v1309 = vmul.f32 %v140, %v1117
  %v1310 = vmul.f32 %v141, %v1118
  %v1311 = vmul.f32 %v142, %v1119
  %v1312 = vmul.f32 %v143, %v1120
  %v1313 = vmul.f32 %v144, %v1121
  %v1314 = vmul.f32 %v145, %v1122
  %v1315 = vmul.f32 %v146, %v1123
  %v1316 = vmul.f32 %v147, %v1124
  %v1317 = vmul.f32 %v148, %v1125
  %v1318 = vmul.f32 %v149, %v1126
  %v1319 = vmul.f32 %v150, %v1127
  %v1320 = vmul.f32 %v151, %v1128
  %v1321 = vmul.f32 %v152, %v1129
  %v1322 = vmul.f32 %v153, %v1130
  %v1323 = vmul.f32 %v154, %v1131
  %v1324 = vmul.f32 %v155, %v1132
  %v1325 = vmul.f32 %v156, %v1133
  %v1326 = vmul.f32 %v157, %v1134
  %v1327 = vmul.f32 %v158, %v1135
  %v1328 = vmul.f32 %v159, %v1136
  %v1329 = vmul.f32 %v160, %v1137
  %v1330 = vmul.f32 %v161, %v1138
  %v1331 = vmul.f32 %v162, %v1139
  %v1332 = vmul.f32 %v163, %v1140
  %v1333 = vmul.f32 %v164, %v1141
  %v1334 = vmul.f32 %v165, %v1142
  %v1335 = vmul.f32 %v166, %v1143
  %v1336 = vmul.f32 %v167, %v1144
  %v1337 = vmul.f32 %v168, %v1145
  %v1338 = vmul.f32 %v169, %v1146
  %v1339 = vmul.f32 %v170, %v1147
  %v1340 = vmul.f32 %v171, %v1148
  %v1341 = vmul.f32 %v172, %v1149
  %v1342 = vmul.f32 %v173, %v1150
  %v1343 = vmul.f32 %v174, %v1151
  %v1344 = vmul.f32 %v175, %v1152
  %v1345 = vmul.f32 %v176, %v1153
  %v1346 = vmul.f32 %v177, %v1154
  %v1347 = vmul.f32 %v178, %v1155
  %v1348 = vmul.f32 %v179, %v1156
  %v1349 = vmul.f32 %v180, %v1157
  %v1350 = vmul.f32 %v181, %v1158
  %v1351 = vmul.f32 %v182, %v1159
  %v1352 = vmul.f32 %v183, %v1160
  %v1353 = vmul.f32 %v184, %v1161
  %v1354 = vmul.f32 %v185, %v1162
  %v1355 = vmul.f32 %v186, %v1163
  %v1356 = vmul.f32 %v187, %v1164
  %v1357 = vmul.f32 %v188, %v1165
  %v1358 = vmul.f32 %v189, %v1166
  %v1359 = vmul.f32 %v190, %v1167
  %v1360 = vmul.f32 %v191, %v1168
  %v1361 = vmul.f32 %v192, %v1169
  %v1362 = vmul.f32 %v193, %v1170
  %v1363 = vmul.f32 %v194, %v1171
  %v1364 = vmul.f32 %v195, %v1172
  %v1365 = vmul.f32 %v196, %v1173
  %v1366 = vmul.f32 %v197, %v1174
  %v1367 = vmul.f32 %v198, %v1175
  %v1368 = vmul.f32 %v199, %v1176
  %v1369 = vmul.f32 %v200, %v1177
  %v1370 = vmul.f32 %v201, %v1178
  %v1371 = vmul.f32 %v202, %v1179
  %v1372 = vmul.f32 %v203, %v1180
  %v1373 = vmul.f32 %v204, %v1181
  %v1374 = vmul.f32 %v205, %v1182
  %v1375 = vmul.f32 %v206, %v1183
  %v1376 = vmul.f32 %v207, %v1184
  %v1377 = vmul.f32 %v208, %v1185
  %v1378 = vmul.f32 %v209, %v1186
  %v1379 = vmul.f32 %v210, %v1187
  %v1380 = vmul.f32 %v211, %v1188
  %v1381 = vmul.f32 %v212, %v1189
  %v1382 = vmul.f32 %v213, %v1190
  %v1383 = vmul.f32 %v214, %v1191
  %v1384 = vmul.f32 %v215, %v1192
  %v1385 = vmul.f32 %v216, %v1193
  %v1386 = vmul.f32 %v217, %v217
  %v1387 = vmul.f32 %v218, %v218
  %v1388 = vmul.f32 %v219, %v219
  %v1389 = vmul.f32 %v220, %v220
  %v1390 = vmul.f32 %v221, %v221
  %v1391 = vmul.f32 %v222, %v222
  %v1392 = vmul.f32 %v223, %v223
  %v1393 = vmul.f32 %v224, %v224
  %v1394 = vmul.f32 %v225, %v225
  %v1395 = vmul.f32 %v226, %v226
  %v1396 = vmul.f32 %v227, %v227
  %v1397 = vmul.f32 %v228, %v228
  %v1398 = vmul.f32 %v229, %v229
  %v1399 = vmul.f32 %v230, %v230
  %v1400 = vmul.f32 %v231, %v231
  %v1401 = vmul.f32 %v232, %v232
  %v1402 = vadd.f32 %v1386, %v1388
  %v1403 = vadd.f32 %v1402, %v1390
  %v1404 = vadd.f32 %v1403, %v1392
  %v1405 = vrot.slane %v1404, 4
  %v1406 = vadd.f32 %v1404, %v1405
  %v1407 = vrot.slane %v1406, 2
  %v1408 = vadd.f32 %v1406, %v1407
  %v1409 = vrot.slane %v1408, 1
  %v1410 = vadd.f32 %v1408, %v1409
  %v1411 = vadd.f32 %v1387, %v1389
  %v1412 = vadd.f32 %v1411, %v1391
  %v1413 = vadd.f32 %v1412, %v1393
  %v1414 = vrot.slane %v1413, 4
  %v1415 = vadd.f32 %v1413, %v1414
  %v1416 = vrot.slane %v1415, 2
  %v1417 = vadd.f32 %v1415, %v1416
  %v1418 = vrot.slane %v1417, 1
  %v1419 = vadd.f32 %v1417, %v1418
  %v1420 = vadd.f32 %v1394, %v1396
  %v1421 = vadd.f32 %v1420, %v1398
  %v1422 = vadd.f32 %v1421, %v1400
  %v1423 = vrot.slane %v1422, 4
  %v1424 = vadd.f32 %v1422, %v1423
  %v1425 = vrot.slane %v1424, 2
  %v1426 = vadd.f32 %v1424, %v1425
  %v1427 = vrot.slane %v1426, 1
  %v1428 = vadd.f32 %v1426, %v1427
  %v1429 = vadd.f32 %v1395, %v1397
  %v1430 = vadd.f32 %v1429, %v1399
  %v1431 = vadd.f32 %v1430, %v1401
  %v1432 = vrot.slane %v1431, 4
  %v1433 = vadd.f32 %v1431, %v1432
  %v1434 = vrot.slane %v1433, 2
  %v1435 = vadd.f32 %v1433, %v1434
  %v1436 = vrot.slane %v1435, 1
  %v1437 = vadd.f32 %v1435, %v1436
  %v1438 = vrsqrt.pop %v1410
  %v1439 = vrsqrt.pop %v1419
  %v1440 = vrsqrt.pop %v1428
  %v1441 = vrsqrt.pop %v1437
  %v1442 = vstv %s24
  %v1443 = vmul.f32 %v1442, %v1438
  %v1444 = vmul.f32 %v1442, %v1439
  %v1445 = vmul.f32 %v1442, %v1440
  %v1446 = vmul.f32 %v1442, %v1441
  %v1447 = vmul.f32 %v217, %v1443
  %v1448 = vmul.f32 %v218, %v1444
  %v1449 = vmul.f32 %v219, %v1443
  %v1450 = vmul.f32 %v220, %v1444
  %v1451 = vmul.f32 %v221, %v1443
  %v1452 = vmul.f32 %v222, %v1444
  %v1453 = vmul.f32 %v223, %v1443
  %v1454 = vmul.f32 %v224, %v1444
  %v1455 = vmul.f32 %v225, %v1445
  %v1456 = vmul.f32 %v226, %v1446
  %v1457 = vmul.f32 %v227, %v1445
  %v1458 = vmul.f32 %v228, %v1446
  %v1459 = vmul.f32 %v229, %v1445
  %v1460 = vmul.f32 %v230, %v1446
  %v1461 = vmul.f32 %v231, %v1445
  %v1462 = vmul.f32 %v232, %v1446
  %v1464 = vsel %vm425, %v1194, 0
  %v1467 = vsel %vm425, %v1195, 0
  %v1470 = vsel %vm425, %v1196, 0
  %v1473 = vsel %vm425, %v1197, 0
  %v1476 = vsel %vm425, %v1198, 0
  %v1479 = vsel %vm425, %v1199, 0
  %v1482 = vsel %vm425, %v1200, 0
  %v1485 = vsel %vm425, %v1201, 0
  %v1488 = vsel %vm425, %v1202, 0
  %v1491 = vsel %vm425, %v1203, 0
  %v1494 = vsel %vm425, %v1204, 0
  %v1497 = vsel %vm425, %v1205, 0
  %v1500 = vsel %vm425, %v1206, 0
  %v1503 = vsel %vm425, %v1207, 0
  %v1506 = vsel %vm425, %v1208, 0
  %v1509 = vsel %vm425, %v1209, 0
  %v1512 = vsel %vm425, %v1210, 0
  %v1515 = vsel %vm425, %v1211, 0
  %v1518 = vsel %vm425, %v1212, 0
  %v1521 = vsel %vm425, %v1213, 0
  %v1524 = vsel %vm425, %v1214, 0
  %v1527 = vsel %vm425, %v1215, 0
  %v1530 = vsel %vm425, %v1216, 0
  %v1533 = vsel %vm425, %v1217, 0
  %v1536 = vsel %vm425, %v1218, 0
  %v1539 = vsel %vm425, %v1219, 0
  %v1542 = vsel %vm425, %v1220, 0
  %v1545 = vsel %vm425, %v1221, 0
  %v1548 = vsel %vm425, %v1222, 0
  %v1551 = vsel %vm425, %v1223, 0
  %v1554 = vsel %vm425, %v1224, 0
  %v1557 = vsel %vm425, %v1225, 0
  %v1560 = vsel %vm425, %v1226, 0
  %v1563 = vsel %vm425, %v1227, 0
  %v1566 = vsel %vm425, %v1228, 0
  %v1569 = vsel %vm425, %v1229, 0
  %v1572 = vsel %vm425, %v1230, 0
  %v1575 = vsel %vm425, %v1231, 0
  %v1578 = vsel %vm425, %v1232, 0
  %v1581 = vsel %vm425, %v1233, 0
  %v1584 = vsel %vm425, %v1234, 0
  %v1587 = vsel %vm425, %v1235, 0
  %v1590 = vsel %vm425, %v1236, 0
  %v1593 = vsel %vm425, %v1237, 0
  %v1596 = vsel %vm425, %v1238, 0
  %v1599 = vsel %vm425, %v1239, 0
  %v1602 = vsel %vm425, %v1240, 0
  %v1605 = vsel %vm425, %v1241, 0
  %v1608 = vsel %vm425, %v1242, 0
  %v1611 = vsel %vm425, %v1243, 0
  %v1614 = vsel %vm425, %v1244, 0
  %v1617 = vsel %vm425, %v1245, 0
  %v1620 = vsel %vm425, %v1246, 0
  %v1623 = vsel %vm425, %v1247, 0
  %v1626 = vsel %vm425, %v1248, 0
  %v1629 = vsel %vm425, %v1249, 0
  %v1632 = vsel %vm425, %v1250, 0
  %v1635 = vsel %vm425, %v1251, 0
  %v1638 = vsel %vm425, %v1252, 0
  %v1641 = vsel %vm425, %v1253, 0
  %v1644 = vsel %vm425, %v1254, 0
  %v1647 = vsel %vm425, %v1255, 0
  %v1650 = vsel %vm425, %v1256, 0
  %v1653 = vsel %vm425, %v1257, 0
  %v1656 = vsel %vm425, %v1258, 0
  %v1659 = vsel %vm425, %v1259, 0
  %v1662 = vsel %vm425, %v1260, 0
  %v1665 = vsel %vm425, %v1261, 0
  %v1668 = vsel %vm425, %v1262, 0
  %v1671 = vsel %vm425, %v1263, 0
  %v1674 = vsel %vm425, %v1264, 0
  %v1677 = vsel %vm425, %v1265, 0
  %v1680 = vsel %vm425, %v1266, 0
  %v1683 = vsel %vm425, %v1267, 0
  %v1686 = vsel %vm425, %v1268, 0
  %v1689 = vsel %vm425, %v1269, 0
  %v1692 = vsel %vm425, %v1270, 0
  %v1695 = vsel %vm425, %v1271, 0
  %v1698 = vsel %vm425, %v1272, 0
  %v1701 = vsel %vm425, %v1273, 0
  %v1704 = vsel %vm425, %v1274, 0
  %v1707 = vsel %vm425, %v1275, 0
  %v1710 = vsel %vm425, %v1276, 0
  %v1713 = vsel %vm425, %v1277, 0
  %v1716 = vsel %vm425, %v1278, 0
  %v1719 = vsel %vm425, %v1279, 0
  %v1722 = vsel %vm425, %v1280, 0
  %v1725 = vsel %vm425, %v1281, 0
  %v1728 = vsel %vm425, %v1282, 0
  %v1731 = vsel %vm425, %v1283, 0
  %v1734 = vsel %vm425, %v1284, 0
  %v1737 = vsel %vm425, %v1285, 0
  %v1740 = vsel %vm425, %v1286, 0
  %v1743 = vsel %vm425, %v1287, 0
  %v1746 = vsel %vm425, %v1288, 0
  %v1749 = vsel %vm425, %v1289, 0
  %1751 = vmatprep.subr.mxu0 0.0
  %1752 = vmatpush1.msra.mxu0 0.0
  %1753 = vmatprep.subr.mxu0 0.0
  %1754 = vmatpush1.msra.mxu0 0.0
  %1755 = vmatprep.subr.mxu0 0.0
  %1756 = vmatpush1.msra.mxu0 0.0
  %1757 = vmatprep.subr.mxu0 0.0
  %1758 = vmatpush1.msra.mxu0 0.0
  %1759 = vmatprep.subr.mxu0 0.0
  %1760 = vmatpush1.msra.mxu0 0.0
  %1761 = vmatprep.subr.mxu0 0.0
  %1762 = vmatpush1.msra.mxu0 0.0
  %1763 = vmatprep.subr.mxu0 0.0
  %1764 = vmatpush1.msra.mxu0 0.0
  %1765 = vmatprep.subr.mxu0 0.0
  %1766 = vmatpush1.msra.mxu0 0.0
  %1767 = vmatprep.subr.mxu0 0.0
  %1768 = vmatpush1.msra.mxu0 0.0
  %1769 = vmatprep.subr.mxu0 0.0
  %1770 = vmatpush1.msra.mxu0 0.0
  %1771 = vmatprep.subr.mxu0 0.0
  %1772 = vmatpush1.msra.mxu0 0.0
  %1773 = vmatprep.subr.mxu0 0.0
  %1774 = vmatpush1.msra.mxu0 0.0
  %1775 = vmatprep.subr.mxu0 %v1454
  %1776 = vmatpush1.msra.mxu0 %v1453
  %1777 = vmatprep.subr.mxu0 %v1452
  %1778 = vmatpush1.msra.mxu0 %v1451
  %1779 = vmatprep.subr.mxu0 %v1450
  %1780 = vmatpush1.msra.mxu0 %v1449
  %1781 = vmatprep.subr.mxu0 %v1448
  %1782 = vmatpush1.msra.mxu0 %v1447
  %1783 = vmatprep.subr.mxu0 0.0
  %1784 = vmatpush2.msra.mxu0 0.0
  %1785 = vmatprep.subr.mxu0 0.0
  %1786 = vmatpush2.msra.mxu0 0.0
  %1787 = vmatprep.subr.mxu0 0.0
  %1788 = vmatpush2.msra.mxu0 0.0
  %1789 = vmatprep.subr.mxu0 0.0
  %1790 = vmatpush2.msra.mxu0 0.0
  %1791 = vmatprep.subr.mxu0 0.0
  %1792 = vmatpush2.msra.mxu0 0.0
  %1793 = vmatprep.subr.mxu0 0.0
  %1794 = vmatpush2.msra.mxu0 0.0
  %1795 = vmatprep.subr.mxu0 0.0
  %1796 = vmatpush2.msra.mxu0 0.0
  %1797 = vmatprep.subr.mxu0 0.0
  %1798 = vmatpush2.msra.mxu0 0.0
  %1799 = vmatprep.subr.mxu0 0.0
  %1800 = vmatpush2.msra.mxu0 0.0
  %1801 = vmatprep.subr.mxu0 0.0
  %1802 = vmatpush2.msra.mxu0 0.0
  %1803 = vmatprep.subr.mxu0 0.0
  %1804 = vmatpush2.msra.mxu0 0.0
  %1805 = vmatprep.subr.mxu0 0.0
  %1806 = vmatpush2.msra.mxu0 0.0
  %1807 = vmatprep.subr.mxu0 0.0
  %1808 = vmatpush2.msra.mxu0 0.0
  %1809 = vmatprep.subr.mxu0 0.0
  %1810 = vmatpush2.msra.mxu0 0.0
  %1811 = vmatprep.subr.mxu0 0.0
  %1812 = vmatpush2.msra.mxu0 0.0
  %1813 = vmatprep.subr.mxu0 0.0
  %1814 = vmatpush2.msra.mxu0 0.0
  %1815 = vmatprep.mubr.f32.mxu0 0.0
  %1816 = vmatmul.mubr.f32.gmra.mxu0 %v1464
  %v1817 = vpop.f32.mrf.mxu0
  %v1818 = vadd.f32 0.0, %v1817
  %v1819 = vpop.f32.mrf.mxu0
  %v1820 = vadd.f32 0.0, %v1819
  %1821 = vmatprep.mubr.f32.mxu0 0.0
  %1822 = vmatmul.mubr.f32.gmra.mxu0 %v1467
  %v1823 = vpop.f32.mrf.mxu0
  %v1824 = vadd.f32 0.0, %v1823
  %v1825 = vpop.f32.mrf.mxu0
  %v1826 = vadd.f32 0.0, %v1825
  %1827 = vmatprep.mubr.f32.mxu0 0.0
  %1828 = vmatmul.mubr.f32.gmra.mxu0 %v1470
  %v1829 = vpop.f32.mrf.mxu0
  %v1830 = vadd.f32 0.0, %v1829
  %v1831 = vpop.f32.mrf.mxu0
  %v1832 = vadd.f32 0.0, %v1831
  %1833 = vmatprep.mubr.f32.mxu0 0.0
  %1834 = vmatmul.mubr.f32.gmra.mxu0 %v1473
  %v1835 = vpop.f32.mrf.mxu0
  %v1836 = vadd.f32 0.0, %v1835
  %v1837 = vpop.f32.mrf.mxu0
  %v1838 = vadd.f32 0.0, %v1837
  %1839 = vmatprep.mubr.f32.mxu0 0.0
  %1840 = vmatmul.mubr.f32.gmra.mxu0 %v1476
  %v1841 = vpop.f32.mrf.mxu0
  %v1842 = vadd.f32 0.0, %v1841
  %v1843 = vpop.f32.mrf.mxu0
  %v1844 = vadd.f32 0.0, %v1843
  %1845 = vmatprep.mubr.f32.mxu0 0.0
  %1846 = vmatmul.mubr.f32.gmra.mxu0 %v1479
  %v1847 = vpop.f32.mrf.mxu0
  %v1848 = vadd.f32 0.0, %v1847
  %v1849 = vpop.f32.mrf.mxu0
  %v1850 = vadd.f32 0.0, %v1849
  %1851 = vmatprep.mubr.f32.mxu0 0.0
  %1852 = vmatmul.mubr.f32.gmra.mxu0 %v1482
  %v1853 = vpop.f32.mrf.mxu0
  %v1854 = vadd.f32 0.0, %v1853
  %v1855 = vpop.f32.mrf.mxu0
  %v1856 = vadd.f32 0.0, %v1855
  %1857 = vmatprep.mubr.f32.mxu0 0.0
  %1858 = vmatmul.mubr.f32.gmra.mxu0 %v1485
  %v1859 = vpop.f32.mrf.mxu0
  %v1860 = vadd.f32 0.0, %v1859
  %v1861 = vpop.f32.mrf.mxu0
  %v1862 = vadd.f32 0.0, %v1861
  %1863 = vmatprep.mubr.f32.mxu0 0.0
  %1864 = vmatmul.mubr.f32.gmra.mxu0 %v1488
  %v1865 = vpop.f32.mrf.mxu0
  %v1866 = vadd.f32 0.0, %v1865
  %v1867 = vpop.f32.mrf.mxu0
  %v1868 = vadd.f32 0.0, %v1867
  %1869 = vmatprep.mubr.f32.mxu0 0.0
  %1870 = vmatmul.mubr.f32.gmra.mxu0 %v1491
  %v1871 = vpop.f32.mrf.mxu0
  %v1872 = vadd.f32 0.0, %v1871
  %v1873 = vpop.f32.mrf.mxu0
  %v1874 = vadd.f32 0.0, %v1873
  %1875 = vmatprep.mubr.f32.mxu0 0.0
  %1876 = vmatmul.mubr.f32.gmra.mxu0 %v1494
  %v1877 = vpop.f32.mrf.mxu0
  %v1878 = vadd.f32 0.0, %v1877
  %v1879 = vpop.f32.mrf.mxu0
  %v1880 = vadd.f32 0.0, %v1879
  %1881 = vmatprep.mubr.f32.mxu0 0.0
  %1882 = vmatmul.mubr.f32.gmra.mxu0 %v1497
  %v1883 = vpop.f32.mrf.mxu0
  %v1884 = vadd.f32 0.0, %v1883
  %v1885 = vpop.f32.mrf.mxu0
  %v1886 = vadd.f32 0.0, %v1885
  %1887 = vmatprep.mubr.f32.mxu0 0.0
  %1888 = vmatmul.mubr.f32.gmra.mxu0 %v1500
  %v1889 = vpop.f32.mrf.mxu0
  %v1890 = vadd.f32 0.0, %v1889
  %v1891 = vpop.f32.mrf.mxu0
  %v1892 = vadd.f32 0.0, %v1891
  %1893 = vmatprep.mubr.f32.mxu0 0.0
  %1894 = vmatmul.mubr.f32.gmra.mxu0 %v1503
  %v1895 = vpop.f32.mrf.mxu0
  %v1896 = vadd.f32 0.0, %v1895
  %v1897 = vpop.f32.mrf.mxu0
  %v1898 = vadd.f32 0.0, %v1897
  %1899 = vmatprep.mubr.f32.mxu0 0.0
  %1900 = vmatmul.mubr.f32.gmra.mxu0 %v1506
  %v1901 = vpop.f32.mrf.mxu0
  %v1902 = vadd.f32 0.0, %v1901
  %v1903 = vpop.f32.mrf.mxu0
  %v1904 = vadd.f32 0.0, %v1903
  %1905 = vmatprep.mubr.f32.mxu0 0.0
  %1906 = vmatmul.mubr.f32.gmra.mxu0 %v1509
  %v1907 = vpop.f32.mrf.mxu0
  %v1908 = vadd.f32 0.0, %v1907
  %v1909 = vpop.f32.mrf.mxu0
  %v1910 = vadd.f32 0.0, %v1909
  %1911 = vmatprep.mubr.f32.mxu0 0.0
  %1912 = vmatmul.mubr.f32.gmra.mxu0 %v1512
  %v1913 = vpop.f32.mrf.mxu0
  %v1914 = vadd.f32 0.0, %v1913
  %v1915 = vpop.f32.mrf.mxu0
  %v1916 = vadd.f32 0.0, %v1915
  %1917 = vmatprep.mubr.f32.mxu0 0.0
  %1918 = vmatmul.mubr.f32.gmra.mxu0 %v1515
  %v1919 = vpop.f32.mrf.mxu0
  %v1920 = vadd.f32 0.0, %v1919
  %v1921 = vpop.f32.mrf.mxu0
  %v1922 = vadd.f32 0.0, %v1921
  %1923 = vmatprep.mubr.f32.mxu0 0.0
  %1924 = vmatmul.mubr.f32.gmra.mxu0 %v1518
  %v1925 = vpop.f32.mrf.mxu0
  %v1926 = vadd.f32 0.0, %v1925
  %v1927 = vpop.f32.mrf.mxu0
  %v1928 = vadd.f32 0.0, %v1927
  %1929 = vmatprep.mubr.f32.mxu0 0.0
  %1930 = vmatmul.mubr.f32.gmra.mxu0 %v1521
  %v1931 = vpop.f32.mrf.mxu0
  %v1932 = vadd.f32 0.0, %v1931
  %v1933 = vpop.f32.mrf.mxu0
  %v1934 = vadd.f32 0.0, %v1933
  %1935 = vmatprep.mubr.f32.mxu0 0.0
  %1936 = vmatmul.mubr.f32.gmra.mxu0 %v1524
  %v1937 = vpop.f32.mrf.mxu0
  %v1938 = vadd.f32 0.0, %v1937
  %v1939 = vpop.f32.mrf.mxu0
  %v1940 = vadd.f32 0.0, %v1939
  %1941 = vmatprep.mubr.f32.mxu0 0.0
  %1942 = vmatmul.mubr.f32.gmra.mxu0 %v1527
  %v1943 = vpop.f32.mrf.mxu0
  %v1944 = vadd.f32 0.0, %v1943
  %v1945 = vpop.f32.mrf.mxu0
  %v1946 = vadd.f32 0.0, %v1945
  %1947 = vmatprep.mubr.f32.mxu0 0.0
  %1948 = vmatmul.mubr.f32.gmra.mxu0 %v1530
  %v1949 = vpop.f32.mrf.mxu0
  %v1950 = vadd.f32 0.0, %v1949
  %v1951 = vpop.f32.mrf.mxu0
  %v1952 = vadd.f32 0.0, %v1951
  %1953 = vmatprep.mubr.f32.mxu0 0.0
  %1954 = vmatmul.mubr.f32.gmra.mxu0 %v1533
  %v1955 = vpop.f32.mrf.mxu0
  %v1956 = vadd.f32 0.0, %v1955
  %v1957 = vpop.f32.mrf.mxu0
  %v1958 = vadd.f32 0.0, %v1957
  %1959 = vmatprep.mubr.f32.mxu0 0.0
  %1960 = vmatmul.mubr.f32.gmra.mxu0 %v1536
  %v1961 = vpop.f32.mrf.mxu0
  %v1962 = vadd.f32 0.0, %v1961
  %v1963 = vpop.f32.mrf.mxu0
  %v1964 = vadd.f32 0.0, %v1963
  %1965 = vmatprep.mubr.f32.mxu0 0.0
  %1966 = vmatmul.mubr.f32.gmra.mxu0 %v1539
  %v1967 = vpop.f32.mrf.mxu0
  %v1968 = vadd.f32 0.0, %v1967
  %v1969 = vpop.f32.mrf.mxu0
  %v1970 = vadd.f32 0.0, %v1969
  %1971 = vmatprep.mubr.f32.mxu0 0.0
  %1972 = vmatmul.mubr.f32.gmra.mxu0 %v1542
  %v1973 = vpop.f32.mrf.mxu0
  %v1974 = vadd.f32 0.0, %v1973
  %v1975 = vpop.f32.mrf.mxu0
  %v1976 = vadd.f32 0.0, %v1975
  %1977 = vmatprep.mubr.f32.mxu0 0.0
  %1978 = vmatmul.mubr.f32.gmra.mxu0 %v1545
  %v1979 = vpop.f32.mrf.mxu0
  %v1980 = vadd.f32 0.0, %v1979
  %v1981 = vpop.f32.mrf.mxu0
  %v1982 = vadd.f32 0.0, %v1981
  %1983 = vmatprep.mubr.f32.mxu0 0.0
  %1984 = vmatmul.mubr.f32.gmra.mxu0 %v1548
  %v1985 = vpop.f32.mrf.mxu0
  %v1986 = vadd.f32 0.0, %v1985
  %v1987 = vpop.f32.mrf.mxu0
  %v1988 = vadd.f32 0.0, %v1987
  %1989 = vmatprep.mubr.f32.mxu0 0.0
  %1990 = vmatmul.mubr.f32.gmra.mxu0 %v1551
  %v1991 = vpop.f32.mrf.mxu0
  %v1992 = vadd.f32 0.0, %v1991
  %v1993 = vpop.f32.mrf.mxu0
  %v1994 = vadd.f32 0.0, %v1993
  %1995 = vmatprep.mubr.f32.mxu0 0.0
  %1996 = vmatmul.mubr.f32.gmra.mxu0 %v1554
  %v1997 = vpop.f32.mrf.mxu0
  %v1998 = vadd.f32 0.0, %v1997
  %v1999 = vpop.f32.mrf.mxu0
  %v2000 = vadd.f32 0.0, %v1999
  %2001 = vmatprep.mubr.f32.mxu0 0.0
  %2002 = vmatmul.mubr.f32.gmra.mxu0 %v1557
  %v2003 = vpop.f32.mrf.mxu0
  %v2004 = vadd.f32 0.0, %v2003
  %v2005 = vpop.f32.mrf.mxu0
  %v2006 = vadd.f32 0.0, %v2005
  %2007 = vmatprep.mubr.f32.mxu0 0.0
  %2008 = vmatmul.mubr.f32.gmra.mxu0 %v1560
  %v2009 = vpop.f32.mrf.mxu0
  %v2010 = vadd.f32 0.0, %v2009
  %v2011 = vpop.f32.mrf.mxu0
  %v2012 = vadd.f32 0.0, %v2011
  %2013 = vmatprep.mubr.f32.mxu0 0.0
  %2014 = vmatmul.mubr.f32.gmra.mxu0 %v1563
  %v2015 = vpop.f32.mrf.mxu0
  %v2016 = vadd.f32 0.0, %v2015
  %v2017 = vpop.f32.mrf.mxu0
  %v2018 = vadd.f32 0.0, %v2017
  %2019 = vmatprep.mubr.f32.mxu0 0.0
  %2020 = vmatmul.mubr.f32.gmra.mxu0 %v1566
  %v2021 = vpop.f32.mrf.mxu0
  %v2022 = vadd.f32 0.0, %v2021
  %v2023 = vpop.f32.mrf.mxu0
  %v2024 = vadd.f32 0.0, %v2023
  %2025 = vmatprep.mubr.f32.mxu0 0.0
  %2026 = vmatmul.mubr.f32.gmra.mxu0 %v1569
  %v2027 = vpop.f32.mrf.mxu0
  %v2028 = vadd.f32 0.0, %v2027
  %v2029 = vpop.f32.mrf.mxu0
  %v2030 = vadd.f32 0.0, %v2029
  %2031 = vmatprep.mubr.f32.mxu0 0.0
  %2032 = vmatmul.mubr.f32.gmra.mxu0 %v1572
  %v2033 = vpop.f32.mrf.mxu0
  %v2034 = vadd.f32 0.0, %v2033
  %v2035 = vpop.f32.mrf.mxu0
  %v2036 = vadd.f32 0.0, %v2035
  %2037 = vmatprep.mubr.f32.mxu0 0.0
  %2038 = vmatmul.mubr.f32.gmra.mxu0 %v1575
  %v2039 = vpop.f32.mrf.mxu0
  %v2040 = vadd.f32 0.0, %v2039
  %v2041 = vpop.f32.mrf.mxu0
  %v2042 = vadd.f32 0.0, %v2041
  %2043 = vmatprep.mubr.f32.mxu0 0.0
  %2044 = vmatmul.mubr.f32.gmra.mxu0 %v1578
  %v2045 = vpop.f32.mrf.mxu0
  %v2046 = vadd.f32 0.0, %v2045
  %v2047 = vpop.f32.mrf.mxu0
  %v2048 = vadd.f32 0.0, %v2047
  %2049 = vmatprep.mubr.f32.mxu0 0.0
  %2050 = vmatmul.mubr.f32.gmra.mxu0 %v1581
  %v2051 = vpop.f32.mrf.mxu0
  %v2052 = vadd.f32 0.0, %v2051
  %v2053 = vpop.f32.mrf.mxu0
  %v2054 = vadd.f32 0.0, %v2053
  %2055 = vmatprep.mubr.f32.mxu0 0.0
  %2056 = vmatmul.mubr.f32.gmra.mxu0 %v1584
  %v2057 = vpop.f32.mrf.mxu0
  %v2058 = vadd.f32 0.0, %v2057
  %v2059 = vpop.f32.mrf.mxu0
  %v2060 = vadd.f32 0.0, %v2059
  %2061 = vmatprep.mubr.f32.mxu0 0.0
  %2062 = vmatmul.mubr.f32.gmra.mxu0 %v1587
  %v2063 = vpop.f32.mrf.mxu0
  %v2064 = vadd.f32 0.0, %v2063
  %v2065 = vpop.f32.mrf.mxu0
  %v2066 = vadd.f32 0.0, %v2065
  %2067 = vmatprep.mubr.f32.mxu0 0.0
  %2068 = vmatmul.mubr.f32.gmra.mxu0 %v1590
  %v2069 = vpop.f32.mrf.mxu0
  %v2070 = vadd.f32 0.0, %v2069
  %v2071 = vpop.f32.mrf.mxu0
  %v2072 = vadd.f32 0.0, %v2071
  %2073 = vmatprep.mubr.f32.mxu0 0.0
  %2074 = vmatmul.mubr.f32.gmra.mxu0 %v1593
  %v2075 = vpop.f32.mrf.mxu0
  %v2076 = vadd.f32 0.0, %v2075
  %v2077 = vpop.f32.mrf.mxu0
  %v2078 = vadd.f32 0.0, %v2077
  %2079 = vmatprep.mubr.f32.mxu0 0.0
  %2080 = vmatmul.mubr.f32.gmra.mxu0 %v1596
  %v2081 = vpop.f32.mrf.mxu0
  %v2082 = vadd.f32 0.0, %v2081
  %v2083 = vpop.f32.mrf.mxu0
  %v2084 = vadd.f32 0.0, %v2083
  %2085 = vmatprep.mubr.f32.mxu0 0.0
  %2086 = vmatmul.mubr.f32.gmra.mxu0 %v1599
  %v2087 = vpop.f32.mrf.mxu0
  %v2088 = vadd.f32 0.0, %v2087
  %v2089 = vpop.f32.mrf.mxu0
  %v2090 = vadd.f32 0.0, %v2089
  %2091 = vmatprep.mubr.f32.mxu0 0.0
  %2092 = vmatmul.mubr.f32.gmra.mxu0 %v1602
  %v2093 = vpop.f32.mrf.mxu0
  %v2094 = vadd.f32 0.0, %v2093
  %v2095 = vpop.f32.mrf.mxu0
  %v2096 = vadd.f32 0.0, %v2095
  %2097 = vmatprep.mubr.f32.mxu0 0.0
  %2098 = vmatmul.mubr.f32.gmra.mxu0 %v1605
  %v2099 = vpop.f32.mrf.mxu0
  %v2100 = vadd.f32 0.0, %v2099
  %v2101 = vpop.f32.mrf.mxu0
  %v2102 = vadd.f32 0.0, %v2101
  %2103 = vmatprep.mubr.f32.mxu0 0.0
  %2104 = vmatmul.mubr.f32.gmra.mxu0 %v1608
  %v2105 = vpop.f32.mrf.mxu0
  %v2106 = vadd.f32 0.0, %v2105
  %v2107 = vpop.f32.mrf.mxu0
  %v2108 = vadd.f32 0.0, %v2107
  %2109 = vmatprep.mubr.f32.mxu0 0.0
  %2110 = vmatmul.mubr.f32.gmra.mxu0 %v1611
  %v2111 = vpop.f32.mrf.mxu0
  %v2112 = vadd.f32 0.0, %v2111
  %v2113 = vpop.f32.mrf.mxu0
  %v2114 = vadd.f32 0.0, %v2113
  %2115 = vmatprep.mubr.f32.mxu0 0.0
  %2116 = vmatmul.mubr.f32.gmra.mxu0 %v1614
  %v2117 = vpop.f32.mrf.mxu0
  %v2118 = vadd.f32 0.0, %v2117
  %v2119 = vpop.f32.mrf.mxu0
  %v2120 = vadd.f32 0.0, %v2119
  %2121 = vmatprep.mubr.f32.mxu0 0.0
  %2122 = vmatmul.mubr.f32.gmra.mxu0 %v1617
  %v2123 = vpop.f32.mrf.mxu0
  %v2124 = vadd.f32 0.0, %v2123
  %v2125 = vpop.f32.mrf.mxu0
  %v2126 = vadd.f32 0.0, %v2125
  %2127 = vmatprep.mubr.f32.mxu0 0.0
  %2128 = vmatmul.mubr.f32.gmra.mxu0 %v1620
  %v2129 = vpop.f32.mrf.mxu0
  %v2130 = vadd.f32 0.0, %v2129
  %v2131 = vpop.f32.mrf.mxu0
  %v2132 = vadd.f32 0.0, %v2131
  %2133 = vmatprep.mubr.f32.mxu0 0.0
  %2134 = vmatmul.mubr.f32.gmra.mxu0 %v1623
  %v2135 = vpop.f32.mrf.mxu0
  %v2136 = vadd.f32 0.0, %v2135
  %v2137 = vpop.f32.mrf.mxu0
  %v2138 = vadd.f32 0.0, %v2137
  %2139 = vmatprep.mubr.f32.mxu0 0.0
  %2140 = vmatmul.mubr.f32.gmra.mxu0 %v1626
  %v2141 = vpop.f32.mrf.mxu0
  %v2142 = vadd.f32 0.0, %v2141
  %v2143 = vpop.f32.mrf.mxu0
  %v2144 = vadd.f32 0.0, %v2143
  %2145 = vmatprep.mubr.f32.mxu0 0.0
  %2146 = vmatmul.mubr.f32.gmra.mxu0 %v1629
  %v2147 = vpop.f32.mrf.mxu0
  %v2148 = vadd.f32 0.0, %v2147
  %v2149 = vpop.f32.mrf.mxu0
  %v2150 = vadd.f32 0.0, %v2149
  %2151 = vmatprep.mubr.f32.mxu0 0.0
  %2152 = vmatmul.mubr.f32.gmra.mxu0 %v1632
  %v2153 = vpop.f32.mrf.mxu0
  %v2154 = vadd.f32 0.0, %v2153
  %v2155 = vpop.f32.mrf.mxu0
  %v2156 = vadd.f32 0.0, %v2155
  %2157 = vmatprep.mubr.f32.mxu0 0.0
  %2158 = vmatmul.mubr.f32.gmra.mxu0 %v1635
  %v2159 = vpop.f32.mrf.mxu0
  %v2160 = vadd.f32 0.0, %v2159
  %v2161 = vpop.f32.mrf.mxu0
  %v2162 = vadd.f32 0.0, %v2161
  %2163 = vmatprep.mubr.f32.mxu0 0.0
  %2164 = vmatmul.mubr.f32.gmra.mxu0 %v1638
  %v2165 = vpop.f32.mrf.mxu0
  %v2166 = vadd.f32 0.0, %v2165
  %v2167 = vpop.f32.mrf.mxu0
  %v2168 = vadd.f32 0.0, %v2167
  %2169 = vmatprep.mubr.f32.mxu0 0.0
  %2170 = vmatmul.mubr.f32.gmra.mxu0 %v1641
  %v2171 = vpop.f32.mrf.mxu0
  %v2172 = vadd.f32 0.0, %v2171
  %v2173 = vpop.f32.mrf.mxu0
  %v2174 = vadd.f32 0.0, %v2173
  %2175 = vmatprep.mubr.f32.mxu0 0.0
  %2176 = vmatmul.mubr.f32.gmra.mxu0 %v1644
  %v2177 = vpop.f32.mrf.mxu0
  %v2178 = vadd.f32 0.0, %v2177
  %v2179 = vpop.f32.mrf.mxu0
  %v2180 = vadd.f32 0.0, %v2179
  %2181 = vmatprep.mubr.f32.mxu0 0.0
  %2182 = vmatmul.mubr.f32.gmra.mxu0 %v1647
  %v2183 = vpop.f32.mrf.mxu0
  %v2184 = vadd.f32 0.0, %v2183
  %v2185 = vpop.f32.mrf.mxu0
  %v2186 = vadd.f32 0.0, %v2185
  %2187 = vmatprep.mubr.f32.mxu0 0.0
  %2188 = vmatmul.mubr.f32.gmra.mxu0 %v1650
  %v2189 = vpop.f32.mrf.mxu0
  %v2190 = vadd.f32 0.0, %v2189
  %v2191 = vpop.f32.mrf.mxu0
  %v2192 = vadd.f32 0.0, %v2191
  %2193 = vmatprep.mubr.f32.mxu0 0.0
  %2194 = vmatmul.mubr.f32.gmra.mxu0 %v1653
  %v2195 = vpop.f32.mrf.mxu0
  %v2196 = vadd.f32 0.0, %v2195
  %v2197 = vpop.f32.mrf.mxu0
  %v2198 = vadd.f32 0.0, %v2197
  %2199 = vmatprep.mubr.f32.mxu0 0.0
  %2200 = vmatmul.mubr.f32.gmra.mxu0 %v1656
  %v2201 = vpop.f32.mrf.mxu0
  %v2202 = vadd.f32 0.0, %v2201
  %v2203 = vpop.f32.mrf.mxu0
  %v2204 = vadd.f32 0.0, %v2203
  %2205 = vmatprep.mubr.f32.mxu0 0.0
  %2206 = vmatmul.mubr.f32.gmra.mxu0 %v1659
  %v2207 = vpop.f32.mrf.mxu0
  %v2208 = vadd.f32 0.0, %v2207
  %v2209 = vpop.f32.mrf.mxu0
  %v2210 = vadd.f32 0.0, %v2209
  %2211 = vmatprep.mubr.f32.mxu0 0.0
  %2212 = vmatmul.mubr.f32.gmra.mxu0 %v1662
  %v2213 = vpop.f32.mrf.mxu0
  %v2214 = vadd.f32 0.0, %v2213
  %v2215 = vpop.f32.mrf.mxu0
  %v2216 = vadd.f32 0.0, %v2215
  %2217 = vmatprep.mubr.f32.mxu0 0.0
  %2218 = vmatmul.mubr.f32.gmra.mxu0 %v1665
  %v2219 = vpop.f32.mrf.mxu0
  %v2220 = vadd.f32 0.0, %v2219
  %v2221 = vpop.f32.mrf.mxu0
  %v2222 = vadd.f32 0.0, %v2221
  %2223 = vmatprep.mubr.f32.mxu0 0.0
  %2224 = vmatmul.mubr.f32.gmra.mxu0 %v1668
  %v2225 = vpop.f32.mrf.mxu0
  %v2226 = vadd.f32 0.0, %v2225
  %v2227 = vpop.f32.mrf.mxu0
  %v2228 = vadd.f32 0.0, %v2227
  %2229 = vmatprep.mubr.f32.mxu0 0.0
  %2230 = vmatmul.mubr.f32.gmra.mxu0 %v1671
  %v2231 = vpop.f32.mrf.mxu0
  %v2232 = vadd.f32 0.0, %v2231
  %v2233 = vpop.f32.mrf.mxu0
  %v2234 = vadd.f32 0.0, %v2233
  %2235 = vmatprep.mubr.f32.mxu0 0.0
  %2236 = vmatmul.mubr.f32.gmra.mxu0 %v1674
  %v2237 = vpop.f32.mrf.mxu0
  %v2238 = vadd.f32 0.0, %v2237
  %v2239 = vpop.f32.mrf.mxu0
  %v2240 = vadd.f32 0.0, %v2239
  %2241 = vmatprep.mubr.f32.mxu0 0.0
  %2242 = vmatmul.mubr.f32.gmra.mxu0 %v1677
  %v2243 = vpop.f32.mrf.mxu0
  %v2244 = vadd.f32 0.0, %v2243
  %v2245 = vpop.f32.mrf.mxu0
  %v2246 = vadd.f32 0.0, %v2245
  %2247 = vmatprep.mubr.f32.mxu0 0.0
  %2248 = vmatmul.mubr.f32.gmra.mxu0 %v1680
  %v2249 = vpop.f32.mrf.mxu0
  %v2250 = vadd.f32 0.0, %v2249
  %v2251 = vpop.f32.mrf.mxu0
  %v2252 = vadd.f32 0.0, %v2251
  %2253 = vmatprep.mubr.f32.mxu0 0.0
  %2254 = vmatmul.mubr.f32.gmra.mxu0 %v1683
  %v2255 = vpop.f32.mrf.mxu0
  %v2256 = vadd.f32 0.0, %v2255
  %v2257 = vpop.f32.mrf.mxu0
  %v2258 = vadd.f32 0.0, %v2257
  %2259 = vmatprep.mubr.f32.mxu0 0.0
  %2260 = vmatmul.mubr.f32.gmra.mxu0 %v1686
  %v2261 = vpop.f32.mrf.mxu0
  %v2262 = vadd.f32 0.0, %v2261
  %v2263 = vpop.f32.mrf.mxu0
  %v2264 = vadd.f32 0.0, %v2263
  %2265 = vmatprep.mubr.f32.mxu0 0.0
  %2266 = vmatmul.mubr.f32.gmra.mxu0 %v1689
  %v2267 = vpop.f32.mrf.mxu0
  %v2268 = vadd.f32 0.0, %v2267
  %v2269 = vpop.f32.mrf.mxu0
  %v2270 = vadd.f32 0.0, %v2269
  %2271 = vmatprep.mubr.f32.mxu0 0.0
  %2272 = vmatmul.mubr.f32.gmra.mxu0 %v1692
  %v2273 = vpop.f32.mrf.mxu0
  %v2274 = vadd.f32 0.0, %v2273
  %v2275 = vpop.f32.mrf.mxu0
  %v2276 = vadd.f32 0.0, %v2275
  %2277 = vmatprep.mubr.f32.mxu0 0.0
  %2278 = vmatmul.mubr.f32.gmra.mxu0 %v1695
  %v2279 = vpop.f32.mrf.mxu0
  %v2280 = vadd.f32 0.0, %v2279
  %v2281 = vpop.f32.mrf.mxu0
  %v2282 = vadd.f32 0.0, %v2281
  %2283 = vmatprep.mubr.f32.mxu0 0.0
  %2284 = vmatmul.mubr.f32.gmra.mxu0 %v1698
  %v2285 = vpop.f32.mrf.mxu0
  %v2286 = vadd.f32 0.0, %v2285
  %v2287 = vpop.f32.mrf.mxu0
  %v2288 = vadd.f32 0.0, %v2287
  %2289 = vmatprep.mubr.f32.mxu0 0.0
  %2290 = vmatmul.mubr.f32.gmra.mxu0 %v1701
  %v2291 = vpop.f32.mrf.mxu0
  %v2292 = vadd.f32 0.0, %v2291
  %v2293 = vpop.f32.mrf.mxu0
  %v2294 = vadd.f32 0.0, %v2293
  %2295 = vmatprep.mubr.f32.mxu0 0.0
  %2296 = vmatmul.mubr.f32.gmra.mxu0 %v1704
  %v2297 = vpop.f32.mrf.mxu0
  %v2298 = vadd.f32 0.0, %v2297
  %v2299 = vpop.f32.mrf.mxu0
  %v2300 = vadd.f32 0.0, %v2299
  %2301 = vmatprep.mubr.f32.mxu0 0.0
  %2302 = vmatmul.mubr.f32.gmra.mxu0 %v1707
  %v2303 = vpop.f32.mrf.mxu0
  %v2304 = vadd.f32 0.0, %v2303
  %v2305 = vpop.f32.mrf.mxu0
  %v2306 = vadd.f32 0.0, %v2305
  %2307 = vmatprep.mubr.f32.mxu0 0.0
  %2308 = vmatmul.mubr.f32.gmra.mxu0 %v1710
  %v2309 = vpop.f32.mrf.mxu0
  %v2310 = vadd.f32 0.0, %v2309
  %v2311 = vpop.f32.mrf.mxu0
  %v2312 = vadd.f32 0.0, %v2311
  %2313 = vmatprep.mubr.f32.mxu0 0.0
  %2314 = vmatmul.mubr.f32.gmra.mxu0 %v1713
  %v2315 = vpop.f32.mrf.mxu0
  %v2316 = vadd.f32 0.0, %v2315
  %v2317 = vpop.f32.mrf.mxu0
  %v2318 = vadd.f32 0.0, %v2317
  %2319 = vmatprep.mubr.f32.mxu0 0.0
  %2320 = vmatmul.mubr.f32.gmra.mxu0 %v1716
  %v2321 = vpop.f32.mrf.mxu0
  %v2322 = vadd.f32 0.0, %v2321
  %v2323 = vpop.f32.mrf.mxu0
  %v2324 = vadd.f32 0.0, %v2323
  %2325 = vmatprep.mubr.f32.mxu0 0.0
  %2326 = vmatmul.mubr.f32.gmra.mxu0 %v1719
  %v2327 = vpop.f32.mrf.mxu0
  %v2328 = vadd.f32 0.0, %v2327
  %v2329 = vpop.f32.mrf.mxu0
  %v2330 = vadd.f32 0.0, %v2329
  %2331 = vmatprep.mubr.f32.mxu0 0.0
  %2332 = vmatmul.mubr.f32.gmra.mxu0 %v1722
  %v2333 = vpop.f32.mrf.mxu0
  %v2334 = vadd.f32 0.0, %v2333
  %v2335 = vpop.f32.mrf.mxu0
  %v2336 = vadd.f32 0.0, %v2335
  %2337 = vmatprep.mubr.f32.mxu0 0.0
  %2338 = vmatmul.mubr.f32.gmra.mxu0 %v1725
  %v2339 = vpop.f32.mrf.mxu0
  %v2340 = vadd.f32 0.0, %v2339
  %v2341 = vpop.f32.mrf.mxu0
  %v2342 = vadd.f32 0.0, %v2341
  %2343 = vmatprep.mubr.f32.mxu0 0.0
  %2344 = vmatmul.mubr.f32.gmra.mxu0 %v1728
  %v2345 = vpop.f32.mrf.mxu0
  %v2346 = vadd.f32 0.0, %v2345
  %v2347 = vpop.f32.mrf.mxu0
  %v2348 = vadd.f32 0.0, %v2347
  %2349 = vmatprep.mubr.f32.mxu0 0.0
  %2350 = vmatmul.mubr.f32.gmra.mxu0 %v1731
  %v2351 = vpop.f32.mrf.mxu0
  %v2352 = vadd.f32 0.0, %v2351
  %v2353 = vpop.f32.mrf.mxu0
  %v2354 = vadd.f32 0.0, %v2353
  %2355 = vmatprep.mubr.f32.mxu0 0.0
  %2356 = vmatmul.mubr.f32.gmra.mxu0 %v1734
  %v2357 = vpop.f32.mrf.mxu0
  %v2358 = vadd.f32 0.0, %v2357
  %v2359 = vpop.f32.mrf.mxu0
  %v2360 = vadd.f32 0.0, %v2359
  %2361 = vmatprep.mubr.f32.mxu0 0.0
  %2362 = vmatmul.mubr.f32.gmra.mxu0 %v1737
  %v2363 = vpop.f32.mrf.mxu0
  %v2364 = vadd.f32 0.0, %v2363
  %v2365 = vpop.f32.mrf.mxu0
  %v2366 = vadd.f32 0.0, %v2365
  %2367 = vmatprep.mubr.f32.mxu0 0.0
  %2368 = vmatmul.mubr.f32.gmra.mxu0 %v1740
  %v2369 = vpop.f32.mrf.mxu0
  %v2370 = vadd.f32 0.0, %v2369
  %v2371 = vpop.f32.mrf.mxu0
  %v2372 = vadd.f32 0.0, %v2371
  %2373 = vmatprep.mubr.f32.mxu0 0.0
  %2374 = vmatmul.mubr.f32.gmra.mxu0 %v1743
  %v2375 = vpop.f32.mrf.mxu0
  %v2376 = vadd.f32 0.0, %v2375
  %v2377 = vpop.f32.mrf.mxu0
  %v2378 = vadd.f32 0.0, %v2377
  %2379 = vmatprep.mubr.f32.mxu0 0.0
  %2380 = vmatmul.mubr.f32.gmra.mxu0 %v1746
  %v2381 = vpop.f32.mrf.mxu0
  %v2382 = vadd.f32 0.0, %v2381
  %v2383 = vpop.f32.mrf.mxu0
  %v2384 = vadd.f32 0.0, %v2383
  %2385 = vmatprep.mubr.f32.mxu0 0.0
  %2386 = vmatmul.mubr.f32.gmra.mxu0 %v1749
  %v2387 = vpop.f32.mrf.mxu0
  %v2388 = vadd.f32 0.0, %v2387
  %v2389 = vpop.f32.mrf.mxu0
  %v2390 = vadd.f32 0.0, %v2389
  %2391 = vdwg.mxu0
  %v2393 = vsel %vm425, %v1290, 0
  %v2396 = vsel %vm425, %v1291, 0
  %v2399 = vsel %vm425, %v1292, 0
  %v2402 = vsel %vm425, %v1293, 0
  %v2405 = vsel %vm425, %v1294, 0
  %v2408 = vsel %vm425, %v1295, 0
  %v2411 = vsel %vm425, %v1296, 0
  %v2414 = vsel %vm425, %v1297, 0
  %v2417 = vsel %vm425, %v1298, 0
  %v2420 = vsel %vm425, %v1299, 0
  %v2423 = vsel %vm425, %v1300, 0
  %v2426 = vsel %vm425, %v1301, 0
  %v2429 = vsel %vm425, %v1302, 0
  %v2432 = vsel %vm425, %v1303, 0
  %v2435 = vsel %vm425, %v1304, 0
  %v2438 = vsel %vm425, %v1305, 0
  %v2441 = vsel %vm425, %v1306, 0
  %v2444 = vsel %vm425, %v1307, 0
  %v2447 = vsel %vm425, %v1308, 0
  %v2450 = vsel %vm425, %v1309, 0
  %v2453 = vsel %vm425, %v1310, 0
  %v2456 = vsel %vm425, %v1311, 0
  %v2459 = vsel %vm425, %v1312, 0
  %v2462 = vsel %vm425, %v1313, 0
  %v2465 = vsel %vm425, %v1314, 0
  %v2468 = vsel %vm425, %v1315, 0
  %v2471 = vsel %vm425, %v1316, 0
  %v2474 = vsel %vm425, %v1317, 0
  %v2477 = vsel %vm425, %v1318, 0
  %v2480 = vsel %vm425, %v1319, 0
  %v2483 = vsel %vm425, %v1320, 0
  %v2486 = vsel %vm425, %v1321, 0
  %v2489 = vsel %vm425, %v1322, 0
  %v2492 = vsel %vm425, %v1323, 0
  %v2495 = vsel %vm425, %v1324, 0
  %v2498 = vsel %vm425, %v1325, 0
  %v2501 = vsel %vm425, %v1326, 0
  %v2504 = vsel %vm425, %v1327, 0
  %v2507 = vsel %vm425, %v1328, 0
  %v2510 = vsel %vm425, %v1329, 0
  %v2513 = vsel %vm425, %v1330, 0
  %v2516 = vsel %vm425, %v1331, 0
  %v2519 = vsel %vm425, %v1332, 0
  %v2522 = vsel %vm425, %v1333, 0
  %v2525 = vsel %vm425, %v1334, 0
  %v2528 = vsel %vm425, %v1335, 0
  %v2531 = vsel %vm425, %v1336, 0
  %v2534 = vsel %vm425, %v1337, 0
  %v2537 = vsel %vm425, %v1338, 0
  %v2540 = vsel %vm425, %v1339, 0
  %v2543 = vsel %vm425, %v1340, 0
  %v2546 = vsel %vm425, %v1341, 0
  %v2549 = vsel %vm425, %v1342, 0
  %v2552 = vsel %vm425, %v1343, 0
  %v2555 = vsel %vm425, %v1344, 0
  %v2558 = vsel %vm425, %v1345, 0
  %v2561 = vsel %vm425, %v1346, 0
  %v2564 = vsel %vm425, %v1347, 0
  %v2567 = vsel %vm425, %v1348, 0
  %v2570 = vsel %vm425, %v1349, 0
  %v2573 = vsel %vm425, %v1350, 0
  %v2576 = vsel %vm425, %v1351, 0
  %v2579 = vsel %vm425, %v1352, 0
  %v2582 = vsel %vm425, %v1353, 0
  %v2585 = vsel %vm425, %v1354, 0
  %v2588 = vsel %vm425, %v1355, 0
  %v2591 = vsel %vm425, %v1356, 0
  %v2594 = vsel %vm425, %v1357, 0
  %v2597 = vsel %vm425, %v1358, 0
  %v2600 = vsel %vm425, %v1359, 0
  %v2603 = vsel %vm425, %v1360, 0
  %v2606 = vsel %vm425, %v1361, 0
  %v2609 = vsel %vm425, %v1362, 0
  %v2612 = vsel %vm425, %v1363, 0
  %v2615 = vsel %vm425, %v1364, 0
  %v2618 = vsel %vm425, %v1365, 0
  %v2621 = vsel %vm425, %v1366, 0
  %v2624 = vsel %vm425, %v1367, 0
  %v2627 = vsel %vm425, %v1368, 0
  %v2630 = vsel %vm425, %v1369, 0
  %v2633 = vsel %vm425, %v1370, 0
  %v2636 = vsel %vm425, %v1371, 0
  %v2639 = vsel %vm425, %v1372, 0
  %v2642 = vsel %vm425, %v1373, 0
  %v2645 = vsel %vm425, %v1374, 0
  %v2648 = vsel %vm425, %v1375, 0
  %v2651 = vsel %vm425, %v1376, 0
  %v2654 = vsel %vm425, %v1377, 0
  %v2657 = vsel %vm425, %v1378, 0
  %v2660 = vsel %vm425, %v1379, 0
  %v2663 = vsel %vm425, %v1380, 0
  %v2666 = vsel %vm425, %v1381, 0
  %v2669 = vsel %vm425, %v1382, 0
  %v2672 = vsel %vm425, %v1383, 0
  %v2675 = vsel %vm425, %v1384, 0
  %v2678 = vsel %vm425, %v1385, 0
  %2680 = vmatprep.subr.mxu0 0.0
  %2681 = vmatpush1.msra.mxu0 0.0
  %2682 = vmatprep.subr.mxu0 0.0
  %2683 = vmatpush1.msra.mxu0 0.0
  %2684 = vmatprep.subr.mxu0 0.0
  %2685 = vmatpush1.msra.mxu0 0.0
  %2686 = vmatprep.subr.mxu0 0.0
  %2687 = vmatpush1.msra.mxu0 0.0
  %2688 = vmatprep.subr.mxu0 0.0
  %2689 = vmatpush1.msra.mxu0 0.0
  %2690 = vmatprep.subr.mxu0 0.0
  %2691 = vmatpush1.msra.mxu0 0.0
  %2692 = vmatprep.subr.mxu0 0.0
  %2693 = vmatpush1.msra.mxu0 0.0
  %2694 = vmatprep.subr.mxu0 0.0
  %2695 = vmatpush1.msra.mxu0 0.0
  %2696 = vmatprep.subr.mxu0 0.0
  %2697 = vmatpush1.msra.mxu0 0.0
  %2698 = vmatprep.subr.mxu0 0.0
  %2699 = vmatpush1.msra.mxu0 0.0
  %2700 = vmatprep.subr.mxu0 0.0
  %2701 = vmatpush1.msra.mxu0 0.0
  %2702 = vmatprep.subr.mxu0 0.0
  %2703 = vmatpush1.msra.mxu0 0.0
  %2704 = vmatprep.subr.mxu0 %v1462
  %2705 = vmatpush1.msra.mxu0 %v1461
  %2706 = vmatprep.subr.mxu0 %v1460
  %2707 = vmatpush1.msra.mxu0 %v1459
  %2708 = vmatprep.subr.mxu0 %v1458
  %2709 = vmatpush1.msra.mxu0 %v1457
  %2710 = vmatprep.subr.mxu0 %v1456
  %2711 = vmatpush1.msra.mxu0 %v1455
  %2712 = vmatprep.subr.mxu0 0.0
  %2713 = vmatpush2.msra.mxu0 0.0
  %2714 = vmatprep.subr.mxu0 0.0
  %2715 = vmatpush2.msra.mxu0 0.0
  %2716 = vmatprep.subr.mxu0 0.0
  %2717 = vmatpush2.msra.mxu0 0.0
  %2718 = vmatprep.subr.mxu0 0.0
  %2719 = vmatpush2.msra.mxu0 0.0
  %2720 = vmatprep.subr.mxu0 0.0
  %2721 = vmatpush2.msra.mxu0 0.0
  %2722 = vmatprep.subr.mxu0 0.0
  %2723 = vmatpush2.msra.mxu0 0.0
  %2724 = vmatprep.subr.mxu0 0.0
  %2725 = vmatpush2.msra.mxu0 0.0
  %2726 = vmatprep.subr.mxu0 0.0
  %2727 = vmatpush2.msra.mxu0 0.0
  %2728 = vmatprep.subr.mxu0 0.0
  %2729 = vmatpush2.msra.mxu0 0.0
  %2730 = vmatprep.subr.mxu0 0.0
  %2731 = vmatpush2.msra.mxu0 0.0
  %2732 = vmatprep.subr.mxu0 0.0
  %2733 = vmatpush2.msra.mxu0 0.0
  %2734 = vmatprep.subr.mxu0 0.0
  %2735 = vmatpush2.msra.mxu0 0.0
  %2736 = vmatprep.subr.mxu0 0.0
  %2737 = vmatpush2.msra.mxu0 0.0
  %2738 = vmatprep.subr.mxu0 0.0
  %2739 = vmatpush2.msra.mxu0 0.0
  %2740 = vmatprep.subr.mxu0 0.0
  %2741 = vmatpush2.msra.mxu0 0.0
  %2742 = vmatprep.subr.mxu0 0.0
  %2743 = vmatpush2.msra.mxu0 0.0
  %2744 = vmatprep.mubr.f32.mxu0 0.0
  %2745 = vmatmul.mubr.f32.gmra.mxu0 %v2393
  %v2746 = vpop.f32.mrf.mxu0
  %v2747 = vadd.f32 0.0, %v2746
  %v2748 = vpop.f32.mrf.mxu0
  %v2749 = vadd.f32 0.0, %v2748
  %2750 = vmatprep.mubr.f32.mxu0 0.0
  %2751 = vmatmul.mubr.f32.gmra.mxu0 %v2396
  %v2752 = vpop.f32.mrf.mxu0
  %v2753 = vadd.f32 0.0, %v2752
  %v2754 = vpop.f32.mrf.mxu0
  %v2755 = vadd.f32 0.0, %v2754
  %2756 = vmatprep.mubr.f32.mxu0 0.0
  %2757 = vmatmul.mubr.f32.gmra.mxu0 %v2399
  %v2758 = vpop.f32.mrf.mxu0
  %v2759 = vadd.f32 0.0, %v2758
  %v2760 = vpop.f32.mrf.mxu0
  %v2761 = vadd.f32 0.0, %v2760
  %2762 = vmatprep.mubr.f32.mxu0 0.0
  %2763 = vmatmul.mubr.f32.gmra.mxu0 %v2402
  %v2764 = vpop.f32.mrf.mxu0
  %v2765 = vadd.f32 0.0, %v2764
  %v2766 = vpop.f32.mrf.mxu0
  %v2767 = vadd.f32 0.0, %v2766
  %2768 = vmatprep.mubr.f32.mxu0 0.0
  %2769 = vmatmul.mubr.f32.gmra.mxu0 %v2405
  %v2770 = vpop.f32.mrf.mxu0
  %v2771 = vadd.f32 0.0, %v2770
  %v2772 = vpop.f32.mrf.mxu0
  %v2773 = vadd.f32 0.0, %v2772
  %2774 = vmatprep.mubr.f32.mxu0 0.0
  %2775 = vmatmul.mubr.f32.gmra.mxu0 %v2408
  %v2776 = vpop.f32.mrf.mxu0
  %v2777 = vadd.f32 0.0, %v2776
  %v2778 = vpop.f32.mrf.mxu0
  %v2779 = vadd.f32 0.0, %v2778
  %2780 = vmatprep.mubr.f32.mxu0 0.0
  %2781 = vmatmul.mubr.f32.gmra.mxu0 %v2411
  %v2782 = vpop.f32.mrf.mxu0
  %v2783 = vadd.f32 0.0, %v2782
  %v2784 = vpop.f32.mrf.mxu0
  %v2785 = vadd.f32 0.0, %v2784
  %2786 = vmatprep.mubr.f32.mxu0 0.0
  %2787 = vmatmul.mubr.f32.gmra.mxu0 %v2414
  %v2788 = vpop.f32.mrf.mxu0
  %v2789 = vadd.f32 0.0, %v2788
  %v2790 = vpop.f32.mrf.mxu0
  %v2791 = vadd.f32 0.0, %v2790
  %2792 = vmatprep.mubr.f32.mxu0 0.0
  %2793 = vmatmul.mubr.f32.gmra.mxu0 %v2417
  %v2794 = vpop.f32.mrf.mxu0
  %v2795 = vadd.f32 0.0, %v2794
  %v2796 = vpop.f32.mrf.mxu0
  %v2797 = vadd.f32 0.0, %v2796
  %2798 = vmatprep.mubr.f32.mxu0 0.0
  %2799 = vmatmul.mubr.f32.gmra.mxu0 %v2420
  %v2800 = vpop.f32.mrf.mxu0
  %v2801 = vadd.f32 0.0, %v2800
  %v2802 = vpop.f32.mrf.mxu0
  %v2803 = vadd.f32 0.0, %v2802
  %2804 = vmatprep.mubr.f32.mxu0 0.0
  %2805 = vmatmul.mubr.f32.gmra.mxu0 %v2423
  %v2806 = vpop.f32.mrf.mxu0
  %v2807 = vadd.f32 0.0, %v2806
  %v2808 = vpop.f32.mrf.mxu0
  %v2809 = vadd.f32 0.0, %v2808
  %2810 = vmatprep.mubr.f32.mxu0 0.0
  %2811 = vmatmul.mubr.f32.gmra.mxu0 %v2426
  %v2812 = vpop.f32.mrf.mxu0
  %v2813 = vadd.f32 0.0, %v2812
  %v2814 = vpop.f32.mrf.mxu0
  %v2815 = vadd.f32 0.0, %v2814
  %2816 = vmatprep.mubr.f32.mxu0 0.0
  %2817 = vmatmul.mubr.f32.gmra.mxu0 %v2429
  %v2818 = vpop.f32.mrf.mxu0
  %v2819 = vadd.f32 0.0, %v2818
  %v2820 = vpop.f32.mrf.mxu0
  %v2821 = vadd.f32 0.0, %v2820
  %2822 = vmatprep.mubr.f32.mxu0 0.0
  %2823 = vmatmul.mubr.f32.gmra.mxu0 %v2432
  %v2824 = vpop.f32.mrf.mxu0
  %v2825 = vadd.f32 0.0, %v2824
  %v2826 = vpop.f32.mrf.mxu0
  %v2827 = vadd.f32 0.0, %v2826
  %2828 = vmatprep.mubr.f32.mxu0 0.0
  %2829 = vmatmul.mubr.f32.gmra.mxu0 %v2435
  %v2830 = vpop.f32.mrf.mxu0
  %v2831 = vadd.f32 0.0, %v2830
  %v2832 = vpop.f32.mrf.mxu0
  %v2833 = vadd.f32 0.0, %v2832
  %2834 = vmatprep.mubr.f32.mxu0 0.0
  %2835 = vmatmul.mubr.f32.gmra.mxu0 %v2438
  %v2836 = vpop.f32.mrf.mxu0
  %v2837 = vadd.f32 0.0, %v2836
  %v2838 = vpop.f32.mrf.mxu0
  %v2839 = vadd.f32 0.0, %v2838
  %2840 = vmatprep.mubr.f32.mxu0 0.0
  %2841 = vmatmul.mubr.f32.gmra.mxu0 %v2441
  %v2842 = vpop.f32.mrf.mxu0
  %v2843 = vadd.f32 0.0, %v2842
  %v2844 = vpop.f32.mrf.mxu0
  %v2845 = vadd.f32 0.0, %v2844
  %2846 = vmatprep.mubr.f32.mxu0 0.0
  %2847 = vmatmul.mubr.f32.gmra.mxu0 %v2444
  %v2848 = vpop.f32.mrf.mxu0
  %v2849 = vadd.f32 0.0, %v2848
  %v2850 = vpop.f32.mrf.mxu0
  %v2851 = vadd.f32 0.0, %v2850
  %2852 = vmatprep.mubr.f32.mxu0 0.0
  %2853 = vmatmul.mubr.f32.gmra.mxu0 %v2447
  %v2854 = vpop.f32.mrf.mxu0
  %v2855 = vadd.f32 0.0, %v2854
  %v2856 = vpop.f32.mrf.mxu0
  %v2857 = vadd.f32 0.0, %v2856
  %2858 = vmatprep.mubr.f32.mxu0 0.0
  %2859 = vmatmul.mubr.f32.gmra.mxu0 %v2450
  %v2860 = vpop.f32.mrf.mxu0
  %v2861 = vadd.f32 0.0, %v2860
  %v2862 = vpop.f32.mrf.mxu0
  %v2863 = vadd.f32 0.0, %v2862
  %2864 = vmatprep.mubr.f32.mxu0 0.0
  %2865 = vmatmul.mubr.f32.gmra.mxu0 %v2453
  %v2866 = vpop.f32.mrf.mxu0
  %v2867 = vadd.f32 0.0, %v2866
  %v2868 = vpop.f32.mrf.mxu0
  %v2869 = vadd.f32 0.0, %v2868
  %2870 = vmatprep.mubr.f32.mxu0 0.0
  %2871 = vmatmul.mubr.f32.gmra.mxu0 %v2456
  %v2872 = vpop.f32.mrf.mxu0
  %v2873 = vadd.f32 0.0, %v2872
  %v2874 = vpop.f32.mrf.mxu0
  %v2875 = vadd.f32 0.0, %v2874
  %2876 = vmatprep.mubr.f32.mxu0 0.0
  %2877 = vmatmul.mubr.f32.gmra.mxu0 %v2459
  %v2878 = vpop.f32.mrf.mxu0
  %v2879 = vadd.f32 0.0, %v2878
  %v2880 = vpop.f32.mrf.mxu0
  %v2881 = vadd.f32 0.0, %v2880
  %2882 = vmatprep.mubr.f32.mxu0 0.0
  %2883 = vmatmul.mubr.f32.gmra.mxu0 %v2462
  %v2884 = vpop.f32.mrf.mxu0
  %v2885 = vadd.f32 0.0, %v2884
  %v2886 = vpop.f32.mrf.mxu0
  %v2887 = vadd.f32 0.0, %v2886
  %2888 = vmatprep.mubr.f32.mxu0 0.0
  %2889 = vmatmul.mubr.f32.gmra.mxu0 %v2465
  %v2890 = vpop.f32.mrf.mxu0
  %v2891 = vadd.f32 0.0, %v2890
  %v2892 = vpop.f32.mrf.mxu0
  %v2893 = vadd.f32 0.0, %v2892
  %2894 = vmatprep.mubr.f32.mxu0 0.0
  %2895 = vmatmul.mubr.f32.gmra.mxu0 %v2468
  %v2896 = vpop.f32.mrf.mxu0
  %v2897 = vadd.f32 0.0, %v2896
  %v2898 = vpop.f32.mrf.mxu0
  %v2899 = vadd.f32 0.0, %v2898
  %2900 = vmatprep.mubr.f32.mxu0 0.0
  %2901 = vmatmul.mubr.f32.gmra.mxu0 %v2471
  %v2902 = vpop.f32.mrf.mxu0
  %v2903 = vadd.f32 0.0, %v2902
  %v2904 = vpop.f32.mrf.mxu0
  %v2905 = vadd.f32 0.0, %v2904
  %2906 = vmatprep.mubr.f32.mxu0 0.0
  %2907 = vmatmul.mubr.f32.gmra.mxu0 %v2474
  %v2908 = vpop.f32.mrf.mxu0
  %v2909 = vadd.f32 0.0, %v2908
  %v2910 = vpop.f32.mrf.mxu0
  %v2911 = vadd.f32 0.0, %v2910
  %2912 = vmatprep.mubr.f32.mxu0 0.0
  %2913 = vmatmul.mubr.f32.gmra.mxu0 %v2477
  %v2914 = vpop.f32.mrf.mxu0
  %v2915 = vadd.f32 0.0, %v2914
  %v2916 = vpop.f32.mrf.mxu0
  %v2917 = vadd.f32 0.0, %v2916
  %2918 = vmatprep.mubr.f32.mxu0 0.0
  %2919 = vmatmul.mubr.f32.gmra.mxu0 %v2480
  %v2920 = vpop.f32.mrf.mxu0
  %v2921 = vadd.f32 0.0, %v2920
  %v2922 = vpop.f32.mrf.mxu0
  %v2923 = vadd.f32 0.0, %v2922
  %2924 = vmatprep.mubr.f32.mxu0 0.0
  %2925 = vmatmul.mubr.f32.gmra.mxu0 %v2483
  %v2926 = vpop.f32.mrf.mxu0
  %v2927 = vadd.f32 0.0, %v2926
  %v2928 = vpop.f32.mrf.mxu0
  %v2929 = vadd.f32 0.0, %v2928
  %2930 = vmatprep.mubr.f32.mxu0 0.0
  %2931 = vmatmul.mubr.f32.gmra.mxu0 %v2486
  %v2932 = vpop.f32.mrf.mxu0
  %v2933 = vadd.f32 0.0, %v2932
  %v2934 = vpop.f32.mrf.mxu0
  %v2935 = vadd.f32 0.0, %v2934
  %2936 = vmatprep.mubr.f32.mxu0 0.0
  %2937 = vmatmul.mubr.f32.gmra.mxu0 %v2489
  %v2938 = vpop.f32.mrf.mxu0
  %v2939 = vadd.f32 0.0, %v2938
  %v2940 = vpop.f32.mrf.mxu0
  %v2941 = vadd.f32 0.0, %v2940
  %2942 = vmatprep.mubr.f32.mxu0 0.0
  %2943 = vmatmul.mubr.f32.gmra.mxu0 %v2492
  %v2944 = vpop.f32.mrf.mxu0
  %v2945 = vadd.f32 0.0, %v2944
  %v2946 = vpop.f32.mrf.mxu0
  %v2947 = vadd.f32 0.0, %v2946
  %2948 = vmatprep.mubr.f32.mxu0 0.0
  %2949 = vmatmul.mubr.f32.gmra.mxu0 %v2495
  %v2950 = vpop.f32.mrf.mxu0
  %v2951 = vadd.f32 0.0, %v2950
  %v2952 = vpop.f32.mrf.mxu0
  %v2953 = vadd.f32 0.0, %v2952
  %2954 = vmatprep.mubr.f32.mxu0 0.0
  %2955 = vmatmul.mubr.f32.gmra.mxu0 %v2498
  %v2956 = vpop.f32.mrf.mxu0
  %v2957 = vadd.f32 0.0, %v2956
  %v2958 = vpop.f32.mrf.mxu0
  %v2959 = vadd.f32 0.0, %v2958
  %2960 = vmatprep.mubr.f32.mxu0 0.0
  %2961 = vmatmul.mubr.f32.gmra.mxu0 %v2501
  %v2962 = vpop.f32.mrf.mxu0
  %v2963 = vadd.f32 0.0, %v2962
  %v2964 = vpop.f32.mrf.mxu0
  %v2965 = vadd.f32 0.0, %v2964
  %2966 = vmatprep.mubr.f32.mxu0 0.0
  %2967 = vmatmul.mubr.f32.gmra.mxu0 %v2504
  %v2968 = vpop.f32.mrf.mxu0
  %v2969 = vadd.f32 0.0, %v2968
  %v2970 = vpop.f32.mrf.mxu0
  %v2971 = vadd.f32 0.0, %v2970
  %2972 = vmatprep.mubr.f32.mxu0 0.0
  %2973 = vmatmul.mubr.f32.gmra.mxu0 %v2507
  %v2974 = vpop.f32.mrf.mxu0
  %v2975 = vadd.f32 0.0, %v2974
  %v2976 = vpop.f32.mrf.mxu0
  %v2977 = vadd.f32 0.0, %v2976
  %2978 = vmatprep.mubr.f32.mxu0 0.0
  %2979 = vmatmul.mubr.f32.gmra.mxu0 %v2510
  %v2980 = vpop.f32.mrf.mxu0
  %v2981 = vadd.f32 0.0, %v2980
  %v2982 = vpop.f32.mrf.mxu0
  %v2983 = vadd.f32 0.0, %v2982
  %2984 = vmatprep.mubr.f32.mxu0 0.0
  %2985 = vmatmul.mubr.f32.gmra.mxu0 %v2513
  %v2986 = vpop.f32.mrf.mxu0
  %v2987 = vadd.f32 0.0, %v2986
  %v2988 = vpop.f32.mrf.mxu0
  %v2989 = vadd.f32 0.0, %v2988
  %2990 = vmatprep.mubr.f32.mxu0 0.0
  %2991 = vmatmul.mubr.f32.gmra.mxu0 %v2516
  %v2992 = vpop.f32.mrf.mxu0
  %v2993 = vadd.f32 0.0, %v2992
  %v2994 = vpop.f32.mrf.mxu0
  %v2995 = vadd.f32 0.0, %v2994
  %2996 = vmatprep.mubr.f32.mxu0 0.0
  %2997 = vmatmul.mubr.f32.gmra.mxu0 %v2519
  %v2998 = vpop.f32.mrf.mxu0
  %v2999 = vadd.f32 0.0, %v2998
  %v3000 = vpop.f32.mrf.mxu0
  %v3001 = vadd.f32 0.0, %v3000
  %3002 = vmatprep.mubr.f32.mxu0 0.0
  %3003 = vmatmul.mubr.f32.gmra.mxu0 %v2522
  %v3004 = vpop.f32.mrf.mxu0
  %v3005 = vadd.f32 0.0, %v3004
  %v3006 = vpop.f32.mrf.mxu0
  %v3007 = vadd.f32 0.0, %v3006
  %3008 = vmatprep.mubr.f32.mxu0 0.0
  %3009 = vmatmul.mubr.f32.gmra.mxu0 %v2525
  %v3010 = vpop.f32.mrf.mxu0
  %v3011 = vadd.f32 0.0, %v3010
  %v3012 = vpop.f32.mrf.mxu0
  %v3013 = vadd.f32 0.0, %v3012
  %3014 = vmatprep.mubr.f32.mxu0 0.0
  %3015 = vmatmul.mubr.f32.gmra.mxu0 %v2528
  %v3016 = vpop.f32.mrf.mxu0
  %v3017 = vadd.f32 0.0, %v3016
  %v3018 = vpop.f32.mrf.mxu0
  %v3019 = vadd.f32 0.0, %v3018
  %3020 = vmatprep.mubr.f32.mxu0 0.0
  %3021 = vmatmul.mubr.f32.gmra.mxu0 %v2531
  %v3022 = vpop.f32.mrf.mxu0
  %v3023 = vadd.f32 0.0, %v3022
  %v3024 = vpop.f32.mrf.mxu0
  %v3025 = vadd.f32 0.0, %v3024
  %3026 = vmatprep.mubr.f32.mxu0 0.0
  %3027 = vmatmul.mubr.f32.gmra.mxu0 %v2534
  %v3028 = vpop.f32.mrf.mxu0
  %v3029 = vadd.f32 0.0, %v3028
  %v3030 = vpop.f32.mrf.mxu0
  %v3031 = vadd.f32 0.0, %v3030
  %3032 = vmatprep.mubr.f32.mxu0 0.0
  %3033 = vmatmul.mubr.f32.gmra.mxu0 %v2537
  %v3034 = vpop.f32.mrf.mxu0
  %v3035 = vadd.f32 0.0, %v3034
  %v3036 = vpop.f32.mrf.mxu0
  %v3037 = vadd.f32 0.0, %v3036
  %3038 = vmatprep.mubr.f32.mxu0 0.0
  %3039 = vmatmul.mubr.f32.gmra.mxu0 %v2540
  %v3040 = vpop.f32.mrf.mxu0
  %v3041 = vadd.f32 0.0, %v3040
  %v3042 = vpop.f32.mrf.mxu0
  %v3043 = vadd.f32 0.0, %v3042
  %3044 = vmatprep.mubr.f32.mxu0 0.0
  %3045 = vmatmul.mubr.f32.gmra.mxu0 %v2543
  %v3046 = vpop.f32.mrf.mxu0
  %v3047 = vadd.f32 0.0, %v3046
  %v3048 = vpop.f32.mrf.mxu0
  %v3049 = vadd.f32 0.0, %v3048
  %3050 = vmatprep.mubr.f32.mxu0 0.0
  %3051 = vmatmul.mubr.f32.gmra.mxu0 %v2546
  %v3052 = vpop.f32.mrf.mxu0
  %v3053 = vadd.f32 0.0, %v3052
  %v3054 = vpop.f32.mrf.mxu0
  %v3055 = vadd.f32 0.0, %v3054
  %3056 = vmatprep.mubr.f32.mxu0 0.0
  %3057 = vmatmul.mubr.f32.gmra.mxu0 %v2549
  %v3058 = vpop.f32.mrf.mxu0
  %v3059 = vadd.f32 0.0, %v3058
  %v3060 = vpop.f32.mrf.mxu0
  %v3061 = vadd.f32 0.0, %v3060
  %3062 = vmatprep.mubr.f32.mxu0 0.0
  %3063 = vmatmul.mubr.f32.gmra.mxu0 %v2552
  %v3064 = vpop.f32.mrf.mxu0
  %v3065 = vadd.f32 0.0, %v3064
  %v3066 = vpop.f32.mrf.mxu0
  %v3067 = vadd.f32 0.0, %v3066
  %3068 = vmatprep.mubr.f32.mxu0 0.0
  %3069 = vmatmul.mubr.f32.gmra.mxu0 %v2555
  %v3070 = vpop.f32.mrf.mxu0
  %v3071 = vadd.f32 0.0, %v3070
  %v3072 = vpop.f32.mrf.mxu0
  %v3073 = vadd.f32 0.0, %v3072
  %3074 = vmatprep.mubr.f32.mxu0 0.0
  %3075 = vmatmul.mubr.f32.gmra.mxu0 %v2558
  %v3076 = vpop.f32.mrf.mxu0
  %v3077 = vadd.f32 0.0, %v3076
  %v3078 = vpop.f32.mrf.mxu0
  %v3079 = vadd.f32 0.0, %v3078
  %3080 = vmatprep.mubr.f32.mxu0 0.0
  %3081 = vmatmul.mubr.f32.gmra.mxu0 %v2561
  %v3082 = vpop.f32.mrf.mxu0
  %v3083 = vadd.f32 0.0, %v3082
  %v3084 = vpop.f32.mrf.mxu0
  %v3085 = vadd.f32 0.0, %v3084
  %3086 = vmatprep.mubr.f32.mxu0 0.0
  %3087 = vmatmul.mubr.f32.gmra.mxu0 %v2564
  %v3088 = vpop.f32.mrf.mxu0
  %v3089 = vadd.f32 0.0, %v3088
  %v3090 = vpop.f32.mrf.mxu0
  %v3091 = vadd.f32 0.0, %v3090
  %3092 = vmatprep.mubr.f32.mxu0 0.0
  %3093 = vmatmul.mubr.f32.gmra.mxu0 %v2567
  %v3094 = vpop.f32.mrf.mxu0
  %v3095 = vadd.f32 0.0, %v3094
  %v3096 = vpop.f32.mrf.mxu0
  %v3097 = vadd.f32 0.0, %v3096
  %3098 = vmatprep.mubr.f32.mxu0 0.0
  %3099 = vmatmul.mubr.f32.gmra.mxu0 %v2570
  %v3100 = vpop.f32.mrf.mxu0
  %v3101 = vadd.f32 0.0, %v3100
  %v3102 = vpop.f32.mrf.mxu0
  %v3103 = vadd.f32 0.0, %v3102
  %3104 = vmatprep.mubr.f32.mxu0 0.0
  %3105 = vmatmul.mubr.f32.gmra.mxu0 %v2573
  %v3106 = vpop.f32.mrf.mxu0
  %v3107 = vadd.f32 0.0, %v3106
  %v3108 = vpop.f32.mrf.mxu0
  %v3109 = vadd.f32 0.0, %v3108
  %3110 = vmatprep.mubr.f32.mxu0 0.0
  %3111 = vmatmul.mubr.f32.gmra.mxu0 %v2576
  %v3112 = vpop.f32.mrf.mxu0
  %v3113 = vadd.f32 0.0, %v3112
  %v3114 = vpop.f32.mrf.mxu0
  %v3115 = vadd.f32 0.0, %v3114
  %3116 = vmatprep.mubr.f32.mxu0 0.0
  %3117 = vmatmul.mubr.f32.gmra.mxu0 %v2579
  %v3118 = vpop.f32.mrf.mxu0
  %v3119 = vadd.f32 0.0, %v3118
  %v3120 = vpop.f32.mrf.mxu0
  %v3121 = vadd.f32 0.0, %v3120
  %3122 = vmatprep.mubr.f32.mxu0 0.0
  %3123 = vmatmul.mubr.f32.gmra.mxu0 %v2582
  %v3124 = vpop.f32.mrf.mxu0
  %v3125 = vadd.f32 0.0, %v3124
  %v3126 = vpop.f32.mrf.mxu0
  %v3127 = vadd.f32 0.0, %v3126
  %3128 = vmatprep.mubr.f32.mxu0 0.0
  %3129 = vmatmul.mubr.f32.gmra.mxu0 %v2585
  %v3130 = vpop.f32.mrf.mxu0
  %v3131 = vadd.f32 0.0, %v3130
  %v3132 = vpop.f32.mrf.mxu0
  %v3133 = vadd.f32 0.0, %v3132
  %3134 = vmatprep.mubr.f32.mxu0 0.0
  %3135 = vmatmul.mubr.f32.gmra.mxu0 %v2588
  %v3136 = vpop.f32.mrf.mxu0
  %v3137 = vadd.f32 0.0, %v3136
  %v3138 = vpop.f32.mrf.mxu0
  %v3139 = vadd.f32 0.0, %v3138
  %3140 = vmatprep.mubr.f32.mxu0 0.0
  %3141 = vmatmul.mubr.f32.gmra.mxu0 %v2591
  %v3142 = vpop.f32.mrf.mxu0
  %v3143 = vadd.f32 0.0, %v3142
  %v3144 = vpop.f32.mrf.mxu0
  %v3145 = vadd.f32 0.0, %v3144
  %3146 = vmatprep.mubr.f32.mxu0 0.0
  %3147 = vmatmul.mubr.f32.gmra.mxu0 %v2594
  %v3148 = vpop.f32.mrf.mxu0
  %v3149 = vadd.f32 0.0, %v3148
  %v3150 = vpop.f32.mrf.mxu0
  %v3151 = vadd.f32 0.0, %v3150
  %3152 = vmatprep.mubr.f32.mxu0 0.0
  %3153 = vmatmul.mubr.f32.gmra.mxu0 %v2597
  %v3154 = vpop.f32.mrf.mxu0
  %v3155 = vadd.f32 0.0, %v3154
  %v3156 = vpop.f32.mrf.mxu0
  %v3157 = vadd.f32 0.0, %v3156
  %3158 = vmatprep.mubr.f32.mxu0 0.0
  %3159 = vmatmul.mubr.f32.gmra.mxu0 %v2600
  %v3160 = vpop.f32.mrf.mxu0
  %v3161 = vadd.f32 0.0, %v3160
  %v3162 = vpop.f32.mrf.mxu0
  %v3163 = vadd.f32 0.0, %v3162
  %3164 = vmatprep.mubr.f32.mxu0 0.0
  %3165 = vmatmul.mubr.f32.gmra.mxu0 %v2603
  %v3166 = vpop.f32.mrf.mxu0
  %v3167 = vadd.f32 0.0, %v3166
  %v3168 = vpop.f32.mrf.mxu0
  %v3169 = vadd.f32 0.0, %v3168
  %3170 = vmatprep.mubr.f32.mxu0 0.0
  %3171 = vmatmul.mubr.f32.gmra.mxu0 %v2606
  %v3172 = vpop.f32.mrf.mxu0
  %v3173 = vadd.f32 0.0, %v3172
  %v3174 = vpop.f32.mrf.mxu0
  %v3175 = vadd.f32 0.0, %v3174
  %3176 = vmatprep.mubr.f32.mxu0 0.0
  %3177 = vmatmul.mubr.f32.gmra.mxu0 %v2609
  %v3178 = vpop.f32.mrf.mxu0
  %v3179 = vadd.f32 0.0, %v3178
  %v3180 = vpop.f32.mrf.mxu0
  %v3181 = vadd.f32 0.0, %v3180
  %3182 = vmatprep.mubr.f32.mxu0 0.0
  %3183 = vmatmul.mubr.f32.gmra.mxu0 %v2612
  %v3184 = vpop.f32.mrf.mxu0
  %v3185 = vadd.f32 0.0, %v3184
  %v3186 = vpop.f32.mrf.mxu0
  %v3187 = vadd.f32 0.0, %v3186
  %3188 = vmatprep.mubr.f32.mxu0 0.0
  %3189 = vmatmul.mubr.f32.gmra.mxu0 %v2615
  %v3190 = vpop.f32.mrf.mxu0
  %v3191 = vadd.f32 0.0, %v3190
  %v3192 = vpop.f32.mrf.mxu0
  %v3193 = vadd.f32 0.0, %v3192
  %3194 = vmatprep.mubr.f32.mxu0 0.0
  %3195 = vmatmul.mubr.f32.gmra.mxu0 %v2618
  %v3196 = vpop.f32.mrf.mxu0
  %v3197 = vadd.f32 0.0, %v3196
  %v3198 = vpop.f32.mrf.mxu0
  %v3199 = vadd.f32 0.0, %v3198
  %3200 = vmatprep.mubr.f32.mxu0 0.0
  %3201 = vmatmul.mubr.f32.gmra.mxu0 %v2621
  %v3202 = vpop.f32.mrf.mxu0
  %v3203 = vadd.f32 0.0, %v3202
  %v3204 = vpop.f32.mrf.mxu0
  %v3205 = vadd.f32 0.0, %v3204
  %3206 = vmatprep.mubr.f32.mxu0 0.0
  %3207 = vmatmul.mubr.f32.gmra.mxu0 %v2624
  %v3208 = vpop.f32.mrf.mxu0
  %v3209 = vadd.f32 0.0, %v3208
  %v3210 = vpop.f32.mrf.mxu0
  %v3211 = vadd.f32 0.0, %v3210
  %3212 = vmatprep.mubr.f32.mxu0 0.0
  %3213 = vmatmul.mubr.f32.gmra.mxu0 %v2627
  %v3214 = vpop.f32.mrf.mxu0
  %v3215 = vadd.f32 0.0, %v3214
  %v3216 = vpop.f32.mrf.mxu0
  %v3217 = vadd.f32 0.0, %v3216
  %3218 = vmatprep.mubr.f32.mxu0 0.0
  %3219 = vmatmul.mubr.f32.gmra.mxu0 %v2630
  %v3220 = vpop.f32.mrf.mxu0
  %v3221 = vadd.f32 0.0, %v3220
  %v3222 = vpop.f32.mrf.mxu0
  %v3223 = vadd.f32 0.0, %v3222
  %3224 = vmatprep.mubr.f32.mxu0 0.0
  %3225 = vmatmul.mubr.f32.gmra.mxu0 %v2633
  %v3226 = vpop.f32.mrf.mxu0
  %v3227 = vadd.f32 0.0, %v3226
  %v3228 = vpop.f32.mrf.mxu0
  %v3229 = vadd.f32 0.0, %v3228
  %3230 = vmatprep.mubr.f32.mxu0 0.0
  %3231 = vmatmul.mubr.f32.gmra.mxu0 %v2636
  %v3232 = vpop.f32.mrf.mxu0
  %v3233 = vadd.f32 0.0, %v3232
  %v3234 = vpop.f32.mrf.mxu0
  %v3235 = vadd.f32 0.0, %v3234
  %3236 = vmatprep.mubr.f32.mxu0 0.0
  %3237 = vmatmul.mubr.f32.gmra.mxu0 %v2639
  %v3238 = vpop.f32.mrf.mxu0
  %v3239 = vadd.f32 0.0, %v3238
  %v3240 = vpop.f32.mrf.mxu0
  %v3241 = vadd.f32 0.0, %v3240
  %3242 = vmatprep.mubr.f32.mxu0 0.0
  %3243 = vmatmul.mubr.f32.gmra.mxu0 %v2642
  %v3244 = vpop.f32.mrf.mxu0
  %v3245 = vadd.f32 0.0, %v3244
  %v3246 = vpop.f32.mrf.mxu0
  %v3247 = vadd.f32 0.0, %v3246
  %3248 = vmatprep.mubr.f32.mxu0 0.0
  %3249 = vmatmul.mubr.f32.gmra.mxu0 %v2645
  %v3250 = vpop.f32.mrf.mxu0
  %v3251 = vadd.f32 0.0, %v3250
  %v3252 = vpop.f32.mrf.mxu0
  %v3253 = vadd.f32 0.0, %v3252
  %3254 = vmatprep.mubr.f32.mxu0 0.0
  %3255 = vmatmul.mubr.f32.gmra.mxu0 %v2648
  %v3256 = vpop.f32.mrf.mxu0
  %v3257 = vadd.f32 0.0, %v3256
  %v3258 = vpop.f32.mrf.mxu0
  %v3259 = vadd.f32 0.0, %v3258
  %3260 = vmatprep.mubr.f32.mxu0 0.0
  %3261 = vmatmul.mubr.f32.gmra.mxu0 %v2651
  %v3262 = vpop.f32.mrf.mxu0
  %v3263 = vadd.f32 0.0, %v3262
  %v3264 = vpop.f32.mrf.mxu0
  %v3265 = vadd.f32 0.0, %v3264
  %3266 = vmatprep.mubr.f32.mxu0 0.0
  %3267 = vmatmul.mubr.f32.gmra.mxu0 %v2654
  %v3268 = vpop.f32.mrf.mxu0
  %v3269 = vadd.f32 0.0, %v3268
  %v3270 = vpop.f32.mrf.mxu0
  %v3271 = vadd.f32 0.0, %v3270
  %3272 = vmatprep.mubr.f32.mxu0 0.0
  %3273 = vmatmul.mubr.f32.gmra.mxu0 %v2657
  %v3274 = vpop.f32.mrf.mxu0
  %v3275 = vadd.f32 0.0, %v3274
  %v3276 = vpop.f32.mrf.mxu0
  %v3277 = vadd.f32 0.0, %v3276
  %3278 = vmatprep.mubr.f32.mxu0 0.0
  %3279 = vmatmul.mubr.f32.gmra.mxu0 %v2660
  %v3280 = vpop.f32.mrf.mxu0
  %v3281 = vadd.f32 0.0, %v3280
  %v3282 = vpop.f32.mrf.mxu0
  %v3283 = vadd.f32 0.0, %v3282
  %3284 = vmatprep.mubr.f32.mxu0 0.0
  %3285 = vmatmul.mubr.f32.gmra.mxu0 %v2663
  %v3286 = vpop.f32.mrf.mxu0
  %v3287 = vadd.f32 0.0, %v3286
  %v3288 = vpop.f32.mrf.mxu0
  %v3289 = vadd.f32 0.0, %v3288
  %3290 = vmatprep.mubr.f32.mxu0 0.0
  %3291 = vmatmul.mubr.f32.gmra.mxu0 %v2666
  %v3292 = vpop.f32.mrf.mxu0
  %v3293 = vadd.f32 0.0, %v3292
  %v3294 = vpop.f32.mrf.mxu0
  %v3295 = vadd.f32 0.0, %v3294
  %3296 = vmatprep.mubr.f32.mxu0 0.0
  %3297 = vmatmul.mubr.f32.gmra.mxu0 %v2669
  %v3298 = vpop.f32.mrf.mxu0
  %v3299 = vadd.f32 0.0, %v3298
  %v3300 = vpop.f32.mrf.mxu0
  %v3301 = vadd.f32 0.0, %v3300
  %3302 = vmatprep.mubr.f32.mxu0 0.0
  %3303 = vmatmul.mubr.f32.gmra.mxu0 %v2672
  %v3304 = vpop.f32.mrf.mxu0
  %v3305 = vadd.f32 0.0, %v3304
  %v3306 = vpop.f32.mrf.mxu0
  %v3307 = vadd.f32 0.0, %v3306
  %3308 = vmatprep.mubr.f32.mxu0 0.0
  %3309 = vmatmul.mubr.f32.gmra.mxu0 %v2675
  %v3310 = vpop.f32.mrf.mxu0
  %v3311 = vadd.f32 0.0, %v3310
  %v3312 = vpop.f32.mrf.mxu0
  %v3313 = vadd.f32 0.0, %v3312
  %3314 = vmatprep.mubr.f32.mxu0 0.0
  %3315 = vmatmul.mubr.f32.gmra.mxu0 %v2678
  %v3316 = vpop.f32.mrf.mxu0
  %v3317 = vadd.f32 0.0, %v3316
  %v3318 = vpop.f32.mrf.mxu0
  %v3319 = vadd.f32 0.0, %v3318
  %3320 = vdwg.mxu0
  %v3321 = vmax.f32 %v1818, %v1824
  %v3322 = vmax.f32 %v3321, %v1830
  %v3323 = vmax.f32 %v3322, %v1836
  %v3324 = vmax.f32 %v3323, %v1842
  %v3325 = vmax.f32 %v3324, %v1848
  %v3326 = vmax.f32 %v3325, %v1854
  %v3327 = vmax.f32 %v3326, %v1860
  %v3328 = vmax.f32 %v3327, %v1866
  %v3329 = vmax.f32 %v3328, %v1872
  %v3330 = vmax.f32 %v3329, %v1878
  %v3331 = vmax.f32 %v3330, %v1884
  %v3332 = vmax.f32 %v3331, %v1890
  %v3333 = vmax.f32 %v3332, %v1896
  %v3334 = vmax.f32 %v3333, %v1902
  %v3335 = vmax.f32 %v3334, %v1908
  %v3336 = vmax.f32 %v3335, %v1914
  %v3337 = vmax.f32 %v3336, %v1920
  %v3338 = vmax.f32 %v3337, %v1926
  %v3339 = vmax.f32 %v3338, %v1932
  %v3340 = vmax.f32 %v3339, %v1938
  %v3341 = vmax.f32 %v3340, %v1944
  %v3342 = vmax.f32 %v3341, %v1950
  %v3343 = vmax.f32 %v3342, %v1956
  %v3344 = vmax.f32 %v3343, %v1962
  %v3345 = vmax.f32 %v3344, %v1968
  %v3346 = vmax.f32 %v3345, %v1974
  %v3347 = vmax.f32 %v3346, %v1980
  %v3348 = vmax.f32 %v3347, %v1986
  %v3349 = vmax.f32 %v3348, %v1992
  %v3350 = vmax.f32 %v3349, %v1998
  %v3351 = vmax.f32 %v3350, %v2004
  %v3352 = vrot.slane %v3351, 4
  %v3353 = vmax.f32 %v3351, %v3352
  %v3354 = vrot.slane %v3353, 2
  %v3355 = vmax.f32 %v3353, %v3354
  %v3356 = vrot.slane %v3355, 1
  %v3357 = vmax.f32 %v3355, %v3356
  %v3358 = vmax.f32 %v1820, %v1826
  %v3359 = vmax.f32 %v3358, %v1832
  %v3360 = vmax.f32 %v3359, %v1838
  %v3361 = vmax.f32 %v3360, %v1844
  %v3362 = vmax.f32 %v3361, %v1850
  %v3363 = vmax.f32 %v3362, %v1856
  %v3364 = vmax.f32 %v3363, %v1862
  %v3365 = vmax.f32 %v3364, %v1868
  %v3366 = vmax.f32 %v3365, %v1874
  %v3367 = vmax.f32 %v3366, %v1880
  %v3368 = vmax.f32 %v3367, %v1886
  %v3369 = vmax.f32 %v3368, %v1892
  %v3370 = vmax.f32 %v3369, %v1898
  %v3371 = vmax.f32 %v3370, %v1904
  %v3372 = vmax.f32 %v3371, %v1910
  %v3373 = vmax.f32 %v3372, %v1916
  %v3374 = vmax.f32 %v3373, %v1922
  %v3375 = vmax.f32 %v3374, %v1928
  %v3376 = vmax.f32 %v3375, %v1934
  %v3377 = vmax.f32 %v3376, %v1940
  %v3378 = vmax.f32 %v3377, %v1946
  %v3379 = vmax.f32 %v3378, %v1952
  %v3380 = vmax.f32 %v3379, %v1958
  %v3381 = vmax.f32 %v3380, %v1964
  %v3382 = vmax.f32 %v3381, %v1970
  %v3383 = vmax.f32 %v3382, %v1976
  %v3384 = vmax.f32 %v3383, %v1982
  %v3385 = vmax.f32 %v3384, %v1988
  %v3386 = vmax.f32 %v3385, %v1994
  %v3387 = vmax.f32 %v3386, %v2000
  %v3388 = vmax.f32 %v3387, %v2006
  %v3389 = vrot.slane %v3388, 4
  %v3390 = vmax.f32 %v3388, %v3389
  %v3391 = vrot.slane %v3390, 2
  %v3392 = vmax.f32 %v3390, %v3391
  %v3393 = vrot.slane %v3392, 1
  %v3394 = vmax.f32 %v3392, %v3393
  %v3395 = vmax.f32 %v2010, %v2016
  %v3396 = vmax.f32 %v3395, %v2022
  %v3397 = vmax.f32 %v3396, %v2028
  %v3398 = vmax.f32 %v3397, %v2034
  %v3399 = vmax.f32 %v3398, %v2040
  %v3400 = vmax.f32 %v3399, %v2046
  %v3401 = vmax.f32 %v3400, %v2052
  %v3402 = vmax.f32 %v3401, %v2058
  %v3403 = vmax.f32 %v3402, %v2064
  %v3404 = vmax.f32 %v3403, %v2070
  %v3405 = vmax.f32 %v3404, %v2076
  %v3406 = vmax.f32 %v3405, %v2082
  %v3407 = vmax.f32 %v3406, %v2088
  %v3408 = vmax.f32 %v3407, %v2094
  %v3409 = vmax.f32 %v3408, %v2100
  %v3410 = vmax.f32 %v3409, %v2106
  %v3411 = vmax.f32 %v3410, %v2112
  %v3412 = vmax.f32 %v3411, %v2118
  %v3413 = vmax.f32 %v3412, %v2124
  %v3414 = vmax.f32 %v3413, %v2130
  %v3415 = vmax.f32 %v3414, %v2136
  %v3416 = vmax.f32 %v3415, %v2142
  %v3417 = vmax.f32 %v3416, %v2148
  %v3418 = vmax.f32 %v3417, %v2154
  %v3419 = vmax.f32 %v3418, %v2160
  %v3420 = vmax.f32 %v3419, %v2166
  %v3421 = vmax.f32 %v3420, %v2172
  %v3422 = vmax.f32 %v3421, %v2178
  %v3423 = vmax.f32 %v3422, %v2184
  %v3424 = vmax.f32 %v3423, %v2190
  %v3425 = vmax.f32 %v3424, %v2196
  %v3426 = vrot.slane %v3425, 4
  %v3427 = vmax.f32 %v3425, %v3426
  %v3428 = vrot.slane %v3427, 2
  %v3429 = vmax.f32 %v3427, %v3428
  %v3430 = vrot.slane %v3429, 1
  %v3431 = vmax.f32 %v3429, %v3430
  %v3432 = vmax.f32 %v2012, %v2018
  %v3433 = vmax.f32 %v3432, %v2024
  %v3434 = vmax.f32 %v3433, %v2030
  %v3435 = vmax.f32 %v3434, %v2036
  %v3436 = vmax.f32 %v3435, %v2042
  %v3437 = vmax.f32 %v3436, %v2048
  %v3438 = vmax.f32 %v3437, %v2054
  %v3439 = vmax.f32 %v3438, %v2060
  %v3440 = vmax.f32 %v3439, %v2066
  %v3441 = vmax.f32 %v3440, %v2072
  %v3442 = vmax.f32 %v3441, %v2078
  %v3443 = vmax.f32 %v3442, %v2084
  %v3444 = vmax.f32 %v3443, %v2090
  %v3445 = vmax.f32 %v3444, %v2096
  %v3446 = vmax.f32 %v3445, %v2102
  %v3447 = vmax.f32 %v3446, %v2108
  %v3448 = vmax.f32 %v3447, %v2114
  %v3449 = vmax.f32 %v3448, %v2120
  %v3450 = vmax.f32 %v3449, %v2126
  %v3451 = vmax.f32 %v3450, %v2132
  %v3452 = vmax.f32 %v3451, %v2138
  %v3453 = vmax.f32 %v3452, %v2144
  %v3454 = vmax.f32 %v3453, %v2150
  %v3455 = vmax.f32 %v3454, %v2156
  %v3456 = vmax.f32 %v3455, %v2162
  %v3457 = vmax.f32 %v3456, %v2168
  %v3458 = vmax.f32 %v3457, %v2174
  %v3459 = vmax.f32 %v3458, %v2180
  %v3460 = vmax.f32 %v3459, %v2186
  %v3461 = vmax.f32 %v3460, %v2192
  %v3462 = vmax.f32 %v3461, %v2198
  %v3463 = vrot.slane %v3462, 4
  %v3464 = vmax.f32 %v3462, %v3463
  %v3465 = vrot.slane %v3464, 2
  %v3466 = vmax.f32 %v3464, %v3465
  %v3467 = vrot.slane %v3466, 1
  %v3468 = vmax.f32 %v3466, %v3467
  %v3469 = vmax.f32 %v2202, %v2208
  %v3470 = vmax.f32 %v3469, %v2214
  %v3471 = vmax.f32 %v3470, %v2220
  %v3472 = vmax.f32 %v3471, %v2226
  %v3473 = vmax.f32 %v3472, %v2232
  %v3474 = vmax.f32 %v3473, %v2238
  %v3475 = vmax.f32 %v3474, %v2244
  %v3476 = vmax.f32 %v3475, %v2250
  %v3477 = vmax.f32 %v3476, %v2256
  %v3478 = vmax.f32 %v3477, %v2262
  %v3479 = vmax.f32 %v3478, %v2268
  %v3480 = vmax.f32 %v3479, %v2274
  %v3481 = vmax.f32 %v3480, %v2280
  %v3482 = vmax.f32 %v3481, %v2286
  %v3483 = vmax.f32 %v3482, %v2292
  %v3484 = vmax.f32 %v3483, %v2298
  %v3485 = vmax.f32 %v3484, %v2304
  %v3486 = vmax.f32 %v3485, %v2310
  %v3487 = vmax.f32 %v3486, %v2316
  %v3488 = vmax.f32 %v3487, %v2322
  %v3489 = vmax.f32 %v3488, %v2328
  %v3490 = vmax.f32 %v3489, %v2334
  %v3491 = vmax.f32 %v3490, %v2340
  %v3492 = vmax.f32 %v3491, %v2346
  %v3493 = vmax.f32 %v3492, %v2352
  %v3494 = vmax.f32 %v3493, %v2358
  %v3495 = vmax.f32 %v3494, %v2364
  %v3496 = vmax.f32 %v3495, %v2370
  %v3497 = vmax.f32 %v3496, %v2376
  %v3498 = vmax.f32 %v3497, %v2382
  %v3499 = vmax.f32 %v3498, %v2388
  %v3500 = vrot.slane %v3499, 4
  %v3501 = vmax.f32 %v3499, %v3500
  %v3502 = vrot.slane %v3501, 2
  %v3503 = vmax.f32 %v3501, %v3502
  %v3504 = vrot.slane %v3503, 1
  %v3505 = vmax.f32 %v3503, %v3504
  %v3506 = vmax.f32 %v2204, %v2210
  %v3507 = vmax.f32 %v3506, %v2216
  %v3508 = vmax.f32 %v3507, %v2222
  %v3509 = vmax.f32 %v3508, %v2228
  %v3510 = vmax.f32 %v3509, %v2234
  %v3511 = vmax.f32 %v3510, %v2240
  %v3512 = vmax.f32 %v3511, %v2246
  %v3513 = vmax.f32 %v3512, %v2252
  %v3514 = vmax.f32 %v3513, %v2258
  %v3515 = vmax.f32 %v3514, %v2264
  %v3516 = vmax.f32 %v3515, %v2270
  %v3517 = vmax.f32 %v3516, %v2276
  %v3518 = vmax.f32 %v3517, %v2282
  %v3519 = vmax.f32 %v3518, %v2288
  %v3520 = vmax.f32 %v3519, %v2294
  %v3521 = vmax.f32 %v3520, %v2300
  %v3522 = vmax.f32 %v3521, %v2306
  %v3523 = vmax.f32 %v3522, %v2312
  %v3524 = vmax.f32 %v3523, %v2318
  %v3525 = vmax.f32 %v3524, %v2324
  %v3526 = vmax.f32 %v3525, %v2330
  %v3527 = vmax.f32 %v3526, %v2336
  %v3528 = vmax.f32 %v3527, %v2342
  %v3529 = vmax.f32 %v3528, %v2348
  %v3530 = vmax.f32 %v3529, %v2354
  %v3531 = vmax.f32 %v3530, %v2360
  %v3532 = vmax.f32 %v3531, %v2366
  %v3533 = vmax.f32 %v3532, %v2372
  %v3534 = vmax.f32 %v3533, %v2378
  %v3535 = vmax.f32 %v3534, %v2384
  %v3536 = vmax.f32 %v3535, %v2390
  %v3537 = vrot.slane %v3536, 4
  %v3538 = vmax.f32 %v3536, %v3537
  %v3539 = vrot.slane %v3538, 2
  %v3540 = vmax.f32 %v3538, %v3539
  %v3541 = vrot.slane %v3540, 1
  %v3542 = vmax.f32 %v3540, %v3541
  %v3543 = vmax.f32 %v2747, %v2753
  %v3544 = vmax.f32 %v3543, %v2759
  %v3545 = vmax.f32 %v3544, %v2765
  %v3546 = vmax.f32 %v3545, %v2771
  %v3547 = vmax.f32 %v3546, %v2777
  %v3548 = vmax.f32 %v3547, %v2783
  %v3549 = vmax.f32 %v3548, %v2789
  %v3550 = vmax.f32 %v3549, %v2795
  %v3551 = vmax.f32 %v3550, %v2801
  %v3552 = vmax.f32 %v3551, %v2807
  %v3553 = vmax.f32 %v3552, %v2813
  %v3554 = vmax.f32 %v3553, %v2819
  %v3555 = vmax.f32 %v3554, %v2825
  %v3556 = vmax.f32 %v3555, %v2831
  %v3557 = vmax.f32 %v3556, %v2837
  %v3558 = vmax.f32 %v3557, %v2843
  %v3559 = vmax.f32 %v3558, %v2849
  %v3560 = vmax.f32 %v3559, %v2855
  %v3561 = vmax.f32 %v3560, %v2861
  %v3562 = vmax.f32 %v3561, %v2867
  %v3563 = vmax.f32 %v3562, %v2873
  %v3564 = vmax.f32 %v3563, %v2879
  %v3565 = vmax.f32 %v3564, %v2885
  %v3566 = vmax.f32 %v3565, %v2891
  %v3567 = vmax.f32 %v3566, %v2897
  %v3568 = vmax.f32 %v3567, %v2903
  %v3569 = vmax.f32 %v3568, %v2909
  %v3570 = vmax.f32 %v3569, %v2915
  %v3571 = vmax.f32 %v3570, %v2921
  %v3572 = vmax.f32 %v3571, %v2927
  %v3573 = vmax.f32 %v3572, %v2933
  %v3574 = vrot.slane %v3573, 4
  %v3575 = vmax.f32 %v3573, %v3574
  %v3576 = vrot.slane %v3575, 2
  %v3577 = vmax.f32 %v3575, %v3576
  %v3578 = vrot.slane %v3577, 1
  %v3579 = vmax.f32 %v3577, %v3578
  %v3580 = vmax.f32 %v2749, %v2755
  %v3581 = vmax.f32 %v3580, %v2761
  %v3582 = vmax.f32 %v3581, %v2767
  %v3583 = vmax.f32 %v3582, %v2773
  %v3584 = vmax.f32 %v3583, %v2779
  %v3585 = vmax.f32 %v3584, %v2785
  %v3586 = vmax.f32 %v3585, %v2791
  %v3587 = vmax.f32 %v3586, %v2797
  %v3588 = vmax.f32 %v3587, %v2803
  %v3589 = vmax.f32 %v3588, %v2809
  %v3590 = vmax.f32 %v3589, %v2815
  %v3591 = vmax.f32 %v3590, %v2821
  %v3592 = vmax.f32 %v3591, %v2827
  %v3593 = vmax.f32 %v3592, %v2833
  %v3594 = vmax.f32 %v3593, %v2839
  %v3595 = vmax.f32 %v3594, %v2845
  %v3596 = vmax.f32 %v3595, %v2851
  %v3597 = vmax.f32 %v3596, %v2857
  %v3598 = vmax.f32 %v3597, %v2863
  %v3599 = vmax.f32 %v3598, %v2869
  %v3600 = vmax.f32 %v3599, %v2875
  %v3601 = vmax.f32 %v3600, %v2881
  %v3602 = vmax.f32 %v3601, %v2887
  %v3603 = vmax.f32 %v3602, %v2893
  %v3604 = vmax.f32 %v3603, %v2899
  %v3605 = vmax.f32 %v3604, %v2905
  %v3606 = vmax.f32 %v3605, %v2911
  %v3607 = vmax.f32 %v3606, %v2917
  %v3608 = vmax.f32 %v3607, %v2923
  %v3609 = vmax.f32 %v3608, %v2929
  %v3610 = vmax.f32 %v3609, %v2935
  %v3611 = vrot.slane %v3610, 4
  %v3612 = vmax.f32 %v3610, %v3611
  %v3613 = vrot.slane %v3612, 2
  %v3614 = vmax.f32 %v3612, %v3613
  %v3615 = vrot.slane %v3614, 1
  %v3616 = vmax.f32 %v3614, %v3615
  %v3617 = vmax.f32 %v2939, %v2945
  %v3618 = vmax.f32 %v3617, %v2951
  %v3619 = vmax.f32 %v3618, %v2957
  %v3620 = vmax.f32 %v3619, %v2963
  %v3621 = vmax.f32 %v3620, %v2969
  %v3622 = vmax.f32 %v3621, %v2975
  %v3623 = vmax.f32 %v3622, %v2981
  %v3624 = vmax.f32 %v3623, %v2987
  %v3625 = vmax.f32 %v3624, %v2993
  %v3626 = vmax.f32 %v3625, %v2999
  %v3627 = vmax.f32 %v3626, %v3005
  %v3628 = vmax.f32 %v3627, %v3011
  %v3629 = vmax.f32 %v3628, %v3017
  %v3630 = vmax.f32 %v3629, %v3023
  %v3631 = vmax.f32 %v3630, %v3029
  %v3632 = vmax.f32 %v3631, %v3035
  %v3633 = vmax.f32 %v3632, %v3041
  %v3634 = vmax.f32 %v3633, %v3047
  %v3635 = vmax.f32 %v3634, %v3053
  %v3636 = vmax.f32 %v3635, %v3059
  %v3637 = vmax.f32 %v3636, %v3065
  %v3638 = vmax.f32 %v3637, %v3071
  %v3639 = vmax.f32 %v3638, %v3077
  %v3640 = vmax.f32 %v3639, %v3083
  %v3641 = vmax.f32 %v3640, %v3089
  %v3642 = vmax.f32 %v3641, %v3095
  %v3643 = vmax.f32 %v3642, %v3101
  %v3644 = vmax.f32 %v3643, %v3107
  %v3645 = vmax.f32 %v3644, %v3113
  %v3646 = vmax.f32 %v3645, %v3119
  %v3647 = vmax.f32 %v3646, %v3125
  %v3648 = vrot.slane %v3647, 4
  %v3649 = vmax.f32 %v3647, %v3648
  %v3650 = vrot.slane %v3649, 2
  %v3651 = vmax.f32 %v3649, %v3650
  %v3652 = vrot.slane %v3651, 1
  %v3653 = vmax.f32 %v3651, %v3652
  %v3654 = vmax.f32 %v2941, %v2947
  %v3655 = vmax.f32 %v3654, %v2953
  %v3656 = vmax.f32 %v3655, %v2959
  %v3657 = vmax.f32 %v3656, %v2965
  %v3658 = vmax.f32 %v3657, %v2971
  %v3659 = vmax.f32 %v3658, %v2977
  %v3660 = vmax.f32 %v3659, %v2983
  %v3661 = vmax.f32 %v3660, %v2989
  %v3662 = vmax.f32 %v3661, %v2995
  %v3663 = vmax.f32 %v3662, %v3001
  %v3664 = vmax.f32 %v3663, %v3007
  %v3665 = vmax.f32 %v3664, %v3013
  %v3666 = vmax.f32 %v3665, %v3019
  %v3667 = vmax.f32 %v3666, %v3025
  %v3668 = vmax.f32 %v3667, %v3031
  %v3669 = vmax.f32 %v3668, %v3037
  %v3670 = vmax.f32 %v3669, %v3043
  %v3671 = vmax.f32 %v3670, %v3049
  %v3672 = vmax.f32 %v3671, %v3055
  %v3673 = vmax.f32 %v3672, %v3061
  %v3674 = vmax.f32 %v3673, %v3067
  %v3675 = vmax.f32 %v3674, %v3073
  %v3676 = vmax.f32 %v3675, %v3079
  %v3677 = vmax.f32 %v3676, %v3085
  %v3678 = vmax.f32 %v3677, %v3091
  %v3679 = vmax.f32 %v3678, %v3097
  %v3680 = vmax.f32 %v3679, %v3103
  %v3681 = vmax.f32 %v3680, %v3109
  %v3682 = vmax.f32 %v3681, %v3115
  %v3683 = vmax.f32 %v3682, %v3121
  %v3684 = vmax.f32 %v3683, %v3127
  %v3685 = vrot.slane %v3684, 4
  %v3686 = vmax.f32 %v3684, %v3685
  %v3687 = vrot.slane %v3686, 2
  %v3688 = vmax.f32 %v3686, %v3687
  %v3689 = vrot.slane %v3688, 1
  %v3690 = vmax.f32 %v3688, %v3689
  %v3691 = vmax.f32 %v3131, %v3137
  %v3692 = vmax.f32 %v3691, %v3143
  %v3693 = vmax.f32 %v3692, %v3149
  %v3694 = vmax.f32 %v3693, %v3155
  %v3695 = vmax.f32 %v3694, %v3161
  %v3696 = vmax.f32 %v3695, %v3167
  %v3697 = vmax.f32 %v3696, %v3173
  %v3698 = vmax.f32 %v3697, %v3179
  %v3699 = vmax.f32 %v3698, %v3185
  %v3700 = vmax.f32 %v3699, %v3191
  %v3701 = vmax.f32 %v3700, %v3197
  %v3702 = vmax.f32 %v3701, %v3203
  %v3703 = vmax.f32 %v3702, %v3209
  %v3704 = vmax.f32 %v3703, %v3215
  %v3705 = vmax.f32 %v3704, %v3221
  %v3706 = vmax.f32 %v3705, %v3227
  %v3707 = vmax.f32 %v3706, %v3233
  %v3708 = vmax.f32 %v3707, %v3239
  %v3709 = vmax.f32 %v3708, %v3245
  %v3710 = vmax.f32 %v3709, %v3251
  %v3711 = vmax.f32 %v3710, %v3257
  %v3712 = vmax.f32 %v3711, %v3263
  %v3713 = vmax.f32 %v3712, %v3269
  %v3714 = vmax.f32 %v3713, %v3275
  %v3715 = vmax.f32 %v3714, %v3281
  %v3716 = vmax.f32 %v3715, %v3287
  %v3717 = vmax.f32 %v3716, %v3293
  %v3718 = vmax.f32 %v3717, %v3299
  %v3719 = vmax.f32 %v3718, %v3305
  %v3720 = vmax.f32 %v3719, %v3311
  %v3721 = vmax.f32 %v3720, %v3317
  %v3722 = vrot.slane %v3721, 4
  %v3723 = vmax.f32 %v3721, %v3722
  %v3724 = vrot.slane %v3723, 2
  %v3725 = vmax.f32 %v3723, %v3724
  %v3726 = vrot.slane %v3725, 1
  %v3727 = vmax.f32 %v3725, %v3726
  %v3728 = vmax.f32 %v3133, %v3139
  %v3729 = vmax.f32 %v3728, %v3145
  %v3730 = vmax.f32 %v3729, %v3151
  %v3731 = vmax.f32 %v3730, %v3157
  %v3732 = vmax.f32 %v3731, %v3163
  %v3733 = vmax.f32 %v3732, %v3169
  %v3734 = vmax.f32 %v3733, %v3175
  %v3735 = vmax.f32 %v3734, %v3181
  %v3736 = vmax.f32 %v3735, %v3187
  %v3737 = vmax.f32 %v3736, %v3193
  %v3738 = vmax.f32 %v3737, %v3199
  %v3739 = vmax.f32 %v3738, %v3205
  %v3740 = vmax.f32 %v3739, %v3211
  %v3741 = vmax.f32 %v3740, %v3217
  %v3742 = vmax.f32 %v3741, %v3223
  %v3743 = vmax.f32 %v3742, %v3229
  %v3744 = vmax.f32 %v3743, %v3235
  %v3745 = vmax.f32 %v3744, %v3241
  %v3746 = vmax.f32 %v3745, %v3247
  %v3747 = vmax.f32 %v3746, %v3253
  %v3748 = vmax.f32 %v3747, %v3259
  %v3749 = vmax.f32 %v3748, %v3265
  %v3750 = vmax.f32 %v3749, %v3271
  %v3751 = vmax.f32 %v3750, %v3277
  %v3752 = vmax.f32 %v3751, %v3283
  %v3753 = vmax.f32 %v3752, %v3289
  %v3754 = vmax.f32 %v3753, %v3295
  %v3755 = vmax.f32 %v3754, %v3301
  %v3756 = vmax.f32 %v3755, %v3307
  %v3757 = vmax.f32 %v3756, %v3313
  %v3758 = vmax.f32 %v3757, %v3319
  %v3759 = vrot.slane %v3758, 4
  %v3760 = vmax.f32 %v3758, %v3759
  %v3761 = vrot.slane %v3760, 2
  %v3762 = vmax.f32 %v3760, %v3761
  %v3763 = vrot.slane %v3762, 1
  %v3764 = vmax.f32 %v3762, %v3763
  %v3765 = vsub.f32 %v1818, %v3357
  %v3766 = vsub.f32 %v1820, %v3394
  %v3767 = vsub.f32 %v1824, %v3357
  %v3768 = vsub.f32 %v1826, %v3394
  %v3769 = vsub.f32 %v1830, %v3357
  %v3770 = vsub.f32 %v1832, %v3394
  %v3771 = vsub.f32 %v1836, %v3357
  %v3772 = vsub.f32 %v1838, %v3394
  %v3773 = vsub.f32 %v1842, %v3357
  %v3774 = vsub.f32 %v1844, %v3394
  %v3775 = vsub.f32 %v1848, %v3357
  %v3776 = vsub.f32 %v1850, %v3394
  %v3777 = vsub.f32 %v1854, %v3357
  %v3778 = vsub.f32 %v1856, %v3394
  %v3779 = vsub.f32 %v1860, %v3357
  %v3780 = vsub.f32 %v1862, %v3394
  %v3781 = vsub.f32 %v1866, %v3357
  %v3782 = vsub.f32 %v1868, %v3394
  %v3783 = vsub.f32 %v1872, %v3357
  %v3784 = vsub.f32 %v1874, %v3394
  %v3785 = vsub.f32 %v1878, %v3357
  %v3786 = vsub.f32 %v1880, %v3394
  %v3787 = vsub.f32 %v1884, %v3357
  %v3788 = vsub.f32 %v1886, %v3394
  %v3789 = vsub.f32 %v1890, %v3357
  %v3790 = vsub.f32 %v1892, %v3394
  %v3791 = vsub.f32 %v1896, %v3357
  %v3792 = vsub.f32 %v1898, %v3394
  %v3793 = vsub.f32 %v1902, %v3357
  %v3794 = vsub.f32 %v1904, %v3394
  %v3795 = vsub.f32 %v1908, %v3357
  %v3796 = vsub.f32 %v1910, %v3394
  %v3797 = vsub.f32 %v1914, %v3357
  %v3798 = vsub.f32 %v1916, %v3394
  %v3799 = vsub.f32 %v1920, %v3357
  %v3800 = vsub.f32 %v1922, %v3394
  %v3801 = vsub.f32 %v1926, %v3357
  %v3802 = vsub.f32 %v1928, %v3394
  %v3803 = vsub.f32 %v1932, %v3357
  %v3804 = vsub.f32 %v1934, %v3394
  %v3805 = vsub.f32 %v1938, %v3357
  %v3806 = vsub.f32 %v1940, %v3394
  %v3807 = vsub.f32 %v1944, %v3357
  %v3808 = vsub.f32 %v1946, %v3394
  %v3809 = vsub.f32 %v1950, %v3357
  %v3810 = vsub.f32 %v1952, %v3394
  %v3811 = vsub.f32 %v1956, %v3357
  %v3812 = vsub.f32 %v1958, %v3394
  %v3813 = vsub.f32 %v1962, %v3357
  %v3814 = vsub.f32 %v1964, %v3394
  %v3815 = vsub.f32 %v1968, %v3357
  %v3816 = vsub.f32 %v1970, %v3394
  %v3817 = vsub.f32 %v1974, %v3357
  %v3818 = vsub.f32 %v1976, %v3394
  %v3819 = vsub.f32 %v1980, %v3357
  %v3820 = vsub.f32 %v1982, %v3394
  %v3821 = vsub.f32 %v1986, %v3357
  %v3822 = vsub.f32 %v1988, %v3394
  %v3823 = vsub.f32 %v1992, %v3357
  %v3824 = vsub.f32 %v1994, %v3394
  %v3825 = vsub.f32 %v1998, %v3357
  %v3826 = vsub.f32 %v2000, %v3394
  %v3827 = vsub.f32 %v2004, %v3357
  %v3828 = vsub.f32 %v2006, %v3394
  %v3829 = vsub.f32 %v2010, %v3431
  %v3830 = vsub.f32 %v2012, %v3468
  %v3831 = vsub.f32 %v2016, %v3431
  %v3832 = vsub.f32 %v2018, %v3468
  %v3833 = vsub.f32 %v2022, %v3431
  %v3834 = vsub.f32 %v2024, %v3468
  %v3835 = vsub.f32 %v2028, %v3431
  %v3836 = vsub.f32 %v2030, %v3468
  %v3837 = vsub.f32 %v2034, %v3431
  %v3838 = vsub.f32 %v2036, %v3468
  %v3839 = vsub.f32 %v2040, %v3431
  %v3840 = vsub.f32 %v2042, %v3468
  %v3841 = vsub.f32 %v2046, %v3431
  %v3842 = vsub.f32 %v2048, %v3468
  %v3843 = vsub.f32 %v2052, %v3431
  %v3844 = vsub.f32 %v2054, %v3468
  %v3845 = vsub.f32 %v2058, %v3431
  %v3846 = vsub.f32 %v2060, %v3468
  %v3847 = vsub.f32 %v2064, %v3431
  %v3848 = vsub.f32 %v2066, %v3468
  %v3849 = vsub.f32 %v2070, %v3431
  %v3850 = vsub.f32 %v2072, %v3468
  %v3851 = vsub.f32 %v2076, %v3431
  %v3852 = vsub.f32 %v2078, %v3468
  %v3853 = vsub.f32 %v2082, %v3431
  %v3854 = vsub.f32 %v2084, %v3468
  %v3855 = vsub.f32 %v2088, %v3431
  %v3856 = vsub.f32 %v2090, %v3468
  %v3857 = vsub.f32 %v2094, %v3431
  %v3858 = vsub.f32 %v2096, %v3468
  %v3859 = vsub.f32 %v2100, %v3431
  %v3860 = vsub.f32 %v2102, %v3468
  %v3861 = vsub.f32 %v2106, %v3431
  %v3862 = vsub.f32 %v2108, %v3468
  %v3863 = vsub.f32 %v2112, %v3431
  %v3864 = vsub.f32 %v2114, %v3468
  %v3865 = vsub.f32 %v2118, %v3431
  %v3866 = vsub.f32 %v2120, %v3468
  %v3867 = vsub.f32 %v2124, %v3431
  %v3868 = vsub.f32 %v2126, %v3468
  %v3869 = vsub.f32 %v2130, %v3431
  %v3870 = vsub.f32 %v2132, %v3468
  %v3871 = vsub.f32 %v2136, %v3431
  %v3872 = vsub.f32 %v2138, %v3468
  %v3873 = vsub.f32 %v2142, %v3431
  %v3874 = vsub.f32 %v2144, %v3468
  %v3875 = vsub.f32 %v2148, %v3431
  %v3876 = vsub.f32 %v2150, %v3468
  %v3877 = vsub.f32 %v2154, %v3431
  %v3878 = vsub.f32 %v2156, %v3468
  %v3879 = vsub.f32 %v2160, %v3431
  %v3880 = vsub.f32 %v2162, %v3468
  %v3881 = vsub.f32 %v2166, %v3431
  %v3882 = vsub.f32 %v2168, %v3468
  %v3883 = vsub.f32 %v2172, %v3431
  %v3884 = vsub.f32 %v2174, %v3468
  %v3885 = vsub.f32 %v2178, %v3431
  %v3886 = vsub.f32 %v2180, %v3468
  %v3887 = vsub.f32 %v2184, %v3431
  %v3888 = vsub.f32 %v2186, %v3468
  %v3889 = vsub.f32 %v2190, %v3431
  %v3890 = vsub.f32 %v2192, %v3468
  %v3891 = vsub.f32 %v2196, %v3431
  %v3892 = vsub.f32 %v2198, %v3468
  %v3893 = vsub.f32 %v2202, %v3505
  %v3894 = vsub.f32 %v2204, %v3542
  %v3895 = vsub.f32 %v2208, %v3505
  %v3896 = vsub.f32 %v2210, %v3542
  %v3897 = vsub.f32 %v2214, %v3505
  %v3898 = vsub.f32 %v2216, %v3542
  %v3899 = vsub.f32 %v2220, %v3505
  %v3900 = vsub.f32 %v2222, %v3542
  %v3901 = vsub.f32 %v2226, %v3505
  %v3902 = vsub.f32 %v2228, %v3542
  %v3903 = vsub.f32 %v2232, %v3505
  %v3904 = vsub.f32 %v2234, %v3542
  %v3905 = vsub.f32 %v2238, %v3505
  %v3906 = vsub.f32 %v2240, %v3542
  %v3907 = vsub.f32 %v2244, %v3505
  %v3908 = vsub.f32 %v2246, %v3542
  %v3909 = vsub.f32 %v2250, %v3505
  %v3910 = vsub.f32 %v2252, %v3542
  %v3911 = vsub.f32 %v2256, %v3505
  %v3912 = vsub.f32 %v2258, %v3542
  %v3913 = vsub.f32 %v2262, %v3505
  %v3914 = vsub.f32 %v2264, %v3542
  %v3915 = vsub.f32 %v2268, %v3505
  %v3916 = vsub.f32 %v2270, %v3542
  %v3917 = vsub.f32 %v2274, %v3505
  %v3918 = vsub.f32 %v2276, %v3542
  %v3919 = vsub.f32 %v2280, %v3505
  %v3920 = vsub.f32 %v2282, %v3542
  %v3921 = vsub.f32 %v2286, %v3505
  %v3922 = vsub.f32 %v2288, %v3542
  %v3923 = vsub.f32 %v2292, %v3505
  %v3924 = vsub.f32 %v2294, %v3542
  %v3925 = vsub.f32 %v2298, %v3505
  %v3926 = vsub.f32 %v2300, %v3542
  %v3927 = vsub.f32 %v2304, %v3505
  %v3928 = vsub.f32 %v2306, %v3542
  %v3929 = vsub.f32 %v2310, %v3505
  %v3930 = vsub.f32 %v2312, %v3542
  %v3931 = vsub.f32 %v2316, %v3505
  %v3932 = vsub.f32 %v2318, %v3542
  %v3933 = vsub.f32 %v2322, %v3505
  %v3934 = vsub.f32 %v2324, %v3542
  %v3935 = vsub.f32 %v2328, %v3505
  %v3936 = vsub.f32 %v2330, %v3542
  %v3937 = vsub.f32 %v2334, %v3505
  %v3938 = vsub.f32 %v2336, %v3542
  %v3939 = vsub.f32 %v2340, %v3505
  %v3940 = vsub.f32 %v2342, %v3542
  %v3941 = vsub.f32 %v2346, %v3505
  %v3942 = vsub.f32 %v2348, %v3542
  %v3943 = vsub.f32 %v2352, %v3505
  %v3944 = vsub.f32 %v2354, %v3542
  %v3945 = vsub.f32 %v2358, %v3505
  %v3946 = vsub.f32 %v2360, %v3542
  %v3947 = vsub.f32 %v2364, %v3505
  %v3948 = vsub.f32 %v2366, %v3542
  %v3949 = vsub.f32 %v2370, %v3505
  %v3950 = vsub.f32 %v2372, %v3542
  %v3951 = vsub.f32 %v2376, %v3505
  %v3952 = vsub.f32 %v2378, %v3542
  %v3953 = vsub.f32 %v2382, %v3505
  %v3954 = vsub.f32 %v2384, %v3542
  %v3955 = vsub.f32 %v2388, %v3505
  %v3956 = vsub.f32 %v2390, %v3542
  %v3957 = vsub.f32 %v2747, %v3579
  %v3958 = vsub.f32 %v2749, %v3616
  %v3959 = vsub.f32 %v2753, %v3579
  %v3960 = vsub.f32 %v2755, %v3616
  %v3961 = vsub.f32 %v2759, %v3579
  %v3962 = vsub.f32 %v2761, %v3616
  %v3963 = vsub.f32 %v2765, %v3579
  %v3964 = vsub.f32 %v2767, %v3616
  %v3965 = vsub.f32 %v2771, %v3579
  %v3966 = vsub.f32 %v2773, %v3616
  %v3967 = vsub.f32 %v2777, %v3579
  %v3968 = vsub.f32 %v2779, %v3616
  %v3969 = vsub.f32 %v2783, %v3579
  %v3970 = vsub.f32 %v2785, %v3616
  %v3971 = vsub.f32 %v2789, %v3579
  %v3972 = vsub.f32 %v2791, %v3616
  %v3973 = vsub.f32 %v2795, %v3579
  %v3974 = vsub.f32 %v2797, %v3616
  %v3975 = vsub.f32 %v2801, %v3579
  %v3976 = vsub.f32 %v2803, %v3616
  %v3977 = vsub.f32 %v2807, %v3579
  %v3978 = vsub.f32 %v2809, %v3616
  %v3979 = vsub.f32 %v2813, %v3579
  %v3980 = vsub.f32 %v2815, %v3616
  %v3981 = vsub.f32 %v2819, %v3579
  %v3982 = vsub.f32 %v2821, %v3616
  %v3983 = vsub.f32 %v2825, %v3579
  %v3984 = vsub.f32 %v2827, %v3616
  %v3985 = vsub.f32 %v2831, %v3579
  %v3986 = vsub.f32 %v2833, %v3616
  %v3987 = vsub.f32 %v2837, %v3579
  %v3988 = vsub.f32 %v2839, %v3616
  %v3989 = vsub.f32 %v2843, %v3579
  %v3990 = vsub.f32 %v2845, %v3616
  %v3991 = vsub.f32 %v2849, %v3579
  %v3992 = vsub.f32 %v2851, %v3616
  %v3993 = vsub.f32 %v2855, %v3579
  %v3994 = vsub.f32 %v2857, %v3616
  %v3995 = vsub.f32 %v2861, %v3579
  %v3996 = vsub.f32 %v2863, %v3616
  %v3997 = vsub.f32 %v2867, %v3579
  %v3998 = vsub.f32 %v2869, %v3616
  %v3999 = vsub.f32 %v2873, %v3579
  %v4000 = vsub.f32 %v2875, %v3616
  %v4001 = vsub.f32 %v2879, %v3579
  %v4002 = vsub.f32 %v2881, %v3616
  %v4003 = vsub.f32 %v2885, %v3579
  %v4004 = vsub.f32 %v2887, %v3616
  %v4005 = vsub.f32 %v2891, %v3579
  %v4006 = vsub.f32 %v2893, %v3616
  %v4007 = vsub.f32 %v2897, %v3579
  %v4008 = vsub.f32 %v2899, %v3616
  %v4009 = vsub.f32 %v2903, %v3579
  %v4010 = vsub.f32 %v2905, %v3616
  %v4011 = vsub.f32 %v2909, %v3579
  %v4012 = vsub.f32 %v2911, %v3616
  %v4013 = vsub.f32 %v2915, %v3579
  %v4014 = vsub.f32 %v2917, %v3616
  %v4015 = vsub.f32 %v2921, %v3579
  %v4016 = vsub.f32 %v2923, %v3616
  %v4017 = vsub.f32 %v2927, %v3579
  %v4018 = vsub.f32 %v2929, %v3616
  %v4019 = vsub.f32 %v2933, %v3579
  %v4020 = vsub.f32 %v2935, %v3616
  %v4021 = vsub.f32 %v2939, %v3653
  %v4022 = vsub.f32 %v2941, %v3690
  %v4023 = vsub.f32 %v2945, %v3653
  %v4024 = vsub.f32 %v2947, %v3690
  %v4025 = vsub.f32 %v2951, %v3653
  %v4026 = vsub.f32 %v2953, %v3690
  %v4027 = vsub.f32 %v2957, %v3653
  %v4028 = vsub.f32 %v2959, %v3690
  %v4029 = vsub.f32 %v2963, %v3653
  %v4030 = vsub.f32 %v2965, %v3690
  %v4031 = vsub.f32 %v2969, %v3653
  %v4032 = vsub.f32 %v2971, %v3690
  %v4033 = vsub.f32 %v2975, %v3653
  %v4034 = vsub.f32 %v2977, %v3690
  %v4035 = vsub.f32 %v2981, %v3653
  %v4036 = vsub.f32 %v2983, %v3690
  %v4037 = vsub.f32 %v2987, %v3653
  %v4038 = vsub.f32 %v2989, %v3690
  %v4039 = vsub.f32 %v2993, %v3653
  %v4040 = vsub.f32 %v2995, %v3690
  %v4041 = vsub.f32 %v2999, %v3653
  %v4042 = vsub.f32 %v3001, %v3690
  %v4043 = vsub.f32 %v3005, %v3653
  %v4044 = vsub.f32 %v3007, %v3690
  %v4045 = vsub.f32 %v3011, %v3653
  %v4046 = vsub.f32 %v3013, %v3690
  %v4047 = vsub.f32 %v3017, %v3653
  %v4048 = vsub.f32 %v3019, %v3690
  %v4049 = vsub.f32 %v3023, %v3653
  %v4050 = vsub.f32 %v3025, %v3690
  %v4051 = vsub.f32 %v3029, %v3653
  %v4052 = vsub.f32 %v3031, %v3690
  %v4053 = vsub.f32 %v3035, %v3653
  %v4054 = vsub.f32 %v3037, %v3690
  %v4055 = vsub.f32 %v3041, %v3653
  %v4056 = vsub.f32 %v3043, %v3690
  %v4057 = vsub.f32 %v3047, %v3653
  %v4058 = vsub.f32 %v3049, %v3690
  %v4059 = vsub.f32 %v3053, %v3653
  %v4060 = vsub.f32 %v3055, %v3690
  %v4061 = vsub.f32 %v3059, %v3653
  %v4062 = vsub.f32 %v3061, %v3690
  %v4063 = vsub.f32 %v3065, %v3653
  %v4064 = vsub.f32 %v3067, %v3690
  %v4065 = vsub.f32 %v3071, %v3653
  %v4066 = vsub.f32 %v3073, %v3690
  %v4067 = vsub.f32 %v3077, %v3653
  %v4068 = vsub.f32 %v3079, %v3690
  %v4069 = vsub.f32 %v3083, %v3653
  %v4070 = vsub.f32 %v3085, %v3690
  %v4071 = vsub.f32 %v3089, %v3653
  %v4072 = vsub.f32 %v3091, %v3690
  %v4073 = vsub.f32 %v3095, %v3653
  %v4074 = vsub.f32 %v3097, %v3690
  %v4075 = vsub.f32 %v3101, %v3653
  %v4076 = vsub.f32 %v3103, %v3690
  %v4077 = vsub.f32 %v3107, %v3653
  %v4078 = vsub.f32 %v3109, %v3690
  %v4079 = vsub.f32 %v3113, %v3653
  %v4080 = vsub.f32 %v3115, %v3690
  %v4081 = vsub.f32 %v3119, %v3653
  %v4082 = vsub.f32 %v3121, %v3690
  %v4083 = vsub.f32 %v3125, %v3653
  %v4084 = vsub.f32 %v3127, %v3690
  %v4085 = vsub.f32 %v3131, %v3727
  %v4086 = vsub.f32 %v3133, %v3764
  %v4087 = vsub.f32 %v3137, %v3727
  %v4088 = vsub.f32 %v3139, %v3764
  %v4089 = vsub.f32 %v3143, %v3727
  %v4090 = vsub.f32 %v3145, %v3764
  %v4091 = vsub.f32 %v3149, %v3727
  %v4092 = vsub.f32 %v3151, %v3764
  %v4093 = vsub.f32 %v3155, %v3727
  %v4094 = vsub.f32 %v3157, %v3764
  %v4095 = vsub.f32 %v3161, %v3727
  %v4096 = vsub.f32 %v3163, %v3764
  %v4097 = vsub.f32 %v3167, %v3727
  %v4098 = vsub.f32 %v3169, %v3764
  %v4099 = vsub.f32 %v3173, %v3727
  %v4100 = vsub.f32 %v3175, %v3764
  %v4101 = vsub.f32 %v3179, %v3727
  %v4102 = vsub.f32 %v3181, %v3764
  %v4103 = vsub.f32 %v3185, %v3727
  %v4104 = vsub.f32 %v3187, %v3764
  %v4105 = vsub.f32 %v3191, %v3727
  %v4106 = vsub.f32 %v3193, %v3764
  %v4107 = vsub.f32 %v3197, %v3727
  %v4108 = vsub.f32 %v3199, %v3764
  %v4109 = vsub.f32 %v3203, %v3727
  %v4110 = vsub.f32 %v3205, %v3764
  %v4111 = vsub.f32 %v3209, %v3727
  %v4112 = vsub.f32 %v3211, %v3764
  %v4113 = vsub.f32 %v3215, %v3727
  %v4114 = vsub.f32 %v3217, %v3764
  %v4115 = vsub.f32 %v3221, %v3727
  %v4116 = vsub.f32 %v3223, %v3764
  %v4117 = vsub.f32 %v3227, %v3727
  %v4118 = vsub.f32 %v3229, %v3764
  %v4119 = vsub.f32 %v3233, %v3727
  %v4120 = vsub.f32 %v3235, %v3764
  %v4121 = vsub.f32 %v3239, %v3727
  %v4122 = vsub.f32 %v3241, %v3764
  %v4123 = vsub.f32 %v3245, %v3727
  %v4124 = vsub.f32 %v3247, %v3764
  %v4125 = vsub.f32 %v3251, %v3727
  %v4126 = vsub.f32 %v3253, %v3764
  %v4127 = vsub.f32 %v3257, %v3727
  %v4128 = vsub.f32 %v3259, %v3764
  %v4129 = vsub.f32 %v3263, %v3727
  %v4130 = vsub.f32 %v3265, %v3764
  %v4131 = vsub.f32 %v3269, %v3727
  %v4132 = vsub.f32 %v3271, %v3764
  %v4133 = vsub.f32 %v3275, %v3727
  %v4134 = vsub.f32 %v3277, %v3764
  %v4135 = vsub.f32 %v3281, %v3727
  %v4136 = vsub.f32 %v3283, %v3764
  %v4137 = vsub.f32 %v3287, %v3727
  %v4138 = vsub.f32 %v3289, %v3764
  %v4139 = vsub.f32 %v3293, %v3727
  %v4140 = vsub.f32 %v3295, %v3764
  %v4141 = vsub.f32 %v3299, %v3727
  %v4142 = vsub.f32 %v3301, %v3764
  %v4143 = vsub.f32 %v3305, %v3727
  %v4144 = vsub.f32 %v3307, %v3764
  %v4145 = vsub.f32 %v3311, %v3727
  %v4146 = vsub.f32 %v3313, %v3764
  %v4147 = vsub.f32 %v3317, %v3727
  %v4148 = vsub.f32 %v3319, %v3764
  %v4149 = vmul.f32 %v3765, 1.442695
  %v4150 = vpow.pop %v4149
  %v4151 = vmul.f32 %v3766, 1.442695
  %v4152 = vpow.pop %v4151
  %v4153 = vmul.f32 %v3767, 1.442695
  %v4154 = vpow.pop %v4153
  %v4155 = vmul.f32 %v3768, 1.442695
  %v4156 = vpow.pop %v4155
  %v4157 = vmul.f32 %v3769, 1.442695
  %v4158 = vpow.pop %v4157
  %v4159 = vmul.f32 %v3770, 1.442695
  %v4160 = vpow.pop %v4159
  %v4161 = vmul.f32 %v3771, 1.442695
  %v4162 = vpow.pop %v4161
  %v4163 = vmul.f32 %v3772, 1.442695
  %v4164 = vpow.pop %v4163
  %v4165 = vmul.f32 %v3773, 1.442695
  %v4166 = vpow.pop %v4165
  %v4167 = vmul.f32 %v3774, 1.442695
  %v4168 = vpow.pop %v4167
  %v4169 = vmul.f32 %v3775, 1.442695
  %v4170 = vpow.pop %v4169
  %v4171 = vmul.f32 %v3776, 1.442695
  %v4172 = vpow.pop %v4171
  %v4173 = vmul.f32 %v3777, 1.442695
  %v4174 = vpow.pop %v4173
  %v4175 = vmul.f32 %v3778, 1.442695
  %v4176 = vpow.pop %v4175
  %v4177 = vmul.f32 %v3779, 1.442695
  %v4178 = vpow.pop %v4177
  %v4179 = vmul.f32 %v3780, 1.442695
  %v4180 = vpow.pop %v4179
  %v4181 = vmul.f32 %v3781, 1.442695
  %v4182 = vpow.pop %v4181
  %v4183 = vmul.f32 %v3782, 1.442695
  %v4184 = vpow.pop %v4183
  %v4185 = vmul.f32 %v3783, 1.442695
  %v4186 = vpow.pop %v4185
  %v4187 = vmul.f32 %v3784, 1.442695
  %v4188 = vpow.pop %v4187
  %v4189 = vmul.f32 %v3785, 1.442695
  %v4190 = vpow.pop %v4189
  %v4191 = vmul.f32 %v3786, 1.442695
  %v4192 = vpow.pop %v4191
  %v4193 = vmul.f32 %v3787, 1.442695
  %v4194 = vpow.pop %v4193
  %v4195 = vmul.f32 %v3788, 1.442695
  %v4196 = vpow.pop %v4195
  %v4197 = vmul.f32 %v3789, 1.442695
  %v4198 = vpow.pop %v4197
  %v4199 = vmul.f32 %v3790, 1.442695
  %v4200 = vpow.pop %v4199
  %v4201 = vmul.f32 %v3791, 1.442695
  %v4202 = vpow.pop %v4201
  %v4203 = vmul.f32 %v3792, 1.442695
  %v4204 = vpow.pop %v4203
  %v4205 = vmul.f32 %v3793, 1.442695
  %v4206 = vpow.pop %v4205
  %v4207 = vmul.f32 %v3794, 1.442695
  %v4208 = vpow.pop %v4207
  %v4209 = vmul.f32 %v3795, 1.442695
  %v4210 = vpow.pop %v4209
  %v4211 = vmul.f32 %v3796, 1.442695
  %v4212 = vpow.pop %v4211
  %v4213 = vmul.f32 %v3797, 1.442695
  %v4214 = vpow.pop %v4213
  %v4215 = vmul.f32 %v3798, 1.442695
  %v4216 = vpow.pop %v4215
  %v4217 = vmul.f32 %v3799, 1.442695
  %v4218 = vpow.pop %v4217
  %v4219 = vmul.f32 %v3800, 1.442695
  %v4220 = vpow.pop %v4219
  %v4221 = vmul.f32 %v3801, 1.442695
  %v4222 = vpow.pop %v4221
  %v4223 = vmul.f32 %v3802, 1.442695
  %v4224 = vpow.pop %v4223
  %v4225 = vmul.f32 %v3803, 1.442695
  %v4226 = vpow.pop %v4225
  %v4227 = vmul.f32 %v3804, 1.442695
  %v4228 = vpow.pop %v4227
  %v4229 = vmul.f32 %v3805, 1.442695
  %v4230 = vpow.pop %v4229
  %v4231 = vmul.f32 %v3806, 1.442695
  %v4232 = vpow.pop %v4231
  %v4233 = vmul.f32 %v3807, 1.442695
  %v4234 = vpow.pop %v4233
  %v4235 = vmul.f32 %v3808, 1.442695
  %v4236 = vpow.pop %v4235
  %v4237 = vmul.f32 %v3809, 1.442695
  %v4238 = vpow.pop %v4237
  %v4239 = vmul.f32 %v3810, 1.442695
  %v4240 = vpow.pop %v4239
  %v4241 = vmul.f32 %v3811, 1.442695
  %v4242 = vpow.pop %v4241
  %v4243 = vmul.f32 %v3812, 1.442695
  %v4244 = vpow.pop %v4243
  %v4245 = vmul.f32 %v3813, 1.442695
  %v4246 = vpow.pop %v4245
  %v4247 = vmul.f32 %v3814, 1.442695
  %v4248 = vpow.pop %v4247
  %v4249 = vmul.f32 %v3815, 1.442695
  %v4250 = vpow.pop %v4249
  %v4251 = vmul.f32 %v3816, 1.442695
  %v4252 = vpow.pop %v4251
  %v4253 = vmul.f32 %v3817, 1.442695
  %v4254 = vpow.pop %v4253
  %v4255 = vmul.f32 %v3818, 1.442695
  %v4256 = vpow.pop %v4255
  %v4257 = vmul.f32 %v3819, 1.442695
  %v4258 = vpow.pop %v4257
  %v4259 = vmul.f32 %v3820, 1.442695
  %v4260 = vpow.pop %v4259
  %v4261 = vmul.f32 %v3821, 1.442695
  %v4262 = vpow.pop %v4261
  %v4263 = vmul.f32 %v3822, 1.442695
  %v4264 = vpow.pop %v4263
  %v4265 = vmul.f32 %v3823, 1.442695
  %v4266 = vpow.pop %v4265
  %v4267 = vmul.f32 %v3824, 1.442695
  %v4268 = vpow.pop %v4267
  %v4269 = vmul.f32 %v3825, 1.442695
  %v4270 = vpow.pop %v4269
  %v4271 = vmul.f32 %v3826, 1.442695
  %v4272 = vpow.pop %v4271
  %v4273 = vmul.f32 %v3827, 1.442695
  %v4274 = vpow.pop %v4273
  %v4275 = vmul.f32 %v3828, 1.442695
  %v4276 = vpow.pop %v4275
  %v4277 = vmul.f32 %v3829, 1.442695
  %v4278 = vpow.pop %v4277
  %v4279 = vmul.f32 %v3830, 1.442695
  %v4280 = vpow.pop %v4279
  %v4281 = vmul.f32 %v3831, 1.442695
  %v4282 = vpow.pop %v4281
  %v4283 = vmul.f32 %v3832, 1.442695
  %v4284 = vpow.pop %v4283
  %v4285 = vmul.f32 %v3833, 1.442695
  %v4286 = vpow.pop %v4285
  %v4287 = vmul.f32 %v3834, 1.442695
  %v4288 = vpow.pop %v4287
  %v4289 = vmul.f32 %v3835, 1.442695
  %v4290 = vpow.pop %v4289
  %v4291 = vmul.f32 %v3836, 1.442695
  %v4292 = vpow.pop %v4291
  %v4293 = vmul.f32 %v3837, 1.442695
  %v4294 = vpow.pop %v4293
  %v4295 = vmul.f32 %v3838, 1.442695
  %v4296 = vpow.pop %v4295
  %v4297 = vmul.f32 %v3839, 1.442695
  %v4298 = vpow.pop %v4297
  %v4299 = vmul.f32 %v3840, 1.442695
  %v4300 = vpow.pop %v4299
  %v4301 = vmul.f32 %v3841, 1.442695
  %v4302 = vpow.pop %v4301
  %v4303 = vmul.f32 %v3842, 1.442695
  %v4304 = vpow.pop %v4303
  %v4305 = vmul.f32 %v3843, 1.442695
  %v4306 = vpow.pop %v4305
  %v4307 = vmul.f32 %v3844, 1.442695
  %v4308 = vpow.pop %v4307
  %v4309 = vmul.f32 %v3845, 1.442695
  %v4310 = vpow.pop %v4309
  %v4311 = vmul.f32 %v3846, 1.442695
  %v4312 = vpow.pop %v4311
  %v4313 = vmul.f32 %v3847, 1.442695
  %v4314 = vpow.pop %v4313
  %v4315 = vmul.f32 %v3848, 1.442695
  %v4316 = vpow.pop %v4315
  %v4317 = vmul.f32 %v3849, 1.442695
  %v4318 = vpow.pop %v4317
  %v4319 = vmul.f32 %v3850, 1.442695
  %v4320 = vpow.pop %v4319
  %v4321 = vmul.f32 %v3851, 1.442695
  %v4322 = vpow.pop %v4321
  %v4323 = vmul.f32 %v3852, 1.442695
  %v4324 = vpow.pop %v4323
  %v4325 = vmul.f32 %v3853, 1.442695
  %v4326 = vpow.pop %v4325
  %v4327 = vmul.f32 %v3854, 1.442695
  %v4328 = vpow.pop %v4327
  %v4329 = vmul.f32 %v3855, 1.442695
  %v4330 = vpow.pop %v4329
  %v4331 = vmul.f32 %v3856, 1.442695
  %v4332 = vpow.pop %v4331
  %v4333 = vmul.f32 %v3857, 1.442695
  %v4334 = vpow.pop %v4333
  %v4335 = vmul.f32 %v3858, 1.442695
  %v4336 = vpow.pop %v4335
  %v4337 = vmul.f32 %v3859, 1.442695
  %v4338 = vpow.pop %v4337
  %v4339 = vmul.f32 %v3860, 1.442695
  %v4340 = vpow.pop %v4339
  %v4341 = vmul.f32 %v3861, 1.442695
  %v4342 = vpow.pop %v4341
  %v4343 = vmul.f32 %v3862, 1.442695
  %v4344 = vpow.pop %v4343
  %v4345 = vmul.f32 %v3863, 1.442695
  %v4346 = vpow.pop %v4345
  %v4347 = vmul.f32 %v3864, 1.442695
  %v4348 = vpow.pop %v4347
  %v4349 = vmul.f32 %v3865, 1.442695
  %v4350 = vpow.pop %v4349
  %v4351 = vmul.f32 %v3866, 1.442695
  %v4352 = vpow.pop %v4351
  %v4353 = vmul.f32 %v3867, 1.442695
  %v4354 = vpow.pop %v4353
  %v4355 = vmul.f32 %v3868, 1.442695
  %v4356 = vpow.pop %v4355
  %v4357 = vmul.f32 %v3869, 1.442695
  %v4358 = vpow.pop %v4357
  %v4359 = vmul.f32 %v3870, 1.442695
  %v4360 = vpow.pop %v4359
  %v4361 = vmul.f32 %v3871, 1.442695
  %v4362 = vpow.pop %v4361
  %v4363 = vmul.f32 %v3872, 1.442695
  %v4364 = vpow.pop %v4363
  %v4365 = vmul.f32 %v3873, 1.442695
  %v4366 = vpow.pop %v4365
  %v4367 = vmul.f32 %v3874, 1.442695
  %v4368 = vpow.pop %v4367
  %v4369 = vmul.f32 %v3875, 1.442695
  %v4370 = vpow.pop %v4369
  %v4371 = vmul.f32 %v3876, 1.442695
  %v4372 = vpow.pop %v4371
  %v4373 = vmul.f32 %v3877, 1.442695
  %v4374 = vpow.pop %v4373
  %v4375 = vmul.f32 %v3878, 1.442695
  %v4376 = vpow.pop %v4375
  %v4377 = vmul.f32 %v3879, 1.442695
  %v4378 = vpow.pop %v4377
  %v4379 = vmul.f32 %v3880, 1.442695
  %v4380 = vpow.pop %v4379
  %v4381 = vmul.f32 %v3881, 1.442695
  %v4382 = vpow.pop %v4381
  %v4383 = vmul.f32 %v3882, 1.442695
  %v4384 = vpow.pop %v4383
  %v4385 = vmul.f32 %v3883, 1.442695
  %v4386 = vpow.pop %v4385
  %v4387 = vmul.f32 %v3884, 1.442695
  %v4388 = vpow.pop %v4387
  %v4389 = vmul.f32 %v3885, 1.442695
  %v4390 = vpow.pop %v4389
  %v4391 = vmul.f32 %v3886, 1.442695
  %v4392 = vpow.pop %v4391
  %v4393 = vmul.f32 %v3887, 1.442695
  %v4394 = vpow.pop %v4393
  %v4395 = vmul.f32 %v3888, 1.442695
  %v4396 = vpow.pop %v4395
  %v4397 = vmul.f32 %v3889, 1.442695
  %v4398 = vpow.pop %v4397
  %v4399 = vmul.f32 %v3890, 1.442695
  %v4400 = vpow.pop %v4399
  %v4401 = vmul.f32 %v3891, 1.442695
  %v4402 = vpow.pop %v4401
  %v4403 = vmul.f32 %v3892, 1.442695
  %v4404 = vpow.pop %v4403
  %v4405 = vmul.f32 %v3893, 1.442695
  %v4406 = vpow.pop %v4405
  %v4407 = vmul.f32 %v3894, 1.442695
  %v4408 = vpow.pop %v4407
  %v4409 = vmul.f32 %v3895, 1.442695
  %v4410 = vpow.pop %v4409
  %v4411 = vmul.f32 %v3896, 1.442695
  %v4412 = vpow.pop %v4411
  %v4413 = vmul.f32 %v3897, 1.442695
  %v4414 = vpow.pop %v4413
  %v4415 = vmul.f32 %v3898, 1.442695
  %v4416 = vpow.pop %v4415
  %v4417 = vmul.f32 %v3899, 1.442695
  %v4418 = vpow.pop %v4417
  %v4419 = vmul.f32 %v3900, 1.442695
  %v4420 = vpow.pop %v4419
  %v4421 = vmul.f32 %v3901, 1.442695
  %v4422 = vpow.pop %v4421
  %v4423 = vmul.f32 %v3902, 1.442695
  %v4424 = vpow.pop %v4423
  %v4425 = vmul.f32 %v3903, 1.442695
  %v4426 = vpow.pop %v4425
  %v4427 = vmul.f32 %v3904, 1.442695
  %v4428 = vpow.pop %v4427
  %v4429 = vmul.f32 %v3905, 1.442695
  %v4430 = vpow.pop %v4429
  %v4431 = vmul.f32 %v3906, 1.442695
  %v4432 = vpow.pop %v4431
  %v4433 = vmul.f32 %v3907, 1.442695
  %v4434 = vpow.pop %v4433
  %v4435 = vmul.f32 %v3908, 1.442695
  %v4436 = vpow.pop %v4435
  %v4437 = vmul.f32 %v3909, 1.442695
  %v4438 = vpow.pop %v4437
  %v4439 = vmul.f32 %v3910, 1.442695
  %v4440 = vpow.pop %v4439
  %v4441 = vmul.f32 %v3911, 1.442695
  %v4442 = vpow.pop %v4441
  %v4443 = vmul.f32 %v3912, 1.442695
  %v4444 = vpow.pop %v4443
  %v4445 = vmul.f32 %v3913, 1.442695
  %v4446 = vpow.pop %v4445
  %v4447 = vmul.f32 %v3914, 1.442695
  %v4448 = vpow.pop %v4447
  %v4449 = vmul.f32 %v3915, 1.442695
  %v4450 = vpow.pop %v4449
  %v4451 = vmul.f32 %v3916, 1.442695
  %v4452 = vpow.pop %v4451
  %v4453 = vmul.f32 %v3917, 1.442695
  %v4454 = vpow.pop %v4453
  %v4455 = vmul.f32 %v3918, 1.442695
  %v4456 = vpow.pop %v4455
  %v4457 = vmul.f32 %v3919, 1.442695
  %v4458 = vpow.pop %v4457
  %v4459 = vmul.f32 %v3920, 1.442695
  %v4460 = vpow.pop %v4459
  %v4461 = vmul.f32 %v3921, 1.442695
  %v4462 = vpow.pop %v4461
  %v4463 = vmul.f32 %v3922, 1.442695
  %v4464 = vpow.pop %v4463
  %v4465 = vmul.f32 %v3923, 1.442695
  %v4466 = vpow.pop %v4465
  %v4467 = vmul.f32 %v3924, 1.442695
  %v4468 = vpow.pop %v4467
  %v4469 = vmul.f32 %v3925, 1.442695
  %v4470 = vpow.pop %v4469
  %v4471 = vmul.f32 %v3926, 1.442695
  %v4472 = vpow.pop %v4471
  %v4473 = vmul.f32 %v3927, 1.442695
  %v4474 = vpow.pop %v4473
  %v4475 = vmul.f32 %v3928, 1.442695
  %v4476 = vpow.pop %v4475
  %v4477 = vmul.f32 %v3929, 1.442695
  %v4478 = vpow.pop %v4477
  %v4479 = vmul.f32 %v3930, 1.442695
  %v4480 = vpow.pop %v4479
  %v4481 = vmul.f32 %v3931, 1.442695
  %v4482 = vpow.pop %v4481
  %v4483 = vmul.f32 %v3932, 1.442695
  %v4484 = vpow.pop %v4483
  %v4485 = vmul.f32 %v3933, 1.442695
  %v4486 = vpow.pop %v4485
  %v4487 = vmul.f32 %v3934, 1.442695
  %v4488 = vpow.pop %v4487
  %v4489 = vmul.f32 %v3935, 1.442695
  %v4490 = vpow.pop %v4489
  %v4491 = vmul.f32 %v3936, 1.442695
  %v4492 = vpow.pop %v4491
  %v4493 = vmul.f32 %v3937, 1.442695
  %v4494 = vpow.pop %v4493
  %v4495 = vmul.f32 %v3938, 1.442695
  %v4496 = vpow.pop %v4495
  %v4497 = vmul.f32 %v3939, 1.442695
  %v4498 = vpow.pop %v4497
  %v4499 = vmul.f32 %v3940, 1.442695
  %v4500 = vpow.pop %v4499
  %v4501 = vmul.f32 %v3941, 1.442695
  %v4502 = vpow.pop %v4501
  %v4503 = vmul.f32 %v3942, 1.442695
  %v4504 = vpow.pop %v4503
  %v4505 = vmul.f32 %v3943, 1.442695
  %v4506 = vpow.pop %v4505
  %v4507 = vmul.f32 %v3944, 1.442695
  %v4508 = vpow.pop %v4507
  %v4509 = vmul.f32 %v3945, 1.442695
  %v4510 = vpow.pop %v4509
  %v4511 = vmul.f32 %v3946, 1.442695
  %v4512 = vpow.pop %v4511
  %v4513 = vmul.f32 %v3947, 1.442695
  %v4514 = vpow.pop %v4513
  %v4515 = vmul.f32 %v3948, 1.442695
  %v4516 = vpow.pop %v4515
  %v4517 = vmul.f32 %v3949, 1.442695
  %v4518 = vpow.pop %v4517
  %v4519 = vmul.f32 %v3950, 1.442695
  %v4520 = vpow.pop %v4519
  %v4521 = vmul.f32 %v3951, 1.442695
  %v4522 = vpow.pop %v4521
  %v4523 = vmul.f32 %v3952, 1.442695
  %v4524 = vpow.pop %v4523
  %v4525 = vmul.f32 %v3953, 1.442695
  %v4526 = vpow.pop %v4525
  %v4527 = vmul.f32 %v3954, 1.442695
  %v4528 = vpow.pop %v4527
  %v4529 = vmul.f32 %v3955, 1.442695
  %v4530 = vpow.pop %v4529
  %v4531 = vmul.f32 %v3956, 1.442695
  %v4532 = vpow.pop %v4531
  %v4533 = vmul.f32 %v3957, 1.442695
  %v4534 = vpow.pop %v4533
  %v4535 = vmul.f32 %v3958, 1.442695
  %v4536 = vpow.pop %v4535
  %v4537 = vmul.f32 %v3959, 1.442695
  %v4538 = vpow.pop %v4537
  %v4539 = vmul.f32 %v3960, 1.442695
  %v4540 = vpow.pop %v4539
  %v4541 = vmul.f32 %v3961, 1.442695
  %v4542 = vpow.pop %v4541
  %v4543 = vmul.f32 %v3962, 1.442695
  %v4544 = vpow.pop %v4543
  %v4545 = vmul.f32 %v3963, 1.442695
  %v4546 = vpow.pop %v4545
  %v4547 = vmul.f32 %v3964, 1.442695
  %v4548 = vpow.pop %v4547
  %v4549 = vmul.f32 %v3965, 1.442695
  %v4550 = vpow.pop %v4549
  %v4551 = vmul.f32 %v3966, 1.442695
  %v4552 = vpow.pop %v4551
  %v4553 = vmul.f32 %v3967, 1.442695
  %v4554 = vpow.pop %v4553
  %v4555 = vmul.f32 %v3968, 1.442695
  %v4556 = vpow.pop %v4555
  %v4557 = vmul.f32 %v3969, 1.442695
  %v4558 = vpow.pop %v4557
  %v4559 = vmul.f32 %v3970, 1.442695
  %v4560 = vpow.pop %v4559
  %v4561 = vmul.f32 %v3971, 1.442695
  %v4562 = vpow.pop %v4561
  %v4563 = vmul.f32 %v3972, 1.442695
  %v4564 = vpow.pop %v4563
  %v4565 = vmul.f32 %v3973, 1.442695
  %v4566 = vpow.pop %v4565
  %v4567 = vmul.f32 %v3974, 1.442695
  %v4568 = vpow.pop %v4567
  %v4569 = vmul.f32 %v3975, 1.442695
  %v4570 = vpow.pop %v4569
  %v4571 = vmul.f32 %v3976, 1.442695
  %v4572 = vpow.pop %v4571
  %v4573 = vmul.f32 %v3977, 1.442695
  %v4574 = vpow.pop %v4573
  %v4575 = vmul.f32 %v3978, 1.442695
  %v4576 = vpow.pop %v4575
  %v4577 = vmul.f32 %v3979, 1.442695
  %v4578 = vpow.pop %v4577
  %v4579 = vmul.f32 %v3980, 1.442695
  %v4580 = vpow.pop %v4579
  %v4581 = vmul.f32 %v3981, 1.442695
  %v4582 = vpow.pop %v4581
  %v4583 = vmul.f32 %v3982, 1.442695
  %v4584 = vpow.pop %v4583
  %v4585 = vmul.f32 %v3983, 1.442695
  %v4586 = vpow.pop %v4585
  %v4587 = vmul.f32 %v3984, 1.442695
  %v4588 = vpow.pop %v4587
  %v4589 = vmul.f32 %v3985, 1.442695
  %v4590 = vpow.pop %v4589
  %v4591 = vmul.f32 %v3986, 1.442695
  %v4592 = vpow.pop %v4591
  %v4593 = vmul.f32 %v3987, 1.442695
  %v4594 = vpow.pop %v4593
  %v4595 = vmul.f32 %v3988, 1.442695
  %v4596 = vpow.pop %v4595
  %v4597 = vmul.f32 %v3989, 1.442695
  %v4598 = vpow.pop %v4597
  %v4599 = vmul.f32 %v3990, 1.442695
  %v4600 = vpow.pop %v4599
  %v4601 = vmul.f32 %v3991, 1.442695
  %v4602 = vpow.pop %v4601
  %v4603 = vmul.f32 %v3992, 1.442695
  %v4604 = vpow.pop %v4603
  %v4605 = vmul.f32 %v3993, 1.442695
  %v4606 = vpow.pop %v4605
  %v4607 = vmul.f32 %v3994, 1.442695
  %v4608 = vpow.pop %v4607
  %v4609 = vmul.f32 %v3995, 1.442695
  %v4610 = vpow.pop %v4609
  %v4611 = vmul.f32 %v3996, 1.442695
  %v4612 = vpow.pop %v4611
  %v4613 = vmul.f32 %v3997, 1.442695
  %v4614 = vpow.pop %v4613
  %v4615 = vmul.f32 %v3998, 1.442695
  %v4616 = vpow.pop %v4615
  %v4617 = vmul.f32 %v3999, 1.442695
  %v4618 = vpow.pop %v4617
  %v4619 = vmul.f32 %v4000, 1.442695
  %v4620 = vpow.pop %v4619
  %v4621 = vmul.f32 %v4001, 1.442695
  %v4622 = vpow.pop %v4621
  %v4623 = vmul.f32 %v4002, 1.442695
  %v4624 = vpow.pop %v4623
  %v4625 = vmul.f32 %v4003, 1.442695
  %v4626 = vpow.pop %v4625
  %v4627 = vmul.f32 %v4004, 1.442695
  %v4628 = vpow.pop %v4627
  %v4629 = vmul.f32 %v4005, 1.442695
  %v4630 = vpow.pop %v4629
  %v4631 = vmul.f32 %v4006, 1.442695
  %v4632 = vpow.pop %v4631
  %v4633 = vmul.f32 %v4007, 1.442695
  %v4634 = vpow.pop %v4633
  %v4635 = vmul.f32 %v4008, 1.442695
  %v4636 = vpow.pop %v4635
  %v4637 = vmul.f32 %v4009, 1.442695
  %v4638 = vpow.pop %v4637
  %v4639 = vmul.f32 %v4010, 1.442695
  %v4640 = vpow.pop %v4639
  %v4641 = vmul.f32 %v4011, 1.442695
  %v4642 = vpow.pop %v4641
  %v4643 = vmul.f32 %v4012, 1.442695
  %v4644 = vpow.pop %v4643
  %v4645 = vmul.f32 %v4013, 1.442695
  %v4646 = vpow.pop %v4645
  %v4647 = vmul.f32 %v4014, 1.442695
  %v4648 = vpow.pop %v4647
  %v4649 = vmul.f32 %v4015, 1.442695
  %v4650 = vpow.pop %v4649
  %v4651 = vmul.f32 %v4016, 1.442695
  %v4652 = vpow.pop %v4651
  %v4653 = vmul.f32 %v4017, 1.442695
  %v4654 = vpow.pop %v4653
  %v4655 = vmul.f32 %v4018, 1.442695
  %v4656 = vpow.pop %v4655
  %v4657 = vmul.f32 %v4019, 1.442695
  %v4658 = vpow.pop %v4657
  %v4659 = vmul.f32 %v4020, 1.442695
  %v4660 = vpow.pop %v4659
  %v4661 = vmul.f32 %v4021, 1.442695
  %v4662 = vpow.pop %v4661
  %v4663 = vmul.f32 %v4022, 1.442695
  %v4664 = vpow.pop %v4663
  %v4665 = vmul.f32 %v4023, 1.442695
  %v4666 = vpow.pop %v4665
  %v4667 = vmul.f32 %v4024, 1.442695
  %v4668 = vpow.pop %v4667
  %v4669 = vmul.f32 %v4025, 1.442695
  %v4670 = vpow.pop %v4669
  %v4671 = vmul.f32 %v4026, 1.442695
  %v4672 = vpow.pop %v4671
  %v4673 = vmul.f32 %v4027, 1.442695
  %v4674 = vpow.pop %v4673
  %v4675 = vmul.f32 %v4028, 1.442695
  %v4676 = vpow.pop %v4675
  %v4677 = vmul.f32 %v4029, 1.442695
  %v4678 = vpow.pop %v4677
  %v4679 = vmul.f32 %v4030, 1.442695
  %v4680 = vpow.pop %v4679
  %v4681 = vmul.f32 %v4031, 1.442695
  %v4682 = vpow.pop %v4681
  %v4683 = vmul.f32 %v4032, 1.442695
  %v4684 = vpow.pop %v4683
  %v4685 = vmul.f32 %v4033, 1.442695
  %v4686 = vpow.pop %v4685
  %v4687 = vmul.f32 %v4034, 1.442695
  %v4688 = vpow.pop %v4687
  %v4689 = vmul.f32 %v4035, 1.442695
  %v4690 = vpow.pop %v4689
  %v4691 = vmul.f32 %v4036, 1.442695
  %v4692 = vpow.pop %v4691
  %v4693 = vmul.f32 %v4037, 1.442695
  %v4694 = vpow.pop %v4693
  %v4695 = vmul.f32 %v4038, 1.442695
  %v4696 = vpow.pop %v4695
  %v4697 = vmul.f32 %v4039, 1.442695
  %v4698 = vpow.pop %v4697
  %v4699 = vmul.f32 %v4040, 1.442695
  %v4700 = vpow.pop %v4699
  %v4701 = vmul.f32 %v4041, 1.442695
  %v4702 = vpow.pop %v4701
  %v4703 = vmul.f32 %v4042, 1.442695
  %v4704 = vpow.pop %v4703
  %v4705 = vmul.f32 %v4043, 1.442695
  %v4706 = vpow.pop %v4705
  %v4707 = vmul.f32 %v4044, 1.442695
  %v4708 = vpow.pop %v4707
  %v4709 = vmul.f32 %v4045, 1.442695
  %v4710 = vpow.pop %v4709
  %v4711 = vmul.f32 %v4046, 1.442695
  %v4712 = vpow.pop %v4711
  %v4713 = vmul.f32 %v4047, 1.442695
  %v4714 = vpow.pop %v4713
  %v4715 = vmul.f32 %v4048, 1.442695
  %v4716 = vpow.pop %v4715
  %v4717 = vmul.f32 %v4049, 1.442695
  %v4718 = vpow.pop %v4717
  %v4719 = vmul.f32 %v4050, 1.442695
  %v4720 = vpow.pop %v4719
  %v4721 = vmul.f32 %v4051, 1.442695
  %v4722 = vpow.pop %v4721
  %v4723 = vmul.f32 %v4052, 1.442695
  %v4724 = vpow.pop %v4723
  %v4725 = vmul.f32 %v4053, 1.442695
  %v4726 = vpow.pop %v4725
  %v4727 = vmul.f32 %v4054, 1.442695
  %v4728 = vpow.pop %v4727
  %v4729 = vmul.f32 %v4055, 1.442695
  %v4730 = vpow.pop %v4729
  %v4731 = vmul.f32 %v4056, 1.442695
  %v4732 = vpow.pop %v4731
  %v4733 = vmul.f32 %v4057, 1.442695
  %v4734 = vpow.pop %v4733
  %v4735 = vmul.f32 %v4058, 1.442695
  %v4736 = vpow.pop %v4735
  %v4737 = vmul.f32 %v4059, 1.442695
  %v4738 = vpow.pop %v4737
  %v4739 = vmul.f32 %v4060, 1.442695
  %v4740 = vpow.pop %v4739
  %v4741 = vmul.f32 %v4061, 1.442695
  %v4742 = vpow.pop %v4741
  %v4743 = vmul.f32 %v4062, 1.442695
  %v4744 = vpow.pop %v4743
  %v4745 = vmul.f32 %v4063, 1.442695
  %v4746 = vpow.pop %v4745
  %v4747 = vmul.f32 %v4064, 1.442695
  %v4748 = vpow.pop %v4747
  %v4749 = vmul.f32 %v4065, 1.442695
  %v4750 = vpow.pop %v4749
  %v4751 = vmul.f32 %v4066, 1.442695
  %v4752 = vpow.pop %v4751
  %v4753 = vmul.f32 %v4067, 1.442695
  %v4754 = vpow.pop %v4753
  %v4755 = vmul.f32 %v4068, 1.442695
  %v4756 = vpow.pop %v4755
  %v4757 = vmul.f32 %v4069, 1.442695
  %v4758 = vpow.pop %v4757
  %v4759 = vmul.f32 %v4070, 1.442695
  %v4760 = vpow.pop %v4759
  %v4761 = vmul.f32 %v4071, 1.442695
  %v4762 = vpow.pop %v4761
  %v4763 = vmul.f32 %v4072, 1.442695
  %v4764 = vpow.pop %v4763
  %v4765 = vmul.f32 %v4073, 1.442695
  %v4766 = vpow.pop %v4765
  %v4767 = vmul.f32 %v4074, 1.442695
  %v4768 = vpow.pop %v4767
  %v4769 = vmul.f32 %v4075, 1.442695
  %v4770 = vpow.pop %v4769
  %v4771 = vmul.f32 %v4076, 1.442695
  %v4772 = vpow.pop %v4771
  %v4773 = vmul.f32 %v4077, 1.442695
  %v4774 = vpow.pop %v4773
  %v4775 = vmul.f32 %v4078, 1.442695
  %v4776 = vpow.pop %v4775
  %v4777 = vmul.f32 %v4079, 1.442695
  %v4778 = vpow.pop %v4777
  %v4779 = vmul.f32 %v4080, 1.442695
  %v4780 = vpow.pop %v4779
  %v4781 = vmul.f32 %v4081, 1.442695
  %v4782 = vpow.pop %v4781
  %v4783 = vmul.f32 %v4082, 1.442695
  %v4784 = vpow.pop %v4783
  %v4785 = vmul.f32 %v4083, 1.442695
  %v4786 = vpow.pop %v4785
  %v4787 = vmul.f32 %v4084, 1.442695
  %v4788 = vpow.pop %v4787
  %v4789 = vmul.f32 %v4085, 1.442695
  %v4790 = vpow.pop %v4789
  %v4791 = vmul.f32 %v4086, 1.442695
  %v4792 = vpow.pop %v4791
  %v4793 = vmul.f32 %v4087, 1.442695
  %v4794 = vpow.pop %v4793
  %v4795 = vmul.f32 %v4088, 1.442695
  %v4796 = vpow.pop %v4795
  %v4797 = vmul.f32 %v4089, 1.442695
  %v4798 = vpow.pop %v4797
  %v4799 = vmul.f32 %v4090, 1.442695
  %v4800 = vpow.pop %v4799
  %v4801 = vmul.f32 %v4091, 1.442695
  %v4802 = vpow.pop %v4801
  %v4803 = vmul.f32 %v4092, 1.442695
  %v4804 = vpow.pop %v4803
  %v4805 = vmul.f32 %v4093, 1.442695
  %v4806 = vpow.pop %v4805
  %v4807 = vmul.f32 %v4094, 1.442695
  %v4808 = vpow.pop %v4807
  %v4809 = vmul.f32 %v4095, 1.442695
  %v4810 = vpow.pop %v4809
  %v4811 = vmul.f32 %v4096, 1.442695
  %v4812 = vpow.pop %v4811
  %v4813 = vmul.f32 %v4097, 1.442695
  %v4814 = vpow.pop %v4813
  %v4815 = vmul.f32 %v4098, 1.442695
  %v4816 = vpow.pop %v4815
  %v4817 = vmul.f32 %v4099, 1.442695
  %v4818 = vpow.pop %v4817
  %v4819 = vmul.f32 %v4100, 1.442695
  %v4820 = vpow.pop %v4819
  %v4821 = vmul.f32 %v4101, 1.442695
  %v4822 = vpow.pop %v4821
  %v4823 = vmul.f32 %v4102, 1.442695
  %v4824 = vpow.pop %v4823
  %v4825 = vmul.f32 %v4103, 1.442695
  %v4826 = vpow.pop %v4825
  %v4827 = vmul.f32 %v4104, 1.442695
  %v4828 = vpow.pop %v4827
  %v4829 = vmul.f32 %v4105, 1.442695
  %v4830 = vpow.pop %v4829
  %v4831 = vmul.f32 %v4106, 1.442695
  %v4832 = vpow.pop %v4831
  %v4833 = vmul.f32 %v4107, 1.442695
  %v4834 = vpow.pop %v4833
  %v4835 = vmul.f32 %v4108, 1.442695
  %v4836 = vpow.pop %v4835
  %v4837 = vmul.f32 %v4109, 1.442695
  %v4838 = vpow.pop %v4837
  %v4839 = vmul.f32 %v4110, 1.442695
  %v4840 = vpow.pop %v4839
  %v4841 = vmul.f32 %v4111, 1.442695
  %v4842 = vpow.pop %v4841
  %v4843 = vmul.f32 %v4112, 1.442695
  %v4844 = vpow.pop %v4843
  %v4845 = vmul.f32 %v4113, 1.442695
  %v4846 = vpow.pop %v4845
  %v4847 = vmul.f32 %v4114, 1.442695
  %v4848 = vpow.pop %v4847
  %v4849 = vmul.f32 %v4115, 1.442695
  %v4850 = vpow.pop %v4849
  %v4851 = vmul.f32 %v4116, 1.442695
  %v4852 = vpow.pop %v4851
  %v4853 = vmul.f32 %v4117, 1.442695
  %v4854 = vpow.pop %v4853
  %v4855 = vmul.f32 %v4118, 1.442695
  %v4856 = vpow.pop %v4855
  %v4857 = vmul.f32 %v4119, 1.442695
  %v4858 = vpow.pop %v4857
  %v4859 = vmul.f32 %v4120, 1.442695
  %v4860 = vpow.pop %v4859
  %v4861 = vmul.f32 %v4121, 1.442695
  %v4862 = vpow.pop %v4861
  %v4863 = vmul.f32 %v4122, 1.442695
  %v4864 = vpow.pop %v4863
  %v4865 = vmul.f32 %v4123, 1.442695
  %v4866 = vpow.pop %v4865
  %v4867 = vmul.f32 %v4124, 1.442695
  %v4868 = vpow.pop %v4867
  %v4869 = vmul.f32 %v4125, 1.442695
  %v4870 = vpow.pop %v4869
  %v4871 = vmul.f32 %v4126, 1.442695
  %v4872 = vpow.pop %v4871
  %v4873 = vmul.f32 %v4127, 1.442695
  %v4874 = vpow.pop %v4873
  %v4875 = vmul.f32 %v4128, 1.442695
  %v4876 = vpow.pop %v4875
  %v4877 = vmul.f32 %v4129, 1.442695
  %v4878 = vpow.pop %v4877
  %v4879 = vmul.f32 %v4130, 1.442695
  %v4880 = vpow.pop %v4879
  %v4881 = vmul.f32 %v4131, 1.442695
  %v4882 = vpow.pop %v4881
  %v4883 = vmul.f32 %v4132, 1.442695
  %v4884 = vpow.pop %v4883
  %v4885 = vmul.f32 %v4133, 1.442695
  %v4886 = vpow.pop %v4885
  %v4887 = vmul.f32 %v4134, 1.442695
  %v4888 = vpow.pop %v4887
  %v4889 = vmul.f32 %v4135, 1.442695
  %v4890 = vpow.pop %v4889
  %v4891 = vmul.f32 %v4136, 1.442695
  %v4892 = vpow.pop %v4891
  %v4893 = vmul.f32 %v4137, 1.442695
  %v4894 = vpow.pop %v4893
  %v4895 = vmul.f32 %v4138, 1.442695
  %v4896 = vpow.pop %v4895
  %v4897 = vmul.f32 %v4139, 1.442695
  %v4898 = vpow.pop %v4897
  %v4899 = vmul.f32 %v4140, 1.442695
  %v4900 = vpow.pop %v4899
  %v4901 = vmul.f32 %v4141, 1.442695
  %v4902 = vpow.pop %v4901
  %v4903 = vmul.f32 %v4142, 1.442695
  %v4904 = vpow.pop %v4903
  %v4905 = vmul.f32 %v4143, 1.442695
  %v4906 = vpow.pop %v4905
  %v4907 = vmul.f32 %v4144, 1.442695
  %v4908 = vpow.pop %v4907
  %v4909 = vmul.f32 %v4145, 1.442695
  %v4910 = vpow.pop %v4909
  %v4911 = vmul.f32 %v4146, 1.442695
  %v4912 = vpow.pop %v4911
  %v4913 = vmul.f32 %v4147, 1.442695
  %v4914 = vpow.pop %v4913
  %v4915 = vmul.f32 %v4148, 1.442695
  %v4916 = vpow.pop %v4915
  %v4917 = vadd.f32 %v4150, %v4154
  %v4918 = vadd.f32 %v4917, %v4158
  %v4919 = vadd.f32 %v4918, %v4162
  %v4920 = vadd.f32 %v4919, %v4166
  %v4921 = vadd.f32 %v4920, %v4170
  %v4922 = vadd.f32 %v4921, %v4174
  %v4923 = vadd.f32 %v4922, %v4178
  %v4924 = vadd.f32 %v4923, %v4182
  %v4925 = vadd.f32 %v4924, %v4186
  %v4926 = vadd.f32 %v4925, %v4190
  %v4927 = vadd.f32 %v4926, %v4194
  %v4928 = vadd.f32 %v4927, %v4198
  %v4929 = vadd.f32 %v4928, %v4202
  %v4930 = vadd.f32 %v4929, %v4206
  %v4931 = vadd.f32 %v4930, %v4210
  %v4932 = vadd.f32 %v4931, %v4214
  %v4933 = vadd.f32 %v4932, %v4218
  %v4934 = vadd.f32 %v4933, %v4222
  %v4935 = vadd.f32 %v4934, %v4226
  %v4936 = vadd.f32 %v4935, %v4230
  %v4937 = vadd.f32 %v4936, %v4234
  %v4938 = vadd.f32 %v4937, %v4238
  %v4939 = vadd.f32 %v4938, %v4242
  %v4940 = vadd.f32 %v4939, %v4246
  %v4941 = vadd.f32 %v4940, %v4250
  %v4942 = vadd.f32 %v4941, %v4254
  %v4943 = vadd.f32 %v4942, %v4258
  %v4944 = vadd.f32 %v4943, %v4262
  %v4945 = vadd.f32 %v4944, %v4266
  %v4946 = vadd.f32 %v4945, %v4270
  %v4947 = vadd.f32 %v4946, %v4274
  %v4948 = vrot.slane %v4947, 4
  %v4949 = vadd.f32 %v4947, %v4948
  %v4950 = vrot.slane %v4949, 2
  %v4951 = vadd.f32 %v4949, %v4950
  %v4952 = vrot.slane %v4951, 1
  %v4953 = vadd.f32 %v4951, %v4952
  %v4954 = vadd.f32 %v4152, %v4156
  %v4955 = vadd.f32 %v4954, %v4160
  %v4956 = vadd.f32 %v4955, %v4164
  %v4957 = vadd.f32 %v4956, %v4168
  %v4958 = vadd.f32 %v4957, %v4172
  %v4959 = vadd.f32 %v4958, %v4176
  %v4960 = vadd.f32 %v4959, %v4180
  %v4961 = vadd.f32 %v4960, %v4184
  %v4962 = vadd.f32 %v4961, %v4188
  %v4963 = vadd.f32 %v4962, %v4192
  %v4964 = vadd.f32 %v4963, %v4196
  %v4965 = vadd.f32 %v4964, %v4200
  %v4966 = vadd.f32 %v4965, %v4204
  %v4967 = vadd.f32 %v4966, %v4208
  %v4968 = vadd.f32 %v4967, %v4212
  %v4969 = vadd.f32 %v4968, %v4216
  %v4970 = vadd.f32 %v4969, %v4220
  %v4971 = vadd.f32 %v4970, %v4224
  %v4972 = vadd.f32 %v4971, %v4228
  %v4973 = vadd.f32 %v4972, %v4232
  %v4974 = vadd.f32 %v4973, %v4236
  %v4975 = vadd.f32 %v4974, %v4240
  %v4976 = vadd.f32 %v4975, %v4244
  %v4977 = vadd.f32 %v4976, %v4248
  %v4978 = vadd.f32 %v4977, %v4252
  %v4979 = vadd.f32 %v4978, %v4256
  %v4980 = vadd.f32 %v4979, %v4260
  %v4981 = vadd.f32 %v4980, %v4264
  %v4982 = vadd.f32 %v4981, %v4268
  %v4983 = vadd.f32 %v4982, %v4272
  %v4984 = vadd.f32 %v4983, %v4276
  %v4985 = vrot.slane %v4984, 4
  %v4986 = vadd.f32 %v4984, %v4985
  %v4987 = vrot.slane %v4986, 2
  %v4988 = vadd.f32 %v4986, %v4987
  %v4989 = vrot.slane %v4988, 1
  %v4990 = vadd.f32 %v4988, %v4989
  %v4991 = vadd.f32 %v4278, %v4282
  %v4992 = vadd.f32 %v4991, %v4286
  %v4993 = vadd.f32 %v4992, %v4290
  %v4994 = vadd.f32 %v4993, %v4294
  %v4995 = vadd.f32 %v4994, %v4298
  %v4996 = vadd.f32 %v4995, %v4302
  %v4997 = vadd.f32 %v4996, %v4306
  %v4998 = vadd.f32 %v4997, %v4310
  %v4999 = vadd.f32 %v4998, %v4314
  %v5000 = vadd.f32 %v4999, %v4318
  %v5001 = vadd.f32 %v5000, %v4322
  %v5002 = vadd.f32 %v5001, %v4326
  %v5003 = vadd.f32 %v5002, %v4330
  %v5004 = vadd.f32 %v5003, %v4334
  %v5005 = vadd.f32 %v5004, %v4338
  %v5006 = vadd.f32 %v5005, %v4342
  %v5007 = vadd.f32 %v5006, %v4346
  %v5008 = vadd.f32 %v5007, %v4350
  %v5009 = vadd.f32 %v5008, %v4354
  %v5010 = vadd.f32 %v5009, %v4358
  %v5011 = vadd.f32 %v5010, %v4362
  %v5012 = vadd.f32 %v5011, %v4366
  %v5013 = vadd.f32 %v5012, %v4370
  %v5014 = vadd.f32 %v5013, %v4374
  %v5015 = vadd.f32 %v5014, %v4378
  %v5016 = vadd.f32 %v5015, %v4382
  %v5017 = vadd.f32 %v5016, %v4386
  %v5018 = vadd.f32 %v5017, %v4390
  %v5019 = vadd.f32 %v5018, %v4394
  %v5020 = vadd.f32 %v5019, %v4398
  %v5021 = vadd.f32 %v5020, %v4402
  %v5022 = vrot.slane %v5021, 4
  %v5023 = vadd.f32 %v5021, %v5022
  %v5024 = vrot.slane %v5023, 2
  %v5025 = vadd.f32 %v5023, %v5024
  %v5026 = vrot.slane %v5025, 1
  %v5027 = vadd.f32 %v5025, %v5026
  %v5028 = vadd.f32 %v4280, %v4284
  %v5029 = vadd.f32 %v5028, %v4288
  %v5030 = vadd.f32 %v5029, %v4292
  %v5031 = vadd.f32 %v5030, %v4296
  %v5032 = vadd.f32 %v5031, %v4300
  %v5033 = vadd.f32 %v5032, %v4304
  %v5034 = vadd.f32 %v5033, %v4308
  %v5035 = vadd.f32 %v5034, %v4312
  %v5036 = vadd.f32 %v5035, %v4316
  %v5037 = vadd.f32 %v5036, %v4320
  %v5038 = vadd.f32 %v5037, %v4324
  %v5039 = vadd.f32 %v5038, %v4328
  %v5040 = vadd.f32 %v5039, %v4332
  %v5041 = vadd.f32 %v5040, %v4336
  %v5042 = vadd.f32 %v5041, %v4340
  %v5043 = vadd.f32 %v5042, %v4344
  %v5044 = vadd.f32 %v5043, %v4348
  %v5045 = vadd.f32 %v5044, %v4352
  %v5046 = vadd.f32 %v5045, %v4356
  %v5047 = vadd.f32 %v5046, %v4360
  %v5048 = vadd.f32 %v5047, %v4364
  %v5049 = vadd.f32 %v5048, %v4368
  %v5050 = vadd.f32 %v5049, %v4372
  %v5051 = vadd.f32 %v5050, %v4376
  %v5052 = vadd.f32 %v5051, %v4380
  %v5053 = vadd.f32 %v5052, %v4384
  %v5054 = vadd.f32 %v5053, %v4388
  %v5055 = vadd.f32 %v5054, %v4392
  %v5056 = vadd.f32 %v5055, %v4396
  %v5057 = vadd.f32 %v5056, %v4400
  %v5058 = vadd.f32 %v5057, %v4404
  %v5059 = vrot.slane %v5058, 4
  %v5060 = vadd.f32 %v5058, %v5059
  %v5061 = vrot.slane %v5060, 2
  %v5062 = vadd.f32 %v5060, %v5061
  %v5063 = vrot.slane %v5062, 1
  %v5064 = vadd.f32 %v5062, %v5063
  %v5065 = vadd.f32 %v4406, %v4410
  %v5066 = vadd.f32 %v5065, %v4414
  %v5067 = vadd.f32 %v5066, %v4418
  %v5068 = vadd.f32 %v5067, %v4422
  %v5069 = vadd.f32 %v5068, %v4426
  %v5070 = vadd.f32 %v5069, %v4430
  %v5071 = vadd.f32 %v5070, %v4434
  %v5072 = vadd.f32 %v5071, %v4438
  %v5073 = vadd.f32 %v5072, %v4442
  %v5074 = vadd.f32 %v5073, %v4446
  %v5075 = vadd.f32 %v5074, %v4450
  %v5076 = vadd.f32 %v5075, %v4454
  %v5077 = vadd.f32 %v5076, %v4458
  %v5078 = vadd.f32 %v5077, %v4462
  %v5079 = vadd.f32 %v5078, %v4466
  %v5080 = vadd.f32 %v5079, %v4470
  %v5081 = vadd.f32 %v5080, %v4474
  %v5082 = vadd.f32 %v5081, %v4478
  %v5083 = vadd.f32 %v5082, %v4482
  %v5084 = vadd.f32 %v5083, %v4486
  %v5085 = vadd.f32 %v5084, %v4490
  %v5086 = vadd.f32 %v5085, %v4494
  %v5087 = vadd.f32 %v5086, %v4498
  %v5088 = vadd.f32 %v5087, %v4502
  %v5089 = vadd.f32 %v5088, %v4506
  %v5090 = vadd.f32 %v5089, %v4510
  %v5091 = vadd.f32 %v5090, %v4514
  %v5092 = vadd.f32 %v5091, %v4518
  %v5093 = vadd.f32 %v5092, %v4522
  %v5094 = vadd.f32 %v5093, %v4526
  %v5095 = vadd.f32 %v5094, %v4530
  %v5096 = vrot.slane %v5095, 4
  %v5097 = vadd.f32 %v5095, %v5096
  %v5098 = vrot.slane %v5097, 2
  %v5099 = vadd.f32 %v5097, %v5098
  %v5100 = vrot.slane %v5099, 1
  %v5101 = vadd.f32 %v5099, %v5100
  %v5102 = vadd.f32 %v4408, %v4412
  %v5103 = vadd.f32 %v5102, %v4416
  %v5104 = vadd.f32 %v5103, %v4420
  %v5105 = vadd.f32 %v5104, %v4424
  %v5106 = vadd.f32 %v5105, %v4428
  %v5107 = vadd.f32 %v5106, %v4432
  %v5108 = vadd.f32 %v5107, %v4436
  %v5109 = vadd.f32 %v5108, %v4440
  %v5110 = vadd.f32 %v5109, %v4444
  %v5111 = vadd.f32 %v5110, %v4448
  %v5112 = vadd.f32 %v5111, %v4452
  %v5113 = vadd.f32 %v5112, %v4456
  %v5114 = vadd.f32 %v5113, %v4460
  %v5115 = vadd.f32 %v5114, %v4464
  %v5116 = vadd.f32 %v5115, %v4468
  %v5117 = vadd.f32 %v5116, %v4472
  %v5118 = vadd.f32 %v5117, %v4476
  %v5119 = vadd.f32 %v5118, %v4480
  %v5120 = vadd.f32 %v5119, %v4484
  %v5121 = vadd.f32 %v5120, %v4488
  %v5122 = vadd.f32 %v5121, %v4492
  %v5123 = vadd.f32 %v5122, %v4496
  %v5124 = vadd.f32 %v5123, %v4500
  %v5125 = vadd.f32 %v5124, %v4504
  %v5126 = vadd.f32 %v5125, %v4508
  %v5127 = vadd.f32 %v5126, %v4512
  %v5128 = vadd.f32 %v5127, %v4516
  %v5129 = vadd.f32 %v5128, %v4520
  %v5130 = vadd.f32 %v5129, %v4524
  %v5131 = vadd.f32 %v5130, %v4528
  %v5132 = vadd.f32 %v5131, %v4532
  %v5133 = vrot.slane %v5132, 4
  %v5134 = vadd.f32 %v5132, %v5133
  %v5135 = vrot.slane %v5134, 2
  %v5136 = vadd.f32 %v5134, %v5135
  %v5137 = vrot.slane %v5136, 1
  %v5138 = vadd.f32 %v5136, %v5137
  %v5139 = vadd.f32 %v4534, %v4538
  %v5140 = vadd.f32 %v5139, %v4542
  %v5141 = vadd.f32 %v5140, %v4546
  %v5142 = vadd.f32 %v5141, %v4550
  %v5143 = vadd.f32 %v5142, %v4554
  %v5144 = vadd.f32 %v5143, %v4558
  %v5145 = vadd.f32 %v5144, %v4562
  %v5146 = vadd.f32 %v5145, %v4566
  %v5147 = vadd.f32 %v5146, %v4570
  %v5148 = vadd.f32 %v5147, %v4574
  %v5149 = vadd.f32 %v5148, %v4578
  %v5150 = vadd.f32 %v5149, %v4582
  %v5151 = vadd.f32 %v5150, %v4586
  %v5152 = vadd.f32 %v5151, %v4590
  %v5153 = vadd.f32 %v5152, %v4594
  %v5154 = vadd.f32 %v5153, %v4598
  %v5155 = vadd.f32 %v5154, %v4602
  %v5156 = vadd.f32 %v5155, %v4606
  %v5157 = vadd.f32 %v5156, %v4610
  %v5158 = vadd.f32 %v5157, %v4614
  %v5159 = vadd.f32 %v5158, %v4618
  %v5160 = vadd.f32 %v5159, %v4622
  %v5161 = vadd.f32 %v5160, %v4626
  %v5162 = vadd.f32 %v5161, %v4630
  %v5163 = vadd.f32 %v5162, %v4634
  %v5164 = vadd.f32 %v5163, %v4638
  %v5165 = vadd.f32 %v5164, %v4642
  %v5166 = vadd.f32 %v5165, %v4646
  %v5167 = vadd.f32 %v5166, %v4650
  %v5168 = vadd.f32 %v5167, %v4654
  %v5169 = vadd.f32 %v5168, %v4658
  %v5170 = vrot.slane %v5169, 4
  %v5171 = vadd.f32 %v5169, %v5170
  %v5172 = vrot.slane %v5171, 2
  %v5173 = vadd.f32 %v5171, %v5172
  %v5174 = vrot.slane %v5173, 1
  %v5175 = vadd.f32 %v5173, %v5174
  %v5176 = vadd.f32 %v4536, %v4540
  %v5177 = vadd.f32 %v5176, %v4544
  %v5178 = vadd.f32 %v5177, %v4548
  %v5179 = vadd.f32 %v5178, %v4552
  %v5180 = vadd.f32 %v5179, %v4556
  %v5181 = vadd.f32 %v5180, %v4560
  %v5182 = vadd.f32 %v5181, %v4564
  %v5183 = vadd.f32 %v5182, %v4568
  %v5184 = vadd.f32 %v5183, %v4572
  %v5185 = vadd.f32 %v5184, %v4576
  %v5186 = vadd.f32 %v5185, %v4580
  %v5187 = vadd.f32 %v5186, %v4584
  %v5188 = vadd.f32 %v5187, %v4588
  %v5189 = vadd.f32 %v5188, %v4592
  %v5190 = vadd.f32 %v5189, %v4596
  %v5191 = vadd.f32 %v5190, %v4600
  %v5192 = vadd.f32 %v5191, %v4604
  %v5193 = vadd.f32 %v5192, %v4608
  %v5194 = vadd.f32 %v5193, %v4612
  %v5195 = vadd.f32 %v5194, %v4616
  %v5196 = vadd.f32 %v5195, %v4620
  %v5197 = vadd.f32 %v5196, %v4624
  %v5198 = vadd.f32 %v5197, %v4628
  %v5199 = vadd.f32 %v5198, %v4632
  %v5200 = vadd.f32 %v5199, %v4636
  %v5201 = vadd.f32 %v5200, %v4640
  %v5202 = vadd.f32 %v5201, %v4644
  %v5203 = vadd.f32 %v5202, %v4648
  %v5204 = vadd.f32 %v5203, %v4652
  %v5205 = vadd.f32 %v5204, %v4656
  %v5206 = vadd.f32 %v5205, %v4660
  %v5207 = vrot.slane %v5206, 4
  %v5208 = vadd.f32 %v5206, %v5207
  %v5209 = vrot.slane %v5208, 2
  %v5210 = vadd.f32 %v5208, %v5209
  %v5211 = vrot.slane %v5210, 1
  %v5212 = vadd.f32 %v5210, %v5211
  %v5213 = vadd.f32 %v4662, %v4666
  %v5214 = vadd.f32 %v5213, %v4670
  %v5215 = vadd.f32 %v5214, %v4674
  %v5216 = vadd.f32 %v5215, %v4678
  %v5217 = vadd.f32 %v5216, %v4682
  %v5218 = vadd.f32 %v5217, %v4686
  %v5219 = vadd.f32 %v5218, %v4690
  %v5220 = vadd.f32 %v5219, %v4694
  %v5221 = vadd.f32 %v5220, %v4698
  %v5222 = vadd.f32 %v5221, %v4702
  %v5223 = vadd.f32 %v5222, %v4706
  %v5224 = vadd.f32 %v5223, %v4710
  %v5225 = vadd.f32 %v5224, %v4714
  %v5226 = vadd.f32 %v5225, %v4718
  %v5227 = vadd.f32 %v5226, %v4722
  %v5228 = vadd.f32 %v5227, %v4726
  %v5229 = vadd.f32 %v5228, %v4730
  %v5230 = vadd.f32 %v5229, %v4734
  %v5231 = vadd.f32 %v5230, %v4738
  %v5232 = vadd.f32 %v5231, %v4742
  %v5233 = vadd.f32 %v5232, %v4746
  %v5234 = vadd.f32 %v5233, %v4750
  %v5235 = vadd.f32 %v5234, %v4754
  %v5236 = vadd.f32 %v5235, %v4758
  %v5237 = vadd.f32 %v5236, %v4762
  %v5238 = vadd.f32 %v5237, %v4766
  %v5239 = vadd.f32 %v5238, %v4770
  %v5240 = vadd.f32 %v5239, %v4774
  %v5241 = vadd.f32 %v5240, %v4778
  %v5242 = vadd.f32 %v5241, %v4782
  %v5243 = vadd.f32 %v5242, %v4786
  %v5244 = vrot.slane %v5243, 4
  %v5245 = vadd.f32 %v5243, %v5244
  %v5246 = vrot.slane %v5245, 2
  %v5247 = vadd.f32 %v5245, %v5246
  %v5248 = vrot.slane %v5247, 1
  %v5249 = vadd.f32 %v5247, %v5248
  %v5250 = vadd.f32 %v4664, %v4668
  %v5251 = vadd.f32 %v5250, %v4672
  %v5252 = vadd.f32 %v5251, %v4676
  %v5253 = vadd.f32 %v5252, %v4680
  %v5254 = vadd.f32 %v5253, %v4684
  %v5255 = vadd.f32 %v5254, %v4688
  %v5256 = vadd.f32 %v5255, %v4692
  %v5257 = vadd.f32 %v5256, %v4696
  %v5258 = vadd.f32 %v5257, %v4700
  %v5259 = vadd.f32 %v5258, %v4704
  %v5260 = vadd.f32 %v5259, %v4708
  %v5261 = vadd.f32 %v5260, %v4712
  %v5262 = vadd.f32 %v5261, %v4716
  %v5263 = vadd.f32 %v5262, %v4720
  %v5264 = vadd.f32 %v5263, %v4724
  %v5265 = vadd.f32 %v5264, %v4728
  %v5266 = vadd.f32 %v5265, %v4732
  %v5267 = vadd.f32 %v5266, %v4736
  %v5268 = vadd.f32 %v5267, %v4740
  %v5269 = vadd.f32 %v5268, %v4744
  %v5270 = vadd.f32 %v5269, %v4748
  %v5271 = vadd.f32 %v5270, %v4752
  %v5272 = vadd.f32 %v5271, %v4756
  %v5273 = vadd.f32 %v5272, %v4760
  %v5274 = vadd.f32 %v5273, %v4764
  %v5275 = vadd.f32 %v5274, %v4768
  %v5276 = vadd.f32 %v5275, %v4772
  %v5277 = vadd.f32 %v5276, %v4776
  %v5278 = vadd.f32 %v5277, %v4780
  %v5279 = vadd.f32 %v5278, %v4784
  %v5280 = vadd.f32 %v5279, %v4788
  %v5281 = vrot.slane %v5280, 4
  %v5282 = vadd.f32 %v5280, %v5281
  %v5283 = vrot.slane %v5282, 2
  %v5284 = vadd.f32 %v5282, %v5283
  %v5285 = vrot.slane %v5284, 1
  %v5286 = vadd.f32 %v5284, %v5285
  %v5287 = vadd.f32 %v4790, %v4794
  %v5288 = vadd.f32 %v5287, %v4798
  %v5289 = vadd.f32 %v5288, %v4802
  %v5290 = vadd.f32 %v5289, %v4806
  %v5291 = vadd.f32 %v5290, %v4810
  %v5292 = vadd.f32 %v5291, %v4814
  %v5293 = vadd.f32 %v5292, %v4818
  %v5294 = vadd.f32 %v5293, %v4822
  %v5295 = vadd.f32 %v5294, %v4826
  %v5296 = vadd.f32 %v5295, %v4830
  %v5297 = vadd.f32 %v5296, %v4834
  %v5298 = vadd.f32 %v5297, %v4838
  %v5299 = vadd.f32 %v5298, %v4842
  %v5300 = vadd.f32 %v5299, %v4846
  %v5301 = vadd.f32 %v5300, %v4850
  %v5302 = vadd.f32 %v5301, %v4854
  %v5303 = vadd.f32 %v5302, %v4858
  %v5304 = vadd.f32 %v5303, %v4862
  %v5305 = vadd.f32 %v5304, %v4866
  %v5306 = vadd.f32 %v5305, %v4870
  %v5307 = vadd.f32 %v5306, %v4874
  %v5308 = vadd.f32 %v5307, %v4878
  %v5309 = vadd.f32 %v5308, %v4882
  %v5310 = vadd.f32 %v5309, %v4886
  %v5311 = vadd.f32 %v5310, %v4890
  %v5312 = vadd.f32 %v5311, %v4894
  %v5313 = vadd.f32 %v5312, %v4898
  %v5314 = vadd.f32 %v5313, %v4902
  %v5315 = vadd.f32 %v5314, %v4906
  %v5316 = vadd.f32 %v5315, %v4910
  %v5317 = vadd.f32 %v5316, %v4914
  %v5318 = vrot.slane %v5317, 4
  %v5319 = vadd.f32 %v5317, %v5318
  %v5320 = vrot.slane %v5319, 2
  %v5321 = vadd.f32 %v5319, %v5320
  %v5322 = vrot.slane %v5321, 1
  %v5323 = vadd.f32 %v5321, %v5322
  %v5324 = vadd.f32 %v4792, %v4796
  %v5325 = vadd.f32 %v5324, %v4800
  %v5326 = vadd.f32 %v5325, %v4804
  %v5327 = vadd.f32 %v5326, %v4808
  %v5328 = vadd.f32 %v5327, %v4812
  %v5329 = vadd.f32 %v5328, %v4816
  %v5330 = vadd.f32 %v5329, %v4820
  %v5331 = vadd.f32 %v5330, %v4824
  %v5332 = vadd.f32 %v5331, %v4828
  %v5333 = vadd.f32 %v5332, %v4832
  %v5334 = vadd.f32 %v5333, %v4836
  %v5335 = vadd.f32 %v5334, %v4840
  %v5336 = vadd.f32 %v5335, %v4844
  %v5337 = vadd.f32 %v5336, %v4848
  %v5338 = vadd.f32 %v5337, %v4852
  %v5339 = vadd.f32 %v5338, %v4856
  %v5340 = vadd.f32 %v5339, %v4860
  %v5341 = vadd.f32 %v5340, %v4864
  %v5342 = vadd.f32 %v5341, %v4868
  %v5343 = vadd.f32 %v5342, %v4872
  %v5344 = vadd.f32 %v5343, %v4876
  %v5345 = vadd.f32 %v5344, %v4880
  %v5346 = vadd.f32 %v5345, %v4884
  %v5347 = vadd.f32 %v5346, %v4888
  %v5348 = vadd.f32 %v5347, %v4892
  %v5349 = vadd.f32 %v5348, %v4896
  %v5350 = vadd.f32 %v5349, %v4900
  %v5351 = vadd.f32 %v5350, %v4904
  %v5352 = vadd.f32 %v5351, %v4908
  %v5353 = vadd.f32 %v5352, %v4912
  %v5354 = vadd.f32 %v5353, %v4916
  %v5355 = vrot.slane %v5354, 4
  %v5356 = vadd.f32 %v5354, %v5355
  %v5357 = vrot.slane %v5356, 2
  %v5358 = vadd.f32 %v5356, %v5357
  %v5359 = vrot.slane %v5358, 1
  %v5360 = vadd.f32 %v5358, %v5359
  %v5361 = vld [vmem:[%s3] sm:$0x77]
  %v5362 = vld [vmem:[%s3 + $0x8] sm:$0x77]
  %v5363 = vld [vmem:[%s3 + $0x10] sm:$0x77]
  %v5364 = vld [vmem:[%s3 + $0x18] sm:$0x77]
  %v5365 = vld [vmem:[%s3 + $0x20] sm:$0x77]
  %v5366 = vld [vmem:[%s3 + $0x28] sm:$0x77]
  %v5370 = vcombine.high %v5361, %v5361
  %v5371 = vcombine.high %v5362, %v5362
  %v5372 = vcombine.high %v5363, %v5363
  %5376 = vmatprep.subr.mxu0 %v4212
  %5377 = vmatpush1.msra.mxu0 %v4210
  %5378 = vmatprep.subr.mxu0 %v4208
  %5379 = vmatpush1.msra.mxu0 %v4206
  %5380 = vmatprep.subr.mxu0 %v4204
  %5381 = vmatpush1.msra.mxu0 %v4202
  %5382 = vmatprep.subr.mxu0 %v4200
  %5383 = vmatpush1.msra.mxu0 %v4198
  %5384 = vmatprep.subr.mxu0 %v4196
  %5385 = vmatpush1.msra.mxu0 %v4194
  %5386 = vmatprep.subr.mxu0 %v4192
  %5387 = vmatpush1.msra.mxu0 %v4190
  %5388 = vmatprep.subr.mxu0 %v4188
  %5389 = vmatpush1.msra.mxu0 %v4186
  %5390 = vmatprep.subr.mxu0 %v4184
  %5391 = vmatpush1.msra.mxu0 %v4182
  %5392 = vmatprep.subr.mxu0 %v4180
  %5393 = vmatpush1.msra.mxu0 %v4178
  %5394 = vmatprep.subr.mxu0 %v4176
  %5395 = vmatpush1.msra.mxu0 %v4174
  %5396 = vmatprep.subr.mxu0 %v4172
  %5397 = vmatpush1.msra.mxu0 %v4170
  %5398 = vmatprep.subr.mxu0 %v4168
  %5399 = vmatpush1.msra.mxu0 %v4166
  %5400 = vmatprep.subr.mxu0 %v4164
  %5401 = vmatpush1.msra.mxu0 %v4162
  %5402 = vmatprep.subr.mxu0 %v4160
  %5403 = vmatpush1.msra.mxu0 %v4158
  %5404 = vmatprep.subr.mxu0 %v4156
  %5405 = vmatpush1.msra.mxu0 %v4154
  %5406 = vmatprep.subr.mxu0 %v4152
  %5407 = vmatpush1.msra.mxu0 %v4150
  %5408 = vmatprep.subr.mxu0 %v4276
  %5409 = vmatpush2.msra.mxu0 %v4274
  %5410 = vmatprep.subr.mxu0 %v4272
  %5411 = vmatpush2.msra.mxu0 %v4270
  %5412 = vmatprep.subr.mxu0 %v4268
  %5413 = vmatpush2.msra.mxu0 %v4266
  %5414 = vmatprep.subr.mxu0 %v4264
  %5415 = vmatpush2.msra.mxu0 %v4262
  %5416 = vmatprep.subr.mxu0 %v4260
  %5417 = vmatpush2.msra.mxu0 %v4258
  %5418 = vmatprep.subr.mxu0 %v4256
  %5419 = vmatpush2.msra.mxu0 %v4254
  %5420 = vmatprep.subr.mxu0 %v4252
  %5421 = vmatpush2.msra.mxu0 %v4250
  %5422 = vmatprep.subr.mxu0 %v4248
  %5423 = vmatpush2.msra.mxu0 %v4246
  %5424 = vmatprep.subr.mxu0 %v4244
  %5425 = vmatpush2.msra.mxu0 %v4242
  %5426 = vmatprep.subr.mxu0 %v4240
  %5427 = vmatpush2.msra.mxu0 %v4238
  %5428 = vmatprep.subr.mxu0 %v4236
  %5429 = vmatpush2.msra.mxu0 %v4234
  %5430 = vmatprep.subr.mxu0 %v4232
  %5431 = vmatpush2.msra.mxu0 %v4230
  %5432 = vmatprep.subr.mxu0 %v4228
  %5433 = vmatpush2.msra.mxu0 %v4226
  %5434 = vmatprep.subr.mxu0 %v4224
  %5435 = vmatpush2.msra.mxu0 %v4222
  %5436 = vmatprep.subr.mxu0 %v4220
  %5437 = vmatpush2.msra.mxu0 %v4218
  %5438 = vmatprep.subr.mxu0 %v4216
  %5439 = vmatpush2.msra.mxu0 %v4214
  %5440 = vmatprep.mubr.f32.mxu0 %v5370
  %5441 = vmatmul.mubr.f32.gmra.mxu0 %v5361
  %v5442 = vpop.f32.mrf.mxu0
  %v5443 = vadd.f32 0.0, %v5442
  %v5444 = vpop.f32.mrf.mxu0
  %v5445 = vadd.f32 0.0, %v5444
  %5446 = vdwg.mxu0
  %5447 = vmatprep.subr.mxu0 %v4340
  %5448 = vmatpush1.msra.mxu0 %v4338
  %5449 = vmatprep.subr.mxu0 %v4336
  %5450 = vmatpush1.msra.mxu0 %v4334
  %5451 = vmatprep.subr.mxu0 %v4332
  %5452 = vmatpush1.msra.mxu0 %v4330
  %5453 = vmatprep.subr.mxu0 %v4328
  %5454 = vmatpush1.msra.mxu0 %v4326
  %5455 = vmatprep.subr.mxu0 %v4324
  %5456 = vmatpush1.msra.mxu0 %v4322
  %5457 = vmatprep.subr.mxu0 %v4320
  %5458 = vmatpush1.msra.mxu0 %v4318
  %5459 = vmatprep.subr.mxu0 %v4316
  %5460 = vmatpush1.msra.mxu0 %v4314
  %5461 = vmatprep.subr.mxu0 %v4312
  %5462 = vmatpush1.msra.mxu0 %v4310
  %5463 = vmatprep.subr.mxu0 %v4308
  %5464 = vmatpush1.msra.mxu0 %v4306
  %5465 = vmatprep.subr.mxu0 %v4304
  %5466 = vmatpush1.msra.mxu0 %v4302
  %5467 = vmatprep.subr.mxu0 %v4300
  %5468 = vmatpush1.msra.mxu0 %v4298
  %5469 = vmatprep.subr.mxu0 %v4296
  %5470 = vmatpush1.msra.mxu0 %v4294
  %5471 = vmatprep.subr.mxu0 %v4292
  %5472 = vmatpush1.msra.mxu0 %v4290
  %5473 = vmatprep.subr.mxu0 %v4288
  %5474 = vmatpush1.msra.mxu0 %v4286
  %5475 = vmatprep.subr.mxu0 %v4284
  %5476 = vmatpush1.msra.mxu0 %v4282
  %5477 = vmatprep.subr.mxu0 %v4280
  %5478 = vmatpush1.msra.mxu0 %v4278
  %5479 = vmatprep.subr.mxu0 %v4404
  %5480 = vmatpush2.msra.mxu0 %v4402
  %5481 = vmatprep.subr.mxu0 %v4400
  %5482 = vmatpush2.msra.mxu0 %v4398
  %5483 = vmatprep.subr.mxu0 %v4396
  %5484 = vmatpush2.msra.mxu0 %v4394
  %5485 = vmatprep.subr.mxu0 %v4392
  %5486 = vmatpush2.msra.mxu0 %v4390
  %5487 = vmatprep.subr.mxu0 %v4388
  %5488 = vmatpush2.msra.mxu0 %v4386
  %5489 = vmatprep.subr.mxu0 %v4384
  %5490 = vmatpush2.msra.mxu0 %v4382
  %5491 = vmatprep.subr.mxu0 %v4380
  %5492 = vmatpush2.msra.mxu0 %v4378
  %5493 = vmatprep.subr.mxu0 %v4376
  %5494 = vmatpush2.msra.mxu0 %v4374
  %5495 = vmatprep.subr.mxu0 %v4372
  %5496 = vmatpush2.msra.mxu0 %v4370
  %5497 = vmatprep.subr.mxu0 %v4368
  %5498 = vmatpush2.msra.mxu0 %v4366
  %5499 = vmatprep.subr.mxu0 %v4364
  %5500 = vmatpush2.msra.mxu0 %v4362
  %5501 = vmatprep.subr.mxu0 %v4360
  %5502 = vmatpush2.msra.mxu0 %v4358
  %5503 = vmatprep.subr.mxu0 %v4356
  %5504 = vmatpush2.msra.mxu0 %v4354
  %5505 = vmatprep.subr.mxu0 %v4352
  %5506 = vmatpush2.msra.mxu0 %v4350
  %5507 = vmatprep.subr.mxu0 %v4348
  %5508 = vmatpush2.msra.mxu0 %v4346
  %5509 = vmatprep.subr.mxu0 %v4344
  %5510 = vmatpush2.msra.mxu0 %v4342
  %5511 = vmatprep.mubr.f32.mxu0 %v5371
  %5512 = vmatmul.mubr.f32.gmra.mxu0 %v5362
  %v5513 = vpop.f32.mrf.mxu0
  %v5514 = vadd.f32 %v5443, %v5513
  %v5515 = vpop.f32.mrf.mxu0
  %v5516 = vadd.f32 %v5445, %v5515
  %5517 = vdwg.mxu0
  %5518 = vmatprep.subr.mxu0 %v4468
  %5519 = vmatpush1.msra.mxu0 %v4466
  %5520 = vmatprep.subr.mxu0 %v4464
  %5521 = vmatpush1.msra.mxu0 %v4462
  %5522 = vmatprep.subr.mxu0 %v4460
  %5523 = vmatpush1.msra.mxu0 %v4458
  %5524 = vmatprep.subr.mxu0 %v4456
  %5525 = vmatpush1.msra.mxu0 %v4454
  %5526 = vmatprep.subr.mxu0 %v4452
  %5527 = vmatpush1.msra.mxu0 %v4450
  %5528 = vmatprep.subr.mxu0 %v4448
  %5529 = vmatpush1.msra.mxu0 %v4446
  %5530 = vmatprep.subr.mxu0 %v4444
  %5531 = vmatpush1.msra.mxu0 %v4442
  %5532 = vmatprep.subr.mxu0 %v4440
  %5533 = vmatpush1.msra.mxu0 %v4438
  %5534 = vmatprep.subr.mxu0 %v4436
  %5535 = vmatpush1.msra.mxu0 %v4434
  %5536 = vmatprep.subr.mxu0 %v4432
  %5537 = vmatpush1.msra.mxu0 %v4430
  %5538 = vmatprep.subr.mxu0 %v4428
  %5539 = vmatpush1.msra.mxu0 %v4426
  %5540 = vmatprep.subr.mxu0 %v4424
  %5541 = vmatpush1.msra.mxu0 %v4422
  %5542 = vmatprep.subr.mxu0 %v4420
  %5543 = vmatpush1.msra.mxu0 %v4418
  %5544 = vmatprep.subr.mxu0 %v4416
  %5545 = vmatpush1.msra.mxu0 %v4414
  %5546 = vmatprep.subr.mxu0 %v4412
  %5547 = vmatpush1.msra.mxu0 %v4410
  %5548 = vmatprep.subr.mxu0 %v4408
  %5549 = vmatpush1.msra.mxu0 %v4406
  %5550 = vmatprep.subr.mxu0 %v4532
  %5551 = vmatpush2.msra.mxu0 %v4530
  %5552 = vmatprep.subr.mxu0 %v4528
  %5553 = vmatpush2.msra.mxu0 %v4526
  %5554 = vmatprep.subr.mxu0 %v4524
  %5555 = vmatpush2.msra.mxu0 %v4522
  %5556 = vmatprep.subr.mxu0 %v4520
  %5557 = vmatpush2.msra.mxu0 %v4518
  %5558 = vmatprep.subr.mxu0 %v4516
  %5559 = vmatpush2.msra.mxu0 %v4514
  %5560 = vmatprep.subr.mxu0 %v4512
  %5561 = vmatpush2.msra.mxu0 %v4510
  %5562 = vmatprep.subr.mxu0 %v4508
  %5563 = vmatpush2.msra.mxu0 %v4506
  %5564 = vmatprep.subr.mxu0 %v4504
  %5565 = vmatpush2.msra.mxu0 %v4502
  %5566 = vmatprep.subr.mxu0 %v4500
  %5567 = vmatpush2.msra.mxu0 %v4498
  %5568 = vmatprep.subr.mxu0 %v4496
  %5569 = vmatpush2.msra.mxu0 %v4494
  %5570 = vmatprep.subr.mxu0 %v4492
  %5571 = vmatpush2.msra.mxu0 %v4490
  %5572 = vmatprep.subr.mxu0 %v4488
  %5573 = vmatpush2.msra.mxu0 %v4486
  %5574 = vmatprep.subr.mxu0 %v4484
  %5575 = vmatpush2.msra.mxu0 %v4482
  %5576 = vmatprep.subr.mxu0 %v4480
  %5577 = vmatpush2.msra.mxu0 %v4478
  %5578 = vmatprep.subr.mxu0 %v4476
  %5579 = vmatpush2.msra.mxu0 %v4474
  %5580 = vmatprep.subr.mxu0 %v4472
  %5581 = vmatpush2.msra.mxu0 %v4470
  %5582 = vmatprep.mubr.f32.mxu0 %v5372
  %5583 = vmatmul.mubr.f32.gmra.mxu0 %v5363
  %v5584 = vpop.f32.mrf.mxu0
  %v5585 = vadd.f32 %v5514, %v5584
  %v5586 = vpop.f32.mrf.mxu0
  %v5587 = vadd.f32 %v5516, %v5586
  %5588 = vdwg.mxu0
  %v5592 = vcombine.high %v5364, %v5364
  %v5593 = vcombine.high %v5365, %v5365
  %v5594 = vcombine.high %v5366, %v5366
  %5598 = vmatprep.subr.mxu0 %v4596
  %5599 = vmatpush1.msra.mxu0 %v4594
  %5600 = vmatprep.subr.mxu0 %v4592
  %5601 = vmatpush1.msra.mxu0 %v4590
  %5602 = vmatprep.subr.mxu0 %v4588
  %5603 = vmatpush1.msra.mxu0 %v4586
  %5604 = vmatprep.subr.mxu0 %v4584
  %5605 = vmatpush1.msra.mxu0 %v4582
  %5606 = vmatprep.subr.mxu0 %v4580
  %5607 = vmatpush1.msra.mxu0 %v4578
  %5608 = vmatprep.subr.mxu0 %v4576
  %5609 = vmatpush1.msra.mxu0 %v4574
  %5610 = vmatprep.subr.mxu0 %v4572
  %5611 = vmatpush1.msra.mxu0 %v4570
  %5612 = vmatprep.subr.mxu0 %v4568
  %5613 = vmatpush1.msra.mxu0 %v4566
  %5614 = vmatprep.subr.mxu0 %v4564
  %5615 = vmatpush1.msra.mxu0 %v4562
  %5616 = vmatprep.subr.mxu0 %v4560
  %5617 = vmatpush1.msra.mxu0 %v4558
  %5618 = vmatprep.subr.mxu0 %v4556
  %5619 = vmatpush1.msra.mxu0 %v4554
  %5620 = vmatprep.subr.mxu0 %v4552
  %5621 = vmatpush1.msra.mxu0 %v4550
  %5622 = vmatprep.subr.mxu0 %v4548
  %5623 = vmatpush1.msra.mxu0 %v4546
  %5624 = vmatprep.subr.mxu0 %v4544
  %5625 = vmatpush1.msra.mxu0 %v4542
  %5626 = vmatprep.subr.mxu0 %v4540
  %5627 = vmatpush1.msra.mxu0 %v4538
  %5628 = vmatprep.subr.mxu0 %v4536
  %5629 = vmatpush1.msra.mxu0 %v4534
  %5630 = vmatprep.subr.mxu0 %v4660
  %5631 = vmatpush2.msra.mxu0 %v4658
  %5632 = vmatprep.subr.mxu0 %v4656
  %5633 = vmatpush2.msra.mxu0 %v4654
  %5634 = vmatprep.subr.mxu0 %v4652
  %5635 = vmatpush2.msra.mxu0 %v4650
  %5636 = vmatprep.subr.mxu0 %v4648
  %5637 = vmatpush2.msra.mxu0 %v4646
  %5638 = vmatprep.subr.mxu0 %v4644
  %5639 = vmatpush2.msra.mxu0 %v4642
  %5640 = vmatprep.subr.mxu0 %v4640
  %5641 = vmatpush2.msra.mxu0 %v4638
  %5642 = vmatprep.subr.mxu0 %v4636
  %5643 = vmatpush2.msra.mxu0 %v4634
  %5644 = vmatprep.subr.mxu0 %v4632
  %5645 = vmatpush2.msra.mxu0 %v4630
  %5646 = vmatprep.subr.mxu0 %v4628
  %5647 = vmatpush2.msra.mxu0 %v4626
  %5648 = vmatprep.subr.mxu0 %v4624
  %5649 = vmatpush2.msra.mxu0 %v4622
  %5650 = vmatprep.subr.mxu0 %v4620
  %5651 = vmatpush2.msra.mxu0 %v4618
  %5652 = vmatprep.subr.mxu0 %v4616
  %5653 = vmatpush2.msra.mxu0 %v4614
  %5654 = vmatprep.subr.mxu0 %v4612
  %5655 = vmatpush2.msra.mxu0 %v4610
  %5656 = vmatprep.subr.mxu0 %v4608
  %5657 = vmatpush2.msra.mxu0 %v4606
  %5658 = vmatprep.subr.mxu0 %v4604
  %5659 = vmatpush2.msra.mxu0 %v4602
  %5660 = vmatprep.subr.mxu0 %v4600
  %5661 = vmatpush2.msra.mxu0 %v4598
  %5662 = vmatprep.mubr.f32.mxu0 %v5592
  %5663 = vmatmul.mubr.f32.gmra.mxu0 %v5364
  %v5664 = vpop.f32.mrf.mxu0
  %v5665 = vadd.f32 0.0, %v5664
  %v5666 = vpop.f32.mrf.mxu0
  %v5667 = vadd.f32 0.0, %v5666
  %5668 = vdwg.mxu0
  %5669 = vmatprep.subr.mxu0 %v4724
  %5670 = vmatpush1.msra.mxu0 %v4722
  %5671 = vmatprep.subr.mxu0 %v4720
  %5672 = vmatpush1.msra.mxu0 %v4718
  %5673 = vmatprep.subr.mxu0 %v4716
  %5674 = vmatpush1.msra.mxu0 %v4714
  %5675 = vmatprep.subr.mxu0 %v4712
  %5676 = vmatpush1.msra.mxu0 %v4710
  %5677 = vmatprep.subr.mxu0 %v4708
  %5678 = vmatpush1.msra.mxu0 %v4706
  %5679 = vmatprep.subr.mxu0 %v4704
  %5680 = vmatpush1.msra.mxu0 %v4702
  %5681 = vmatprep.subr.mxu0 %v4700
  %5682 = vmatpush1.msra.mxu0 %v4698
  %5683 = vmatprep.subr.mxu0 %v4696
  %5684 = vmatpush1.msra.mxu0 %v4694
  %5685 = vmatprep.subr.mxu0 %v4692
  %5686 = vmatpush1.msra.mxu0 %v4690
  %5687 = vmatprep.subr.mxu0 %v4688
  %5688 = vmatpush1.msra.mxu0 %v4686
  %5689 = vmatprep.subr.mxu0 %v4684
  %5690 = vmatpush1.msra.mxu0 %v4682
  %5691 = vmatprep.subr.mxu0 %v4680
  %5692 = vmatpush1.msra.mxu0 %v4678
  %5693 = vmatprep.subr.mxu0 %v4676
  %5694 = vmatpush1.msra.mxu0 %v4674
  %5695 = vmatprep.subr.mxu0 %v4672
  %5696 = vmatpush1.msra.mxu0 %v4670
  %5697 = vmatprep.subr.mxu0 %v4668
  %5698 = vmatpush1.msra.mxu0 %v4666
  %5699 = vmatprep.subr.mxu0 %v4664
  %5700 = vmatpush1.msra.mxu0 %v4662
  %5701 = vmatprep.subr.mxu0 %v4788
  %5702 = vmatpush2.msra.mxu0 %v4786
  %5703 = vmatprep.subr.mxu0 %v4784
  %5704 = vmatpush2.msra.mxu0 %v4782
  %5705 = vmatprep.subr.mxu0 %v4780
  %5706 = vmatpush2.msra.mxu0 %v4778
  %5707 = vmatprep.subr.mxu0 %v4776
  %5708 = vmatpush2.msra.mxu0 %v4774
  %5709 = vmatprep.subr.mxu0 %v4772
  %5710 = vmatpush2.msra.mxu0 %v4770
  %5711 = vmatprep.subr.mxu0 %v4768
  %5712 = vmatpush2.msra.mxu0 %v4766
  %5713 = vmatprep.subr.mxu0 %v4764
  %5714 = vmatpush2.msra.mxu0 %v4762
  %5715 = vmatprep.subr.mxu0 %v4760
  %5716 = vmatpush2.msra.mxu0 %v4758
  %5717 = vmatprep.subr.mxu0 %v4756
  %5718 = vmatpush2.msra.mxu0 %v4754
  %5719 = vmatprep.subr.mxu0 %v4752
  %5720 = vmatpush2.msra.mxu0 %v4750
  %5721 = vmatprep.subr.mxu0 %v4748
  %5722 = vmatpush2.msra.mxu0 %v4746
  %5723 = vmatprep.subr.mxu0 %v4744
  %5724 = vmatpush2.msra.mxu0 %v4742
  %5725 = vmatprep.subr.mxu0 %v4740
  %5726 = vmatpush2.msra.mxu0 %v4738
  %5727 = vmatprep.subr.mxu0 %v4736
  %5728 = vmatpush2.msra.mxu0 %v4734
  %5729 = vmatprep.subr.mxu0 %v4732
  %5730 = vmatpush2.msra.mxu0 %v4730
  %5731 = vmatprep.subr.mxu0 %v4728
  %5732 = vmatpush2.msra.mxu0 %v4726
  %5733 = vmatprep.mubr.f32.mxu0 %v5593
  %5734 = vmatmul.mubr.f32.gmra.mxu0 %v5365
  %v5735 = vpop.f32.mrf.mxu0
  %v5736 = vadd.f32 %v5665, %v5735
  %v5737 = vpop.f32.mrf.mxu0
  %v5738 = vadd.f32 %v5667, %v5737
  %5739 = vdwg.mxu0
  %5740 = vmatprep.subr.mxu0 %v4852
  %5741 = vmatpush1.msra.mxu0 %v4850
  %5742 = vmatprep.subr.mxu0 %v4848
  %5743 = vmatpush1.msra.mxu0 %v4846
  %5744 = vmatprep.subr.mxu0 %v4844
  %5745 = vmatpush1.msra.mxu0 %v4842
  %5746 = vmatprep.subr.mxu0 %v4840
  %5747 = vmatpush1.msra.mxu0 %v4838
  %5748 = vmatprep.subr.mxu0 %v4836
  %5749 = vmatpush1.msra.mxu0 %v4834
  %5750 = vmatprep.subr.mxu0 %v4832
  %5751 = vmatpush1.msra.mxu0 %v4830
  %5752 = vmatprep.subr.mxu0 %v4828
  %5753 = vmatpush1.msra.mxu0 %v4826
  %5754 = vmatprep.subr.mxu0 %v4824
  %5755 = vmatpush1.msra.mxu0 %v4822
  %5756 = vmatprep.subr.mxu0 %v4820
  %5757 = vmatpush1.msra.mxu0 %v4818
  %5758 = vmatprep.subr.mxu0 %v4816
  %5759 = vmatpush1.msra.mxu0 %v4814
  %5760 = vmatprep.subr.mxu0 %v4812
  %5761 = vmatpush1.msra.mxu0 %v4810
  %5762 = vmatprep.subr.mxu0 %v4808
  %5763 = vmatpush1.msra.mxu0 %v4806
  %5764 = vmatprep.subr.mxu0 %v4804
  %5765 = vmatpush1.msra.mxu0 %v4802
  %5766 = vmatprep.subr.mxu0 %v4800
  %5767 = vmatpush1.msra.mxu0 %v4798
  %5768 = vmatprep.subr.mxu0 %v4796
  %5769 = vmatpush1.msra.mxu0 %v4794
  %5770 = vmatprep.subr.mxu0 %v4792
  %5771 = vmatpush1.msra.mxu0 %v4790
  %5772 = vmatprep.subr.mxu0 %v4916
  %5773 = vmatpush2.msra.mxu0 %v4914
  %5774 = vmatprep.subr.mxu0 %v4912
  %5775 = vmatpush2.msra.mxu0 %v4910
  %5776 = vmatprep.subr.mxu0 %v4908
  %5777 = vmatpush2.msra.mxu0 %v4906
  %5778 = vmatprep.subr.mxu0 %v4904
  %5779 = vmatpush2.msra.mxu0 %v4902
  %5780 = vmatprep.subr.mxu0 %v4900
  %5781 = vmatpush2.msra.mxu0 %v4898
  %5782 = vmatprep.subr.mxu0 %v4896
  %5783 = vmatpush2.msra.mxu0 %v4894
  %5784 = vmatprep.subr.mxu0 %v4892
  %5785 = vmatpush2.msra.mxu0 %v4890
  %5786 = vmatprep.subr.mxu0 %v4888
  %5787 = vmatpush2.msra.mxu0 %v4886
  %5788 = vmatprep.subr.mxu0 %v4884
  %5789 = vmatpush2.msra.mxu0 %v4882
  %5790 = vmatprep.subr.mxu0 %v4880
  %5791 = vmatpush2.msra.mxu0 %v4878
  %5792 = vmatprep.subr.mxu0 %v4876
  %5793 = vmatpush2.msra.mxu0 %v4874
  %5794 = vmatprep.subr.mxu0 %v4872
  %5795 = vmatpush2.msra.mxu0 %v4870
  %5796 = vmatprep.subr.mxu0 %v4868
  %5797 = vmatpush2.msra.mxu0 %v4866
  %5798 = vmatprep.subr.mxu0 %v4864
  %5799 = vmatpush2.msra.mxu0 %v4862
  %5800 = vmatprep.subr.mxu0 %v4860
  %5801 = vmatpush2.msra.mxu0 %v4858
  %5802 = vmatprep.subr.mxu0 %v4856
  %5803 = vmatpush2.msra.mxu0 %v4854
  %5804 = vmatprep.mubr.f32.mxu0 %v5594
  %5805 = vmatmul.mubr.f32.gmra.mxu0 %v5366
  %v5806 = vpop.f32.mrf.mxu0
  %v5807 = vadd.f32 %v5736, %v5806
  %v5808 = vpop.f32.mrf.mxu0
  %v5809 = vadd.f32 %v5738, %v5808
  %5810 = vdwg.mxu0
  %v5811 = vrcp.pop %v4953
  %v5812 = vrcp.pop %v4990
  %v5813 = vrcp.pop %v5027
  %v5814 = vrcp.pop %v5064
  %v5815 = vrcp.pop %v5101
  %v5816 = vrcp.pop %v5138
  %v5817 = vrcp.pop %v5175
  %v5818 = vrcp.pop %v5212
  %v5819 = vrcp.pop %v5249
  %v5820 = vrcp.pop %v5286
  %v5821 = vrcp.pop %v5323
  %v5822 = vrcp.pop %v5360
  %vm5835 = vcmask 1041409
  %v5836 = vsel %vm5835, %v5813, %v5811
  %vm5837 = vcmask 1042434
  %v5838 = vsel %vm5837, %v5815, %v5836
  %v5839 = vsel %vm5835, %v5814, %v5812
  %v5840 = vsel %vm5837, %v5816, %v5839
  %v5841 = vsel %vm5835, %v5819, %v5817
  %v5842 = vsel %vm5837, %v5821, %v5841
  %v5843 = vsel %vm5835, %v5820, %v5818
  %v5844 = vsel %vm5837, %v5822, %v5843
  %v5849 = vmul.f32 %v5585, %v5838
  %v5850 = vmul.f32 %v5587, %v5840
  %v5851 = vmul.f32 %v5807, %v5842
  %v5852 = vmul.f32 %v5809, %v5844
  %v5853 = vld [vmem:[%s4] sm:$0xff]
  %v5854 = vld [vmem:[%s4 + $0x8] sm:$0xff]
  %v5855 = vld [vmem:[%s4 + $0x10] sm:$0xff]
  %v5856 = vld [vmem:[%s4 + $0x18] sm:$0xff]
  %v5857 = vld [vmem:[%s4 + $0x20] sm:$0xff]
  %v5858 = vld [vmem:[%s4 + $0x28] sm:$0xff]
  %v5859 = vld [vmem:[%s4 + $0x30] sm:$0xff]
  %v5860 = vld [vmem:[%s4 + $0x38] sm:$0xff]
  %v5861 = vld [vmem:[%s4 + $0x40] sm:$0xff]
  %v5862 = vld [vmem:[%s4 + $0x48] sm:$0xff]
  %v5863 = vld [vmem:[%s4 + $0x50] sm:$0xff]
  %v5864 = vld [vmem:[%s4 + $0x58] sm:$0xff]
  %v5865 = vld [vmem:[%s4 + $0x60] sm:$0xff]
  %v5866 = vld [vmem:[%s4 + $0x68] sm:$0xff]
  %v5867 = vld [vmem:[%s4 + $0x70] sm:$0xff]
  %v5868 = vld [vmem:[%s4 + $0x78] sm:$0xff]
  %v5869 = vld [vmem:[%s4 + $0x80] sm:$0xff]
  %v5870 = vld [vmem:[%s4 + $0x88] sm:$0xff]
  %v5871 = vld [vmem:[%s4 + $0x90] sm:$0xff]
  %v5872 = vld [vmem:[%s4 + $0x98] sm:$0xff]
  %v5873 = vld [vmem:[%s4 + $0xa0] sm:$0xff]
  %v5874 = vld [vmem:[%s4 + $0xa8] sm:$0xff]
  %v5875 = vld [vmem:[%s4 + $0xb0] sm:$0xff]
  %v5876 = vld [vmem:[%s4 + $0xb8] sm:$0xff]
  %v5877 = vld [vmem:[%s4 + $0xc0] sm:$0xff]
  %v5878 = vld [vmem:[%s4 + $0xc8] sm:$0xff]
  %v5879 = vld [vmem:[%s4 + $0xd0] sm:$0xff]
  %v5880 = vld [vmem:[%s4 + $0xd8] sm:$0xff]
  %v5881 = vld [vmem:[%s4 + $0xe0] sm:$0xff]
  %v5882 = vld [vmem:[%s4 + $0xe8] sm:$0xff]
  %v5883 = vld [vmem:[%s4 + $0xf0] sm:$0xff]
  %v5884 = vld [vmem:[%s4 + $0xf8] sm:$0xff]
  %v5885 = vld [vmem:[%s4 + $0x100] sm:$0xff]
  %v5886 = vld [vmem:[%s4 + $0x108] sm:$0xff]
  %v5887 = vld [vmem:[%s4 + $0x110] sm:$0xff]
  %v5888 = vld [vmem:[%s4 + $0x118] sm:$0xff]
  %v5889 = vld [vmem:[%s4 + $0x120] sm:$0xff]
  %v5890 = vld [vmem:[%s4 + $0x128] sm:$0xff]
  %v5891 = vld [vmem:[%s4 + $0x130] sm:$0xff]
  %v5892 = vld [vmem:[%s4 + $0x138] sm:$0xff]
  %v5893 = vld [vmem:[%s4 + $0x140] sm:$0xff]
  %v5894 = vld [vmem:[%s4 + $0x148] sm:$0xff]
  %v5895 = vld [vmem:[%s4 + $0x150] sm:$0xff]
  %v5896 = vld [vmem:[%s4 + $0x158] sm:$0xff]
  %v5897 = vld [vmem:[%s4 + $0x160] sm:$0xff]
  %v5898 = vld [vmem:[%s4 + $0x168] sm:$0xff]
  %v5899 = vld [vmem:[%s4 + $0x170] sm:$0xff]
  %v5900 = vld [vmem:[%s4 + $0x178] sm:$0xff]
  %v5901 = vld [vmem:[%s4 + $0x180] sm:$0xff]
  %v5902 = vld [vmem:[%s4 + $0x188] sm:$0xff]
  %v5903 = vld [vmem:[%s4 + $0x190] sm:$0xff]
  %v5904 = vld [vmem:[%s4 + $0x198] sm:$0xff]
  %v5905 = vld [vmem:[%s4 + $0x1a0] sm:$0xff]
  %v5906 = vld [vmem:[%s4 + $0x1a8] sm:$0xff]
  %v5907 = vld [vmem:[%s4 + $0x1b0] sm:$0xff]
  %v5908 = vld [vmem:[%s4 + $0x1b8] sm:$0xff]
  %v5909 = vld [vmem:[%s4 + $0x1c0] sm:$0xff]
  %v5910 = vld [vmem:[%s4 + $0x1c8] sm:$0xff]
  %v5911 = vld [vmem:[%s4 + $0x1d0] sm:$0xff]
  %v5912 = vld [vmem:[%s4 + $0x1d8] sm:$0xff]
  %v5913 = vld [vmem:[%s4 + $0x1e0] sm:$0xff]
  %v5914 = vld [vmem:[%s4 + $0x1e8] sm:$0xff]
  %v5915 = vld [vmem:[%s4 + $0x1f0] sm:$0xff]
  %v5916 = vld [vmem:[%s4 + $0x1f8] sm:$0xff]
  %v5917 = vld [vmem:[%s4 + $0x200] sm:$0xff]
  %v5918 = vld [vmem:[%s4 + $0x208] sm:$0xff]
  %v5919 = vld [vmem:[%s4 + $0x210] sm:$0xff]
  %v5920 = vld [vmem:[%s4 + $0x218] sm:$0xff]
  %v5921 = vld [vmem:[%s4 + $0x220] sm:$0xff]
  %v5922 = vld [vmem:[%s4 + $0x228] sm:$0xff]
  %v5923 = vld [vmem:[%s4 + $0x230] sm:$0xff]
  %v5924 = vld [vmem:[%s4 + $0x238] sm:$0xff]
  %v5925 = vld [vmem:[%s4 + $0x240] sm:$0xff]
  %v5926 = vld [vmem:[%s4 + $0x248] sm:$0xff]
  %v5927 = vld [vmem:[%s4 + $0x250] sm:$0xff]
  %v5928 = vld [vmem:[%s4 + $0x258] sm:$0xff]
  %v5929 = vld [vmem:[%s4 + $0x260] sm:$0xff]
  %v5930 = vld [vmem:[%s4 + $0x268] sm:$0xff]
  %v5931 = vld [vmem:[%s4 + $0x270] sm:$0xff]
  %v5932 = vld [vmem:[%s4 + $0x278] sm:$0xff]
  %v5933 = vld [vmem:[%s4 + $0x280] sm:$0xff]
  %v5934 = vld [vmem:[%s4 + $0x288] sm:$0xff]
  %v5935 = vld [vmem:[%s4 + $0x290] sm:$0xff]
  %v5936 = vld [vmem:[%s4 + $0x298] sm:$0xff]
  %v5937 = vld [vmem:[%s4 + $0x2a0] sm:$0xff]
  %v5938 = vld [vmem:[%s4 + $0x2a8] sm:$0xff]
  %v5939 = vld [vmem:[%s4 + $0x2b0] sm:$0xff]
  %v5940 = vld [vmem:[%s4 + $0x2b8] sm:$0xff]
  %v5941 = vld [vmem:[%s4 + $0x2c0] sm:$0xff]
  %v5942 = vld [vmem:[%s4 + $0x2c8] sm:$0xff]
  %v5943 = vld [vmem:[%s4 + $0x2d0] sm:$0xff]
  %v5944 = vld [vmem:[%s4 + $0x2d8] sm:$0xff]
  %v5945 = vld [vmem:[%s4 + $0x2e0] sm:$0xff]
  %v5946 = vld [vmem:[%s4 + $0x2e8] sm:$0xff]
  %v5947 = vld [vmem:[%s4 + $0x2f0] sm:$0xff]
  %v5948 = vld [vmem:[%s4 + $0x2f8] sm:$0xff]
  %v5949 = vld [vmem:[%s4 + $0x300] sm:$0xff]
  %v5950 = vld [vmem:[%s4 + $0x308] sm:$0xff]
  %v5951 = vld [vmem:[%s4 + $0x310] sm:$0xff]
  %v5952 = vld [vmem:[%s4 + $0x318] sm:$0xff]
  %v5953 = vld [vmem:[%s4 + $0x320] sm:$0xff]
  %v5954 = vld [vmem:[%s4 + $0x328] sm:$0xff]
  %v5955 = vld [vmem:[%s4 + $0x330] sm:$0xff]
  %v5956 = vld [vmem:[%s4 + $0x338] sm:$0xff]
  %v5957 = vld [vmem:[%s4 + $0x340] sm:$0xff]
  %v5958 = vld [vmem:[%s4 + $0x348] sm:$0xff]
  %v5959 = vld [vmem:[%s4 + $0x350] sm:$0xff]
  %v5960 = vld [vmem:[%s4 + $0x358] sm:$0xff]
  %v5961 = vld [vmem:[%s4 + $0x360] sm:$0xff]
  %v5962 = vld [vmem:[%s4 + $0x368] sm:$0xff]
  %v5963 = vld [vmem:[%s4 + $0x370] sm:$0xff]
  %v5964 = vld [vmem:[%s4 + $0x378] sm:$0xff]
  %v5965 = vld [vmem:[%s4 + $0x380] sm:$0xff]
  %v5966 = vld [vmem:[%s4 + $0x388] sm:$0xff]
  %v5967 = vld [vmem:[%s4 + $0x390] sm:$0xff]
  %v5968 = vld [vmem:[%s4 + $0x398] sm:$0xff]
  %v5969 = vld [vmem:[%s4 + $0x3a0] sm:$0xff]
  %v5970 = vld [vmem:[%s4 + $0x3a8] sm:$0xff]
  %v5971 = vld [vmem:[%s4 + $0x3b0] sm:$0xff]
  %v5972 = vld [vmem:[%s4 + $0x3b8] sm:$0xff]
  %v5973 = vld [vmem:[%s4 + $0x3c0] sm:$0xff]
  %v5974 = vld [vmem:[%s4 + $0x3c8] sm:$0xff]
  %v5975 = vld [vmem:[%s4 + $0x3d0] sm:$0xff]
  %v5976 = vld [vmem:[%s4 + $0x3d8] sm:$0xff]
  %v5977 = vld [vmem:[%s4 + $0x3e0] sm:$0xff]
  %v5978 = vld [vmem:[%s4 + $0x3e8] sm:$0xff]
  %v5979 = vld [vmem:[%s4 + $0x3f0] sm:$0xff]
  %v5980 = vld [vmem:[%s4 + $0x3f8] sm:$0xff]
  %v5981 = vld [vmem:[%s4 + $0x400] sm:$0xff]
  %v5982 = vld [vmem:[%s4 + $0x408] sm:$0xff]
  %v5983 = vld [vmem:[%s4 + $0x410] sm:$0xff]
  %v5984 = vld [vmem:[%s4 + $0x418] sm:$0xff]
  %v5985 = vld [vmem:[%s4 + $0x420] sm:$0xff]
  %v5986 = vld [vmem:[%s4 + $0x428] sm:$0xff]
  %v5987 = vld [vmem:[%s4 + $0x430] sm:$0xff]
  %v5988 = vld [vmem:[%s4 + $0x438] sm:$0xff]
  %v5989 = vld [vmem:[%s4 + $0x440] sm:$0xff]
  %v5990 = vld [vmem:[%s4 + $0x448] sm:$0xff]
  %v5991 = vld [vmem:[%s4 + $0x450] sm:$0xff]
  %v5992 = vld [vmem:[%s4 + $0x458] sm:$0xff]
  %v5993 = vld [vmem:[%s4 + $0x460] sm:$0xff]
  %v5994 = vld [vmem:[%s4 + $0x468] sm:$0xff]
  %v5995 = vld [vmem:[%s4 + $0x470] sm:$0xff]
  %v5996 = vld [vmem:[%s4 + $0x478] sm:$0xff]
  %v5997 = vld [vmem:[%s4 + $0x480] sm:$0xff]
  %v5998 = vld [vmem:[%s4 + $0x488] sm:$0xff]
  %v5999 = vld [vmem:[%s4 + $0x490] sm:$0xff]
  %v6000 = vld [vmem:[%s4 + $0x498] sm:$0xff]
  %v6001 = vld [vmem:[%s4 + $0x4a0] sm:$0xff]
  %v6002 = vld [vmem:[%s4 + $0x4a8] sm:$0xff]
  %v6003 = vld [vmem:[%s4 + $0x4b0] sm:$0xff]
  %v6004 = vld [vmem:[%s4 + $0x4b8] sm:$0xff]
  %v6005 = vld [vmem:[%s4 + $0x4c0] sm:$0xff]
  %v6006 = vld [vmem:[%s4 + $0x4c8] sm:$0xff]
  %v6007 = vld [vmem:[%s4 + $0x4d0] sm:$0xff]
  %v6008 = vld [vmem:[%s4 + $0x4d8] sm:$0xff]
  %v6009 = vld [vmem:[%s4 + $0x4e0] sm:$0xff]
  %v6010 = vld [vmem:[%s4 + $0x4e8] sm:$0xff]
  %v6011 = vld [vmem:[%s4 + $0x4f0] sm:$0xff]
  %v6012 = vld [vmem:[%s4 + $0x4f8] sm:$0xff]
  %v6013 = vld [vmem:[%s4 + $0x500] sm:$0xff]
  %v6014 = vld [vmem:[%s4 + $0x508] sm:$0xff]
  %v6015 = vld [vmem:[%s4 + $0x510] sm:$0xff]
  %v6016 = vld [vmem:[%s4 + $0x518] sm:$0xff]
  %v6017 = vld [vmem:[%s4 + $0x520] sm:$0xff]
  %v6018 = vld [vmem:[%s4 + $0x528] sm:$0xff]
  %v6019 = vld [vmem:[%s4 + $0x530] sm:$0xff]
  %v6020 = vld [vmem:[%s4 + $0x538] sm:$0xff]
  %v6021 = vld [vmem:[%s4 + $0x540] sm:$0xff]
  %v6022 = vld [vmem:[%s4 + $0x548] sm:$0xff]
  %v6023 = vld [vmem:[%s4 + $0x550] sm:$0xff]
  %v6024 = vld [vmem:[%s4 + $0x558] sm:$0xff]
  %v6025 = vld [vmem:[%s4 + $0x560] sm:$0xff]
  %v6026 = vld [vmem:[%s4 + $0x568] sm:$0xff]
  %v6027 = vld [vmem:[%s4 + $0x570] sm:$0xff]
  %v6028 = vld [vmem:[%s4 + $0x578] sm:$0xff]
  %v6029 = vld [vmem:[%s4 + $0x580] sm:$0xff]
  %v6030 = vld [vmem:[%s4 + $0x588] sm:$0xff]
  %v6031 = vld [vmem:[%s4 + $0x590] sm:$0xff]
  %v6032 = vld [vmem:[%s4 + $0x598] sm:$0xff]
  %v6033 = vld [vmem:[%s4 + $0x5a0] sm:$0xff]
  %v6034 = vld [vmem:[%s4 + $0x5a8] sm:$0xff]
  %v6035 = vld [vmem:[%s4 + $0x5b0] sm:$0xff]
  %v6036 = vld [vmem:[%s4 + $0x5b8] sm:$0xff]
  %v6037 = vld [vmem:[%s4 + $0x5c0] sm:$0xff]
  %v6038 = vld [vmem:[%s4 + $0x5c8] sm:$0xff]
  %v6039 = vld [vmem:[%s4 + $0x5d0] sm:$0xff]
  %v6040 = vld [vmem:[%s4 + $0x5d8] sm:$0xff]
  %v6041 = vld [vmem:[%s4 + $0x5e0] sm:$0xff]
  %v6042 = vld [vmem:[%s4 + $0x5e8] sm:$0xff]
  %v6043 = vld [vmem:[%s4 + $0x5f0] sm:$0xff]
  %v6044 = vld [vmem:[%s4 + $0x5f8] sm:$0xff]
  %v6045 = vld [vmem:[%s4 + $0x600] sm:$0xff]
  %v6046 = vld [vmem:[%s4 + $0x608] sm:$0xff]
  %v6047 = vld [vmem:[%s4 + $0x610] sm:$0xff]
  %v6048 = vld [vmem:[%s4 + $0x618] sm:$0xff]
  %v6049 = vld [vmem:[%s4 + $0x620] sm:$0xff]
  %v6050 = vld [vmem:[%s4 + $0x628] sm:$0xff]
  %v6051 = vld [vmem:[%s4 + $0x630] sm:$0xff]
  %v6052 = vld [vmem:[%s4 + $0x638] sm:$0xff]
  %v6053 = vld [vmem:[%s4 + $0x640] sm:$0xff]
  %v6054 = vld [vmem:[%s4 + $0x648] sm:$0xff]
  %v6055 = vld [vmem:[%s4 + $0x650] sm:$0xff]
  %v6056 = vld [vmem:[%s4 + $0x658] sm:$0xff]
  %v6057 = vld [vmem:[%s4 + $0x660] sm:$0xff]
  %v6058 = vld [vmem:[%s4 + $0x668] sm:$0xff]
  %v6059 = vld [vmem:[%s4 + $0x670] sm:$0xff]
  %v6060 = vld [vmem:[%s4 + $0x678] sm:$0xff]
  %v6061 = vld [vmem:[%s4 + $0x680] sm:$0xff]
  %v6062 = vld [vmem:[%s4 + $0x688] sm:$0xff]
  %v6063 = vld [vmem:[%s4 + $0x690] sm:$0xff]
  %v6064 = vld [vmem:[%s4 + $0x698] sm:$0xff]
  %v6065 = vld [vmem:[%s4 + $0x6a0] sm:$0xff]
  %v6066 = vld [vmem:[%s4 + $0x6a8] sm:$0xff]
  %v6067 = vld [vmem:[%s4 + $0x6b0] sm:$0xff]
  %v6068 = vld [vmem:[%s4 + $0x6b8] sm:$0xff]
  %v6069 = vld [vmem:[%s4 + $0x6c0] sm:$0xff]
  %v6070 = vld [vmem:[%s4 + $0x6c8] sm:$0xff]
  %v6071 = vld [vmem:[%s4 + $0x6d0] sm:$0xff]
  %v6072 = vld [vmem:[%s4 + $0x6d8] sm:$0xff]
  %v6073 = vld [vmem:[%s4 + $0x6e0] sm:$0xff]
  %v6074 = vld [vmem:[%s4 + $0x6e8] sm:$0xff]
  %v6075 = vld [vmem:[%s4 + $0x6f0] sm:$0xff]
  %v6076 = vld [vmem:[%s4 + $0x6f8] sm:$0xff]
  %v6077 = vld [vmem:[%s4 + $0x700] sm:$0xff]
  %v6078 = vld [vmem:[%s4 + $0x708] sm:$0xff]
  %v6079 = vld [vmem:[%s4 + $0x710] sm:$0xff]
  %v6080 = vld [vmem:[%s4 + $0x718] sm:$0xff]
  %v6081 = vld [vmem:[%s4 + $0x720] sm:$0xff]
  %v6082 = vld [vmem:[%s4 + $0x728] sm:$0xff]
  %v6083 = vld [vmem:[%s4 + $0x730] sm:$0xff]
  %v6084 = vld [vmem:[%s4 + $0x738] sm:$0xff]
  %v6085 = vld [vmem:[%s4 + $0x740] sm:$0xff]
  %v6086 = vld [vmem:[%s4 + $0x748] sm:$0xff]
  %v6087 = vld [vmem:[%s4 + $0x750] sm:$0xff]
  %v6088 = vld [vmem:[%s4 + $0x758] sm:$0xff]
  %v6089 = vld [vmem:[%s4 + $0x760] sm:$0xff]
  %v6090 = vld [vmem:[%s4 + $0x768] sm:$0xff]
  %v6091 = vld [vmem:[%s4 + $0x770] sm:$0xff]
  %v6092 = vld [vmem:[%s4 + $0x778] sm:$0xff]
  %v6093 = vld [vmem:[%s4 + $0x780] sm:$0xff]
  %v6094 = vld [vmem:[%s4 + $0x788] sm:$0xff]
  %v6095 = vld [vmem:[%s4 + $0x790] sm:$0xff]
  %v6096 = vld [vmem:[%s4 + $0x798] sm:$0xff]
  %v6097 = vld [vmem:[%s4 + $0x7a0] sm:$0xff]
  %v6098 = vld [vmem:[%s4 + $0x7a8] sm:$0xff]
  %v6099 = vld [vmem:[%s4 + $0x7b0] sm:$0xff]
  %v6100 = vld [vmem:[%s4 + $0x7b8] sm:$0xff]
  %v6101 = vld [vmem:[%s4 + $0x7c0] sm:$0xff]
  %v6102 = vld [vmem:[%s4 + $0x7c8] sm:$0xff]
  %v6103 = vld [vmem:[%s4 + $0x7d0] sm:$0xff]
  %v6104 = vld [vmem:[%s4 + $0x7d8] sm:$0xff]
  %v6105 = vld [vmem:[%s4 + $0x7e0] sm:$0xff]
  %v6106 = vld [vmem:[%s4 + $0x7e8] sm:$0xff]
  %v6107 = vld [vmem:[%s4 + $0x7f0] sm:$0xff]
  %v6108 = vld [vmem:[%s4 + $0x7f8] sm:$0xff]
  %v6109 = vld [vmem:[%s5] sm:$0xff]
  %v6110 = vld [vmem:[%s5 + $0x8] sm:$0xff]
  %6111 = vmatprep.subr.mxu0 %v5974
  %6112 = vmatpush1.msra.mxu0 %v5973
  %6113 = vmatprep.subr.mxu0 %v5966
  %6114 = vmatpush1.msra.mxu0 %v5965
  %6115 = vmatprep.subr.mxu0 %v5958
  %6116 = vmatpush1.msra.mxu0 %v5957
  %6117 = vmatprep.subr.mxu0 %v5950
  %6118 = vmatpush1.msra.mxu0 %v5949
  %6119 = vmatprep.subr.mxu0 %v5942
  %6120 = vmatpush1.msra.mxu0 %v5941
  %6121 = vmatprep.subr.mxu0 %v5934
  %6122 = vmatpush1.msra.mxu0 %v5933
  %6123 = vmatprep.subr.mxu0 %v5926
  %6124 = vmatpush1.msra.mxu0 %v5925
  %6125 = vmatprep.subr.mxu0 %v5918
  %6126 = vmatpush1.msra.mxu0 %v5917
  %6127 = vmatprep.subr.mxu0 %v5910
  %6128 = vmatpush1.msra.mxu0 %v5909
  %6129 = vmatprep.subr.mxu0 %v5902
  %6130 = vmatpush1.msra.mxu0 %v5901
  %6131 = vmatprep.subr.mxu0 %v5894
  %6132 = vmatpush1.msra.mxu0 %v5893
  %6133 = vmatprep.subr.mxu0 %v5886
  %6134 = vmatpush1.msra.mxu0 %v5885
  %6135 = vmatprep.subr.mxu0 %v5878
  %6136 = vmatpush1.msra.mxu0 %v5877
  %6137 = vmatprep.subr.mxu0 %v5870
  %6138 = vmatpush1.msra.mxu0 %v5869
  %6139 = vmatprep.subr.mxu0 %v5862
  %6140 = vmatpush1.msra.mxu0 %v5861
  %6141 = vmatprep.subr.mxu0 %v5854
  %6142 = vmatpush1.msra.mxu0 %v5853
  %6143 = vmatprep.subr.mxu0 %v6102
  %6144 = vmatpush2.msra.mxu0 %v6101
  %6145 = vmatprep.subr.mxu0 %v6094
  %6146 = vmatpush2.msra.mxu0 %v6093
  %6147 = vmatprep.subr.mxu0 %v6086
  %6148 = vmatpush2.msra.mxu0 %v6085
  %6149 = vmatprep.subr.mxu0 %v6078
  %6150 = vmatpush2.msra.mxu0 %v6077
  %6151 = vmatprep.subr.mxu0 %v6070
  %6152 = vmatpush2.msra.mxu0 %v6069
  %6153 = vmatprep.subr.mxu0 %v6062
  %6154 = vmatpush2.msra.mxu0 %v6061
  %6155 = vmatprep.subr.mxu0 %v6054
  %6156 = vmatpush2.msra.mxu0 %v6053
  %6157 = vmatprep.subr.mxu0 %v6046
  %6158 = vmatpush2.msra.mxu0 %v6045
  %6159 = vmatprep.subr.mxu0 %v6038
  %6160 = vmatpush2.msra.mxu0 %v6037
  %6161 = vmatprep.subr.mxu0 %v6030
  %6162 = vmatpush2.msra.mxu0 %v6029
  %6163 = vmatprep.subr.mxu0 %v6022
  %6164 = vmatpush2.msra.mxu0 %v6021
  %6165 = vmatprep.subr.mxu0 %v6014
  %6166 = vmatpush2.msra.mxu0 %v6013
  %6167 = vmatprep.subr.mxu0 %v6006
  %6168 = vmatpush2.msra.mxu0 %v6005
  %6169 = vmatprep.subr.mxu0 %v5998
  %6170 = vmatpush2.msra.mxu0 %v5997
  %6171 = vmatprep.subr.mxu0 %v5990
  %6172 = vmatpush2.msra.mxu0 %v5989
  %6173 = vmatprep.subr.mxu0 %v5982
  %6174 = vmatpush2.msra.mxu0 %v5981
  %6175 = vmatprep.mubr.f32.mxu0 %v5850
  %6176 = vmatmul.mubr.f32.gmra.mxu0 %v5849
  %v6177 = vpop.f32.mrf.mxu0
  %v6178 = vadd.f32 0.0, %v6177
  %v6179 = vpop.f32.mrf.mxu0
  %v6180 = vadd.f32 0.0, %v6179
  %6181 = vdwg.mxu0
  %6182 = vmatprep.subr.mxu0 %v5976
  %6183 = vmatpush1.msra.mxu0 %v5975
  %6184 = vmatprep.subr.mxu0 %v5968
  %6185 = vmatpush1.msra.mxu0 %v5967
  %6186 = vmatprep.subr.mxu0 %v5960
  %6187 = vmatpush1.msra.mxu0 %v5959
  %6188 = vmatprep.subr.mxu0 %v5952
  %6189 = vmatpush1.msra.mxu0 %v5951
  %6190 = vmatprep.subr.mxu0 %v5944
  %6191 = vmatpush1.msra.mxu0 %v5943
  %6192 = vmatprep.subr.mxu0 %v5936
  %6193 = vmatpush1.msra.mxu0 %v5935
  %6194 = vmatprep.subr.mxu0 %v5928
  %6195 = vmatpush1.msra.mxu0 %v5927
  %6196 = vmatprep.subr.mxu0 %v5920
  %6197 = vmatpush1.msra.mxu0 %v5919
  %6198 = vmatprep.subr.mxu0 %v5912
  %6199 = vmatpush1.msra.mxu0 %v5911
  %6200 = vmatprep.subr.mxu0 %v5904
  %6201 = vmatpush1.msra.mxu0 %v5903
  %6202 = vmatprep.subr.mxu0 %v5896
  %6203 = vmatpush1.msra.mxu0 %v5895
  %6204 = vmatprep.subr.mxu0 %v5888
  %6205 = vmatpush1.msra.mxu0 %v5887
  %6206 = vmatprep.subr.mxu0 %v5880
  %6207 = vmatpush1.msra.mxu0 %v5879
  %6208 = vmatprep.subr.mxu0 %v5872
  %6209 = vmatpush1.msra.mxu0 %v5871
  %6210 = vmatprep.subr.mxu0 %v5864
  %6211 = vmatpush1.msra.mxu0 %v5863
  %6212 = vmatprep.subr.mxu0 %v5856
  %6213 = vmatpush1.msra.mxu0 %v5855
  %6214 = vmatprep.subr.mxu0 %v6104
  %6215 = vmatpush2.msra.mxu0 %v6103
  %6216 = vmatprep.subr.mxu0 %v6096
  %6217 = vmatpush2.msra.mxu0 %v6095
  %6218 = vmatprep.subr.mxu0 %v6088
  %6219 = vmatpush2.msra.mxu0 %v6087
  %6220 = vmatprep.subr.mxu0 %v6080
  %6221 = vmatpush2.msra.mxu0 %v6079
  %6222 = vmatprep.subr.mxu0 %v6072
  %6223 = vmatpush2.msra.mxu0 %v6071
  %6224 = vmatprep.subr.mxu0 %v6064
  %6225 = vmatpush2.msra.mxu0 %v6063
  %6226 = vmatprep.subr.mxu0 %v6056
  %6227 = vmatpush2.msra.mxu0 %v6055
  %6228 = vmatprep.subr.mxu0 %v6048
  %6229 = vmatpush2.msra.mxu0 %v6047
  %6230 = vmatprep.subr.mxu0 %v6040
  %6231 = vmatpush2.msra.mxu0 %v6039
  %6232 = vmatprep.subr.mxu0 %v6032
  %6233 = vmatpush2.msra.mxu0 %v6031
  %6234 = vmatprep.subr.mxu0 %v6024
  %6235 = vmatpush2.msra.mxu0 %v6023
  %6236 = vmatprep.subr.mxu0 %v6016
  %6237 = vmatpush2.msra.mxu0 %v6015
  %6238 = vmatprep.subr.mxu0 %v6008
  %6239 = vmatpush2.msra.mxu0 %v6007
  %6240 = vmatprep.subr.mxu0 %v6000
  %6241 = vmatpush2.msra.mxu0 %v5999
  %6242 = vmatprep.subr.mxu0 %v5992
  %6243 = vmatpush2.msra.mxu0 %v5991
  %6244 = vmatprep.subr.mxu0 %v5984
  %6245 = vmatpush2.msra.mxu0 %v5983
  %6246 = vmatprep.mubr.f32.mxu0 %v5850
  %6247 = vmatmul.mubr.f32.gmra.mxu0 %v5849
  %v6248 = vpop.f32.mrf.mxu0
  %v6249 = vadd.f32 0.0, %v6248
  %v6250 = vpop.f32.mrf.mxu0
  %v6251 = vadd.f32 0.0, %v6250
  %6252 = vdwg.mxu0
  %6253 = vmatprep.subr.mxu0 %v5978
  %6254 = vmatpush1.msra.mxu0 %v5977
  %6255 = vmatprep.subr.mxu0 %v5970
  %6256 = vmatpush1.msra.mxu0 %v5969
  %6257 = vmatprep.subr.mxu0 %v5962
  %6258 = vmatpush1.msra.mxu0 %v5961
  %6259 = vmatprep.subr.mxu0 %v5954
  %6260 = vmatpush1.msra.mxu0 %v5953
  %6261 = vmatprep.subr.mxu0 %v5946
  %6262 = vmatpush1.msra.mxu0 %v5945
  %6263 = vmatprep.subr.mxu0 %v5938
  %6264 = vmatpush1.msra.mxu0 %v5937
  %6265 = vmatprep.subr.mxu0 %v5930
  %6266 = vmatpush1.msra.mxu0 %v5929
  %6267 = vmatprep.subr.mxu0 %v5922
  %6268 = vmatpush1.msra.mxu0 %v5921
  %6269 = vmatprep.subr.mxu0 %v5914
  %6270 = vmatpush1.msra.mxu0 %v5913
  %6271 = vmatprep.subr.mxu0 %v5906
  %6272 = vmatpush1.msra.mxu0 %v5905
  %6273 = vmatprep.subr.mxu0 %v5898
  %6274 = vmatpush1.msra.mxu0 %v5897
  %6275 = vmatprep.subr.mxu0 %v5890
  %6276 = vmatpush1.msra.mxu0 %v5889
  %6277 = vmatprep.subr.mxu0 %v5882
  %6278 = vmatpush1.msra.mxu0 %v5881
  %6279 = vmatprep.subr.mxu0 %v5874
  %6280 = vmatpush1.msra.mxu0 %v5873
  %6281 = vmatprep.subr.mxu0 %v5866
  %6282 = vmatpush1.msra.mxu0 %v5865
  %6283 = vmatprep.subr.mxu0 %v5858
  %6284 = vmatpush1.msra.mxu0 %v5857
  %6285 = vmatprep.subr.mxu0 %v6106
  %6286 = vmatpush2.msra.mxu0 %v6105
  %6287 = vmatprep.subr.mxu0 %v6098
  %6288 = vmatpush2.msra.mxu0 %v6097
  %6289 = vmatprep.subr.mxu0 %v6090
  %6290 = vmatpush2.msra.mxu0 %v6089
  %6291 = vmatprep.subr.mxu0 %v6082
  %6292 = vmatpush2.msra.mxu0 %v6081
  %6293 = vmatprep.subr.mxu0 %v6074
  %6294 = vmatpush2.msra.mxu0 %v6073
  %6295 = vmatprep.subr.mxu0 %v6066
  %6296 = vmatpush2.msra.mxu0 %v6065
  %6297 = vmatprep.subr.mxu0 %v6058
  %6298 = vmatpush2.msra.mxu0 %v6057
  %6299 = vmatprep.subr.mxu0 %v6050
  %6300 = vmatpush2.msra.mxu0 %v6049
  %6301 = vmatprep.subr.mxu0 %v6042
  %6302 = vmatpush2.msra.mxu0 %v6041
  %6303 = vmatprep.subr.mxu0 %v6034
  %6304 = vmatpush2.msra.mxu0 %v6033
  %6305 = vmatprep.subr.mxu0 %v6026
  %6306 = vmatpush2.msra.mxu0 %v6025
  %6307 = vmatprep.subr.mxu0 %v6018
  %6308 = vmatpush2.msra.mxu0 %v6017
  %6309 = vmatprep.subr.mxu0 %v6010
  %6310 = vmatpush2.msra.mxu0 %v6009
  %6311 = vmatprep.subr.mxu0 %v6002
  %6312 = vmatpush2.msra.mxu0 %v6001
  %6313 = vmatprep.subr.mxu0 %v5994
  %6314 = vmatpush2.msra.mxu0 %v5993
  %6315 = vmatprep.subr.mxu0 %v5986
  %6316 = vmatpush2.msra.mxu0 %v5985
  %6317 = vmatprep.mubr.f32.mxu0 %v5850
  %6318 = vmatmul.mubr.f32.gmra.mxu0 %v5849
  %v6319 = vpop.f32.mrf.mxu0
  %v6320 = vadd.f32 0.0, %v6319
  %v6321 = vpop.f32.mrf.mxu0
  %v6322 = vadd.f32 0.0, %v6321
  %6323 = vdwg.mxu0
  %6324 = vmatprep.subr.mxu0 %v5980
  %6325 = vmatpush1.msra.mxu0 %v5979
  %6326 = vmatprep.subr.mxu0 %v5972
  %6327 = vmatpush1.msra.mxu0 %v5971
  %6328 = vmatprep.subr.mxu0 %v5964
  %6329 = vmatpush1.msra.mxu0 %v5963
  %6330 = vmatprep.subr.mxu0 %v5956
  %6331 = vmatpush1.msra.mxu0 %v5955
  %6332 = vmatprep.subr.mxu0 %v5948
  %6333 = vmatpush1.msra.mxu0 %v5947
  %6334 = vmatprep.subr.mxu0 %v5940
  %6335 = vmatpush1.msra.mxu0 %v5939
  %6336 = vmatprep.subr.mxu0 %v5932
  %6337 = vmatpush1.msra.mxu0 %v5931
  %6338 = vmatprep.subr.mxu0 %v5924
  %6339 = vmatpush1.msra.mxu0 %v5923
  %6340 = vmatprep.subr.mxu0 %v5916
  %6341 = vmatpush1.msra.mxu0 %v5915
  %6342 = vmatprep.subr.mxu0 %v5908
  %6343 = vmatpush1.msra.mxu0 %v5907
  %6344 = vmatprep.subr.mxu0 %v5900
  %6345 = vmatpush1.msra.mxu0 %v5899
  %6346 = vmatprep.subr.mxu0 %v5892
  %6347 = vmatpush1.msra.mxu0 %v5891
  %6348 = vmatprep.subr.mxu0 %v5884
  %6349 = vmatpush1.msra.mxu0 %v5883
  %6350 = vmatprep.subr.mxu0 %v5876
  %6351 = vmatpush1.msra.mxu0 %v5875
  %6352 = vmatprep.subr.mxu0 %v5868
  %6353 = vmatpush1.msra.mxu0 %v5867
  %6354 = vmatprep.subr.mxu0 %v5860
  %6355 = vmatpush1.msra.mxu0 %v5859
  %6356 = vmatprep.subr.mxu0 %v6108
  %6357 = vmatpush2.msra.mxu0 %v6107
  %6358 = vmatprep.subr.mxu0 %v6100
  %6359 = vmatpush2.msra.mxu0 %v6099
  %6360 = vmatprep.subr.mxu0 %v6092
  %6361 = vmatpush2.msra.mxu0 %v6091
  %6362 = vmatprep.subr.mxu0 %v6084
  %6363 = vmatpush2.msra.mxu0 %v6083
  %6364 = vmatprep.subr.mxu0 %v6076
  %6365 = vmatpush2.msra.mxu0 %v6075
  %6366 = vmatprep.subr.mxu0 %v6068
  %6367 = vmatpush2.msra.mxu0 %v6067
  %6368 = vmatprep.subr.mxu0 %v6060
  %6369 = vmatpush2.msra.mxu0 %v6059
  %6370 = vmatprep.subr.mxu0 %v6052
  %6371 = vmatpush2.msra.mxu0 %v6051
  %6372 = vmatprep.subr.mxu0 %v6044
  %6373 = vmatpush2.msra.mxu0 %v6043
  %6374 = vmatprep.subr.mxu0 %v6036
  %6375 = vmatpush2.msra.mxu0 %v6035
  %6376 = vmatprep.subr.mxu0 %v6028
  %6377 = vmatpush2.msra.mxu0 %v6027
  %6378 = vmatprep.subr.mxu0 %v6020
  %6379 = vmatpush2.msra.mxu0 %v6019
  %6380 = vmatprep.subr.mxu0 %v6012
  %6381 = vmatpush2.msra.mxu0 %v6011
  %6382 = vmatprep.subr.mxu0 %v6004
  %6383 = vmatpush2.msra.mxu0 %v6003
  %6384 = vmatprep.subr.mxu0 %v5996
  %6385 = vmatpush2.msra.mxu0 %v5995
  %6386 = vmatprep.subr.mxu0 %v5988
  %6387 = vmatpush2.msra.mxu0 %v5987
  %6388 = vmatprep.mubr.f32.mxu0 %v5850
  %6389 = vmatmul.mubr.f32.gmra.mxu0 %v5849
  %v6390 = vpop.f32.mrf.mxu0
  %v6391 = vadd.f32 0.0, %v6390
  %v6392 = vpop.f32.mrf.mxu0
  %v6393 = vadd.f32 0.0, %v6392
  %6394 = vdwg.mxu0
  %vm6395 = vcmask 1042432
  %v6396 = vsel %vm6395, %v6178, 0.0
  %v6397 = vrot.slane %v6396, 4
  %v6398 = vadd.f32 %v6396, %v6397
  %v6399 = vrot.slane %v6398, 2
  %v6400 = vadd.f32 %v6398, %v6399
  %v6401 = vrot.slane %v6400, 1
  %v6402 = vadd.f32 %v6400, %v6401
  %v6403 = vsel %vm6395, %v6180, 0.0
  %v6404 = vrot.slane %v6403, 4
  %v6405 = vadd.f32 %v6403, %v6404
  %v6406 = vrot.slane %v6405, 2
  %v6407 = vadd.f32 %v6405, %v6406
  %v6408 = vrot.slane %v6407, 1
  %v6409 = vadd.f32 %v6407, %v6408
  %v6410 = vsel %vm6395, %v6249, 0.0
  %v6411 = vrot.slane %v6410, 4
  %v6412 = vadd.f32 %v6410, %v6411
  %v6413 = vrot.slane %v6412, 2
  %v6414 = vadd.f32 %v6412, %v6413
  %v6415 = vrot.slane %v6414, 1
  %v6416 = vadd.f32 %v6414, %v6415
  %v6417 = vsel %vm6395, %v6251, 0.0
  %v6418 = vrot.slane %v6417, 4
  %v6419 = vadd.f32 %v6417, %v6418
  %v6420 = vrot.slane %v6419, 2
  %v6421 = vadd.f32 %v6419, %v6420
  %v6422 = vrot.slane %v6421, 1
  %v6423 = vadd.f32 %v6421, %v6422
  %v6424 = vsel %vm6395, %v6320, 0.0
  %v6425 = vrot.slane %v6424, 4
  %v6426 = vadd.f32 %v6424, %v6425
  %v6427 = vrot.slane %v6426, 2
  %v6428 = vadd.f32 %v6426, %v6427
  %v6429 = vrot.slane %v6428, 1
  %v6430 = vadd.f32 %v6428, %v6429
  %v6431 = vsel %vm6395, %v6322, 0.0
  %v6432 = vrot.slane %v6431, 4
  %v6433 = vadd.f32 %v6431, %v6432
  %v6434 = vrot.slane %v6433, 2
  %v6435 = vadd.f32 %v6433, %v6434
  %v6436 = vrot.slane %v6435, 1
  %v6437 = vadd.f32 %v6435, %v6436
  %v6438 = vsel %vm6395, %v6391, 0.0
  %v6439 = vrot.slane %v6438, 4
  %v6440 = vadd.f32 %v6438, %v6439
  %v6441 = vrot.slane %v6440, 2
  %v6442 = vadd.f32 %v6440, %v6441
  %v6443 = vrot.slane %v6442, 1
  %v6444 = vadd.f32 %v6442, %v6443
  %v6445 = vsel %vm6395, %v6393, 0.0
  %v6446 = vrot.slane %v6445, 4
  %v6447 = vadd.f32 %v6445, %v6446
  %v6448 = vrot.slane %v6447, 2
  %v6449 = vadd.f32 %v6447, %v6448
  %v6450 = vrot.slane %v6449, 1
  %v6451 = vadd.f32 %v6449, %v6450
  %v6452 = vmul.f32 %v6402, 0.33333334
  %v6453 = vmul.f32 %v6409, 0.33333334
  %v6454 = vmul.f32 %v6416, 0.33333334
  %v6455 = vmul.f32 %v6423, 0.33333334
  %v6456 = vmul.f32 %v6430, 0.33333334
  %v6457 = vmul.f32 %v6437, 0.33333334
  %v6458 = vmul.f32 %v6444, 0.33333334
  %v6459 = vmul.f32 %v6451, 0.33333334
  %v6460 = vsub.f32 %v6178, %v6452
  %v6461 = vsub.f32 %v6180, %v6453
  %v6462 = vsub.f32 %v6249, %v6454
  %v6463 = vsub.f32 %v6251, %v6455
  %v6464 = vsub.f32 %v6320, %v6456
  %v6465 = vsub.f32 %v6322, %v6457
  %v6466 = vsub.f32 %v6391, %v6458
  %v6467 = vsub.f32 %v6393, %v6459
  %v6468 = vmul.f32 %v6460, %v6460
  %v6469 = vmul.f32 %v6461, %v6461
  %v6470 = vmul.f32 %v6462, %v6462
  %v6471 = vmul.f32 %v6463, %v6463
  %v6472 = vmul.f32 %v6464, %v6464
  %v6473 = vmul.f32 %v6465, %v6465
  %v6474 = vmul.f32 %v6466, %v6466
  %v6475 = vmul.f32 %v6467, %v6467
  %v6476 = vsel %vm6395, %v6468, 0.0
  %v6477 = vrot.slane %v6476, 4
  %v6478 = vadd.f32 %v6476, %v6477
  %v6479 = vrot.slane %v6478, 2
  %v6480 = vadd.f32 %v6478, %v6479
  %v6481 = vrot.slane %v6480, 1
  %v6482 = vadd.f32 %v6480, %v6481
  %v6483 = vsel %vm6395, %v6469, 0.0
  %v6484 = vrot.slane %v6483, 4
  %v6485 = vadd.f32 %v6483, %v6484
  %v6486 = vrot.slane %v6485, 2
  %v6487 = vadd.f32 %v6485, %v6486
  %v6488 = vrot.slane %v6487, 1
  %v6489 = vadd.f32 %v6487, %v6488
  %v6490 = vsel %vm6395, %v6470, 0.0
  %v6491 = vrot.slane %v6490, 4
  %v6492 = vadd.f32 %v6490, %v6491
  %v6493 = vrot.slane %v6492, 2
  %v6494 = vadd.f32 %v6492, %v6493
  %v6495 = vrot.slane %v6494, 1
  %v6496 = vadd.f32 %v6494, %v6495
  %v6497 = vsel %vm6395, %v6471, 0.0
  %v6498 = vrot.slane %v6497, 4
  %v6499 = vadd.f32 %v6497, %v6498
  %v6500 = vrot.slane %v6499, 2
  %v6501 = vadd.f32 %v6499, %v6500
  %v6502 = vrot.slane %v6501, 1
  %v6503 = vadd.f32 %v6501, %v6502
  %v6504 = vsel %vm6395, %v6472, 0.0
  %v6505 = vrot.slane %v6504, 4
  %v6506 = vadd.f32 %v6504, %v6505
  %v6507 = vrot.slane %v6506, 2
  %v6508 = vadd.f32 %v6506, %v6507
  %v6509 = vrot.slane %v6508, 1
  %v6510 = vadd.f32 %v6508, %v6509
  %v6511 = vsel %vm6395, %v6473, 0.0
  %v6512 = vrot.slane %v6511, 4
  %v6513 = vadd.f32 %v6511, %v6512
  %v6514 = vrot.slane %v6513, 2
  %v6515 = vadd.f32 %v6513, %v6514
  %v6516 = vrot.slane %v6515, 1
  %v6517 = vadd.f32 %v6515, %v6516
  %v6518 = vsel %vm6395, %v6474, 0.0
  %v6519 = vrot.slane %v6518, 4
  %v6520 = vadd.f32 %v6518, %v6519
  %v6521 = vrot.slane %v6520, 2
  %v6522 = vadd.f32 %v6520, %v6521
  %v6523 = vrot.slane %v6522, 1
  %v6524 = vadd.f32 %v6522, %v6523
  %v6525 = vsel %vm6395, %v6475, 0.0
  %v6526 = vrot.slane %v6525, 4
  %v6527 = vadd.f32 %v6525, %v6526
  %v6528 = vrot.slane %v6527, 2
  %v6529 = vadd.f32 %v6527, %v6528
  %v6530 = vrot.slane %v6529, 1
  %v6531 = vadd.f32 %v6529, %v6530
  %v6532 = vmul.f32 %v6482, 0.5
  %v6533 = vmul.f32 %v6489, 0.5
  %v6534 = vmul.f32 %v6496, 0.5
  %v6535 = vmul.f32 %v6503, 0.5
  %v6536 = vmul.f32 %v6510, 0.5
  %v6537 = vmul.f32 %v6517, 0.5
  %v6538 = vmul.f32 %v6524, 0.5
  %v6539 = vmul.f32 %v6531, 0.5
  %v6540 = vadd.f32 %v6532, 1.0
  %v6541 = vadd.f32 %v6533, 1.0
  %v6542 = vadd.f32 %v6534, 1.0
  %v6543 = vadd.f32 %v6535, 1.0
  %v6544 = vadd.f32 %v6536, 1.0
  %v6545 = vadd.f32 %v6537, 1.0
  %v6546 = vadd.f32 %v6538, 1.0
  %v6547 = vadd.f32 %v6539, 1.0
  %v6548 = vrcp.pop %v6540
  %v6549 = vmul.f32 20.0, %v6548
  %v6550 = vrcp.pop %v6541
  %v6551 = vmul.f32 20.0, %v6550
  %v6552 = vrcp.pop %v6542
  %v6553 = vmul.f32 20.0, %v6552
  %v6554 = vrcp.pop %v6543
  %v6555 = vmul.f32 20.0, %v6554
  %v6556 = vrcp.pop %v6544
  %v6557 = vmul.f32 20.0, %v6556
  %v6558 = vrcp.pop %v6545
  %v6559 = vmul.f32 20.0, %v6558
  %v6560 = vrcp.pop %v6546
  %v6561 = vmul.f32 20.0, %v6560
  %v6562 = vrcp.pop %v6547
  %v6563 = vmul.f32 20.0, %v6562
  %v6564 = vsub.f32 %v6549, 20.0
  %v6565 = vsub.f32 %v6551, 20.0
  %v6566 = vsub.f32 %v6553, 20.0
  %v6567 = vsub.f32 %v6555, 20.0
  %v6568 = vsub.f32 %v6557, 20.0
  %v6569 = vsub.f32 %v6559, 20.0
  %v6570 = vsub.f32 %v6561, 20.0
  %v6571 = vsub.f32 %v6563, 20.0
  %v6572 = vmul.f32 %v6564, 1.442695
  %v6573 = vpow.pop %v6572
  %v6574 = vmul.f32 %v6565, 1.442695
  %v6575 = vpow.pop %v6574
  %v6576 = vmul.f32 %v6566, 1.442695
  %v6577 = vpow.pop %v6576
  %v6578 = vmul.f32 %v6567, 1.442695
  %v6579 = vpow.pop %v6578
  %v6580 = vmul.f32 %v6568, 1.442695
  %v6581 = vpow.pop %v6580
  %v6582 = vmul.f32 %v6569, 1.442695
  %v6583 = vpow.pop %v6582
  %v6584 = vmul.f32 %v6570, 1.442695
  %v6585 = vpow.pop %v6584
  %v6586 = vmul.f32 %v6571, 1.442695
  %v6587 = vpow.pop %v6586
  %v6588 = vmul.f32 %v6573, %v6452
  %v6589 = vmul.f32 %v6575, %v6453
  %v6590 = vmul.f32 %v6577, %v6454
  %v6591 = vmul.f32 %v6579, %v6455
  %v6592 = vmul.f32 %v6581, %v6456
  %v6593 = vmul.f32 %v6583, %v6457
  %v6594 = vmul.f32 %v6585, %v6458
  %v6595 = vmul.f32 %v6587, %v6459
  %v6597 = vlaneseq
  %v6598 = vshrl.u32 %v6597, 7
  %v6599 = vsub.s32 0, %v6598
  %v6600 = vrot.slane %v6109, %v6599
  %v6601 = vlaneseq
  %v6602 = vshrl.u32 %v6601, 7
  %v6603 = vsub.s32 1, %v6602
  %v6604 = vrot.slane %v6109, %v6603
  %v6605 = vlaneseq
  %v6606 = vshrl.u32 %v6605, 7
  %v6607 = vsub.s32 2, %v6606
  %v6608 = vrot.slane %v6109, %v6607
  %v6609 = vlaneseq
  %v6610 = vshrl.u32 %v6609, 7
  %v6611 = vsub.s32 3, %v6610
  %v6612 = vrot.slane %v6109, %v6611
  %v6613 = vlaneseq
  %v6614 = vshrl.u32 %v6613, 7
  %v6615 = vsub.s32 4, %v6614
  %v6616 = vrot.slane %v6109, %v6615
  %v6617 = vlaneseq
  %v6618 = vshrl.u32 %v6617, 7
  %v6619 = vsub.s32 5, %v6618
  %v6620 = vrot.slane %v6109, %v6619
  %v6621 = vlaneseq
  %v6622 = vshrl.u32 %v6621, 7
  %v6623 = vsub.s32 6, %v6622
  %v6624 = vrot.slane %v6109, %v6623
  %v6625 = vlaneseq
  %v6626 = vshrl.u32 %v6625, 7
  %v6627 = vsub.s32 7, %v6626
  %v6628 = vrot.slane %v6109, %v6627
  %v6637 = vadd.f32 %v6588, %v6600
  %v6638 = vadd.f32 %v6589, %v6604
  %v6639 = vadd.f32 %v6590, %v6608
  %v6640 = vadd.f32 %v6591, %v6612
  %v6641 = vadd.f32 %v6592, %v6616
  %v6642 = vadd.f32 %v6593, %v6620
  %v6643 = vadd.f32 %v6594, %v6624
  %v6644 = vadd.f32 %v6595, %v6628
  %v6645 = vmax.f32 %v6588, %v6592
  %v6646 = vmax.f32 %v6589, %v6593
  %v6647 = vmax.f32 %v6590, %v6594
  %v6648 = vmax.f32 %v6591, %v6595
  %v6649 = vmax.f32 %v6645, %v6646
  %v6650 = vmax.f32 %v6647, %v6648
  %v6651 = vmax.f32 %v6649, %v6650
  %6652 = vmax.xlane.f32.xlu0 %v6651
  %v6653 = vpop.xlane.xlu0 %6652
  %s6654 = vtos %v6653
  %vm6655 = vcmask 1040384
  %v6656 = vsel %vm6655, %v6637, -inf
  %v6657 = vsel %vm6655, %v6638, -inf
  %v6658 = vsel %vm6655, %v6639, -inf
  %v6659 = vsel %vm6655, %v6640, -inf
  %v6660 = vsel %vm6655, %v6641, -inf
  %v6661 = vmax.f32 %v6656, %v6660
  %v6662 = vsel %vm6655, %v6642, -inf
  %v6663 = vmax.f32 %v6657, %v6662
  %v6664 = vsel %vm6655, %v6643, -inf
  %v6665 = vmax.f32 %v6658, %v6664
  %v6666 = vsel %vm6655, %v6644, -inf
  %v6667 = vmax.f32 %v6659, %v6666
  %v6668 = vmax.f32 %v6661, %v6663
  %v6669 = vmax.f32 %v6665, %v6667
  %v6670 = vmax.f32 %v6668, %v6669
  %6671 = vmax.xlane.f32.xlu0 %v6670
  %v6672 = vpop.xlane.xlu0 %6671
  %v6673 = vrot.slane %v6672, 4
  %v6674 = vmax.f32 %v6672, %v6673
  %v6675 = vrot.slane %v6674, 2
  %v6676 = vmax.f32 %v6674, %v6675
  %v6677 = vrot.slane %v6676, 1
  %v6678 = vmax.f32 %v6676, %v6677
  %s6679 = vtos %v6678
  %6680 = vmatprep.subr.mxu0 %v5974
  %6681 = vmatpush1.msra.mxu0 %v5973
  %6682 = vmatprep.subr.mxu0 %v5966
  %6683 = vmatpush1.msra.mxu0 %v5965
  %6684 = vmatprep.subr.mxu0 %v5958
  %6685 = vmatpush1.msra.mxu0 %v5957
  %6686 = vmatprep.subr.mxu0 %v5950
  %6687 = vmatpush1.msra.mxu0 %v5949
  %6688 = vmatprep.subr.mxu0 %v5942
  %6689 = vmatpush1.msra.mxu0 %v5941
  %6690 = vmatprep.subr.mxu0 %v5934
  %6691 = vmatpush1.msra.mxu0 %v5933
  %6692 = vmatprep.subr.mxu0 %v5926
  %6693 = vmatpush1.msra.mxu0 %v5925
  %6694 = vmatprep.subr.mxu0 %v5918
  %6695 = vmatpush1.msra.mxu0 %v5917
  %6696 = vmatprep.subr.mxu0 %v5910
  %6697 = vmatpush1.msra.mxu0 %v5909
  %6698 = vmatprep.subr.mxu0 %v5902
  %6699 = vmatpush1.msra.mxu0 %v5901
  %6700 = vmatprep.subr.mxu0 %v5894
  %6701 = vmatpush1.msra.mxu0 %v5893
  %6702 = vmatprep.subr.mxu0 %v5886
  %6703 = vmatpush1.msra.mxu0 %v5885
  %6704 = vmatprep.subr.mxu0 %v5878
  %6705 = vmatpush1.msra.mxu0 %v5877
  %6706 = vmatprep.subr.mxu0 %v5870
  %6707 = vmatpush1.msra.mxu0 %v5869
  %6708 = vmatprep.subr.mxu0 %v5862
  %6709 = vmatpush1.msra.mxu0 %v5861
  %6710 = vmatprep.subr.mxu0 %v5854
  %6711 = vmatpush1.msra.mxu0 %v5853
  %6712 = vmatprep.subr.mxu0 %v6102
  %6713 = vmatpush2.msra.mxu0 %v6101
  %6714 = vmatprep.subr.mxu0 %v6094
  %6715 = vmatpush2.msra.mxu0 %v6093
  %6716 = vmatprep.subr.mxu0 %v6086
  %6717 = vmatpush2.msra.mxu0 %v6085
  %6718 = vmatprep.subr.mxu0 %v6078
  %6719 = vmatpush2.msra.mxu0 %v6077
  %6720 = vmatprep.subr.mxu0 %v6070
  %6721 = vmatpush2.msra.mxu0 %v6069
  %6722 = vmatprep.subr.mxu0 %v6062
  %6723 = vmatpush2.msra.mxu0 %v6061
  %6724 = vmatprep.subr.mxu0 %v6054
  %6725 = vmatpush2.msra.mxu0 %v6053
  %6726 = vmatprep.subr.mxu0 %v6046
  %6727 = vmatpush2.msra.mxu0 %v6045
  %6728 = vmatprep.subr.mxu0 %v6038
  %6729 = vmatpush2.msra.mxu0 %v6037
  %6730 = vmatprep.subr.mxu0 %v6030
  %6731 = vmatpush2.msra.mxu0 %v6029
  %6732 = vmatprep.subr.mxu0 %v6022
  %6733 = vmatpush2.msra.mxu0 %v6021
  %6734 = vmatprep.subr.mxu0 %v6014
  %6735 = vmatpush2.msra.mxu0 %v6013
  %6736 = vmatprep.subr.mxu0 %v6006
  %6737 = vmatpush2.msra.mxu0 %v6005
  %6738 = vmatprep.subr.mxu0 %v5998
  %6739 = vmatpush2.msra.mxu0 %v5997
  %6740 = vmatprep.subr.mxu0 %v5990
  %6741 = vmatpush2.msra.mxu0 %v5989
  %6742 = vmatprep.subr.mxu0 %v5982
  %6743 = vmatpush2.msra.mxu0 %v5981
  %6744 = vmatprep.mubr.f32.mxu0 %v5852
  %6745 = vmatmul.mubr.f32.gmra.mxu0 %v5851
  %v6746 = vpop.f32.mrf.mxu0
  %v6747 = vadd.f32 0.0, %v6746
  %v6748 = vpop.f32.mrf.mxu0
  %v6749 = vadd.f32 0.0, %v6748
  %6750 = vdwg.mxu0
  %6751 = vmatprep.subr.mxu0 %v5976
  %6752 = vmatpush1.msra.mxu0 %v5975
  %6753 = vmatprep.subr.mxu0 %v5968
  %6754 = vmatpush1.msra.mxu0 %v5967
  %6755 = vmatprep.subr.mxu0 %v5960
  %6756 = vmatpush1.msra.mxu0 %v5959
  %6757 = vmatprep.subr.mxu0 %v5952
  %6758 = vmatpush1.msra.mxu0 %v5951
  %6759 = vmatprep.subr.mxu0 %v5944
  %6760 = vmatpush1.msra.mxu0 %v5943
  %6761 = vmatprep.subr.mxu0 %v5936
  %6762 = vmatpush1.msra.mxu0 %v5935
  %6763 = vmatprep.subr.mxu0 %v5928
  %6764 = vmatpush1.msra.mxu0 %v5927
  %6765 = vmatprep.subr.mxu0 %v5920
  %6766 = vmatpush1.msra.mxu0 %v5919
  %6767 = vmatprep.subr.mxu0 %v5912
  %6768 = vmatpush1.msra.mxu0 %v5911
  %6769 = vmatprep.subr.mxu0 %v5904
  %6770 = vmatpush1.msra.mxu0 %v5903
  %6771 = vmatprep.subr.mxu0 %v5896
  %6772 = vmatpush1.msra.mxu0 %v5895
  %6773 = vmatprep.subr.mxu0 %v5888
  %6774 = vmatpush1.msra.mxu0 %v5887
  %6775 = vmatprep.subr.mxu0 %v5880
  %6776 = vmatpush1.msra.mxu0 %v5879
  %6777 = vmatprep.subr.mxu0 %v5872
  %6778 = vmatpush1.msra.mxu0 %v5871
  %6779 = vmatprep.subr.mxu0 %v5864
  %6780 = vmatpush1.msra.mxu0 %v5863
  %6781 = vmatprep.subr.mxu0 %v5856
  %6782 = vmatpush1.msra.mxu0 %v5855
  %6783 = vmatprep.subr.mxu0 %v6104
  %6784 = vmatpush2.msra.mxu0 %v6103
  %6785 = vmatprep.subr.mxu0 %v6096
  %6786 = vmatpush2.msra.mxu0 %v6095
  %6787 = vmatprep.subr.mxu0 %v6088
  %6788 = vmatpush2.msra.mxu0 %v6087
  %6789 = vmatprep.subr.mxu0 %v6080
  %6790 = vmatpush2.msra.mxu0 %v6079
  %6791 = vmatprep.subr.mxu0 %v6072
  %6792 = vmatpush2.msra.mxu0 %v6071
  %6793 = vmatprep.subr.mxu0 %v6064
  %6794 = vmatpush2.msra.mxu0 %v6063
  %6795 = vmatprep.subr.mxu0 %v6056
  %6796 = vmatpush2.msra.mxu0 %v6055
  %6797 = vmatprep.subr.mxu0 %v6048
  %6798 = vmatpush2.msra.mxu0 %v6047
  %6799 = vmatprep.subr.mxu0 %v6040
  %6800 = vmatpush2.msra.mxu0 %v6039
  %6801 = vmatprep.subr.mxu0 %v6032
  %6802 = vmatpush2.msra.mxu0 %v6031
  %6803 = vmatprep.subr.mxu0 %v6024
  %6804 = vmatpush2.msra.mxu0 %v6023
  %6805 = vmatprep.subr.mxu0 %v6016
  %6806 = vmatpush2.msra.mxu0 %v6015
  %6807 = vmatprep.subr.mxu0 %v6008
  %6808 = vmatpush2.msra.mxu0 %v6007
  %6809 = vmatprep.subr.mxu0 %v6000
  %6810 = vmatpush2.msra.mxu0 %v5999
  %6811 = vmatprep.subr.mxu0 %v5992
  %6812 = vmatpush2.msra.mxu0 %v5991
  %6813 = vmatprep.subr.mxu0 %v5984
  %6814 = vmatpush2.msra.mxu0 %v5983
  %6815 = vmatprep.mubr.f32.mxu0 %v5852
  %6816 = vmatmul.mubr.f32.gmra.mxu0 %v5851
  %v6817 = vpop.f32.mrf.mxu0
  %v6818 = vadd.f32 0.0, %v6817
  %v6819 = vpop.f32.mrf.mxu0
  %v6820 = vadd.f32 0.0, %v6819
  %6821 = vdwg.mxu0
  %6822 = vmatprep.subr.mxu0 %v5978
  %6823 = vmatpush1.msra.mxu0 %v5977
  %6824 = vmatprep.subr.mxu0 %v5970
  %6825 = vmatpush1.msra.mxu0 %v5969
  %6826 = vmatprep.subr.mxu0 %v5962
  %6827 = vmatpush1.msra.mxu0 %v5961
  %6828 = vmatprep.subr.mxu0 %v5954
  %6829 = vmatpush1.msra.mxu0 %v5953
  %6830 = vmatprep.subr.mxu0 %v5946
  %6831 = vmatpush1.msra.mxu0 %v5945
  %6832 = vmatprep.subr.mxu0 %v5938
  %6833 = vmatpush1.msra.mxu0 %v5937
  %6834 = vmatprep.subr.mxu0 %v5930
  %6835 = vmatpush1.msra.mxu0 %v5929
  %6836 = vmatprep.subr.mxu0 %v5922
  %6837 = vmatpush1.msra.mxu0 %v5921
  %6838 = vmatprep.subr.mxu0 %v5914
  %6839 = vmatpush1.msra.mxu0 %v5913
  %6840 = vmatprep.subr.mxu0 %v5906
  %6841 = vmatpush1.msra.mxu0 %v5905
  %6842 = vmatprep.subr.mxu0 %v5898
  %6843 = vmatpush1.msra.mxu0 %v5897
  %6844 = vmatprep.subr.mxu0 %v5890
  %6845 = vmatpush1.msra.mxu0 %v5889
  %6846 = vmatprep.subr.mxu0 %v5882
  %6847 = vmatpush1.msra.mxu0 %v5881
  %6848 = vmatprep.subr.mxu0 %v5874
  %6849 = vmatpush1.msra.mxu0 %v5873
  %6850 = vmatprep.subr.mxu0 %v5866
  %6851 = vmatpush1.msra.mxu0 %v5865
  %6852 = vmatprep.subr.mxu0 %v5858
  %6853 = vmatpush1.msra.mxu0 %v5857
  %6854 = vmatprep.subr.mxu0 %v6106
  %6855 = vmatpush2.msra.mxu0 %v6105
  %6856 = vmatprep.subr.mxu0 %v6098
  %6857 = vmatpush2.msra.mxu0 %v6097
  %6858 = vmatprep.subr.mxu0 %v6090
  %6859 = vmatpush2.msra.mxu0 %v6089
  %6860 = vmatprep.subr.mxu0 %v6082
  %6861 = vmatpush2.msra.mxu0 %v6081
  %6862 = vmatprep.subr.mxu0 %v6074
  %6863 = vmatpush2.msra.mxu0 %v6073
  %6864 = vmatprep.subr.mxu0 %v6066
  %6865 = vmatpush2.msra.mxu0 %v6065
  %6866 = vmatprep.subr.mxu0 %v6058
  %6867 = vmatpush2.msra.mxu0 %v6057
  %6868 = vmatprep.subr.mxu0 %v6050
  %6869 = vmatpush2.msra.mxu0 %v6049
  %6870 = vmatprep.subr.mxu0 %v6042
  %6871 = vmatpush2.msra.mxu0 %v6041
  %6872 = vmatprep.subr.mxu0 %v6034
  %6873 = vmatpush2.msra.mxu0 %v6033
  %6874 = vmatprep.subr.mxu0 %v6026
  %6875 = vmatpush2.msra.mxu0 %v6025
  %6876 = vmatprep.subr.mxu0 %v6018
  %6877 = vmatpush2.msra.mxu0 %v6017
  %6878 = vmatprep.subr.mxu0 %v6010
  %6879 = vmatpush2.msra.mxu0 %v6009
  %6880 = vmatprep.subr.mxu0 %v6002
  %6881 = vmatpush2.msra.mxu0 %v6001
  %6882 = vmatprep.subr.mxu0 %v5994
  %6883 = vmatpush2.msra.mxu0 %v5993
  %6884 = vmatprep.subr.mxu0 %v5986
  %6885 = vmatpush2.msra.mxu0 %v5985
  %6886 = vmatprep.mubr.f32.mxu0 %v5852
  %6887 = vmatmul.mubr.f32.gmra.mxu0 %v5851
  %v6888 = vpop.f32.mrf.mxu0
  %v6889 = vadd.f32 0.0, %v6888
  %v6890 = vpop.f32.mrf.mxu0
  %v6891 = vadd.f32 0.0, %v6890
  %6892 = vdwg.mxu0
  %6893 = vmatprep.subr.mxu0 %v5980
  %6894 = vmatpush1.msra.mxu0 %v5979
  %6895 = vmatprep.subr.mxu0 %v5972
  %6896 = vmatpush1.msra.mxu0 %v5971
  %6897 = vmatprep.subr.mxu0 %v5964
  %6898 = vmatpush1.msra.mxu0 %v5963
  %6899 = vmatprep.subr.mxu0 %v5956
  %6900 = vmatpush1.msra.mxu0 %v5955
  %6901 = vmatprep.subr.mxu0 %v5948
  %6902 = vmatpush1.msra.mxu0 %v5947
  %6903 = vmatprep.subr.mxu0 %v5940
  %6904 = vmatpush1.msra.mxu0 %v5939
  %6905 = vmatprep.subr.mxu0 %v5932
  %6906 = vmatpush1.msra.mxu0 %v5931
  %6907 = vmatprep.subr.mxu0 %v5924
  %6908 = vmatpush1.msra.mxu0 %v5923
  %6909 = vmatprep.subr.mxu0 %v5916
  %6910 = vmatpush1.msra.mxu0 %v5915
  %6911 = vmatprep.subr.mxu0 %v5908
  %6912 = vmatpush1.msra.mxu0 %v5907
  %6913 = vmatprep.subr.mxu0 %v5900
  %6914 = vmatpush1.msra.mxu0 %v5899
  %6915 = vmatprep.subr.mxu0 %v5892
  %6916 = vmatpush1.msra.mxu0 %v5891
  %6917 = vmatprep.subr.mxu0 %v5884
  %6918 = vmatpush1.msra.mxu0 %v5883
  %6919 = vmatprep.subr.mxu0 %v5876
  %6920 = vmatpush1.msra.mxu0 %v5875
  %6921 = vmatprep.subr.mxu0 %v5868
  %6922 = vmatpush1.msra.mxu0 %v5867
  %6923 = vmatprep.subr.mxu0 %v5860
  %6924 = vmatpush1.msra.mxu0 %v5859
  %6925 = vmatprep.subr.mxu0 %v6108
  %6926 = vmatpush2.msra.mxu0 %v6107
  %6927 = vmatprep.subr.mxu0 %v6100
  %6928 = vmatpush2.msra.mxu0 %v6099
  %6929 = vmatprep.subr.mxu0 %v6092
  %6930 = vmatpush2.msra.mxu0 %v6091
  %6931 = vmatprep.subr.mxu0 %v6084
  %6932 = vmatpush2.msra.mxu0 %v6083
  %6933 = vmatprep.subr.mxu0 %v6076
  %6934 = vmatpush2.msra.mxu0 %v6075
  %6935 = vmatprep.subr.mxu0 %v6068
  %6936 = vmatpush2.msra.mxu0 %v6067
  %6937 = vmatprep.subr.mxu0 %v6060
  %6938 = vmatpush2.msra.mxu0 %v6059
  %6939 = vmatprep.subr.mxu0 %v6052
  %6940 = vmatpush2.msra.mxu0 %v6051
  %6941 = vmatprep.subr.mxu0 %v6044
  %6942 = vmatpush2.msra.mxu0 %v6043
  %6943 = vmatprep.subr.mxu0 %v6036
  %6944 = vmatpush2.msra.mxu0 %v6035
  %6945 = vmatprep.subr.mxu0 %v6028
  %6946 = vmatpush2.msra.mxu0 %v6027
  %6947 = vmatprep.subr.mxu0 %v6020
  %6948 = vmatpush2.msra.mxu0 %v6019
  %6949 = vmatprep.subr.mxu0 %v6012
  %6950 = vmatpush2.msra.mxu0 %v6011
  %6951 = vmatprep.subr.mxu0 %v6004
  %6952 = vmatpush2.msra.mxu0 %v6003
  %6953 = vmatprep.subr.mxu0 %v5996
  %6954 = vmatpush2.msra.mxu0 %v5995
  %6955 = vmatprep.subr.mxu0 %v5988
  %6956 = vmatpush2.msra.mxu0 %v5987
  %6957 = vmatprep.mubr.f32.mxu0 %v5852
  %6958 = vmatmul.mubr.f32.gmra.mxu0 %v5851
  %v6959 = vpop.f32.mrf.mxu0
  %v6960 = vadd.f32 0.0, %v6959
  %v6961 = vpop.f32.mrf.mxu0
  %v6962 = vadd.f32 0.0, %v6961
  %6963 = vdwg.mxu0
  %v6964 = vsel %vm6395, %v6747, 0.0
  %v6965 = vrot.slane %v6964, 4
  %v6966 = vadd.f32 %v6964, %v6965
  %v6967 = vrot.slane %v6966, 2
  %v6968 = vadd.f32 %v6966, %v6967
  %v6969 = vrot.slane %v6968, 1
  %v6970 = vadd.f32 %v6968, %v6969
  %v6971 = vsel %vm6395, %v6749, 0.0
  %v6972 = vrot.slane %v6971, 4
  %v6973 = vadd.f32 %v6971, %v6972
  %v6974 = vrot.slane %v6973, 2
  %v6975 = vadd.f32 %v6973, %v6974
  %v6976 = vrot.slane %v6975, 1
  %v6977 = vadd.f32 %v6975, %v6976
  %v6978 = vsel %vm6395, %v6818, 0.0
  %v6979 = vrot.slane %v6978, 4
  %v6980 = vadd.f32 %v6978, %v6979
  %v6981 = vrot.slane %v6980, 2
  %v6982 = vadd.f32 %v6980, %v6981
  %v6983 = vrot.slane %v6982, 1
  %v6984 = vadd.f32 %v6982, %v6983
  %v6985 = vsel %vm6395, %v6820, 0.0
  %v6986 = vrot.slane %v6985, 4
  %v6987 = vadd.f32 %v6985, %v6986
  %v6988 = vrot.slane %v6987, 2
  %v6989 = vadd.f32 %v6987, %v6988
  %v6990 = vrot.slane %v6989, 1
  %v6991 = vadd.f32 %v6989, %v6990
  %v6992 = vsel %vm6395, %v6889, 0.0
  %v6993 = vrot.slane %v6992, 4
  %v6994 = vadd.f32 %v6992, %v6993
  %v6995 = vrot.slane %v6994, 2
  %v6996 = vadd.f32 %v6994, %v6995
  %v6997 = vrot.slane %v6996, 1
  %v6998 = vadd.f32 %v6996, %v6997
  %v6999 = vsel %vm6395, %v6891, 0.0
  %v7000 = vrot.slane %v6999, 4
  %v7001 = vadd.f32 %v6999, %v7000
  %v7002 = vrot.slane %v7001, 2
  %v7003 = vadd.f32 %v7001, %v7002
  %v7004 = vrot.slane %v7003, 1
  %v7005 = vadd.f32 %v7003, %v7004
  %v7006 = vsel %vm6395, %v6960, 0.0
  %v7007 = vrot.slane %v7006, 4
  %v7008 = vadd.f32 %v7006, %v7007
  %v7009 = vrot.slane %v7008, 2
  %v7010 = vadd.f32 %v7008, %v7009
  %v7011 = vrot.slane %v7010, 1
  %v7012 = vadd.f32 %v7010, %v7011
  %v7013 = vsel %vm6395, %v6962, 0.0
  %v7014 = vrot.slane %v7013, 4
  %v7015 = vadd.f32 %v7013, %v7014
  %v7016 = vrot.slane %v7015, 2
  %v7017 = vadd.f32 %v7015, %v7016
  %v7018 = vrot.slane %v7017, 1
  %v7019 = vadd.f32 %v7017, %v7018
  %v7020 = vmul.f32 %v6970, 0.33333334
  %v7021 = vmul.f32 %v6977, 0.33333334
  %v7022 = vmul.f32 %v6984, 0.33333334
  %v7023 = vmul.f32 %v6991, 0.33333334
  %v7024 = vmul.f32 %v6998, 0.33333334
  %v7025 = vmul.f32 %v7005, 0.33333334
  %v7026 = vmul.f32 %v7012, 0.33333334
  %v7027 = vmul.f32 %v7019, 0.33333334
  %v7028 = vsub.f32 %v6747, %v7020
  %v7029 = vsub.f32 %v6749, %v7021
  %v7030 = vsub.f32 %v6818, %v7022
  %v7031 = vsub.f32 %v6820, %v7023
  %v7032 = vsub.f32 %v6889, %v7024
  %v7033 = vsub.f32 %v6891, %v7025
  %v7034 = vsub.f32 %v6960, %v7026
  %v7035 = vsub.f32 %v6962, %v7027
  %v7036 = vmul.f32 %v7028, %v7028
  %v7037 = vmul.f32 %v7029, %v7029
  %v7038 = vmul.f32 %v7030, %v7030
  %v7039 = vmul.f32 %v7031, %v7031
  %v7040 = vmul.f32 %v7032, %v7032
  %v7041 = vmul.f32 %v7033, %v7033
  %v7042 = vmul.f32 %v7034, %v7034
  %v7043 = vmul.f32 %v7035, %v7035
  %v7044 = vsel %vm6395, %v7036, 0.0
  %v7045 = vrot.slane %v7044, 4
  %v7046 = vadd.f32 %v7044, %v7045
  %v7047 = vrot.slane %v7046, 2
  %v7048 = vadd.f32 %v7046, %v7047
  %v7049 = vrot.slane %v7048, 1
  %v7050 = vadd.f32 %v7048, %v7049
  %v7051 = vsel %vm6395, %v7037, 0.0
  %v7052 = vrot.slane %v7051, 4
  %v7053 = vadd.f32 %v7051, %v7052
  %v7054 = vrot.slane %v7053, 2
  %v7055 = vadd.f32 %v7053, %v7054
  %v7056 = vrot.slane %v7055, 1
  %v7057 = vadd.f32 %v7055, %v7056
  %v7058 = vsel %vm6395, %v7038, 0.0
  %v7059 = vrot.slane %v7058, 4
  %v7060 = vadd.f32 %v7058, %v7059
  %v7061 = vrot.slane %v7060, 2
  %v7062 = vadd.f32 %v7060, %v7061
  %v7063 = vrot.slane %v7062, 1
  %v7064 = vadd.f32 %v7062, %v7063
  %v7065 = vsel %vm6395, %v7039, 0.0
  %v7066 = vrot.slane %v7065, 4
  %v7067 = vadd.f32 %v7065, %v7066
  %v7068 = vrot.slane %v7067, 2
  %v7069 = vadd.f32 %v7067, %v7068
  %v7070 = vrot.slane %v7069, 1
  %v7071 = vadd.f32 %v7069, %v7070
  %v7072 = vsel %vm6395, %v7040, 0.0
  %v7073 = vrot.slane %v7072, 4
  %v7074 = vadd.f32 %v7072, %v7073
  %v7075 = vrot.slane %v7074, 2
  %v7076 = vadd.f32 %v7074, %v7075
  %v7077 = vrot.slane %v7076, 1
  %v7078 = vadd.f32 %v7076, %v7077
  %v7079 = vsel %vm6395, %v7041, 0.0
  %v7080 = vrot.slane %v7079, 4
  %v7081 = vadd.f32 %v7079, %v7080
  %v7082 = vrot.slane %v7081, 2
  %v7083 = vadd.f32 %v7081, %v7082
  %v7084 = vrot.slane %v7083, 1
  %v7085 = vadd.f32 %v7083, %v7084
  %v7086 = vsel %vm6395, %v7042, 0.0
  %v7087 = vrot.slane %v7086, 4
  %v7088 = vadd.f32 %v7086, %v7087
  %v7089 = vrot.slane %v7088, 2
  %v7090 = vadd.f32 %v7088, %v7089
  %v7091 = vrot.slane %v7090, 1
  %v7092 = vadd.f32 %v7090, %v7091
  %v7093 = vsel %vm6395, %v7043, 0.0
  %v7094 = vrot.slane %v7093, 4
  %v7095 = vadd.f32 %v7093, %v7094
  %v7096 = vrot.slane %v7095, 2
  %v7097 = vadd.f32 %v7095, %v7096
  %v7098 = vrot.slane %v7097, 1
  %v7099 = vadd.f32 %v7097, %v7098
  %v7100 = vmul.f32 %v7050, 0.5
  %v7101 = vmul.f32 %v7057, 0.5
  %v7102 = vmul.f32 %v7064, 0.5
  %v7103 = vmul.f32 %v7071, 0.5
  %v7104 = vmul.f32 %v7078, 0.5
  %v7105 = vmul.f32 %v7085, 0.5
  %v7106 = vmul.f32 %v7092, 0.5
  %v7107 = vmul.f32 %v7099, 0.5
  %v7108 = vadd.f32 %v7100, 1.0
  %v7109 = vadd.f32 %v7101, 1.0
  %v7110 = vadd.f32 %v7102, 1.0
  %v7111 = vadd.f32 %v7103, 1.0
  %v7112 = vadd.f32 %v7104, 1.0
  %v7113 = vadd.f32 %v7105, 1.0
  %v7114 = vadd.f32 %v7106, 1.0
  %v7115 = vadd.f32 %v7107, 1.0
  %v7116 = vrcp.pop %v7108
  %v7117 = vmul.f32 20.0, %v7116
  %v7118 = vrcp.pop %v7109
  %v7119 = vmul.f32 20.0, %v7118
  %v7120 = vrcp.pop %v7110
  %v7121 = vmul.f32 20.0, %v7120
  %v7122 = vrcp.pop %v7111
  %v7123 = vmul.f32 20.0, %v7122
  %v7124 = vrcp.pop %v7112
  %v7125 = vmul.f32 20.0, %v7124
  %v7126 = vrcp.pop %v7113
  %v7127 = vmul.f32 20.0, %v7126
  %v7128 = vrcp.pop %v7114
  %v7129 = vmul.f32 20.0, %v7128
  %v7130 = vrcp.pop %v7115
  %v7131 = vmul.f32 20.0, %v7130
  %v7132 = vsub.f32 %v7117, 20.0
  %v7133 = vsub.f32 %v7119, 20.0
  %v7134 = vsub.f32 %v7121, 20.0
  %v7135 = vsub.f32 %v7123, 20.0
  %v7136 = vsub.f32 %v7125, 20.0
  %v7137 = vsub.f32 %v7127, 20.0
  %v7138 = vsub.f32 %v7129, 20.0
  %v7139 = vsub.f32 %v7131, 20.0
  %v7140 = vmul.f32 %v7132, 1.442695
  %v7141 = vpow.pop %v7140
  %v7142 = vmul.f32 %v7133, 1.442695
  %v7143 = vpow.pop %v7142
  %v7144 = vmul.f32 %v7134, 1.442695
  %v7145 = vpow.pop %v7144
  %v7146 = vmul.f32 %v7135, 1.442695
  %v7147 = vpow.pop %v7146
  %v7148 = vmul.f32 %v7136, 1.442695
  %v7149 = vpow.pop %v7148
  %v7150 = vmul.f32 %v7137, 1.442695
  %v7151 = vpow.pop %v7150
  %v7152 = vmul.f32 %v7138, 1.442695
  %v7153 = vpow.pop %v7152
  %v7154 = vmul.f32 %v7139, 1.442695
  %v7155 = vpow.pop %v7154
  %v7156 = vmul.f32 %v7141, %v7020
  %v7157 = vmul.f32 %v7143, %v7021
  %v7158 = vmul.f32 %v7145, %v7022
  %v7159 = vmul.f32 %v7147, %v7023
  %v7160 = vmul.f32 %v7149, %v7024
  %v7161 = vmul.f32 %v7151, %v7025
  %v7162 = vmul.f32 %v7153, %v7026
  %v7163 = vmul.f32 %v7155, %v7027
  %v7165 = vlaneseq
  %v7166 = vshrl.u32 %v7165, 7
  %v7167 = vsub.s32 0, %v7166
  %v7168 = vrot.slane %v6110, %v7167
  %v7169 = vlaneseq
  %v7170 = vshrl.u32 %v7169, 7
  %v7171 = vsub.s32 1, %v7170
  %v7172 = vrot.slane %v6110, %v7171
  %v7173 = vlaneseq
  %v7174 = vshrl.u32 %v7173, 7
  %v7175 = vsub.s32 2, %v7174
  %v7176 = vrot.slane %v6110, %v7175
  %v7177 = vlaneseq
  %v7178 = vshrl.u32 %v7177, 7
  %v7179 = vsub.s32 3, %v7178
  %v7180 = vrot.slane %v6110, %v7179
  %v7181 = vlaneseq
  %v7182 = vshrl.u32 %v7181, 7
  %v7183 = vsub.s32 4, %v7182
  %v7184 = vrot.slane %v6110, %v7183
  %v7185 = vlaneseq
  %v7186 = vshrl.u32 %v7185, 7
  %v7187 = vsub.s32 5, %v7186
  %v7188 = vrot.slane %v6110, %v7187
  %v7189 = vlaneseq
  %v7190 = vshrl.u32 %v7189, 7
  %v7191 = vsub.s32 6, %v7190
  %v7192 = vrot.slane %v6110, %v7191
  %v7193 = vlaneseq
  %v7194 = vshrl.u32 %v7193, 7
  %v7195 = vsub.s32 7, %v7194
  %v7196 = vrot.slane %v6110, %v7195
  %v7205 = vadd.f32 %v7156, %v7168
  %v7206 = vadd.f32 %v7157, %v7172
  %v7207 = vadd.f32 %v7158, %v7176
  %v7208 = vadd.f32 %v7159, %v7180
  %v7209 = vadd.f32 %v7160, %v7184
  %v7210 = vadd.f32 %v7161, %v7188
  %v7211 = vadd.f32 %v7162, %v7192
  %v7212 = vadd.f32 %v7163, %v7196
  %v7213 = vmax.f32 %v7156, %v7160
  %v7214 = vmax.f32 %v7157, %v7161
  %v7215 = vmax.f32 %v7158, %v7162
  %v7216 = vmax.f32 %v7159, %v7163
  %v7217 = vmax.f32 %v7213, %v7214
  %v7218 = vmax.f32 %v7215, %v7216
  %v7219 = vmax.f32 %v7217, %v7218
  %7220 = vmax.xlane.f32.xlu0 %v7219
  %v7221 = vpop.xlane.xlu0 %7220
  %s7222 = vtos %v7221
  %v7223 = vsel %vm6655, %v7205, -inf
  %v7224 = vsel %vm6655, %v7206, -inf
  %v7225 = vsel %vm6655, %v7207, -inf
  %v7226 = vsel %vm6655, %v7208, -inf
  %v7227 = vsel %vm6655, %v7209, -inf
  %v7228 = vmax.f32 %v7223, %v7227
  %v7229 = vsel %vm6655, %v7210, -inf
  %v7230 = vmax.f32 %v7224, %v7229
  %v7231 = vsel %vm6655, %v7211, -inf
  %v7232 = vmax.f32 %v7225, %v7231
  %v7233 = vsel %vm6655, %v7212, -inf
  %v7234 = vmax.f32 %v7226, %v7233
  %v7235 = vmax.f32 %v7228, %v7230
  %v7236 = vmax.f32 %v7232, %v7234
  %v7237 = vmax.f32 %v7235, %v7236
  %7238 = vmax.xlane.f32.xlu0 %v7237
  %v7239 = vpop.xlane.xlu0 %7238
  %v7240 = vrot.slane %v7239, 4
  %v7241 = vmax.f32 %v7239, %v7240
  %v7242 = vrot.slane %v7241, 2
  %v7243 = vmax.f32 %v7241, %v7242
  %v7244 = vrot.slane %v7243, 1
  %v7245 = vmax.f32 %v7243, %v7244
  %s7246 = vtos %v7245
  %s7247 = smax.f32 %s6654, %s7222
  %s7248 = smax.f32 %s6679, %s7246
  %v7249 = vsel %vm6655, %v6600, -inf
  %v7250 = vsel %vm6655, %v6604, -inf
  %v7251 = vsel %vm6655, %v6608, -inf
  %v7252 = vsel %vm6655, %v6612, -inf
  %v7253 = vsel %vm6655, %v6616, -inf
  %v7254 = vmax.f32 %v7249, %v7253
  %v7255 = vsel %vm6655, %v6620, -inf
  %v7256 = vmax.f32 %v7250, %v7255
  %v7257 = vsel %vm6655, %v6624, -inf
  %v7258 = vmax.f32 %v7251, %v7257
  %v7259 = vsel %vm6655, %v6628, -inf
  %v7260 = vmax.f32 %v7252, %v7259
  %v7261 = vsel %vm6655, %v7168, -inf
  %v7262 = vmax.f32 %v7254, %v7261
  %v7263 = vsel %vm6655, %v7172, -inf
  %v7264 = vmax.f32 %v7256, %v7263
  %v7265 = vsel %vm6655, %v7176, -inf
  %v7266 = vmax.f32 %v7258, %v7265
  %v7267 = vsel %vm6655, %v7180, -inf
  %v7268 = vmax.f32 %v7260, %v7267
  %v7269 = vsel %vm6655, %v7184, -inf
  %v7270 = vmax.f32 %v7262, %v7269
  %v7271 = vsel %vm6655, %v7188, -inf
  %v7272 = vmax.f32 %v7264, %v7271
  %v7273 = vsel %vm6655, %v7192, -inf
  %v7274 = vmax.f32 %v7266, %v7273
  %v7275 = vsel %vm6655, %v7196, -inf
  %v7276 = vmax.f32 %v7268, %v7275
  %v7277 = vmax.f32 %v7270, %v7272
  %v7278 = vmax.f32 %v7274, %v7276
  %v7279 = vmax.f32 %v7277, %v7278
  %7280 = vmax.xlane.f32.xlu0 %v7279
  %v7281 = vpop.xlane.xlu0 %7280
  %v7282 = vrot.slane %v7281, 4
  %v7283 = vmax.f32 %v7281, %v7282
  %v7284 = vrot.slane %v7283, 2
  %v7285 = vmax.f32 %v7283, %v7284
  %v7286 = vrot.slane %v7285, 1
  %v7287 = vmax.f32 %v7285, %v7286
  %s7288 = vtos %v7287
  %s7289 = smax.f32 %s7288, %s7247
  %v7290 = vstv %s7248
  %v7291 = vrcp.pop %v7290
  %s7292 = vtos %v7291
  %s7293 = smul.f32 %s7289, %s7292
  %v7294 = vstv %s7293
  %v7295 = vmul.f32 %v6637, %v7294
  %v7296 = vmul.f32 %v6638, %v7294
  %v7297 = vmul.f32 %v6639, %v7294
  %v7298 = vmul.f32 %v6640, %v7294
  %v7299 = vmul.f32 %v6641, %v7294
  %v7300 = vmul.f32 %v6642, %v7294
  %v7301 = vmul.f32 %v6643, %v7294
  %v7302 = vmul.f32 %v6644, %v7294
  %v7311 = vcombine.low %v7295, %v7296
  %v7312 = vcombine.low %v7297, %v7298
  %v7313 = vcombine.low %v7299, %v7300
  %v7314 = vcombine.low %v7301, %v7302
  %v7316 = vunpack.c.l.s4 1966171168
  %v7317 = vunpack.c.0.s8 %v7316
  %v7318 = vlaneseq
  %v7319 = vshrl.u32 %v7318, 7
  %v7320 = vsub.s32 %v7317, %v7319
  %v7321 = vrot.slane %v7311, %v7320
  %v7323 = vunpack.c.l.s4 1966171168
  %v7324 = vunpack.c.0.s8 %v7323
  %v7325 = vlaneseq
  %v7326 = vshrl.u32 %v7325, 7
  %v7327 = vsub.s32 %v7324, %v7326
  %v7328 = vrot.slane %v7312, %v7327
  %v7330 = vunpack.c.l.s4 1966171168
  %v7331 = vunpack.c.0.s8 %v7330
  %v7332 = vlaneseq
  %v7333 = vshrl.u32 %v7332, 7
  %v7334 = vsub.s32 %v7331, %v7333
  %v7335 = vrot.slane %v7313, %v7334
  %v7337 = vunpack.c.l.s4 1966171168
  %v7338 = vunpack.c.0.s8 %v7337
  %v7339 = vlaneseq
  %v7340 = vshrl.u32 %v7339, 7
  %v7341 = vsub.s32 %v7338, %v7340
  %v7342 = vrot.slane %v7314, %v7341
  %v7343 = vcombine.low %v7321, %v7328
  %v7344 = vcombine.low %v7335, %v7342
  %v7346 = vunpack.c.l.s4 1966171168
  %v7347 = vunpack.c.0.s8 %v7346
  %v7348 = vlaneseq
  %v7349 = vshrl.u32 %v7348, 7
  %v7350 = vsub.s32 %v7347, %v7349
  %v7351 = vrot.slane %v7343, %v7350
  %v7353 = vunpack.c.l.s4 1966171168
  %v7354 = vunpack.c.0.s8 %v7353
  %v7355 = vlaneseq
  %v7356 = vshrl.u32 %v7355, 7
  %v7357 = vsub.s32 %v7354, %v7356
  %v7358 = vrot.slane %v7344, %v7357
  %v7359 = vcombine.low %v7351, %v7358
  %7361 = vst [vmem:[%s6] sm:$0xff] %v7359
  %v7362 = vmul.f32 %v7205, %v7294
  %v7363 = vmul.f32 %v7206, %v7294
  %v7364 = vmul.f32 %v7207, %v7294
  %v7365 = vmul.f32 %v7208, %v7294
  %v7366 = vmul.f32 %v7209, %v7294
  %v7367 = vmul.f32 %v7210, %v7294
  %v7368 = vmul.f32 %v7211, %v7294
  %v7369 = vmul.f32 %v7212, %v7294
  %v7378 = vcombine.low %v7362, %v7363
  %v7379 = vcombine.low %v7364, %v7365
  %v7380 = vcombine.low %v7366, %v7367
  %v7381 = vcombine.low %v7368, %v7369
  %v7383 = vunpack.c.l.s4 1966171168
  %v7384 = vunpack.c.0.s8 %v7383
  %v7385 = vlaneseq
  %v7386 = vshrl.u32 %v7385, 7
  %v7387 = vsub.s32 %v7384, %v7386
  %v7388 = vrot.slane %v7378, %v7387
  %v7390 = vunpack.c.l.s4 1966171168
  %v7391 = vunpack.c.0.s8 %v7390
  %v7392 = vlaneseq
  %v7393 = vshrl.u32 %v7392, 7
  %v7394 = vsub.s32 %v7391, %v7393
  %v7395 = vrot.slane %v7379, %v7394
  %v7397 = vunpack.c.l.s4 1966171168
  %v7398 = vunpack.c.0.s8 %v7397
  %v7399 = vlaneseq
  %v7400 = vshrl.u32 %v7399, 7
  %v7401 = vsub.s32 %v7398, %v7400
  %v7402 = vrot.slane %v7380, %v7401
  %v7404 = vunpack.c.l.s4 1966171168
  %v7405 = vunpack.c.0.s8 %v7404
  %v7406 = vlaneseq
  %v7407 = vshrl.u32 %v7406, 7
  %v7408 = vsub.s32 %v7405, %v7407
  %v7409 = vrot.slane %v7381, %v7408
  %v7410 = vcombine.low %v7388, %v7395
  %v7411 = vcombine.low %v7402, %v7409
  %v7413 = vunpack.c.l.s4 1966171168
  %v7414 = vunpack.c.0.s8 %v7413
  %v7415 = vlaneseq
  %v7416 = vshrl.u32 %v7415, 7
  %v7417 = vsub.s32 %v7414, %v7416
  %v7418 = vrot.slane %v7410, %v7417
  %v7420 = vunpack.c.l.s4 1966171168
  %v7421 = vunpack.c.0.s8 %v7420
  %v7422 = vlaneseq
  %v7423 = vshrl.u32 %v7422, 7
  %v7424 = vsub.s32 %v7421, %v7423
  %v7425 = vrot.slane %v7411, %v7424
  %v7426 = vcombine.low %v7418, %v7425
  %s7428 = scalar_lea.vmem %s6, 8
  %7429 = vst [vmem:[%s7428] sm:$0xff] %v7426
  // Predicated region
  $region26: #{forward.1} parent=0 // pred_check
    _
  $region27: #{forward.1} parent=0 // pred_check_branch
    %7431 = sbr.rel (0) target = $region29
  $region28: #{forward.1} parent=0 // pred_region
    _
  $region29: #{forward.1} parent=0 // pred_fallthru
    _
  // Predicated region
  $region30: #{forward.1} parent=0 // pred_check
    _
  $region31: #{forward.1} parent=0 // pred_check_branch
    %7433 = sbr.rel (0) target = $region33
  $region32: #{forward.1} parent=0 // pred_region
    _
  $region33: #{forward.1} parent=0 // pred_fallthru
    _

</llo_original>
